<compile_context>
chip_gen: v6e
topology: v6e:2x2x1
jax: 0.10.0
libtpu: 0.0.40
codegen_flags: <defaults>
</compile_context>

<pallas_src>
import functools

import jax
import jax.numpy as jnp
from jax import lax
from jax.experimental import pallas as pl
from jax.experimental.pallas import tpu as pltpu


# ---------------------------------------------------------------------------
# Fused Pallas kernel
# ---------------------------------------------------------------------------

def make_fused_kernel(num_features, hidden, heads_per_layer, mha_heads):
    """Build the fused forward kernel for fixed static shapes/heads."""
    num_layers = len(heads_per_layer)
    C = hidden
    w_row = max(num_features, hidden)          # row stride of a GAT weight block

    def kernel(x_ref, adj_ref, gatw_ref, att_ref, vec_ref, mhaw_ref, clsw_ref, out_ref):
        # dot_general dimension numbers (batch over leading "head" axis)
        b_dims = (((2,), (1,)), ((0,), (0,)))    # [H,M,K] x [H,K,N] -> [H,M,N]
        bT_dims = (((2,), (2,)), ((0,), (0,)))   # [H,M,K] x [H,N,K] -> [H,M,N]

        adj = adj_ref[...]                       # [N, N]
        adj3 = adj[None, :, :]                   # [1, N, N]
        h = x_ref[...]                           # [N, Fin]

        # ------------------- GAT layers (lane-dense projection) -------------------
        att_off = 0
        for l, H in enumerate(heads_per_layer):
            fin = num_features if l == 0 else hidden
            r0 = l * w_row
            w = gatw_ref[r0:r0 + fin, 0:H * C]                     # [Fin, H*C]
            # one fat MXU push: [N, Fin] @ [Fin, H*C]
            ht_flat = jnp.dot(h, w, preferred_element_type=jnp.float32)
            # rebuild per-head view [H, N, C] from static lane slices (no broadcast of h)
            ht = jnp.stack([ht_flat[:, j * C:(j + 1) * C] for j in range(H)], axis=0)

            a_dst = att_ref[att_off:att_off + H, :][:, None, :]            # [H,1,C]
            a_src = att_ref[att_off + H:att_off + 2 * H, :][:, None, :]    # [H,1,C]
            att_off += 2 * H

            # destination scores [H,N,1] (VPU mul + lane reduce), source scores [H,1,N]
            adst = jnp.sum(ht * a_dst, axis=-1, keepdims=True)
            asrc = lax.dot_general(a_src, ht, bT_dims,
                                   preferred_element_type=jnp.float32)
            e = adst + asrc                                         # [H, N, N]
            e = jnp.where(e >= 0.0, e, 0.2 * e)                     # LeakyReLU(0.2)
            e = jnp.where(adj3 > 0.0, e, -1e30)                     # mask non-edges
            m = jnp.max(e, axis=-1, keepdims=True)
            p = jnp.exp(e - m)                                      # non-edges underflow to 0
            alpha = p * pl.reciprocal(jnp.sum(p, axis=-1, keepdims=True), approx=True)
            # aggregation, all heads in one batched matmul: [H, N, C]
            agg = lax.dot_general(alpha, ht, b_dims, preferred_element_type=jnp.float32)
            y = jnp.sum(agg, axis=0)                                # head sum; 1/H in scale

            scale = vec_ref[l:l + 1, 0:C]                           # BN scale (1/H folded)
            shift = vec_ref[num_layers + l:num_layers + l + 1, 0:C]  # BN shift (+GAT bias)
            h = jnp.maximum(y * scale + shift, 0.0)
            # F.dropout(training=False) -> identity

        # --------------- multi-head self-attention (4 heads) ---------------
        Hm = mha_heads
        d = C // Hm
        wqkv = mhaw_ref[:, 0:3 * C]                                 # [C, 3C]
        wo = mhaw_ref[:, 3 * C:4 * C]                               # [C, C]
        bqkv = vec_ref[2 * num_layers:2 * num_layers + 1, 0:3 * C]  # [1, 3C]
        bo = vec_ref[2 * num_layers + 1:2 * num_layers + 2, 0:C]    # [1, C]

        qkv = jnp.dot(h, wqkv, preferred_element_type=jnp.float32) + bqkv   # [N, 3C]
        q = jnp.stack([qkv[:, j * d:(j + 1) * d] for j in range(Hm)], axis=0)          # [Hm,N,d]
        k = jnp.stack([qkv[:, C + j * d:C + (j + 1) * d] for j in range(Hm)], axis=0)
        v = jnp.stack([qkv[:, 2 * C + j * d:2 * C + (j + 1) * d] for j in range(Hm)], axis=0)

        s = lax.dot_general(q, k, bT_dims,
                            preferred_element_type=jnp.float32) * (1.0 / (float(d) ** 0.5))
        m = jnp.max(s, axis=-1, keepdims=True)
        p = jnp.exp(s - m)
        p = p * pl.reciprocal(jnp.sum(p, axis=-1, keepdims=True), approx=True)
        o = lax.dot_general(p, v, b_dims, preferred_element_type=jnp.float32)   # [Hm,N,d]
        o_cat = jnp.concatenate([o[j] for j in range(Hm)], axis=-1)              # [N, C]
        att_out = jnp.dot(o_cat, wo, preferred_element_type=jnp.float32) + bo    # [N, C]

        # --------------- classifier: Linear -> ReLU -> Linear --------------
        Ch = C // 2
        ncp = out_ref.shape[1]
        w1 = clsw_ref[0:C, 0:Ch]                                    # [C, C/2]
        w2 = clsw_ref[C:C + Ch, :]                                  # [C/2, ncp] (lane-dense)
        b1 = vec_ref[2 * num_layers + 2:2 * num_layers + 3, 0:Ch]
        b2 = vec_ref[2 * num_layers + 3:2 * num_layers + 4, 0:ncp]
        h1 = jnp.maximum(jnp.dot(att_out, w1, preferred_element_type=jnp.float32) + b1, 0.0)
        # (Dropout = identity in eval); lane-dense store
        out_ref[...] = jnp.dot(h1, w2, preferred_element_type=jnp.float32) + b2

    return kernel


# ---------------------------------------------------------------------------
# Parameter init (torch-like shapes, self-generated random weights)
# ---------------------------------------------------------------------------

def init_params(key, num_features, num_classes, hidden_dim=32, num_layers=3):
    params = {"gat": [], "bn": []}
    std = 0.1
    for i in range(num_layers):
        in_dim = num_features if i == 0 else hidden_dim
        heads = 8 if i < num_layers - 1 else 1
        key, k1, k2, k3 = jax.random.split(key, 4)
        params["gat"].append({
            "w": jax.random.normal(k1, (in_dim, heads * hidden_dim), jnp.float32) * std,
            "att_src": jax.random.normal(k2, (heads, hidden_dim), jnp.float32) * std,
            "att_dst": jax.random.normal(k3, (heads, hidden_dim), jnp.float32) * std,
            "bias": jnp.zeros((1, hidden_dim), jnp.float32),
        })
        # PyTorch BatchNorm default init (eval mode -> running stats).
        params["bn"].append({
            "gamma": jnp.ones((1, hidden_dim), jnp.float32),
            "beta": jnp.zeros((1, hidden_dim), jnp.float32),
            "mean": jnp.zeros((1, hidden_dim), jnp.float32),
            "var": jnp.ones((1, hidden_dim), jnp.float32),
        })
    key, kq, kk, kv, ko = jax.random.split(key, 5)
    # NOTE: weights applied as x @ W (self-consistent random params); porting trained
    # PyTorch weights would require transposing / splitting in_proj_weight.
    params["mha"] = {
        "wq": jax.random.normal(kq, (hidden_dim, hidden_dim), jnp.float32) * std,
        "wk": jax.random.normal(kk, (hidden_dim, hidden_dim), jnp.float32) * std,
        "wv": jax.random.normal(kv, (hidden_dim, hidden_dim), jnp.float32) * std,
        "wo": jax.random.normal(ko, (hidden_dim, hidden_dim), jnp.float32) * std,
        "bq": jnp.zeros((1, hidden_dim), jnp.float32),
        "bk": jnp.zeros((1, hidden_dim), jnp.float32),
        "bv": jnp.zeros((1, hidden_dim), jnp.float32),
        "bo": jnp.zeros((1, hidden_dim), jnp.float32),
    }
    key, k1, k2 = jax.random.split(key, 3)
    params["cls"] = {
        "w1": jax.random.normal(k1, (hidden_dim, hidden_dim // 2), jnp.float32) * std,
        "b1": jnp.zeros((1, hidden_dim // 2), jnp.float32),
        "w2": jax.random.normal(k2, (hidden_dim // 2, num_classes), jnp.float32) * std,
        "b2": jnp.zeros((1, num_classes), jnp.float32),
    }
    return params


# ---------------------------------------------------------------------------
# One-time packing (model-load time, OUTSIDE the jitted per-call path)
# ---------------------------------------------------------------------------

_MHA_HEADS = 4
_LANE = 128


def pack_params(params, num_features, num_classes, hidden=32, num_layers=3):
    """Fold BN/bias/head-mean, stack & lane-pad everything into 5 packed operands."""
    eps = 1e-5
    C = hidden
    heads = tuple([8] * (num_layers - 1) + [1])
    w_row = max(num_features, hidden)
    w_col = max(hh * C for hh in heads)

    gat_blocks, att_rows, scale_rows, shift_rows = [], [], [], []
    for l, (g, b) in enumerate(zip(params["gat"], params["bn"])):
        H = heads[l]
        w = g["w"]                                                   # [Fin, H*C]
        blk = jnp.zeros((w_row, w_col), jnp.float32).at[:w.shape[0], :w.shape[1]].set(w)
        gat_blocks.append(blk)
        att_rows.append(g["att_dst"])                                # [H, C]
        att_rows.append(g["att_src"])                                # [H, C]
        scale = b["gamma"] * lax.rsqrt(b["var"] + eps)               # [1, C]
        shift = b["beta"] + (g["bias"] - b["mean"]) * scale          # GAT bias folded in
        scale_rows.append(scale / float(H))                          # 1/H head-mean folded in
        shift_rows.append(shift)
    gat_w = jnp.concatenate(gat_blocks, axis=0)                      # [L*w_row, w_col]
    att = jnp.concatenate(att_rows, axis=0)                          # [sum 2H, C]

    ncp = max(_LANE, ((num_classes + _LANE - 1) // _LANE) * _LANE)   # lane-dense logits width
    vec_width = max(ncp, 3 * C)

    def pad_row(v):
        return jnp.zeros((1, vec_width), jnp.float32).at[:, :v.shape[1]].set(v)

    m = params["mha"]
    cl = params["cls"]
    bqkv = jnp.concatenate([m["bq"], m["bk"], m["bv"]], axis=1)      # [1, 3C]
    vec = jnp.concatenate(
        [pad_row(r) for r in scale_rows] + [pad_row(r) for r in shift_rows] +
        [pad_row(bqkv), pad_row(m["bo"]), pad_row(cl["b1"]), pad_row(cl["b2"])], axis=0)

    wqkv = jnp.concatenate([m["wq"], m["wk"], m["wv"]], axis=1)      # [C, 3C]
    mha_w = jnp.concatenate([wqkv, m["wo"]], axis=1)                 # [C, 4C]

    w1p = jnp.zeros((C, ncp), jnp.float32).at[:, :C // 2].set(cl["w1"])
    w2p = jnp.zeros((C // 2, ncp), jnp.float32).at[:, :num_classes].set(cl["w2"])
    cls_w = jnp.concatenate([w1p, w2p], axis=0)                      # [C + C/2, ncp]

    packed = {"gat_w": gat_w, "att": att, "vec": vec, "mha_w": mha_w, "cls_w": cls_w}
    meta = dict(num_features=num_features, hidden=hidden, heads=heads,
                mha_heads=_MHA_HEADS, ncp=ncp)
    return packed, meta


# ---------------------------------------------------------------------------
# Jitted forward: single fused pallas_call
# ---------------------------------------------------------------------------

@functools.partial(jax.jit,
                   static_argnames=("num_features", "hidden", "heads", "mha_heads", "ncp"))
def neural_gnn_with_attention_forward(packed, x, adj, *, num_features, hidden, heads,
                                      mha_heads, ncp):
    n = x.shape[0]
    kernel = make_fused_kernel(num_features, hidden, heads, mha_heads)
    out_padded = pl.pallas_call(
        kernel,
        out_shape=jax.ShapeDtypeStruct((n, ncp), jnp.float32),
        in_specs=[pl.BlockSpec(memory_space=pltpu.MemorySpace.VMEM)] * 7,
        out_specs=pl.BlockSpec(memory_space=pltpu.MemorySpace.VMEM),
    )(x, adj, packed["gat_w"], packed["att"], packed["vec"],
      packed["mha_w"], packed["cls_w"])
    return out_padded


# ---------------------------------------------------------------------------
# main
# ---------------------------------------------------------------------------

if __name__ == "__main__":
    N = 64            # number of graph nodes
    NUM_FEATURES = 16
    HIDDEN = 32
    NUM_CLASSES = 4
    NUM_LAYERS = 3

    key = jax.random.PRNGKey(0)
    key, kx = jax.random.split(key)
    x = jax.random.normal(kx, (N, NUM_FEATURES), jnp.float32)

    # Deterministic directed edge set (ring graph, both directions) ->
    # dense adjacency mask adj[dst, src] with self loops (GATConv add_self_loops).
    src = jnp.arange(N)
    dst = (src + 1) % N
    adj = jnp.zeros((N, N), jnp.float32)
    adj = adj.at[dst, src].set(1.0)
    adj = adj.at[src, dst].set(1.0)
    adj = jnp.minimum(adj + jnp.eye(N, dtype=jnp.float32), 1.0)

    params = init_params(key, NUM_FEATURES, NUM_CLASSES, HIDDEN, NUM_LAYERS)
    packed, meta = pack_params(params, NUM_FEATURES, NUM_CLASSES, HIDDEN, NUM_LAYERS)

    out_padded = neural_gnn_with_attention_forward(packed, x, adj, **meta)
    out = jax.block_until_ready(out_padded)[:, :NUM_CLASSES]
    assert out.shape == (N, NUM_CLASSES)
    assert bool(jnp.all(jnp.isfinite(out)))
    print("KERNEL_OK")
</pallas_src>

<mosaic_0001>
module attributes {stable_mosaic.version = 11 : i64} {
  func.func @kernel(%arg0: memref<64x16xf32, #tpu.memory_space<vmem>>, %arg1: memref<64x64xf32, #tpu.memory_space<vmem>>, %arg2: memref<96x256xf32, #tpu.memory_space<vmem>>, %arg3: memref<34x32xf32, #tpu.memory_space<vmem>>, %arg4: memref<10x128xf32, #tpu.memory_space<vmem>>, %arg5: memref<32x128xf32, #tpu.memory_space<vmem>>, %arg6: memref<48x128xf32, #tpu.memory_space<vmem>>, %arg7: memref<64x128xf32, #tpu.memory_space<vmem>>) attributes {dimension_semantics = [], scalar_prefetch = 0 : i64, scratch_operands = 0 : i64, tpu.core_type = #tpu.core_type<tc>} {
    %c0 = arith.constant 0 : index
    %c0_0 = arith.constant 0 : index
    %0 = vector.load %arg1[%c0, %c0_0] : memref<64x64xf32, #tpu.memory_space<vmem>>, vector<64x64xf32>
    %1 = vector.shape_cast %0 : vector<64x64xf32> to vector<1x64x64xf32>
    %c0_1 = arith.constant 0 : index
    %c0_2 = arith.constant 0 : index
    %2 = vector.load %arg0[%c0_1, %c0_2] : memref<64x16xf32, #tpu.memory_space<vmem>>, vector<64x16xf32>
    %c0_3 = arith.constant 0 : index
    %c0_4 = arith.constant 0 : index
    %3 = vector.load %arg2[%c0_3, %c0_4] : memref<96x256xf32, #tpu.memory_space<vmem>>, vector<16x256xf32>
    %cst = arith.constant dense<0.000000e+00> : vector<64x256xf32>
    %4 = tpu.matmul %2, %3, %cst {dimension_numbers = #tpu.dot_dimension_numbers<[1], [0], [0], [1], [0, 0, 1, 1], [], []>} : vector<64x16xf32>, vector<16x256xf32>, vector<64x256xf32> -> vector<64x256xf32>
    %5 = vector.extract_strided_slice %4 {offsets = [0, 0], sizes = [64, 32], strides = [1, 1]} : vector<64x256xf32> to vector<64x32xf32>
    %6 = vector.extract_strided_slice %4 {offsets = [0, 32], sizes = [64, 32], strides = [1, 1]} : vector<64x256xf32> to vector<64x32xf32>
    %7 = vector.extract_strided_slice %4 {offsets = [0, 64], sizes = [64, 32], strides = [1, 1]} : vector<64x256xf32> to vector<64x32xf32>
    %8 = vector.extract_strided_slice %4 {offsets = [0, 96], sizes = [64, 32], strides = [1, 1]} : vector<64x256xf32> to vector<64x32xf32>
    %9 = vector.extract_strided_slice %4 {offsets = [0, 128], sizes = [64, 32], strides = [1, 1]} : vector<64x256xf32> to vector<64x32xf32>
    %10 = vector.extract_strided_slice %4 {offsets = [0, 160], sizes = [64, 32], strides = [1, 1]} : vector<64x256xf32> to vector<64x32xf32>
    %11 = vector.extract_strided_slice %4 {offsets = [0, 192], sizes = [64, 32], strides = [1, 1]} : vector<64x256xf32> to vector<64x32xf32>
    %12 = vector.extract_strided_slice %4 {offsets = [0, 224], sizes = [64, 32], strides = [1, 1]} : vector<64x256xf32> to vector<64x32xf32>
    %13 = vector.shape_cast %5 : vector<64x32xf32> to vector<1x64x32xf32>
    %14 = vector.shape_cast %6 : vector<64x32xf32> to vector<1x64x32xf32>
    %15 = vector.shape_cast %7 : vector<64x32xf32> to vector<1x64x32xf32>
    %16 = vector.shape_cast %8 : vector<64x32xf32> to vector<1x64x32xf32>
    %17 = vector.shape_cast %9 : vector<64x32xf32> to vector<1x64x32xf32>
    %18 = vector.shape_cast %10 : vector<64x32xf32> to vector<1x64x32xf32>
    %19 = vector.shape_cast %11 : vector<64x32xf32> to vector<1x64x32xf32>
    %20 = vector.shape_cast %12 : vector<64x32xf32> to vector<1x64x32xf32>
    %21 = tpu.concatenate %13, %14, %15, %16, %17, %18, %19, %20 in 0 : vector<1x64x32xf32>, vector<1x64x32xf32>, vector<1x64x32xf32>, vector<1x64x32xf32>, vector<1x64x32xf32>, vector<1x64x32xf32>, vector<1x64x32xf32>, vector<1x64x32xf32> -> vector<8x64x32xf32>
    %c0_5 = arith.constant 0 : index
    %c0_6 = arith.constant 0 : index
    %22 = vector.load %arg3[%c0_5, %c0_6] : memref<34x32xf32, #tpu.memory_space<vmem>>, vector<8x32xf32>
    %23 = vector.shape_cast %22 : vector<8x32xf32> to vector<8x1x32xf32>
    %c8 = arith.constant 8 : index
    %c0_7 = arith.constant 0 : index
    %24 = vector.load %arg3[%c8, %c0_7] : memref<34x32xf32, #tpu.memory_space<vmem>>, vector<8x32xf32>
    %25 = vector.shape_cast %24 : vector<8x32xf32> to vector<8x1x32xf32>
    %26 = vector.broadcast %23 : vector<8x1x32xf32> to vector<8x64x32xf32>
    %27 = arith.mulf %21, %26 : vector<8x64x32xf32>
    %cst_8 = arith.constant dense<0.000000e+00> : vector<8x64xf32>
    %28 = vector.multi_reduction <add>, %27, %cst_8 [2] : vector<8x64x32xf32> to vector<8x64xf32>
    %29 = vector.shape_cast %28 : vector<8x64xf32> to vector<8x64x1xf32>
    %cst_9 = arith.constant dense<0.000000e+00> : vector<8x1x64xf32>
    %30 = tpu.matmul %25, %21, %cst_9 {dimension_numbers = #tpu.dot_dimension_numbers<[2], [2], [1], [1], [0, 0, 0, 1, 1, 1], [0], [0]>} : vector<8x1x32xf32>, vector<8x64x32xf32>, vector<8x1x64xf32> -> vector<8x1x64xf32>
    %31 = vector.broadcast %29 : vector<8x64x1xf32> to vector<8x64x64xf32>
    %32 = vector.broadcast %30 : vector<8x1x64xf32> to vector<8x64x64xf32>
    %33 = arith.addf %31, %32 : vector<8x64x64xf32>
    %cst_10 = arith.constant 0.000000e+00 : f32
    %34 = vector.broadcast %cst_10 : f32 to vector<8x64x64xf32>
    %35 = arith.cmpf oge, %33, %34 : vector<8x64x64xf32>
    %cst_11 = arith.constant 2.000000e-01 : f32
    %36 = vector.broadcast %cst_11 : f32 to vector<8x64x64xf32>
    %37 = arith.mulf %36, %33 : vector<8x64x64xf32>
    %38 = arith.select %35, %33, %37 : vector<8x64x64xi1>, vector<8x64x64xf32>
    %cst_12 = arith.constant 0.000000e+00 : f32
    %39 = vector.broadcast %cst_12 : f32 to vector<1x64x64xf32>
    %40 = arith.cmpf ogt, %1, %39 : vector<1x64x64xf32>
    %cst_13 = arith.constant -1.000000e+30 : f32
    %41 = vector.shape_cast %40 : vector<1x64x64xi1> to vector<1x64x64xi1>
    %42 = vector.broadcast %41 : vector<1x64x64xi1> to vector<8x64x64xi1>
    %43 = vector.broadcast %cst_13 : f32 to vector<8x64x64xf32>
    %44 = arith.select %42, %38, %43 : vector<8x64x64xi1>, vector<8x64x64xf32>
    %cst_14 = arith.constant dense<0xFF800000> : vector<8x64xf32>
    %45 = vector.multi_reduction <maximumf>, %44, %cst_14 [2] : vector<8x64x64xf32> to vector<8x64xf32>
    %46 = vector.shape_cast %45 : vector<8x64xf32> to vector<8x64x1xf32>
    %47 = vector.broadcast %46 : vector<8x64x1xf32> to vector<8x64x64xf32>
    %48 = arith.subf %44, %47 : vector<8x64x64xf32>
    %49 = math.exp %48 : vector<8x64x64xf32>
    %cst_15 = arith.constant dense<0.000000e+00> : vector<8x64xf32>
    %50 = vector.multi_reduction <add>, %49, %cst_15 [2] : vector<8x64x64xf32> to vector<8x64xf32>
    %51 = vector.shape_cast %50 : vector<8x64xf32> to vector<8x64x1xf32>
    %52 = tpu.reciprocal %51 {approx = true} : vector<8x64x1xf32> -> vector<8x64x1xf32>
    %53 = vector.broadcast %52 : vector<8x64x1xf32> to vector<8x64x64xf32>
    %54 = arith.mulf %49, %53 : vector<8x64x64xf32>
    %cst_16 = arith.constant dense<0.000000e+00> : vector<8x64x32xf32>
    %55 = tpu.matmul %54, %21, %cst_16 {dimension_numbers = #tpu.dot_dimension_numbers<[2], [1], [1], [2], [0, 0, 0, 1, 1, 2], [0], [0]>} : vector<8x64x64xf32>, vector<8x64x32xf32>, vector<8x64x32xf32> -> vector<8x64x32xf32>
    %cst_17 = arith.constant dense<0.000000e+00> : vector<64x32xf32>
    %56 = vector.multi_reduction <add>, %55, %cst_17 [0] : vector<8x64x32xf32> to vector<64x32xf32>
    %c0_18 = arith.constant 0 : index
    %c0_19 = arith.constant 0 : index
    %57 = vector.load %arg4[%c0_18, %c0_19] : memref<10x128xf32, #tpu.memory_space<vmem>>, vector<1x32xf32>
    %c3 = arith.constant 3 : index
    %c0_20 = arith.constant 0 : index
    %58 = vector.load %arg4[%c3, %c0_20] : memref<10x128xf32, #tpu.memory_space<vmem>>, vector<1x32xf32>
    %59 = vector.broadcast %57 : vector<1x32xf32> to vector<64x32xf32>
    %60 = arith.mulf %56, %59 : vector<64x32xf32>
    %61 = vector.broadcast %58 : vector<1x32xf32> to vector<64x32xf32>
    %62 = arith.addf %60, %61 : vector<64x32xf32>
    %cst_21 = arith.constant 0.000000e+00 : f32
    %63 = vector.broadcast %cst_21 : f32 to vector<64x32xf32>
    %64 = arith.maximumf %62, %63 : vector<64x32xf32>
    %c32 = arith.constant 32 : index
    %c0_22 = arith.constant 0 : index
    %65 = vector.load %arg2[%c32, %c0_22] : memref<96x256xf32, #tpu.memory_space<vmem>>, vector<32x256xf32>
    %cst_23 = arith.constant dense<0.000000e+00> : vector<64x256xf32>
    %66 = tpu.matmul %64, %65, %cst_23 {dimension_numbers = #tpu.dot_dimension_numbers<[1], [0], [0], [1], [0, 0, 1, 1], [], []>} : vector<64x32xf32>, vector<32x256xf32>, vector<64x256xf32> -> vector<64x256xf32>
    %67 = vector.extract_strided_slice %66 {offsets = [0, 0], sizes = [64, 32], strides = [1, 1]} : vector<64x256xf32> to vector<64x32xf32>
    %68 = vector.extract_strided_slice %66 {offsets = [0, 32], sizes = [64, 32], strides = [1, 1]} : vector<64x256xf32> to vector<64x32xf32>
    %69 = vector.extract_strided_slice %66 {offsets = [0, 64], sizes = [64, 32], strides = [1, 1]} : vector<64x256xf32> to vector<64x32xf32>
    %70 = vector.extract_strided_slice %66 {offsets = [0, 96], sizes = [64, 32], strides = [1, 1]} : vector<64x256xf32> to vector<64x32xf32>
    %71 = vector.extract_strided_slice %66 {offsets = [0, 128], sizes = [64, 32], strides = [1, 1]} : vector<64x256xf32> to vector<64x32xf32>
    %72 = vector.extract_strided_slice %66 {offsets = [0, 160], sizes = [64, 32], strides = [1, 1]} : vector<64x256xf32> to vector<64x32xf32>
    %73 = vector.extract_strided_slice %66 {offsets = [0, 192], sizes = [64, 32], strides = [1, 1]} : vector<64x256xf32> to vector<64x32xf32>
    %74 = vector.extract_strided_slice %66 {offsets = [0, 224], sizes = [64, 32], strides = [1, 1]} : vector<64x256xf32> to vector<64x32xf32>
    %75 = vector.shape_cast %67 : vector<64x32xf32> to vector<1x64x32xf32>
    %76 = vector.shape_cast %68 : vector<64x32xf32> to vector<1x64x32xf32>
    %77 = vector.shape_cast %69 : vector<64x32xf32> to vector<1x64x32xf32>
    %78 = vector.shape_cast %70 : vector<64x32xf32> to vector<1x64x32xf32>
    %79 = vector.shape_cast %71 : vector<64x32xf32> to vector<1x64x32xf32>
    %80 = vector.shape_cast %72 : vector<64x32xf32> to vector<1x64x32xf32>
    %81 = vector.shape_cast %73 : vector<64x32xf32> to vector<1x64x32xf32>
    %82 = vector.shape_cast %74 : vector<64x32xf32> to vector<1x64x32xf32>
    %83 = tpu.concatenate %75, %76, %77, %78, %79, %80, %81, %82 in 0 : vector<1x64x32xf32>, vector<1x64x32xf32>, vector<1x64x32xf32>, vector<1x64x32xf32>, vector<1x64x32xf32>, vector<1x64x32xf32>, vector<1x64x32xf32>, vector<1x64x32xf32> -> vector<8x64x32xf32>
    %c16 = arith.constant 16 : index
    %c0_24 = arith.constant 0 : index
    %84 = vector.load %arg3[%c16, %c0_24] : memref<34x32xf32, #tpu.memory_space<vmem>>, vector<8x32xf32>
    %85 = vector.shape_cast %84 : vector<8x32xf32> to vector<8x1x32xf32>
    %c24 = arith.constant 24 : index
    %c0_25 = arith.constant 0 : index
    %86 = vector.load %arg3[%c24, %c0_25] : memref<34x32xf32, #tpu.memory_space<vmem>>, vector<8x32xf32>
    %87 = vector.shape_cast %86 : vector<8x32xf32> to vector<8x1x32xf32>
    %88 = vector.broadcast %85 : vector<8x1x32xf32> to vector<8x64x32xf32>
    %89 = arith.mulf %83, %88 : vector<8x64x32xf32>
    %cst_26 = arith.constant dense<0.000000e+00> : vector<8x64xf32>
    %90 = vector.multi_reduction <add>, %89, %cst_26 [2] : vector<8x64x32xf32> to vector<8x64xf32>
    %91 = vector.shape_cast %90 : vector<8x64xf32> to vector<8x64x1xf32>
    %cst_27 = arith.constant dense<0.000000e+00> : vector<8x1x64xf32>
    %92 = tpu.matmul %87, %83, %cst_27 {dimension_numbers = #tpu.dot_dimension_numbers<[2], [2], [1], [1], [0, 0, 0, 1, 1, 1], [0], [0]>} : vector<8x1x32xf32>, vector<8x64x32xf32>, vector<8x1x64xf32> -> vector<8x1x64xf32>
    %93 = vector.broadcast %91 : vector<8x64x1xf32> to vector<8x64x64xf32>
    %94 = vector.broadcast %92 : vector<8x1x64xf32> to vector<8x64x64xf32>
    %95 = arith.addf %93, %94 : vector<8x64x64xf32>
    %cst_28 = arith.constant 0.000000e+00 : f32
    %96 = vector.broadcast %cst_28 : f32 to vector<8x64x64xf32>
    %97 = arith.cmpf oge, %95, %96 : vector<8x64x64xf32>
    %cst_29 = arith.constant 2.000000e-01 : f32
    %98 = vector.broadcast %cst_29 : f32 to vector<8x64x64xf32>
    %99 = arith.mulf %98, %95 : vector<8x64x64xf32>
    %100 = arith.select %97, %95, %99 : vector<8x64x64xi1>, vector<8x64x64xf32>
    %cst_30 = arith.constant 0.000000e+00 : f32
    %101 = vector.broadcast %cst_30 : f32 to vector<1x64x64xf32>
    %102 = arith.cmpf ogt, %1, %101 : vector<1x64x64xf32>
    %cst_31 = arith.constant -1.000000e+30 : f32
    %103 = vector.shape_cast %102 : vector<1x64x64xi1> to vector<1x64x64xi1>
    %104 = vector.broadcast %103 : vector<1x64x64xi1> to vector<8x64x64xi1>
    %105 = vector.broadcast %cst_31 : f32 to vector<8x64x64xf32>
    %106 = arith.select %104, %100, %105 : vector<8x64x64xi1>, vector<8x64x64xf32>
    %cst_32 = arith.constant dense<0xFF800000> : vector<8x64xf32>
    %107 = vector.multi_reduction <maximumf>, %106, %cst_32 [2] : vector<8x64x64xf32> to vector<8x64xf32>
    %108 = vector.shape_cast %107 : vector<8x64xf32> to vector<8x64x1xf32>
    %109 = vector.broadcast %108 : vector<8x64x1xf32> to vector<8x64x64xf32>
    %110 = arith.subf %106, %109 : vector<8x64x64xf32>
    %111 = math.exp %110 : vector<8x64x64xf32>
    %cst_33 = arith.constant dense<0.000000e+00> : vector<8x64xf32>
    %112 = vector.multi_reduction <add>, %111, %cst_33 [2] : vector<8x64x64xf32> to vector<8x64xf32>
    %113 = vector.shape_cast %112 : vector<8x64xf32> to vector<8x64x1xf32>
    %114 = tpu.reciprocal %113 {approx = true} : vector<8x64x1xf32> -> vector<8x64x1xf32>
    %115 = vector.broadcast %114 : vector<8x64x1xf32> to vector<8x64x64xf32>
    %116 = arith.mulf %111, %115 : vector<8x64x64xf32>
    %cst_34 = arith.constant dense<0.000000e+00> : vector<8x64x32xf32>
    %117 = tpu.matmul %116, %83, %cst_34 {dimension_numbers = #tpu.dot_dimension_numbers<[2], [1], [1], [2], [0, 0, 0, 1, 1, 2], [0], [0]>} : vector<8x64x64xf32>, vector<8x64x32xf32>, vector<8x64x32xf32> -> vector<8x64x32xf32>
    %cst_35 = arith.constant dense<0.000000e+00> : vector<64x32xf32>
    %118 = vector.multi_reduction <add>, %117, %cst_35 [0] : vector<8x64x32xf32> to vector<64x32xf32>
    %c1 = arith.constant 1 : index
    %c0_36 = arith.constant 0 : index
    %119 = vector.load %arg4[%c1, %c0_36] : memref<10x128xf32, #tpu.memory_space<vmem>>, vector<1x32xf32>
    %c4 = arith.constant 4 : index
    %c0_37 = arith.constant 0 : index
    %120 = vector.load %arg4[%c4, %c0_37] : memref<10x128xf32, #tpu.memory_space<vmem>>, vector<1x32xf32>
    %121 = vector.broadcast %119 : vector<1x32xf32> to vector<64x32xf32>
    %122 = arith.mulf %118, %121 : vector<64x32xf32>
    %123 = vector.broadcast %120 : vector<1x32xf32> to vector<64x32xf32>
    %124 = arith.addf %122, %123 : vector<64x32xf32>
    %cst_38 = arith.constant 0.000000e+00 : f32
    %125 = vector.broadcast %cst_38 : f32 to vector<64x32xf32>
    %126 = arith.maximumf %124, %125 : vector<64x32xf32>
    %c64 = arith.constant 64 : index
    %c0_39 = arith.constant 0 : index
    %127 = vector.load %arg2[%c64, %c0_39] : memref<96x256xf32, #tpu.memory_space<vmem>>, vector<32x32xf32>
    %cst_40 = arith.constant dense<0.000000e+00> : vector<64x32xf32>
    %128 = tpu.matmul %126, %127, %cst_40 {dimension_numbers = #tpu.dot_dimension_numbers<[1], [0], [0], [1], [0, 0, 1, 1], [], []>} : vector<64x32xf32>, vector<32x32xf32>, vector<64x32xf32> -> vector<64x32xf32>
    %129 = vector.shape_cast %128 : vector<64x32xf32> to vector<1x64x32xf32>
    %c32_41 = arith.constant 32 : index
    %c0_42 = arith.constant 0 : index
    %130 = vector.load %arg3[%c32_41, %c0_42] : memref<34x32xf32, #tpu.memory_space<vmem>>, vector<1x32xf32>
    %131 = vector.shape_cast %130 : vector<1x32xf32> to vector<1x1x32xf32>
    %c33 = arith.constant 33 : index
    %c0_43 = arith.constant 0 : index
    %132 = vector.load %arg3[%c33, %c0_43] : memref<34x32xf32, #tpu.memory_space<vmem>>, vector<1x32xf32>
    %133 = vector.shape_cast %132 : vector<1x32xf32> to vector<1x1x32xf32>
    %134 = vector.broadcast %131 : vector<1x1x32xf32> to vector<1x64x32xf32>
    %135 = arith.mulf %129, %134 : vector<1x64x32xf32>
    %cst_44 = arith.constant dense<0.000000e+00> : vector<1x64xf32>
    %136 = vector.multi_reduction <add>, %135, %cst_44 [2] : vector<1x64x32xf32> to vector<1x64xf32>
    %137 = vector.shape_cast %136 : vector<1x64xf32> to vector<1x64x1xf32>
    %cst_45 = arith.constant dense<0.000000e+00> : vector<1x1x64xf32>
    %138 = tpu.matmul %133, %129, %cst_45 {dimension_numbers = #tpu.dot_dimension_numbers<[2], [2], [1], [1], [0, 0, 0, 1, 1, 1], [0], [0]>} : vector<1x1x32xf32>, vector<1x64x32xf32>, vector<1x1x64xf32> -> vector<1x1x64xf32>
    %139 = vector.broadcast %137 : vector<1x64x1xf32> to vector<1x64x64xf32>
    %140 = vector.broadcast %138 : vector<1x1x64xf32> to vector<1x64x64xf32>
    %141 = arith.addf %139, %140 : vector<1x64x64xf32>
    %cst_46 = arith.constant 0.000000e+00 : f32
    %142 = vector.broadcast %cst_46 : f32 to vector<1x64x64xf32>
    %143 = arith.cmpf oge, %141, %142 : vector<1x64x64xf32>
    %cst_47 = arith.constant 2.000000e-01 : f32
    %144 = vector.broadcast %cst_47 : f32 to vector<1x64x64xf32>
    %145 = arith.mulf %144, %141 : vector<1x64x64xf32>
    %146 = arith.select %143, %141, %145 : vector<1x64x64xi1>, vector<1x64x64xf32>
    %cst_48 = arith.constant 0.000000e+00 : f32
    %147 = vector.broadcast %cst_48 : f32 to vector<1x64x64xf32>
    %148 = arith.cmpf ogt, %1, %147 : vector<1x64x64xf32>
    %cst_49 = arith.constant -1.000000e+30 : f32
    %149 = vector.broadcast %cst_49 : f32 to vector<1x64x64xf32>
    %150 = arith.select %148, %146, %149 : vector<1x64x64xi1>, vector<1x64x64xf32>
    %cst_50 = arith.constant dense<0xFF800000> : vector<1x64xf32>
    %151 = vector.multi_reduction <maximumf>, %150, %cst_50 [2] : vector<1x64x64xf32> to vector<1x64xf32>
    %152 = vector.shape_cast %151 : vector<1x64xf32> to vector<1x64x1xf32>
    %153 = vector.broadcast %152 : vector<1x64x1xf32> to vector<1x64x64xf32>
    %154 = arith.subf %150, %153 : vector<1x64x64xf32>
    %155 = math.exp %154 : vector<1x64x64xf32>
    %cst_51 = arith.constant dense<0.000000e+00> : vector<1x64xf32>
    %156 = vector.multi_reduction <add>, %155, %cst_51 [2] : vector<1x64x64xf32> to vector<1x64xf32>
    %157 = vector.shape_cast %156 : vector<1x64xf32> to vector<1x64x1xf32>
    %158 = tpu.reciprocal %157 {approx = true} : vector<1x64x1xf32> -> vector<1x64x1xf32>
    %159 = vector.broadcast %158 : vector<1x64x1xf32> to vector<1x64x64xf32>
    %160 = arith.mulf %155, %159 : vector<1x64x64xf32>
    %cst_52 = arith.constant dense<0.000000e+00> : vector<1x64x32xf32>
    %161 = tpu.matmul %160, %129, %cst_52 {dimension_numbers = #tpu.dot_dimension_numbers<[2], [1], [1], [2], [0, 0, 0, 1, 1, 2], [0], [0]>} : vector<1x64x64xf32>, vector<1x64x32xf32>, vector<1x64x32xf32> -> vector<1x64x32xf32>
    %cst_53 = arith.constant dense<0.000000e+00> : vector<64x32xf32>
    %162 = vector.multi_reduction <add>, %161, %cst_53 [0] : vector<1x64x32xf32> to vector<64x32xf32>
    %c2 = arith.constant 2 : index
    %c0_54 = arith.constant 0 : index
    %163 = vector.load %arg4[%c2, %c0_54] : memref<10x128xf32, #tpu.memory_space<vmem>>, vector<1x32xf32>
    %c5 = arith.constant 5 : index
    %c0_55 = arith.constant 0 : index
    %164 = vector.load %arg4[%c5, %c0_55] : memref<10x128xf32, #tpu.memory_space<vmem>>, vector<1x32xf32>
    %165 = vector.broadcast %163 : vector<1x32xf32> to vector<64x32xf32>
    %166 = arith.mulf %162, %165 : vector<64x32xf32>
    %167 = vector.broadcast %164 : vector<1x32xf32> to vector<64x32xf32>
    %168 = arith.addf %166, %167 : vector<64x32xf32>
    %cst_56 = arith.constant 0.000000e+00 : f32
    %169 = vector.broadcast %cst_56 : f32 to vector<64x32xf32>
    %170 = arith.maximumf %168, %169 : vector<64x32xf32>
    %c0_57 = arith.constant 0 : index
    %c0_58 = arith.constant 0 : index
    %171 = vector.load %arg5[%c0_57, %c0_58] : memref<32x128xf32, #tpu.memory_space<vmem>>, vector<32x96xf32>
    %c0_59 = arith.constant 0 : index
    %c96 = arith.constant 96 : index
    %172 = vector.load %arg5[%c0_59, %c96] : memref<32x128xf32, #tpu.memory_space<vmem>>, vector<32x32xf32>
    %c6 = arith.constant 6 : index
    %c0_60 = arith.constant 0 : index
    %173 = vector.load %arg4[%c6, %c0_60] : memref<10x128xf32, #tpu.memory_space<vmem>>, vector<1x96xf32>
    %c7 = arith.constant 7 : index
    %c0_61 = arith.constant 0 : index
    %174 = vector.load %arg4[%c7, %c0_61] : memref<10x128xf32, #tpu.memory_space<vmem>>, vector<1x32xf32>
    %cst_62 = arith.constant dense<0.000000e+00> : vector<64x96xf32>
    %175 = tpu.matmul %170, %171, %cst_62 {dimension_numbers = #tpu.dot_dimension_numbers<[1], [0], [0], [1], [0, 0, 1, 1], [], []>} : vector<64x32xf32>, vector<32x96xf32>, vector<64x96xf32> -> vector<64x96xf32>
    %176 = vector.broadcast %173 : vector<1x96xf32> to vector<64x96xf32>
    %177 = arith.addf %175, %176 : vector<64x96xf32>
    %178 = vector.extract_strided_slice %177 {offsets = [0, 0], sizes = [64, 8], strides = [1, 1]} : vector<64x96xf32> to vector<64x8xf32>
    %179 = vector.extract_strided_slice %177 {offsets = [0, 8], sizes = [64, 8], strides = [1, 1]} : vector<64x96xf32> to vector<64x8xf32>
    %180 = vector.extract_strided_slice %177 {offsets = [0, 16], sizes = [64, 8], strides = [1, 1]} : vector<64x96xf32> to vector<64x8xf32>
    %181 = vector.extract_strided_slice %177 {offsets = [0, 24], sizes = [64, 8], strides = [1, 1]} : vector<64x96xf32> to vector<64x8xf32>
    %182 = vector.shape_cast %178 : vector<64x8xf32> to vector<1x64x8xf32>
    %183 = vector.shape_cast %179 : vector<64x8xf32> to vector<1x64x8xf32>
    %184 = vector.shape_cast %180 : vector<64x8xf32> to vector<1x64x8xf32>
    %185 = vector.shape_cast %181 : vector<64x8xf32> to vector<1x64x8xf32>
    %186 = tpu.concatenate %182, %183, %184, %185 in 0 : vector<1x64x8xf32>, vector<1x64x8xf32>, vector<1x64x8xf32>, vector<1x64x8xf32> -> vector<4x64x8xf32>
    %187 = vector.extract_strided_slice %177 {offsets = [0, 32], sizes = [64, 8], strides = [1, 1]} : vector<64x96xf32> to vector<64x8xf32>
    %188 = vector.extract_strided_slice %177 {offsets = [0, 40], sizes = [64, 8], strides = [1, 1]} : vector<64x96xf32> to vector<64x8xf32>
    %189 = vector.extract_strided_slice %177 {offsets = [0, 48], sizes = [64, 8], strides = [1, 1]} : vector<64x96xf32> to vector<64x8xf32>
    %190 = vector.extract_strided_slice %177 {offsets = [0, 56], sizes = [64, 8], strides = [1, 1]} : vector<64x96xf32> to vector<64x8xf32>
    %191 = vector.shape_cast %187 : vector<64x8xf32> to vector<1x64x8xf32>
    %192 = vector.shape_cast %188 : vector<64x8xf32> to vector<1x64x8xf32>
    %193 = vector.shape_cast %189 : vector<64x8xf32> to vector<1x64x8xf32>
    %194 = vector.shape_cast %190 : vector<64x8xf32> to vector<1x64x8xf32>
    %195 = tpu.concatenate %191, %192, %193, %194 in 0 : vector<1x64x8xf32>, vector<1x64x8xf32>, vector<1x64x8xf32>, vector<1x64x8xf32> -> vector<4x64x8xf32>
    %196 = vector.extract_strided_slice %177 {offsets = [0, 64], sizes = [64, 8], strides = [1, 1]} : vector<64x96xf32> to vector<64x8xf32>
    %197 = vector.extract_strided_slice %177 {offsets = [0, 72], sizes = [64, 8], strides = [1, 1]} : vector<64x96xf32> to vector<64x8xf32>
    %198 = vector.extract_strided_slice %177 {offsets = [0, 80], sizes = [64, 8], strides = [1, 1]} : vector<64x96xf32> to vector<64x8xf32>
    %199 = vector.extract_strided_slice %177 {offsets = [0, 88], sizes = [64, 8], strides = [1, 1]} : vector<64x96xf32> to vector<64x8xf32>
    %200 = vector.shape_cast %196 : vector<64x8xf32> to vector<1x64x8xf32>
    %201 = vector.shape_cast %197 : vector<64x8xf32> to vector<1x64x8xf32>
    %202 = vector.shape_cast %198 : vector<64x8xf32> to vector<1x64x8xf32>
    %203 = vector.shape_cast %199 : vector<64x8xf32> to vector<1x64x8xf32>
    %204 = tpu.concatenate %200, %201, %202, %203 in 0 : vector<1x64x8xf32>, vector<1x64x8xf32>, vector<1x64x8xf32>, vector<1x64x8xf32> -> vector<4x64x8xf32>
    %cst_63 = arith.constant dense<0.000000e+00> : vector<4x64x64xf32>
    %205 = tpu.matmul %186, %195, %cst_63 {dimension_numbers = #tpu.dot_dimension_numbers<[2], [2], [1], [1], [0, 0, 0, 1, 1, 1], [0], [0]>} : vector<4x64x8xf32>, vector<4x64x8xf32>, vector<4x64x64xf32> -> vector<4x64x64xf32>
    %cst_64 = arith.constant 0.353553385 : f32
    %206 = vector.broadcast %cst_64 : f32 to vector<4x64x64xf32>
    %207 = arith.mulf %205, %206 : vector<4x64x64xf32>
    %cst_65 = arith.constant dense<0xFF800000> : vector<4x64xf32>
    %208 = vector.multi_reduction <maximumf>, %207, %cst_65 [2] : vector<4x64x64xf32> to vector<4x64xf32>
    %209 = vector.shape_cast %208 : vector<4x64xf32> to vector<4x64x1xf32>
    %210 = vector.broadcast %209 : vector<4x64x1xf32> to vector<4x64x64xf32>
    %211 = arith.subf %207, %210 : vector<4x64x64xf32>
    %212 = math.exp %211 : vector<4x64x64xf32>
    %cst_66 = arith.constant dense<0.000000e+00> : vector<4x64xf32>
    %213 = vector.multi_reduction <add>, %212, %cst_66 [2] : vector<4x64x64xf32> to vector<4x64xf32>
    %214 = vector.shape_cast %213 : vector<4x64xf32> to vector<4x64x1xf32>
    %215 = tpu.reciprocal %214 {approx = true} : vector<4x64x1xf32> -> vector<4x64x1xf32>
    %216 = vector.broadcast %215 : vector<4x64x1xf32> to vector<4x64x64xf32>
    %217 = arith.mulf %212, %216 : vector<4x64x64xf32>
    %cst_67 = arith.constant dense<0.000000e+00> : vector<4x64x8xf32>
    %218 = tpu.matmul %217, %204, %cst_67 {dimension_numbers = #tpu.dot_dimension_numbers<[2], [1], [1], [2], [0, 0, 0, 1, 1, 2], [0], [0]>} : vector<4x64x64xf32>, vector<4x64x8xf32>, vector<4x64x8xf32> -> vector<4x64x8xf32>
    %219 = vector.extract_strided_slice %218 {offsets = [0, 0, 0], sizes = [1, 64, 8], strides = [1, 1, 1]} : vector<4x64x8xf32> to vector<1x64x8xf32>
    %220 = vector.shape_cast %219 : vector<1x64x8xf32> to vector<64x8xf32>
    %221 = vector.extract_strided_slice %218 {offsets = [1, 0, 0], sizes = [1, 64, 8], strides = [1, 1, 1]} : vector<4x64x8xf32> to vector<1x64x8xf32>
    %222 = vector.shape_cast %221 : vector<1x64x8xf32> to vector<64x8xf32>
    %223 = vector.extract_strided_slice %218 {offsets = [2, 0, 0], sizes = [1, 64, 8], strides = [1, 1, 1]} : vector<4x64x8xf32> to vector<1x64x8xf32>
    %224 = vector.shape_cast %223 : vector<1x64x8xf32> to vector<64x8xf32>
    %225 = vector.extract_strided_slice %218 {offsets = [3, 0, 0], sizes = [1, 64, 8], strides = [1, 1, 1]} : vector<4x64x8xf32> to vector<1x64x8xf32>
    %226 = vector.shape_cast %225 : vector<1x64x8xf32> to vector<64x8xf32>
    %227 = tpu.concatenate %220, %222, %224, %226 in 1 : vector<64x8xf32>, vector<64x8xf32>, vector<64x8xf32>, vector<64x8xf32> -> vector<64x32xf32>
    %cst_68 = arith.constant dense<0.000000e+00> : vector<64x32xf32>
    %228 = tpu.matmul %227, %172, %cst_68 {dimension_numbers = #tpu.dot_dimension_numbers<[1], [0], [0], [1], [0, 0, 1, 1], [], []>} : vector<64x32xf32>, vector<32x32xf32>, vector<64x32xf32> -> vector<64x32xf32>
    %229 = vector.broadcast %174 : vector<1x32xf32> to vector<64x32xf32>
    %230 = arith.addf %228, %229 : vector<64x32xf32>
    %c0_69 = arith.constant 0 : index
    %c0_70 = arith.constant 0 : index
    %231 = vector.load %arg6[%c0_69, %c0_70] : memref<48x128xf32, #tpu.memory_space<vmem>>, vector<32x16xf32>
    %c32_71 = arith.constant 32 : index
    %c0_72 = arith.constant 0 : index
    %232 = vector.load %arg6[%c32_71, %c0_72] : memref<48x128xf32, #tpu.memory_space<vmem>>, vector<16x128xf32>
    %c8_73 = arith.constant 8 : index
    %c0_74 = arith.constant 0 : index
    %233 = vector.load %arg4[%c8_73, %c0_74] : memref<10x128xf32, #tpu.memory_space<vmem>>, vector<1x16xf32>
    %c9 = arith.constant 9 : index
    %c0_75 = arith.constant 0 : index
    %234 = vector.load %arg4[%c9, %c0_75] : memref<10x128xf32, #tpu.memory_space<vmem>>, vector<1x128xf32>
    %cst_76 = arith.constant dense<0.000000e+00> : vector<64x16xf32>
    %235 = tpu.matmul %230, %231, %cst_76 {dimension_numbers = #tpu.dot_dimension_numbers<[1], [0], [0], [1], [0, 0, 1, 1], [], []>} : vector<64x32xf32>, vector<32x16xf32>, vector<64x16xf32> -> vector<64x16xf32>
    %236 = vector.broadcast %233 : vector<1x16xf32> to vector<64x16xf32>
    %237 = arith.addf %235, %236 : vector<64x16xf32>
    %cst_77 = arith.constant 0.000000e+00 : f32
    %238 = vector.broadcast %cst_77 : f32 to vector<64x16xf32>
    %239 = arith.maximumf %237, %238 : vector<64x16xf32>
    %cst_78 = arith.constant dense<0.000000e+00> : vector<64x128xf32>
    %240 = tpu.matmul %239, %232, %cst_78 {dimension_numbers = #tpu.dot_dimension_numbers<[1], [0], [0], [1], [0, 0, 1, 1], [], []>} : vector<64x16xf32>, vector<16x128xf32>, vector<64x128xf32> -> vector<64x128xf32>
    %241 = vector.broadcast %234 : vector<1x128xf32> to vector<64x128xf32>
    %242 = arith.addf %240, %241 : vector<64x128xf32>
    %c0_79 = arith.constant 0 : index
    %c0_80 = arith.constant 0 : index
    %243 = vector.load %arg7[%c0_79, %c0_80] : memref<64x128xf32, #tpu.memory_space<vmem>>, vector<64x128xf32>
    tpu.vector_store %arg7[%c0_79, %c0_80], %242 {strides = array<i32>} : memref<64x128xf32, #tpu.memory_space<vmem>>, vector<64x128xf32>,
    return
  }
}

</mosaic_0001>

<llo_original>
// kernel: neural_gnn_with_attention_forward.1
$region0: #{neural_gnn_with_attention_forward.1}
  #allocation0 [shape = 'u32[]', space=smem, size = 0x4, offset = 0x4, fixed_abs, tag = 'smem constant byte address 0x4 - core index']
  #allocation1 [shape = 'u32[144,128]{1,0:T(1,128)}', space=vmem, size = 0x12000, scoped, tag = 'internal scratch']
  %s0 = inlined_call_operand.vmem [shape: f32[64,16], index: 0, kind: input, shape index: {}]
  %s1 = inlined_call_operand.vmem [shape: f32[64,64], index: 1, kind: input, shape index: {}]
  %s2 = inlined_call_operand.hbm [shape: f32[96,256], index: 2, kind: input, shape index: {}]
  %s3 = inlined_call_operand.vmem [shape: f32[34,32], index: 3, kind: input, shape index: {}]
  %s4 = inlined_call_operand.hbm [shape: f32[10,128], index: 4, kind: input, shape index: {}]
  %s5 = inlined_call_operand.vmem [shape: f32[32,128], index: 5, kind: input, shape index: {}]
  %s6 = inlined_call_operand.vmem [shape: f32[48,128], index: 6, kind: input, shape index: {}]
  %s7 = inlined_call_operand.hbm [shape: f32[64,128], index: 7, kind: output, shape index: {}]
  %s8 = sld [smem:[#allocation0]]
  $region46: #{neural_gnn_with_attention_forward.1} parent=0
    _
  %s10 = ssub.s32 1, %s8
  %s11 = scalar_select 0, %s10, %s8
  $region1: #{neural_gnn_with_attention_forward.1} parent=0
    #allocation2 [shape = 'u8[98304]{0}', space=vmem, size = 0x18000, scoped, tag = 'input window, operand 2, single buffered']
    #allocation3 [shape = 's32[1]{0}', space=sflag, size = 0x4, scoped, tag = 'scoped memory for neural_gnn_with_attention_forward.1']
    #allocation4 [shape = 's32[1]{0}', space=sflag, size = 0x4, scoped, tag = 'scoped memory for neural_gnn_with_attention_forward.1']
    #allocation5 [shape = 'u8[8192]{0}', space=vmem, size = 0x2000, scoped, tag = 'input window, operand 4, single buffered']
    #allocation6 [shape = 's32[1]{0}', space=sflag, size = 0x4, scoped, tag = 'scoped memory for neural_gnn_with_attention_forward.1']
    #allocation7 [shape = 'u8[32768]{0}', space=vmem, size = 0x8000, scoped, tag = 'output window, operand 0, single buffered']
    %12 = vsyncpa [#allocation3], 0
    %13 = vsyncpa [#allocation6], 0
    %14 = vsyncpa [#allocation4], 0
    // Predicated region
    $region2: #{neural_gnn_with_attention_forward.1} parent=1 // pred_check
      _
    $region3: #{neural_gnn_with_attention_forward.1} parent=1 // pred_check_branch
      %16 = sbr.rel (0) target = $region5
    $region4: #{neural_gnn_with_attention_forward.1} parent=1 // pred_region
      _
    $region5: #{neural_gnn_with_attention_forward.1} parent=1 // pred_fallthru
      _
    // Predicated region
    $region6: #{neural_gnn_with_attention_forward.1} parent=1 // pred_check
      _
    $region7: #{neural_gnn_with_attention_forward.1} parent=1 // pred_check_branch
      %18 = sbr.rel (0) target = $region9
    $region8: #{neural_gnn_with_attention_forward.1} parent=1 // pred_region
      _
    $region9: #{neural_gnn_with_attention_forward.1} parent=1 // pred_fallthru
      _
    // Predicated region
    $region10: #{neural_gnn_with_attention_forward.1} parent=1 // pred_check
      _
    $region11: #{neural_gnn_with_attention_forward.1} parent=1 // pred_check_branch
      %20 = sbr.rel (0) target = $region13
    $region12: #{neural_gnn_with_attention_forward.1} parent=1 // pred_region
      %s22 = ssub.s32 3072, 3072
      %23 = vsyncadd [#allocation3], %s22
      %s24 = sshll.u32 [#allocation2], 4
      %s25 = int_to_ptr.vmem [resolvable:$true] %s24
      %30 = dma.hbm_to_vmem [thread:$0]  %s2, 3072, %s25, [#allocation3], 256, 256, 16
    $region13: #{neural_gnn_with_attention_forward.1} parent=1 // pred_fallthru
      _
    // Predicated region
    $region14: #{neural_gnn_with_attention_forward.1} parent=1 // pred_check
      _
    $region15: #{neural_gnn_with_attention_forward.1} parent=1 // pred_check_branch
      %32 = sbr.rel (0) target = $region17
    $region16: #{neural_gnn_with_attention_forward.1} parent=1 // pred_region
      _
    $region17: #{neural_gnn_with_attention_forward.1} parent=1 // pred_fallthru
      _
    // Predicated region
    $region18: #{neural_gnn_with_attention_forward.1} parent=1 // pred_check
      _
    $region19: #{neural_gnn_with_attention_forward.1} parent=1 // pred_check_branch
      %34 = sbr.rel (0) target = $region21
    $region20: #{neural_gnn_with_attention_forward.1} parent=1 // pred_region
      %s36 = ssub.s32 256, 256
      %37 = vsyncadd [#allocation6], %s36
      %s38 = sshll.u32 [#allocation5], 4
      %s39 = int_to_ptr.vmem [resolvable:$true] %s38
      %44 = dma.hbm_to_vmem [thread:$0]  %s4, 256, %s39, [#allocation6], 128, 128, 8
    $region21: #{neural_gnn_with_attention_forward.1} parent=1 // pred_fallthru
      _
    // Predicated region
    $region22: #{neural_gnn_with_attention_forward.1} parent=1 // pred_check
      _
    $region23: #{neural_gnn_with_attention_forward.1} parent=1 // pred_check_branch
      %46 = sbr.rel (0) target = $region25
    $region24: #{neural_gnn_with_attention_forward.1} parent=1 // pred_region
      _
    $region25: #{neural_gnn_with_attention_forward.1} parent=1 // pred_fallthru
      _
    // Predicated region
    $region26: #{neural_gnn_with_attention_forward.1} parent=1 // pred_check
      _
    $region27: #{neural_gnn_with_attention_forward.1} parent=1 // pred_check_branch
      %48 = sbr.rel (0) target = $region29
    $region28: #{neural_gnn_with_attention_forward.1} parent=1 // pred_region
      _
    $region29: #{neural_gnn_with_attention_forward.1} parent=1 // pred_fallthru
      _
    // Predicated region
    $region30: #{neural_gnn_with_attention_forward.1} parent=1 // pred_check
      _
    $region31: #{neural_gnn_with_attention_forward.1} parent=1 // pred_check_branch
      %50 = sbr.rel (0) target = $region33
    $region32: #{neural_gnn_with_attention_forward.1} parent=1 // pred_region
      %51 = dma.done [#allocation3], 3072
    $region33: #{neural_gnn_with_attention_forward.1} parent=1 // pred_fallthru
      _
    // Predicated region
    $region34: #{neural_gnn_with_attention_forward.1} parent=1 // pred_check
      _
    $region35: #{neural_gnn_with_attention_forward.1} parent=1 // pred_check_branch
      %53 = sbr.rel (0) target = $region37
    $region36: #{neural_gnn_with_attention_forward.1} parent=1 // pred_region
      %54 = dma.done [#allocation6], 256
    $region37: #{neural_gnn_with_attention_forward.1} parent=1 // pred_fallthru
      _
    %v55 = vld [vmem:[%s1] sm:$0xff]
    %v56 = vld [vmem:[%s1 + $0x8] sm:$0xff]
    %v57 = vld [vmem:[%s1 + $0x10] sm:$0xff]
    %v58 = vld [vmem:[%s1 + $0x18] sm:$0xff]
    %v59 = vld [vmem:[%s1 + $0x20] sm:$0xff]
    %v60 = vld [vmem:[%s1 + $0x28] sm:$0xff]
    %v61 = vld [vmem:[%s1 + $0x30] sm:$0xff]
    %v62 = vld [vmem:[%s1 + $0x38] sm:$0xff]
    %v63 = vld [vmem:[%s0] sm:$0xff]
    %v64 = vld [vmem:[%s0 + $0x8] sm:$0xff]
    %v65 = vld [vmem:[%s0 + $0x10] sm:$0xff]
    %v66 = vld [vmem:[%s0 + $0x18] sm:$0xff]
    %v67 = vld [vmem:[%s0 + $0x20] sm:$0xff]
    %v68 = vld [vmem:[%s0 + $0x28] sm:$0xff]
    %v69 = vld [vmem:[%s0 + $0x30] sm:$0xff]
    %v70 = vld [vmem:[%s0 + $0x38] sm:$0xff]
    %v71 = vld [vmem:[#allocation2] sm:$0xff]
    %v72 = vld [vmem:[#allocation2 + $0x8] sm:$0xff]
    %v73 = vld [vmem:[#allocation2 + $0x10] sm:$0xff]
    %v74 = vld [vmem:[#allocation2 + $0x18] sm:$0xff]
    %vm75 = vcmask 130048
    %v77 = vsel %vm75, %v63, 0
    %v80 = vsel %vm75, %v64, 0
    %v83 = vsel %vm75, %v65, 0
    %v86 = vsel %vm75, %v66, 0
    %v89 = vsel %vm75, %v67, 0
    %v92 = vsel %vm75, %v68, 0
    %v95 = vsel %vm75, %v69, 0
    %v98 = vsel %vm75, %v70, 0
    %100 = vmatprep.subr.mxu0 0.0
    %101 = vmatpush1.msra.mxu0 0.0
    %102 = vmatprep.subr.mxu0 0.0
    %103 = vmatpush1.msra.mxu0 0.0
    %104 = vmatprep.subr.mxu0 0.0
    %105 = vmatpush1.msra.mxu0 0.0
    %106 = vmatprep.subr.mxu0 0.0
    %107 = vmatpush1.msra.mxu0 0.0
    %108 = vmatprep.subr.mxu0 0.0
    %109 = vmatpush1.msra.mxu0 0.0
    %110 = vmatprep.subr.mxu0 0.0
    %111 = vmatpush1.msra.mxu0 0.0
    %112 = vmatprep.subr.mxu0 0.0
    %113 = vmatpush1.msra.mxu0 0.0
    %114 = vmatprep.subr.mxu0 0.0
    %115 = vmatpush1.msra.mxu0 0.0
    %116 = vmatprep.subr.mxu0 0.0
    %117 = vmatpush1.msra.mxu0 0.0
    %118 = vmatprep.subr.mxu0 0.0
    %119 = vmatpush1.msra.mxu0 0.0
    %120 = vmatprep.subr.mxu0 0.0
    %121 = vmatpush1.msra.mxu0 0.0
    %122 = vmatprep.subr.mxu0 0.0
    %123 = vmatpush1.msra.mxu0 0.0
    %124 = vmatprep.subr.mxu0 0.0
    %125 = vmatpush1.msra.mxu0 0.0
    %126 = vmatprep.subr.mxu0 0.0
    %127 = vmatpush1.msra.mxu0 0.0
    %128 = vmatprep.subr.mxu0 %v74
    %129 = vmatpush1.msra.mxu0 %v73
    %130 = vmatprep.subr.mxu0 %v72
    %131 = vmatpush1.msra.mxu0 %v71
    %132 = vmatprep.subr.mxu0 0.0
    %133 = vmatpush2.msra.mxu0 0.0
    %134 = vmatprep.subr.mxu0 0.0
    %135 = vmatpush2.msra.mxu0 0.0
    %136 = vmatprep.subr.mxu0 0.0
    %137 = vmatpush2.msra.mxu0 0.0
    %138 = vmatprep.subr.mxu0 0.0
    %139 = vmatpush2.msra.mxu0 0.0
    %140 = vmatprep.subr.mxu0 0.0
    %141 = vmatpush2.msra.mxu0 0.0
    %142 = vmatprep.subr.mxu0 0.0
    %143 = vmatpush2.msra.mxu0 0.0
    %144 = vmatprep.subr.mxu0 0.0
    %145 = vmatpush2.msra.mxu0 0.0
    %146 = vmatprep.subr.mxu0 0.0
    %147 = vmatpush2.msra.mxu0 0.0
    %148 = vmatprep.subr.mxu0 0.0
    %149 = vmatpush2.msra.mxu0 0.0
    %150 = vmatprep.subr.mxu0 0.0
    %151 = vmatpush2.msra.mxu0 0.0
    %152 = vmatprep.subr.mxu0 0.0
    %153 = vmatpush2.msra.mxu0 0.0
    %154 = vmatprep.subr.mxu0 0.0
    %155 = vmatpush2.msra.mxu0 0.0
    %156 = vmatprep.subr.mxu0 0.0
    %157 = vmatpush2.msra.mxu0 0.0
    %158 = vmatprep.subr.mxu0 0.0
    %159 = vmatpush2.msra.mxu0 0.0
    %160 = vmatprep.subr.mxu0 0.0
    %161 = vmatpush2.msra.mxu0 0.0
    %162 = vmatprep.subr.mxu0 0.0
    %163 = vmatpush2.msra.mxu0 0.0
    %164 = vmatprep.mubr.f32.mxu0 0.0
    %165 = vmatmul.mubr.f32.gmra.mxu0 %v77
    %v166 = vpop.f32.mrf.mxu0
    %v167 = vadd.f32 0.0, %v166
    %v168 = vpop.f32.mrf.mxu0
    %v169 = vadd.f32 0.0, %v168
    %170 = vmatprep.mubr.f32.mxu0 0.0
    %171 = vmatmul.mubr.f32.gmra.mxu0 %v80
    %v172 = vpop.f32.mrf.mxu0
    %v173 = vadd.f32 0.0, %v172
    %v174 = vpop.f32.mrf.mxu0
    %v175 = vadd.f32 0.0, %v174
    %176 = vmatprep.mubr.f32.mxu0 0.0
    %177 = vmatmul.mubr.f32.gmra.mxu0 %v83
    %v178 = vpop.f32.mrf.mxu0
    %v179 = vadd.f32 0.0, %v178
    %v180 = vpop.f32.mrf.mxu0
    %v181 = vadd.f32 0.0, %v180
    %182 = vmatprep.mubr.f32.mxu0 0.0
    %183 = vmatmul.mubr.f32.gmra.mxu0 %v86
    %v184 = vpop.f32.mrf.mxu0
    %v185 = vadd.f32 0.0, %v184
    %v186 = vpop.f32.mrf.mxu0
    %v187 = vadd.f32 0.0, %v186
    %188 = vmatprep.mubr.f32.mxu0 0.0
    %189 = vmatmul.mubr.f32.gmra.mxu0 %v89
    %v190 = vpop.f32.mrf.mxu0
    %v191 = vadd.f32 0.0, %v190
    %v192 = vpop.f32.mrf.mxu0
    %v193 = vadd.f32 0.0, %v192
    %194 = vmatprep.mubr.f32.mxu0 0.0
    %195 = vmatmul.mubr.f32.gmra.mxu0 %v92
    %v196 = vpop.f32.mrf.mxu0
    %v197 = vadd.f32 0.0, %v196
    %v198 = vpop.f32.mrf.mxu0
    %v199 = vadd.f32 0.0, %v198
    %200 = vmatprep.mubr.f32.mxu0 0.0
    %201 = vmatmul.mubr.f32.gmra.mxu0 %v95
    %v202 = vpop.f32.mrf.mxu0
    %v203 = vadd.f32 0.0, %v202
    %v204 = vpop.f32.mrf.mxu0
    %v205 = vadd.f32 0.0, %v204
    %206 = vmatprep.mubr.f32.mxu0 0.0
    %207 = vmatmul.mubr.f32.gmra.mxu0 %v98
    %v208 = vpop.f32.mrf.mxu0
    %v209 = vadd.f32 0.0, %v208
    %v210 = vpop.f32.mrf.mxu0
    %v211 = vadd.f32 0.0, %v210
    %212 = vdwg.mxu0
    %221 = vrot.lane.b32.xlu0 %v167, 96
    %v222 = vpop.permute.xlu0 %221
    %223 = vrot.lane.b32.xlu0 %v173, 96
    %v224 = vpop.permute.xlu0 %223
    %225 = vrot.lane.b32.xlu0 %v179, 96
    %v226 = vpop.permute.xlu0 %225
    %227 = vrot.lane.b32.xlu0 %v185, 96
    %v228 = vpop.permute.xlu0 %227
    %229 = vrot.lane.b32.xlu0 %v191, 96
    %v230 = vpop.permute.xlu0 %229
    %231 = vrot.lane.b32.xlu0 %v197, 96
    %v232 = vpop.permute.xlu0 %231
    %233 = vrot.lane.b32.xlu0 %v203, 96
    %v234 = vpop.permute.xlu0 %233
    %235 = vrot.lane.b32.xlu0 %v209, 96
    %v236 = vpop.permute.xlu0 %235
    %245 = vrot.lane.b32.xlu0 %v167, 64
    %v246 = vpop.permute.xlu0 %245
    %247 = vrot.lane.b32.xlu0 %v173, 64
    %v248 = vpop.permute.xlu0 %247
    %249 = vrot.lane.b32.xlu0 %v179, 64
    %v250 = vpop.permute.xlu0 %249
    %251 = vrot.lane.b32.xlu0 %v185, 64
    %v252 = vpop.permute.xlu0 %251
    %253 = vrot.lane.b32.xlu0 %v191, 64
    %v254 = vpop.permute.xlu0 %253
    %255 = vrot.lane.b32.xlu0 %v197, 64
    %v256 = vpop.permute.xlu0 %255
    %257 = vrot.lane.b32.xlu0 %v203, 64
    %v258 = vpop.permute.xlu0 %257
    %259 = vrot.lane.b32.xlu0 %v209, 64
    %v260 = vpop.permute.xlu0 %259
    %269 = vrot.lane.b32.xlu0 %v167, 32
    %v270 = vpop.permute.xlu0 %269
    %271 = vrot.lane.b32.xlu0 %v173, 32
    %v272 = vpop.permute.xlu0 %271
    %273 = vrot.lane.b32.xlu0 %v179, 32
    %v274 = vpop.permute.xlu0 %273
    %275 = vrot.lane.b32.xlu0 %v185, 32
    %v276 = vpop.permute.xlu0 %275
    %277 = vrot.lane.b32.xlu0 %v191, 32
    %v278 = vpop.permute.xlu0 %277
    %279 = vrot.lane.b32.xlu0 %v197, 32
    %v280 = vpop.permute.xlu0 %279
    %281 = vrot.lane.b32.xlu0 %v203, 32
    %v282 = vpop.permute.xlu0 %281
    %283 = vrot.lane.b32.xlu0 %v209, 32
    %v284 = vpop.permute.xlu0 %283
    %301 = vrot.lane.b32.xlu0 %v169, 96
    %v302 = vpop.permute.xlu0 %301
    %303 = vrot.lane.b32.xlu0 %v175, 96
    %v304 = vpop.permute.xlu0 %303
    %305 = vrot.lane.b32.xlu0 %v181, 96
    %v306 = vpop.permute.xlu0 %305
    %307 = vrot.lane.b32.xlu0 %v187, 96
    %v308 = vpop.permute.xlu0 %307
    %309 = vrot.lane.b32.xlu0 %v193, 96
    %v310 = vpop.permute.xlu0 %309
    %311 = vrot.lane.b32.xlu0 %v199, 96
    %v312 = vpop.permute.xlu0 %311
    %313 = vrot.lane.b32.xlu0 %v205, 96
    %v314 = vpop.permute.xlu0 %313
    %315 = vrot.lane.b32.xlu0 %v211, 96
    %v316 = vpop.permute.xlu0 %315
    %325 = vrot.lane.b32.xlu0 %v169, 64
    %v326 = vpop.permute.xlu0 %325
    %327 = vrot.lane.b32.xlu0 %v175, 64
    %v328 = vpop.permute.xlu0 %327
    %329 = vrot.lane.b32.xlu0 %v181, 64
    %v330 = vpop.permute.xlu0 %329
    %331 = vrot.lane.b32.xlu0 %v187, 64
    %v332 = vpop.permute.xlu0 %331
    %333 = vrot.lane.b32.xlu0 %v193, 64
    %v334 = vpop.permute.xlu0 %333
    %335 = vrot.lane.b32.xlu0 %v199, 64
    %v336 = vpop.permute.xlu0 %335
    %337 = vrot.lane.b32.xlu0 %v205, 64
    %v338 = vpop.permute.xlu0 %337
    %339 = vrot.lane.b32.xlu0 %v211, 64
    %v340 = vpop.permute.xlu0 %339
    %349 = vrot.lane.b32.xlu0 %v169, 32
    %v350 = vpop.permute.xlu0 %349
    %351 = vrot.lane.b32.xlu0 %v175, 32
    %v352 = vpop.permute.xlu0 %351
    %353 = vrot.lane.b32.xlu0 %v181, 32
    %v354 = vpop.permute.xlu0 %353
    %355 = vrot.lane.b32.xlu0 %v187, 32
    %v356 = vpop.permute.xlu0 %355
    %357 = vrot.lane.b32.xlu0 %v193, 32
    %v358 = vpop.permute.xlu0 %357
    %359 = vrot.lane.b32.xlu0 %v199, 32
    %v360 = vpop.permute.xlu0 %359
    %361 = vrot.lane.b32.xlu0 %v205, 32
    %v362 = vpop.permute.xlu0 %361
    %363 = vrot.lane.b32.xlu0 %v211, 32
    %v364 = vpop.permute.xlu0 %363
    %v373 = vld [vmem:[%s3] sm:$0xff]
    %v375 = vcombine.high %v373, %v373
    %v377 = vunpack.c.l.s4 1966171168
    %v378 = vunpack.c.0.s8 %v377
    %v379 = vlaneseq
    %v380 = vshrl.u32 %v379, 7
    %v381 = vsub.s32 %v378, %v380
    %v382 = vrot.slane %v373, %v381
    %v384 = vunpack.c.l.s4 1966171168
    %v385 = vunpack.c.0.s8 %v384
    %v386 = vlaneseq
    %v387 = vshrl.u32 %v386, 7
    %v388 = vsub.s32 %v385, %v387
    %v389 = vrot.slane %v375, %v388
    %v390 = vcombine.high %v382, %v382
    %v391 = vcombine.high %v389, %v389
    %v393 = vunpack.c.l.s4 1966171168
    %v394 = vunpack.c.0.s8 %v393
    %v395 = vlaneseq
    %v396 = vshrl.u32 %v395, 7
    %v397 = vsub.s32 %v394, %v396
    %v398 = vrot.slane %v382, %v397
    %v400 = vunpack.c.l.s4 1966171168
    %v401 = vunpack.c.0.s8 %v400
    %v402 = vlaneseq
    %v403 = vshrl.u32 %v402, 7
    %v404 = vsub.s32 %v401, %v403
    %v405 = vrot.slane %v389, %v404
    %v407 = vunpack.c.l.s4 1966171168
    %v408 = vunpack.c.0.s8 %v407
    %v409 = vlaneseq
    %v410 = vshrl.u32 %v409, 7
    %v411 = vsub.s32 %v408, %v410
    %v412 = vrot.slane %v390, %v411
    %v414 = vunpack.c.l.s4 1966171168
    %v415 = vunpack.c.0.s8 %v414
    %v416 = vlaneseq
    %v417 = vshrl.u32 %v416, 7
    %v418 = vsub.s32 %v415, %v417
    %v419 = vrot.slane %v391, %v418
    %v420 = vcombine.high %v398, %v398
    %v421 = vcombine.high %v405, %v405
    %v422 = vcombine.high %v412, %v412
    %v423 = vcombine.high %v419, %v419
    %v424 = vld [vmem:[%s3 + $0x8] sm:$0xff]
    %v426 = vcombine.high %v424, %v424
    %v428 = vunpack.c.l.s4 1966171168
    %v429 = vunpack.c.0.s8 %v428
    %v430 = vlaneseq
    %v431 = vshrl.u32 %v430, 7
    %v432 = vsub.s32 %v429, %v431
    %v433 = vrot.slane %v424, %v432
    %v435 = vunpack.c.l.s4 1966171168
    %v436 = vunpack.c.0.s8 %v435
    %v437 = vlaneseq
    %v438 = vshrl.u32 %v437, 7
    %v439 = vsub.s32 %v436, %v438
    %v440 = vrot.slane %v426, %v439
    %v441 = vcombine.high %v433, %v433
    %v442 = vcombine.high %v440, %v440
    %v444 = vunpack.c.l.s4 1966171168
    %v445 = vunpack.c.0.s8 %v444
    %v446 = vlaneseq
    %v447 = vshrl.u32 %v446, 7
    %v448 = vsub.s32 %v445, %v447
    %v449 = vrot.slane %v433, %v448
    %v451 = vunpack.c.l.s4 1966171168
    %v452 = vunpack.c.0.s8 %v451
    %v453 = vlaneseq
    %v454 = vshrl.u32 %v453, 7
    %v455 = vsub.s32 %v452, %v454
    %v456 = vrot.slane %v440, %v455
    %v458 = vunpack.c.l.s4 1966171168
    %v459 = vunpack.c.0.s8 %v458
    %v460 = vlaneseq
    %v461 = vshrl.u32 %v460, 7
    %v462 = vsub.s32 %v459, %v461
    %v463 = vrot.slane %v441, %v462
    %v465 = vunpack.c.l.s4 1966171168
    %v466 = vunpack.c.0.s8 %v465
    %v467 = vlaneseq
    %v468 = vshrl.u32 %v467, 7
    %v469 = vsub.s32 %v466, %v468
    %v470 = vrot.slane %v442, %v469
    %v471 = vcombine.high %v449, %v449
    %v472 = vcombine.high %v456, %v456
    %v473 = vcombine.high %v463, %v463
    %v474 = vcombine.high %v470, %v470
    %v475 = vlaneseq
    %v476 = vshrl.u32 %v475, 7
    %v477 = vsub.s32 0, %v476
    %v478 = vrot.slane %v398, %v477
    %v479 = vlaneseq
    %v480 = vshrl.u32 %v479, 7
    %v481 = vsub.s32 0, %v480
    %v482 = vrot.slane %v412, %v481
    %v483 = vlaneseq
    %v484 = vshrl.u32 %v483, 7
    %v485 = vsub.s32 0, %v484
    %v486 = vrot.slane %v420, %v485
    %v487 = vlaneseq
    %v488 = vshrl.u32 %v487, 7
    %v489 = vsub.s32 0, %v488
    %v490 = vrot.slane %v422, %v489
    %v491 = vlaneseq
    %v492 = vshrl.u32 %v491, 7
    %v493 = vsub.s32 0, %v492
    %v494 = vrot.slane %v405, %v493
    %v495 = vlaneseq
    %v496 = vshrl.u32 %v495, 7
    %v497 = vsub.s32 0, %v496
    %v498 = vrot.slane %v419, %v497
    %v499 = vlaneseq
    %v500 = vshrl.u32 %v499, 7
    %v501 = vsub.s32 0, %v500
    %v502 = vrot.slane %v421, %v501
    %v503 = vlaneseq
    %v504 = vshrl.u32 %v503, 7
    %v505 = vsub.s32 0, %v504
    %v506 = vrot.slane %v423, %v505
    %v515 = vmul.f32 %v167, %v478
    %v516 = vmul.f32 %v173, %v478
    %v517 = vmul.f32 %v179, %v478
    %v518 = vmul.f32 %v185, %v478
    %v519 = vmul.f32 %v191, %v478
    %v520 = vmul.f32 %v197, %v478
    %v521 = vmul.f32 %v203, %v478
    %v522 = vmul.f32 %v209, %v478
    %v523 = vmul.f32 %v222, %v482
    %v524 = vmul.f32 %v224, %v482
    %v525 = vmul.f32 %v226, %v482
    %v526 = vmul.f32 %v228, %v482
    %v527 = vmul.f32 %v230, %v482
    %v528 = vmul.f32 %v232, %v482
    %v529 = vmul.f32 %v234, %v482
    %v530 = vmul.f32 %v236, %v482
    %v531 = vmul.f32 %v246, %v486
    %v532 = vmul.f32 %v248, %v486
    %v533 = vmul.f32 %v250, %v486
    %v534 = vmul.f32 %v252, %v486
    %v535 = vmul.f32 %v254, %v486
    %v536 = vmul.f32 %v256, %v486
    %v537 = vmul.f32 %v258, %v486
    %v538 = vmul.f32 %v260, %v486
    %v539 = vmul.f32 %v270, %v490
    %v540 = vmul.f32 %v272, %v490
    %v541 = vmul.f32 %v274, %v490
    %v542 = vmul.f32 %v276, %v490
    %v543 = vmul.f32 %v278, %v490
    %v544 = vmul.f32 %v280, %v490
    %v545 = vmul.f32 %v282, %v490
    %v546 = vmul.f32 %v284, %v490
    %v547 = vmul.f32 %v169, %v494
    %v548 = vmul.f32 %v175, %v494
    %v549 = vmul.f32 %v181, %v494
    %v550 = vmul.f32 %v187, %v494
    %v551 = vmul.f32 %v193, %v494
    %v552 = vmul.f32 %v199, %v494
    %v553 = vmul.f32 %v205, %v494
    %v554 = vmul.f32 %v211, %v494
    %v555 = vmul.f32 %v302, %v498
    %v556 = vmul.f32 %v304, %v498
    %v557 = vmul.f32 %v306, %v498
    %v558 = vmul.f32 %v308, %v498
    %v559 = vmul.f32 %v310, %v498
    %v560 = vmul.f32 %v312, %v498
    %v561 = vmul.f32 %v314, %v498
    %v562 = vmul.f32 %v316, %v498
    %v563 = vmul.f32 %v326, %v502
    %v564 = vmul.f32 %v328, %v502
    %v565 = vmul.f32 %v330, %v502
    %v566 = vmul.f32 %v332, %v502
    %v567 = vmul.f32 %v334, %v502
    %v568 = vmul.f32 %v336, %v502
    %v569 = vmul.f32 %v338, %v502
    %v570 = vmul.f32 %v340, %v502
    %v571 = vmul.f32 %v350, %v506
    %v572 = vmul.f32 %v352, %v506
    %v573 = vmul.f32 %v354, %v506
    %v574 = vmul.f32 %v356, %v506
    %v575 = vmul.f32 %v358, %v506
    %v576 = vmul.f32 %v360, %v506
    %v577 = vmul.f32 %v362, %v506
    %v578 = vmul.f32 %v364, %v506
    %vm579 = vcmask 261120
    %v580 = vsel %vm579, %v515, 0.0
    %581 = vadd.xlane.f32.xlu0 %v580
    %v582 = vpop.xlane.xlu0 %581
    %v583 = vsel %vm579, %v516, 0.0
    %584 = vadd.xlane.f32.xlu0 %v583
    %v585 = vpop.xlane.xlu0 %584
    %v586 = vsel %vm579, %v517, 0.0
    %587 = vadd.xlane.f32.xlu0 %v586
    %v588 = vpop.xlane.xlu0 %587
    %v589 = vsel %vm579, %v518, 0.0
    %590 = vadd.xlane.f32.xlu0 %v589
    %v591 = vpop.xlane.xlu0 %590
    %v592 = vsel %vm579, %v519, 0.0
    %593 = vadd.xlane.f32.xlu0 %v592
    %v594 = vpop.xlane.xlu0 %593
    %v595 = vsel %vm579, %v520, 0.0
    %596 = vadd.xlane.f32.xlu0 %v595
    %v597 = vpop.xlane.xlu0 %596
    %v598 = vsel %vm579, %v521, 0.0
    %599 = vadd.xlane.f32.xlu0 %v598
    %v600 = vpop.xlane.xlu0 %599
    %v601 = vsel %vm579, %v522, 0.0
    %602 = vadd.xlane.f32.xlu0 %v601
    %v603 = vpop.xlane.xlu0 %602
    %v604 = vsel %vm579, %v523, 0.0
    %605 = vadd.xlane.f32.xlu0 %v604
    %v606 = vpop.xlane.xlu0 %605
    %v607 = vsel %vm579, %v524, 0.0
    %608 = vadd.xlane.f32.xlu0 %v607
    %v609 = vpop.xlane.xlu0 %608
    %v610 = vsel %vm579, %v525, 0.0
    %611 = vadd.xlane.f32.xlu0 %v610
    %v612 = vpop.xlane.xlu0 %611
    %v613 = vsel %vm579, %v526, 0.0
    %614 = vadd.xlane.f32.xlu0 %v613
    %v615 = vpop.xlane.xlu0 %614
    %v616 = vsel %vm579, %v527, 0.0
    %617 = vadd.xlane.f32.xlu0 %v616
    %v618 = vpop.xlane.xlu0 %617
    %v619 = vsel %vm579, %v528, 0.0
    %620 = vadd.xlane.f32.xlu0 %v619
    %v621 = vpop.xlane.xlu0 %620
    %v622 = vsel %vm579, %v529, 0.0
    %623 = vadd.xlane.f32.xlu0 %v622
    %v624 = vpop.xlane.xlu0 %623
    %v625 = vsel %vm579, %v530, 0.0
    %626 = vadd.xlane.f32.xlu0 %v625
    %v627 = vpop.xlane.xlu0 %626
    %v628 = vsel %vm579, %v531, 0.0
    %629 = vadd.xlane.f32.xlu0 %v628
    %v630 = vpop.xlane.xlu0 %629
    %v631 = vsel %vm579, %v532, 0.0
    %632 = vadd.xlane.f32.xlu0 %v631
    %v633 = vpop.xlane.xlu0 %632
    %v634 = vsel %vm579, %v533, 0.0
    %635 = vadd.xlane.f32.xlu0 %v634
    %v636 = vpop.xlane.xlu0 %635
    %v637 = vsel %vm579, %v534, 0.0
    %638 = vadd.xlane.f32.xlu0 %v637
    %v639 = vpop.xlane.xlu0 %638
    %v640 = vsel %vm579, %v535, 0.0
    %641 = vadd.xlane.f32.xlu0 %v640
    %v642 = vpop.xlane.xlu0 %641
    %v643 = vsel %vm579, %v536, 0.0
    %644 = vadd.xlane.f32.xlu0 %v643
    %v645 = vpop.xlane.xlu0 %644
    %v646 = vsel %vm579, %v537, 0.0
    %647 = vadd.xlane.f32.xlu0 %v646
    %v648 = vpop.xlane.xlu0 %647
    %v649 = vsel %vm579, %v538, 0.0
    %650 = vadd.xlane.f32.xlu0 %v649
    %v651 = vpop.xlane.xlu0 %650
    %v652 = vsel %vm579, %v539, 0.0
    %653 = vadd.xlane.f32.xlu0 %v652
    %v654 = vpop.xlane.xlu0 %653
    %v655 = vsel %vm579, %v540, 0.0
    %656 = vadd.xlane.f32.xlu0 %v655
    %v657 = vpop.xlane.xlu0 %656
    %v658 = vsel %vm579, %v541, 0.0
    %659 = vadd.xlane.f32.xlu0 %v658
    %v660 = vpop.xlane.xlu0 %659
    %v661 = vsel %vm579, %v542, 0.0
    %662 = vadd.xlane.f32.xlu0 %v661
    %v663 = vpop.xlane.xlu0 %662
    %v664 = vsel %vm579, %v543, 0.0
    %665 = vadd.xlane.f32.xlu0 %v664
    %v666 = vpop.xlane.xlu0 %665
    %v667 = vsel %vm579, %v544, 0.0
    %668 = vadd.xlane.f32.xlu0 %v667
    %v669 = vpop.xlane.xlu0 %668
    %v670 = vsel %vm579, %v545, 0.0
    %671 = vadd.xlane.f32.xlu0 %v670
    %v672 = vpop.xlane.xlu0 %671
    %v673 = vsel %vm579, %v546, 0.0
    %674 = vadd.xlane.f32.xlu0 %v673
    %v675 = vpop.xlane.xlu0 %674
    %v676 = vsel %vm579, %v547, 0.0
    %677 = vadd.xlane.f32.xlu0 %v676
    %v678 = vpop.xlane.xlu0 %677
    %v679 = vsel %vm579, %v548, 0.0
    %680 = vadd.xlane.f32.xlu0 %v679
    %v681 = vpop.xlane.xlu0 %680
    %v682 = vsel %vm579, %v549, 0.0
    %683 = vadd.xlane.f32.xlu0 %v682
    %v684 = vpop.xlane.xlu0 %683
    %v685 = vsel %vm579, %v550, 0.0
    %686 = vadd.xlane.f32.xlu0 %v685
    %v687 = vpop.xlane.xlu0 %686
    %v688 = vsel %vm579, %v551, 0.0
    %689 = vadd.xlane.f32.xlu0 %v688
    %v690 = vpop.xlane.xlu0 %689
    %v691 = vsel %vm579, %v552, 0.0
    %692 = vadd.xlane.f32.xlu0 %v691
    %v693 = vpop.xlane.xlu0 %692
    %v694 = vsel %vm579, %v553, 0.0
    %695 = vadd.xlane.f32.xlu0 %v694
    %v696 = vpop.xlane.xlu0 %695
    %v697 = vsel %vm579, %v554, 0.0
    %698 = vadd.xlane.f32.xlu0 %v697
    %v699 = vpop.xlane.xlu0 %698
    %v700 = vsel %vm579, %v555, 0.0
    %701 = vadd.xlane.f32.xlu0 %v700
    %v702 = vpop.xlane.xlu0 %701
    %v703 = vsel %vm579, %v556, 0.0
    %704 = vadd.xlane.f32.xlu0 %v703
    %v705 = vpop.xlane.xlu0 %704
    %v706 = vsel %vm579, %v557, 0.0
    %707 = vadd.xlane.f32.xlu0 %v706
    %v708 = vpop.xlane.xlu0 %707
    %v709 = vsel %vm579, %v558, 0.0
    %710 = vadd.xlane.f32.xlu0 %v709
    %v711 = vpop.xlane.xlu0 %710
    %v712 = vsel %vm579, %v559, 0.0
    %713 = vadd.xlane.f32.xlu0 %v712
    %v714 = vpop.xlane.xlu0 %713
    %v715 = vsel %vm579, %v560, 0.0
    %716 = vadd.xlane.f32.xlu0 %v715
    %v717 = vpop.xlane.xlu0 %716
    %v718 = vsel %vm579, %v561, 0.0
    %719 = vadd.xlane.f32.xlu0 %v718
    %v720 = vpop.xlane.xlu0 %719
    %v721 = vsel %vm579, %v562, 0.0
    %722 = vadd.xlane.f32.xlu0 %v721
    %v723 = vpop.xlane.xlu0 %722
    %v724 = vsel %vm579, %v563, 0.0
    %725 = vadd.xlane.f32.xlu0 %v724
    %v726 = vpop.xlane.xlu0 %725
    %v727 = vsel %vm579, %v564, 0.0
    %728 = vadd.xlane.f32.xlu0 %v727
    %v729 = vpop.xlane.xlu0 %728
    %v730 = vsel %vm579, %v565, 0.0
    %731 = vadd.xlane.f32.xlu0 %v730
    %v732 = vpop.xlane.xlu0 %731
    %v733 = vsel %vm579, %v566, 0.0
    %734 = vadd.xlane.f32.xlu0 %v733
    %v735 = vpop.xlane.xlu0 %734
    %v736 = vsel %vm579, %v567, 0.0
    %737 = vadd.xlane.f32.xlu0 %v736
    %v738 = vpop.xlane.xlu0 %737
    %v739 = vsel %vm579, %v568, 0.0
    %740 = vadd.xlane.f32.xlu0 %v739
    %v741 = vpop.xlane.xlu0 %740
    %v742 = vsel %vm579, %v569, 0.0
    %743 = vadd.xlane.f32.xlu0 %v742
    %v744 = vpop.xlane.xlu0 %743
    %v745 = vsel %vm579, %v570, 0.0
    %746 = vadd.xlane.f32.xlu0 %v745
    %v747 = vpop.xlane.xlu0 %746
    %v748 = vsel %vm579, %v571, 0.0
    %749 = vadd.xlane.f32.xlu0 %v748
    %v750 = vpop.xlane.xlu0 %749
    %v751 = vsel %vm579, %v572, 0.0
    %752 = vadd.xlane.f32.xlu0 %v751
    %v753 = vpop.xlane.xlu0 %752
    %v754 = vsel %vm579, %v573, 0.0
    %755 = vadd.xlane.f32.xlu0 %v754
    %v756 = vpop.xlane.xlu0 %755
    %v757 = vsel %vm579, %v574, 0.0
    %758 = vadd.xlane.f32.xlu0 %v757
    %v759 = vpop.xlane.xlu0 %758
    %v760 = vsel %vm579, %v575, 0.0
    %761 = vadd.xlane.f32.xlu0 %v760
    %v762 = vpop.xlane.xlu0 %761
    %v763 = vsel %vm579, %v576, 0.0
    %764 = vadd.xlane.f32.xlu0 %v763
    %v765 = vpop.xlane.xlu0 %764
    %v766 = vsel %vm579, %v577, 0.0
    %767 = vadd.xlane.f32.xlu0 %v766
    %v768 = vpop.xlane.xlu0 %767
    %v769 = vsel %vm579, %v578, 0.0
    %770 = vadd.xlane.f32.xlu0 %v769
    %v771 = vpop.xlane.xlu0 %770
    %v772 = vsel %vm579, %v449, 0
    %v774 = vsel %vm579, %v167, 0
    %v776 = vsel %vm579, %v173, 0
    %v778 = vsel %vm579, %v179, 0
    %v780 = vsel %vm579, %v185, 0
    %v782 = vsel %vm579, %v191, 0
    %v784 = vsel %vm579, %v197, 0
    %v786 = vsel %vm579, %v203, 0
    %v788 = vsel %vm579, %v209, 0
    %790 = vmatprep.subr.mxu0 0.0
    %791 = vmatpush1.xpose.msra.mxu0 0.0
    %792 = vmatprep.subr.mxu0 0.0
    %793 = vmatpush1.xpose.msra.mxu0 0.0
    %794 = vmatprep.subr.mxu0 0.0
    %795 = vmatpush1.xpose.msra.mxu0 0.0
    %796 = vmatprep.subr.mxu0 0.0
    %797 = vmatpush1.xpose.msra.mxu0 0.0
    %798 = vmatprep.subr.mxu0 0.0
    %799 = vmatpush1.xpose.msra.mxu0 0.0
    %800 = vmatprep.subr.mxu0 0.0
    %801 = vmatpush1.xpose.msra.mxu0 0.0
    %802 = vmatprep.subr.mxu0 0.0
    %803 = vmatpush1.xpose.msra.mxu0 0.0
    %804 = vmatprep.subr.mxu0 0.0
    %805 = vmatpush1.xpose.msra.mxu0 0.0
    %806 = vmatprep.subr.mxu0 0.0
    %807 = vmatpush1.xpose.msra.mxu0 %v788
    %808 = vmatprep.subr.mxu0 0.0
    %809 = vmatpush1.xpose.msra.mxu0 %v786
    %810 = vmatprep.subr.mxu0 0.0
    %811 = vmatpush1.xpose.msra.mxu0 %v784
    %812 = vmatprep.subr.mxu0 0.0
    %813 = vmatpush1.xpose.msra.mxu0 %v782
    %814 = vmatprep.subr.mxu0 0.0
    %815 = vmatpush1.xpose.msra.mxu0 %v780
    %816 = vmatprep.subr.mxu0 0.0
    %817 = vmatpush1.xpose.msra.mxu0 %v778
    %818 = vmatprep.subr.mxu0 0.0
    %819 = vmatpush1.xpose.msra.mxu0 %v776
    %820 = vmatprep.subr.mxu0 0.0
    %821 = vmatpush1.xpose.msra.mxu0 %v774
    %822 = vmatprep.subr.mxu0 0.0
    %823 = vmatpush2.xpose.msra.mxu0 0.0
    %824 = vmatprep.subr.mxu0 0.0
    %825 = vmatpush2.xpose.msra.mxu0 0.0
    %826 = vmatprep.subr.mxu0 0.0
    %827 = vmatpush2.xpose.msra.mxu0 0.0
    %828 = vmatprep.subr.mxu0 0.0
    %829 = vmatpush2.xpose.msra.mxu0 0.0
    %830 = vmatprep.subr.mxu0 0.0
    %831 = vmatpush2.xpose.msra.mxu0 0.0
    %832 = vmatprep.subr.mxu0 0.0
    %833 = vmatpush2.xpose.msra.mxu0 0.0
    %834 = vmatprep.subr.mxu0 0.0
    %835 = vmatpush2.xpose.msra.mxu0 0.0
    %836 = vmatprep.subr.mxu0 0.0
    %837 = vmatpush2.xpose.msra.mxu0 0.0
    %838 = vmatprep.subr.mxu0 0.0
    %839 = vmatpush2.xpose.msra.mxu0 0.0
    %840 = vmatprep.subr.mxu0 0.0
    %841 = vmatpush2.xpose.msra.mxu0 0.0
    %842 = vmatprep.subr.mxu0 0.0
    %843 = vmatpush2.xpose.msra.mxu0 0.0
    %844 = vmatprep.subr.mxu0 0.0
    %845 = vmatpush2.xpose.msra.mxu0 0.0
    %846 = vmatprep.subr.mxu0 0.0
    %847 = vmatpush2.xpose.msra.mxu0 0.0
    %848 = vmatprep.subr.mxu0 0.0
    %849 = vmatpush2.xpose.msra.mxu0 0.0
    %850 = vmatprep.subr.mxu0 0.0
    %851 = vmatpush2.xpose.msra.mxu0 0.0
    %852 = vmatprep.subr.mxu0 0.0
    %853 = vmatpush2.xpose.msra.mxu0 0.0
    %854 = vmatprep.mubr.f32.mxu0 0.0
    %855 = vmatmul.mubr.f32.gmra.mxu0 %v772
    %v856 = vpop.f32.mrf.mxu0
    %v857 = vadd.f32 0.0, %v856
    %v858 = vpop.f32.mrf.mxu0
    %859 = vdwg.mxu0
    %v860 = vsel %vm579, %v463, 0
    %v862 = vsel %vm579, %v222, 0
    %v864 = vsel %vm579, %v224, 0
    %v866 = vsel %vm579, %v226, 0
    %v868 = vsel %vm579, %v228, 0
    %v870 = vsel %vm579, %v230, 0
    %v872 = vsel %vm579, %v232, 0
    %v874 = vsel %vm579, %v234, 0
    %v876 = vsel %vm579, %v236, 0
    %878 = vmatprep.subr.mxu0 0.0
    %879 = vmatpush1.xpose.msra.mxu0 0.0
    %880 = vmatprep.subr.mxu0 0.0
    %881 = vmatpush1.xpose.msra.mxu0 0.0
    %882 = vmatprep.subr.mxu0 0.0
    %883 = vmatpush1.xpose.msra.mxu0 0.0
    %884 = vmatprep.subr.mxu0 0.0
    %885 = vmatpush1.xpose.msra.mxu0 0.0
    %886 = vmatprep.subr.mxu0 0.0
    %887 = vmatpush1.xpose.msra.mxu0 0.0
    %888 = vmatprep.subr.mxu0 0.0
    %889 = vmatpush1.xpose.msra.mxu0 0.0
    %890 = vmatprep.subr.mxu0 0.0
    %891 = vmatpush1.xpose.msra.mxu0 0.0
    %892 = vmatprep.subr.mxu0 0.0
    %893 = vmatpush1.xpose.msra.mxu0 0.0
    %894 = vmatprep.subr.mxu0 0.0
    %895 = vmatpush1.xpose.msra.mxu0 %v876
    %896 = vmatprep.subr.mxu0 0.0
    %897 = vmatpush1.xpose.msra.mxu0 %v874
    %898 = vmatprep.subr.mxu0 0.0
    %899 = vmatpush1.xpose.msra.mxu0 %v872
    %900 = vmatprep.subr.mxu0 0.0
    %901 = vmatpush1.xpose.msra.mxu0 %v870
    %902 = vmatprep.subr.mxu0 0.0
    %903 = vmatpush1.xpose.msra.mxu0 %v868
    %904 = vmatprep.subr.mxu0 0.0
    %905 = vmatpush1.xpose.msra.mxu0 %v866
    %906 = vmatprep.subr.mxu0 0.0
    %907 = vmatpush1.xpose.msra.mxu0 %v864
    %908 = vmatprep.subr.mxu0 0.0
    %909 = vmatpush1.xpose.msra.mxu0 %v862
    %910 = vmatprep.subr.mxu0 0.0
    %911 = vmatpush2.xpose.msra.mxu0 0.0
    %912 = vmatprep.subr.mxu0 0.0
    %913 = vmatpush2.xpose.msra.mxu0 0.0
    %914 = vmatprep.subr.mxu0 0.0
    %915 = vmatpush2.xpose.msra.mxu0 0.0
    %916 = vmatprep.subr.mxu0 0.0
    %917 = vmatpush2.xpose.msra.mxu0 0.0
    %918 = vmatprep.subr.mxu0 0.0
    %919 = vmatpush2.xpose.msra.mxu0 0.0
    %920 = vmatprep.subr.mxu0 0.0
    %921 = vmatpush2.xpose.msra.mxu0 0.0
    %922 = vmatprep.subr.mxu0 0.0
    %923 = vmatpush2.xpose.msra.mxu0 0.0
    %924 = vmatprep.subr.mxu0 0.0
    %925 = vmatpush2.xpose.msra.mxu0 0.0
    %926 = vmatprep.subr.mxu0 0.0
    %927 = vmatpush2.xpose.msra.mxu0 0.0
    %928 = vmatprep.subr.mxu0 0.0
    %929 = vmatpush2.xpose.msra.mxu0 0.0
    %930 = vmatprep.subr.mxu0 0.0
    %931 = vmatpush2.xpose.msra.mxu0 0.0
    %932 = vmatprep.subr.mxu0 0.0
    %933 = vmatpush2.xpose.msra.mxu0 0.0
    %934 = vmatprep.subr.mxu0 0.0
    %935 = vmatpush2.xpose.msra.mxu0 0.0
    %936 = vmatprep.subr.mxu0 0.0
    %937 = vmatpush2.xpose.msra.mxu0 0.0
    %938 = vmatprep.subr.mxu0 0.0
    %939 = vmatpush2.xpose.msra.mxu0 0.0
    %940 = vmatprep.subr.mxu0 0.0
    %941 = vmatpush2.xpose.msra.mxu0 0.0
    %942 = vmatprep.mubr.f32.mxu0 0.0
    %943 = vmatmul.mubr.f32.gmra.mxu0 %v860
    %v944 = vpop.f32.mrf.mxu0
    %v945 = vadd.f32 0.0, %v944
    %v946 = vpop.f32.mrf.mxu0
    %947 = vdwg.mxu0
    %v948 = vsel %vm579, %v471, 0
    %v950 = vsel %vm579, %v246, 0
    %v952 = vsel %vm579, %v248, 0
    %v954 = vsel %vm579, %v250, 0
    %v956 = vsel %vm579, %v252, 0
    %v958 = vsel %vm579, %v254, 0
    %v960 = vsel %vm579, %v256, 0
    %v962 = vsel %vm579, %v258, 0
    %v964 = vsel %vm579, %v260, 0
    %966 = vmatprep.subr.mxu0 0.0
    %967 = vmatpush1.xpose.msra.mxu0 0.0
    %968 = vmatprep.subr.mxu0 0.0
    %969 = vmatpush1.xpose.msra.mxu0 0.0
    %970 = vmatprep.subr.mxu0 0.0
    %971 = vmatpush1.xpose.msra.mxu0 0.0
    %972 = vmatprep.subr.mxu0 0.0
    %973 = vmatpush1.xpose.msra.mxu0 0.0
    %974 = vmatprep.subr.mxu0 0.0
    %975 = vmatpush1.xpose.msra.mxu0 0.0
    %976 = vmatprep.subr.mxu0 0.0
    %977 = vmatpush1.xpose.msra.mxu0 0.0
    %978 = vmatprep.subr.mxu0 0.0
    %979 = vmatpush1.xpose.msra.mxu0 0.0
    %980 = vmatprep.subr.mxu0 0.0
    %981 = vmatpush1.xpose.msra.mxu0 0.0
    %982 = vmatprep.subr.mxu0 0.0
    %983 = vmatpush1.xpose.msra.mxu0 %v964
    %984 = vmatprep.subr.mxu0 0.0
    %985 = vmatpush1.xpose.msra.mxu0 %v962
    %986 = vmatprep.subr.mxu0 0.0
    %987 = vmatpush1.xpose.msra.mxu0 %v960
    %988 = vmatprep.subr.mxu0 0.0
    %989 = vmatpush1.xpose.msra.mxu0 %v958
    %990 = vmatprep.subr.mxu0 0.0
    %991 = vmatpush1.xpose.msra.mxu0 %v956
    %992 = vmatprep.subr.mxu0 0.0
    %993 = vmatpush1.xpose.msra.mxu0 %v954
    %994 = vmatprep.subr.mxu0 0.0
    %995 = vmatpush1.xpose.msra.mxu0 %v952
    %996 = vmatprep.subr.mxu0 0.0
    %997 = vmatpush1.xpose.msra.mxu0 %v950
    %998 = vmatprep.subr.mxu0 0.0
    %999 = vmatpush2.xpose.msra.mxu0 0.0
    %1000 = vmatprep.subr.mxu0 0.0
    %1001 = vmatpush2.xpose.msra.mxu0 0.0
    %1002 = vmatprep.subr.mxu0 0.0
    %1003 = vmatpush2.xpose.msra.mxu0 0.0
    %1004 = vmatprep.subr.mxu0 0.0
    %1005 = vmatpush2.xpose.msra.mxu0 0.0
    %1006 = vmatprep.subr.mxu0 0.0
    %1007 = vmatpush2.xpose.msra.mxu0 0.0
    %1008 = vmatprep.subr.mxu0 0.0
    %1009 = vmatpush2.xpose.msra.mxu0 0.0
    %1010 = vmatprep.subr.mxu0 0.0
    %1011 = vmatpush2.xpose.msra.mxu0 0.0
    %1012 = vmatprep.subr.mxu0 0.0
    %1013 = vmatpush2.xpose.msra.mxu0 0.0
    %1014 = vmatprep.subr.mxu0 0.0
    %1015 = vmatpush2.xpose.msra.mxu0 0.0
    %1016 = vmatprep.subr.mxu0 0.0
    %1017 = vmatpush2.xpose.msra.mxu0 0.0
    %1018 = vmatprep.subr.mxu0 0.0
    %1019 = vmatpush2.xpose.msra.mxu0 0.0
    %1020 = vmatprep.subr.mxu0 0.0
    %1021 = vmatpush2.xpose.msra.mxu0 0.0
    %1022 = vmatprep.subr.mxu0 0.0
    %1023 = vmatpush2.xpose.msra.mxu0 0.0
    %1024 = vmatprep.subr.mxu0 0.0
    %1025 = vmatpush2.xpose.msra.mxu0 0.0
    %1026 = vmatprep.subr.mxu0 0.0
    %1027 = vmatpush2.xpose.msra.mxu0 0.0
    %1028 = vmatprep.subr.mxu0 0.0
    %1029 = vmatpush2.xpose.msra.mxu0 0.0
    %1030 = vmatprep.mubr.f32.mxu0 0.0
    %1031 = vmatmul.mubr.f32.gmra.mxu0 %v948
    %v1032 = vpop.f32.mrf.mxu0
    %v1033 = vadd.f32 0.0, %v1032
    %v1034 = vpop.f32.mrf.mxu0
    %1035 = vdwg.mxu0
    %v1036 = vsel %vm579, %v473, 0
    %v1038 = vsel %vm579, %v270, 0
    %v1040 = vsel %vm579, %v272, 0
    %v1042 = vsel %vm579, %v274, 0
    %v1044 = vsel %vm579, %v276, 0
    %v1046 = vsel %vm579, %v278, 0
    %v1048 = vsel %vm579, %v280, 0
    %v1050 = vsel %vm579, %v282, 0
    %v1052 = vsel %vm579, %v284, 0
    %1054 = vmatprep.subr.mxu0 0.0
    %1055 = vmatpush1.xpose.msra.mxu0 0.0
    %1056 = vmatprep.subr.mxu0 0.0
    %1057 = vmatpush1.xpose.msra.mxu0 0.0
    %1058 = vmatprep.subr.mxu0 0.0
    %1059 = vmatpush1.xpose.msra.mxu0 0.0
    %1060 = vmatprep.subr.mxu0 0.0
    %1061 = vmatpush1.xpose.msra.mxu0 0.0
    %1062 = vmatprep.subr.mxu0 0.0
    %1063 = vmatpush1.xpose.msra.mxu0 0.0
    %1064 = vmatprep.subr.mxu0 0.0
    %1065 = vmatpush1.xpose.msra.mxu0 0.0
    %1066 = vmatprep.subr.mxu0 0.0
    %1067 = vmatpush1.xpose.msra.mxu0 0.0
    %1068 = vmatprep.subr.mxu0 0.0
    %1069 = vmatpush1.xpose.msra.mxu0 0.0
    %1070 = vmatprep.subr.mxu0 0.0
    %1071 = vmatpush1.xpose.msra.mxu0 %v1052
    %1072 = vmatprep.subr.mxu0 0.0
    %1073 = vmatpush1.xpose.msra.mxu0 %v1050
    %1074 = vmatprep.subr.mxu0 0.0
    %1075 = vmatpush1.xpose.msra.mxu0 %v1048
    %1076 = vmatprep.subr.mxu0 0.0
    %1077 = vmatpush1.xpose.msra.mxu0 %v1046
    %1078 = vmatprep.subr.mxu0 0.0
    %1079 = vmatpush1.xpose.msra.mxu0 %v1044
    %1080 = vmatprep.subr.mxu0 0.0
    %1081 = vmatpush1.xpose.msra.mxu0 %v1042
    %1082 = vmatprep.subr.mxu0 0.0
    %1083 = vmatpush1.xpose.msra.mxu0 %v1040
    %1084 = vmatprep.subr.mxu0 0.0
    %1085 = vmatpush1.xpose.msra.mxu0 %v1038
    %1086 = vmatprep.subr.mxu0 0.0
    %1087 = vmatpush2.xpose.msra.mxu0 0.0
    %1088 = vmatprep.subr.mxu0 0.0
    %1089 = vmatpush2.xpose.msra.mxu0 0.0
    %1090 = vmatprep.subr.mxu0 0.0
    %1091 = vmatpush2.xpose.msra.mxu0 0.0
    %1092 = vmatprep.subr.mxu0 0.0
    %1093 = vmatpush2.xpose.msra.mxu0 0.0
    %1094 = vmatprep.subr.mxu0 0.0
    %1095 = vmatpush2.xpose.msra.mxu0 0.0
    %1096 = vmatprep.subr.mxu0 0.0
    %1097 = vmatpush2.xpose.msra.mxu0 0.0
    %1098 = vmatprep.subr.mxu0 0.0
    %1099 = vmatpush2.xpose.msra.mxu0 0.0
    %1100 = vmatprep.subr.mxu0 0.0
    %1101 = vmatpush2.xpose.msra.mxu0 0.0
    %1102 = vmatprep.subr.mxu0 0.0
    %1103 = vmatpush2.xpose.msra.mxu0 0.0
    %1104 = vmatprep.subr.mxu0 0.0
    %1105 = vmatpush2.xpose.msra.mxu0 0.0
    %1106 = vmatprep.subr.mxu0 0.0
    %1107 = vmatpush2.xpose.msra.mxu0 0.0
    %1108 = vmatprep.subr.mxu0 0.0
    %1109 = vmatpush2.xpose.msra.mxu0 0.0
    %1110 = vmatprep.subr.mxu0 0.0
    %1111 = vmatpush2.xpose.msra.mxu0 0.0
    %1112 = vmatprep.subr.mxu0 0.0
    %1113 = vmatpush2.xpose.msra.mxu0 0.0
    %1114 = vmatprep.subr.mxu0 0.0
    %1115 = vmatpush2.xpose.msra.mxu0 0.0
    %1116 = vmatprep.subr.mxu0 0.0
    %1117 = vmatpush2.xpose.msra.mxu0 0.0
    %1118 = vmatprep.mubr.f32.mxu0 0.0
    %1119 = vmatmul.mubr.f32.gmra.mxu0 %v1036
    %v1120 = vpop.f32.mrf.mxu0
    %v1121 = vadd.f32 0.0, %v1120
    %v1122 = vpop.f32.mrf.mxu0
    %1123 = vdwg.mxu0
    %v1124 = vsel %vm579, %v456, 0
    %v1126 = vsel %vm579, %v169, 0
    %v1128 = vsel %vm579, %v175, 0
    %v1130 = vsel %vm579, %v181, 0
    %v1132 = vsel %vm579, %v187, 0
    %v1134 = vsel %vm579, %v193, 0
    %v1136 = vsel %vm579, %v199, 0
    %v1138 = vsel %vm579, %v205, 0
    %v1140 = vsel %vm579, %v211, 0
    %1142 = vmatprep.subr.mxu0 0.0
    %1143 = vmatpush1.xpose.msra.mxu0 0.0
    %1144 = vmatprep.subr.mxu0 0.0
    %1145 = vmatpush1.xpose.msra.mxu0 0.0
    %1146 = vmatprep.subr.mxu0 0.0
    %1147 = vmatpush1.xpose.msra.mxu0 0.0
    %1148 = vmatprep.subr.mxu0 0.0
    %1149 = vmatpush1.xpose.msra.mxu0 0.0
    %1150 = vmatprep.subr.mxu0 0.0
    %1151 = vmatpush1.xpose.msra.mxu0 0.0
    %1152 = vmatprep.subr.mxu0 0.0
    %1153 = vmatpush1.xpose.msra.mxu0 0.0
    %1154 = vmatprep.subr.mxu0 0.0
    %1155 = vmatpush1.xpose.msra.mxu0 0.0
    %1156 = vmatprep.subr.mxu0 0.0
    %1157 = vmatpush1.xpose.msra.mxu0 0.0
    %1158 = vmatprep.subr.mxu0 0.0
    %1159 = vmatpush1.xpose.msra.mxu0 %v1140
    %1160 = vmatprep.subr.mxu0 0.0
    %1161 = vmatpush1.xpose.msra.mxu0 %v1138
    %1162 = vmatprep.subr.mxu0 0.0
    %1163 = vmatpush1.xpose.msra.mxu0 %v1136
    %1164 = vmatprep.subr.mxu0 0.0
    %1165 = vmatpush1.xpose.msra.mxu0 %v1134
    %1166 = vmatprep.subr.mxu0 0.0
    %1167 = vmatpush1.xpose.msra.mxu0 %v1132
    %1168 = vmatprep.subr.mxu0 0.0
    %1169 = vmatpush1.xpose.msra.mxu0 %v1130
    %1170 = vmatprep.subr.mxu0 0.0
    %1171 = vmatpush1.xpose.msra.mxu0 %v1128
    %1172 = vmatprep.subr.mxu0 0.0
    %1173 = vmatpush1.xpose.msra.mxu0 %v1126
    %1174 = vmatprep.subr.mxu0 0.0
    %1175 = vmatpush2.xpose.msra.mxu0 0.0
    %1176 = vmatprep.subr.mxu0 0.0
    %1177 = vmatpush2.xpose.msra.mxu0 0.0
    %1178 = vmatprep.subr.mxu0 0.0
    %1179 = vmatpush2.xpose.msra.mxu0 0.0
    %1180 = vmatprep.subr.mxu0 0.0
    %1181 = vmatpush2.xpose.msra.mxu0 0.0
    %1182 = vmatprep.subr.mxu0 0.0
    %1183 = vmatpush2.xpose.msra.mxu0 0.0
    %1184 = vmatprep.subr.mxu0 0.0
    %1185 = vmatpush2.xpose.msra.mxu0 0.0
    %1186 = vmatprep.subr.mxu0 0.0
    %1187 = vmatpush2.xpose.msra.mxu0 0.0
    %1188 = vmatprep.subr.mxu0 0.0
    %1189 = vmatpush2.xpose.msra.mxu0 0.0
    %1190 = vmatprep.subr.mxu0 0.0
    %1191 = vmatpush2.xpose.msra.mxu0 0.0
    %1192 = vmatprep.subr.mxu0 0.0
    %1193 = vmatpush2.xpose.msra.mxu0 0.0
    %1194 = vmatprep.subr.mxu0 0.0
    %1195 = vmatpush2.xpose.msra.mxu0 0.0
    %1196 = vmatprep.subr.mxu0 0.0
    %1197 = vmatpush2.xpose.msra.mxu0 0.0
    %1198 = vmatprep.subr.mxu0 0.0
    %1199 = vmatpush2.xpose.msra.mxu0 0.0
    %1200 = vmatprep.subr.mxu0 0.0
    %1201 = vmatpush2.xpose.msra.mxu0 0.0
    %1202 = vmatprep.subr.mxu0 0.0
    %1203 = vmatpush2.xpose.msra.mxu0 0.0
    %1204 = vmatprep.subr.mxu0 0.0
    %1205 = vmatpush2.xpose.msra.mxu0 0.0
    %1206 = vmatprep.mubr.f32.mxu0 0.0
    %1207 = vmatmul.mubr.f32.gmra.mxu0 %v1124
    %v1208 = vpop.f32.mrf.mxu0
    %v1209 = vadd.f32 0.0, %v1208
    %v1210 = vpop.f32.mrf.mxu0
    %1211 = vdwg.mxu0
    %v1212 = vsel %vm579, %v470, 0
    %v1214 = vsel %vm579, %v302, 0
    %v1216 = vsel %vm579, %v304, 0
    %v1218 = vsel %vm579, %v306, 0
    %v1220 = vsel %vm579, %v308, 0
    %v1222 = vsel %vm579, %v310, 0
    %v1224 = vsel %vm579, %v312, 0
    %v1226 = vsel %vm579, %v314, 0
    %v1228 = vsel %vm579, %v316, 0
    %1230 = vmatprep.subr.mxu0 0.0
    %1231 = vmatpush1.xpose.msra.mxu0 0.0
    %1232 = vmatprep.subr.mxu0 0.0
    %1233 = vmatpush1.xpose.msra.mxu0 0.0
    %1234 = vmatprep.subr.mxu0 0.0
    %1235 = vmatpush1.xpose.msra.mxu0 0.0
    %1236 = vmatprep.subr.mxu0 0.0
    %1237 = vmatpush1.xpose.msra.mxu0 0.0
    %1238 = vmatprep.subr.mxu0 0.0
    %1239 = vmatpush1.xpose.msra.mxu0 0.0
    %1240 = vmatprep.subr.mxu0 0.0
    %1241 = vmatpush1.xpose.msra.mxu0 0.0
    %1242 = vmatprep.subr.mxu0 0.0
    %1243 = vmatpush1.xpose.msra.mxu0 0.0
    %1244 = vmatprep.subr.mxu0 0.0
    %1245 = vmatpush1.xpose.msra.mxu0 0.0
    %1246 = vmatprep.subr.mxu0 0.0
    %1247 = vmatpush1.xpose.msra.mxu0 %v1228
    %1248 = vmatprep.subr.mxu0 0.0
    %1249 = vmatpush1.xpose.msra.mxu0 %v1226
    %1250 = vmatprep.subr.mxu0 0.0
    %1251 = vmatpush1.xpose.msra.mxu0 %v1224
    %1252 = vmatprep.subr.mxu0 0.0
    %1253 = vmatpush1.xpose.msra.mxu0 %v1222
    %1254 = vmatprep.subr.mxu0 0.0
    %1255 = vmatpush1.xpose.msra.mxu0 %v1220
    %1256 = vmatprep.subr.mxu0 0.0
    %1257 = vmatpush1.xpose.msra.mxu0 %v1218
    %1258 = vmatprep.subr.mxu0 0.0
    %1259 = vmatpush1.xpose.msra.mxu0 %v1216
    %1260 = vmatprep.subr.mxu0 0.0
    %1261 = vmatpush1.xpose.msra.mxu0 %v1214
    %1262 = vmatprep.subr.mxu0 0.0
    %1263 = vmatpush2.xpose.msra.mxu0 0.0
    %1264 = vmatprep.subr.mxu0 0.0
    %1265 = vmatpush2.xpose.msra.mxu0 0.0
    %1266 = vmatprep.subr.mxu0 0.0
    %1267 = vmatpush2.xpose.msra.mxu0 0.0
    %1268 = vmatprep.subr.mxu0 0.0
    %1269 = vmatpush2.xpose.msra.mxu0 0.0
    %1270 = vmatprep.subr.mxu0 0.0
    %1271 = vmatpush2.xpose.msra.mxu0 0.0
    %1272 = vmatprep.subr.mxu0 0.0
    %1273 = vmatpush2.xpose.msra.mxu0 0.0
    %1274 = vmatprep.subr.mxu0 0.0
    %1275 = vmatpush2.xpose.msra.mxu0 0.0
    %1276 = vmatprep.subr.mxu0 0.0
    %1277 = vmatpush2.xpose.msra.mxu0 0.0
    %1278 = vmatprep.subr.mxu0 0.0
    %1279 = vmatpush2.xpose.msra.mxu0 0.0
    %1280 = vmatprep.subr.mxu0 0.0
    %1281 = vmatpush2.xpose.msra.mxu0 0.0
    %1282 = vmatprep.subr.mxu0 0.0
    %1283 = vmatpush2.xpose.msra.mxu0 0.0
    %1284 = vmatprep.subr.mxu0 0.0
    %1285 = vmatpush2.xpose.msra.mxu0 0.0
    %1286 = vmatprep.subr.mxu0 0.0
    %1287 = vmatpush2.xpose.msra.mxu0 0.0
    %1288 = vmatprep.subr.mxu0 0.0
    %1289 = vmatpush2.xpose.msra.mxu0 0.0
    %1290 = vmatprep.subr.mxu0 0.0
    %1291 = vmatpush2.xpose.msra.mxu0 0.0
    %1292 = vmatprep.subr.mxu0 0.0
    %1293 = vmatpush2.xpose.msra.mxu0 0.0
    %1294 = vmatprep.mubr.f32.mxu0 0.0
    %1295 = vmatmul.mubr.f32.gmra.mxu0 %v1212
    %v1296 = vpop.f32.mrf.mxu0
    %v1297 = vadd.f32 0.0, %v1296
    %v1298 = vpop.f32.mrf.mxu0
    %1299 = vdwg.mxu0
    %v1300 = vsel %vm579, %v472, 0
    %v1302 = vsel %vm579, %v326, 0
    %v1304 = vsel %vm579, %v328, 0
    %v1306 = vsel %vm579, %v330, 0
    %v1308 = vsel %vm579, %v332, 0
    %v1310 = vsel %vm579, %v334, 0
    %v1312 = vsel %vm579, %v336, 0
    %v1314 = vsel %vm579, %v338, 0
    %v1316 = vsel %vm579, %v340, 0
    %1318 = vmatprep.subr.mxu0 0.0
    %1319 = vmatpush1.xpose.msra.mxu0 0.0
    %1320 = vmatprep.subr.mxu0 0.0
    %1321 = vmatpush1.xpose.msra.mxu0 0.0
    %1322 = vmatprep.subr.mxu0 0.0
    %1323 = vmatpush1.xpose.msra.mxu0 0.0
    %1324 = vmatprep.subr.mxu0 0.0
    %1325 = vmatpush1.xpose.msra.mxu0 0.0
    %1326 = vmatprep.subr.mxu0 0.0
    %1327 = vmatpush1.xpose.msra.mxu0 0.0
    %1328 = vmatprep.subr.mxu0 0.0
    %1329 = vmatpush1.xpose.msra.mxu0 0.0
    %1330 = vmatprep.subr.mxu0 0.0
    %1331 = vmatpush1.xpose.msra.mxu0 0.0
    %1332 = vmatprep.subr.mxu0 0.0
    %1333 = vmatpush1.xpose.msra.mxu0 0.0
    %1334 = vmatprep.subr.mxu0 0.0
    %1335 = vmatpush1.xpose.msra.mxu0 %v1316
    %1336 = vmatprep.subr.mxu0 0.0
    %1337 = vmatpush1.xpose.msra.mxu0 %v1314
    %1338 = vmatprep.subr.mxu0 0.0
    %1339 = vmatpush1.xpose.msra.mxu0 %v1312
    %1340 = vmatprep.subr.mxu0 0.0
    %1341 = vmatpush1.xpose.msra.mxu0 %v1310
    %1342 = vmatprep.subr.mxu0 0.0
    %1343 = vmatpush1.xpose.msra.mxu0 %v1308
    %1344 = vmatprep.subr.mxu0 0.0
    %1345 = vmatpush1.xpose.msra.mxu0 %v1306
    %1346 = vmatprep.subr.mxu0 0.0
    %1347 = vmatpush1.xpose.msra.mxu0 %v1304
    %1348 = vmatprep.subr.mxu0 0.0
    %1349 = vmatpush1.xpose.msra.mxu0 %v1302
    %1350 = vmatprep.subr.mxu0 0.0
    %1351 = vmatpush2.xpose.msra.mxu0 0.0
    %1352 = vmatprep.subr.mxu0 0.0
    %1353 = vmatpush2.xpose.msra.mxu0 0.0
    %1354 = vmatprep.subr.mxu0 0.0
    %1355 = vmatpush2.xpose.msra.mxu0 0.0
    %1356 = vmatprep.subr.mxu0 0.0
    %1357 = vmatpush2.xpose.msra.mxu0 0.0
    %1358 = vmatprep.subr.mxu0 0.0
    %1359 = vmatpush2.xpose.msra.mxu0 0.0
    %1360 = vmatprep.subr.mxu0 0.0
    %1361 = vmatpush2.xpose.msra.mxu0 0.0
    %1362 = vmatprep.subr.mxu0 0.0
    %1363 = vmatpush2.xpose.msra.mxu0 0.0
    %1364 = vmatprep.subr.mxu0 0.0
    %1365 = vmatpush2.xpose.msra.mxu0 0.0
    %1366 = vmatprep.subr.mxu0 0.0
    %1367 = vmatpush2.xpose.msra.mxu0 0.0
    %1368 = vmatprep.subr.mxu0 0.0
    %1369 = vmatpush2.xpose.msra.mxu0 0.0
    %1370 = vmatprep.subr.mxu0 0.0
    %1371 = vmatpush2.xpose.msra.mxu0 0.0
    %1372 = vmatprep.subr.mxu0 0.0
    %1373 = vmatpush2.xpose.msra.mxu0 0.0
    %1374 = vmatprep.subr.mxu0 0.0
    %1375 = vmatpush2.xpose.msra.mxu0 0.0
    %1376 = vmatprep.subr.mxu0 0.0
    %1377 = vmatpush2.xpose.msra.mxu0 0.0
    %1378 = vmatprep.subr.mxu0 0.0
    %1379 = vmatpush2.xpose.msra.mxu0 0.0
    %1380 = vmatprep.subr.mxu0 0.0
    %1381 = vmatpush2.xpose.msra.mxu0 0.0
    %1382 = vmatprep.mubr.f32.mxu0 0.0
    %1383 = vmatmul.mubr.f32.gmra.mxu0 %v1300
    %v1384 = vpop.f32.mrf.mxu0
    %v1385 = vadd.f32 0.0, %v1384
    %v1386 = vpop.f32.mrf.mxu0
    %1387 = vdwg.mxu0
    %v1388 = vsel %vm579, %v474, 0
    %v1390 = vsel %vm579, %v350, 0
    %v1392 = vsel %vm579, %v352, 0
    %v1394 = vsel %vm579, %v354, 0
    %v1396 = vsel %vm579, %v356, 0
    %v1398 = vsel %vm579, %v358, 0
    %v1400 = vsel %vm579, %v360, 0
    %v1402 = vsel %vm579, %v362, 0
    %v1404 = vsel %vm579, %v364, 0
    %1406 = vmatprep.subr.mxu0 0.0
    %1407 = vmatpush1.xpose.msra.mxu0 0.0
    %1408 = vmatprep.subr.mxu0 0.0
    %1409 = vmatpush1.xpose.msra.mxu0 0.0
    %1410 = vmatprep.subr.mxu0 0.0
    %1411 = vmatpush1.xpose.msra.mxu0 0.0
    %1412 = vmatprep.subr.mxu0 0.0
    %1413 = vmatpush1.xpose.msra.mxu0 0.0
    %1414 = vmatprep.subr.mxu0 0.0
    %1415 = vmatpush1.xpose.msra.mxu0 0.0
    %1416 = vmatprep.subr.mxu0 0.0
    %1417 = vmatpush1.xpose.msra.mxu0 0.0
    %1418 = vmatprep.subr.mxu0 0.0
    %1419 = vmatpush1.xpose.msra.mxu0 0.0
    %1420 = vmatprep.subr.mxu0 0.0
    %1421 = vmatpush1.xpose.msra.mxu0 0.0
    %1422 = vmatprep.subr.mxu0 0.0
    %1423 = vmatpush1.xpose.msra.mxu0 %v1404
    %1424 = vmatprep.subr.mxu0 0.0
    %1425 = vmatpush1.xpose.msra.mxu0 %v1402
    %1426 = vmatprep.subr.mxu0 0.0
    %1427 = vmatpush1.xpose.msra.mxu0 %v1400
    %1428 = vmatprep.subr.mxu0 0.0
    %1429 = vmatpush1.xpose.msra.mxu0 %v1398
    %1430 = vmatprep.subr.mxu0 0.0
    %1431 = vmatpush1.xpose.msra.mxu0 %v1396
    %1432 = vmatprep.subr.mxu0 0.0
    %1433 = vmatpush1.xpose.msra.mxu0 %v1394
    %1434 = vmatprep.subr.mxu0 0.0
    %1435 = vmatpush1.xpose.msra.mxu0 %v1392
    %1436 = vmatprep.subr.mxu0 0.0
    %1437 = vmatpush1.xpose.msra.mxu0 %v1390
    %1438 = vmatprep.subr.mxu0 0.0
    %1439 = vmatpush2.xpose.msra.mxu0 0.0
    %1440 = vmatprep.subr.mxu0 0.0
    %1441 = vmatpush2.xpose.msra.mxu0 0.0
    %1442 = vmatprep.subr.mxu0 0.0
    %1443 = vmatpush2.xpose.msra.mxu0 0.0
    %1444 = vmatprep.subr.mxu0 0.0
    %1445 = vmatpush2.xpose.msra.mxu0 0.0
    %1446 = vmatprep.subr.mxu0 0.0
    %1447 = vmatpush2.xpose.msra.mxu0 0.0
    %1448 = vmatprep.subr.mxu0 0.0
    %1449 = vmatpush2.xpose.msra.mxu0 0.0
    %1450 = vmatprep.subr.mxu0 0.0
    %1451 = vmatpush2.xpose.msra.mxu0 0.0
    %1452 = vmatprep.subr.mxu0 0.0
    %1453 = vmatpush2.xpose.msra.mxu0 0.0
    %1454 = vmatprep.subr.mxu0 0.0
    %1455 = vmatpush2.xpose.msra.mxu0 0.0
    %1456 = vmatprep.subr.mxu0 0.0
    %1457 = vmatpush2.xpose.msra.mxu0 0.0
    %1458 = vmatprep.subr.mxu0 0.0
    %1459 = vmatpush2.xpose.msra.mxu0 0.0
    %1460 = vmatprep.subr.mxu0 0.0
    %1461 = vmatpush2.xpose.msra.mxu0 0.0
    %1462 = vmatprep.subr.mxu0 0.0
    %1463 = vmatpush2.xpose.msra.mxu0 0.0
    %1464 = vmatprep.subr.mxu0 0.0
    %1465 = vmatpush2.xpose.msra.mxu0 0.0
    %1466 = vmatprep.subr.mxu0 0.0
    %1467 = vmatpush2.xpose.msra.mxu0 0.0
    %1468 = vmatprep.subr.mxu0 0.0
    %1469 = vmatpush2.xpose.msra.mxu0 0.0
    %1470 = vmatprep.mubr.f32.mxu0 0.0
    %1471 = vmatmul.mubr.f32.gmra.mxu0 %v1388
    %v1472 = vpop.f32.mrf.mxu0
    %v1473 = vadd.f32 0.0, %v1472
    %v1474 = vpop.f32.mrf.mxu0
    %1475 = vdwg.mxu0
    %v1476 = vlaneseq
    %v1477 = vshrl.u32 %v1476, 7
    %v1478 = vsub.s32 0, %v1477
    %v1479 = vrot.slane %v857, %v1478
    %v1480 = vlaneseq
    %v1481 = vshrl.u32 %v1480, 7
    %v1482 = vsub.s32 0, %v1481
    %v1483 = vrot.slane %v945, %v1482
    %v1484 = vlaneseq
    %v1485 = vshrl.u32 %v1484, 7
    %v1486 = vsub.s32 0, %v1485
    %v1487 = vrot.slane %v1033, %v1486
    %v1488 = vlaneseq
    %v1489 = vshrl.u32 %v1488, 7
    %v1490 = vsub.s32 0, %v1489
    %v1491 = vrot.slane %v1121, %v1490
    %v1492 = vlaneseq
    %v1493 = vshrl.u32 %v1492, 7
    %v1494 = vsub.s32 0, %v1493
    %v1495 = vrot.slane %v1209, %v1494
    %v1496 = vlaneseq
    %v1497 = vshrl.u32 %v1496, 7
    %v1498 = vsub.s32 0, %v1497
    %v1499 = vrot.slane %v1297, %v1498
    %v1500 = vlaneseq
    %v1501 = vshrl.u32 %v1500, 7
    %v1502 = vsub.s32 0, %v1501
    %v1503 = vrot.slane %v1385, %v1502
    %v1504 = vlaneseq
    %v1505 = vshrl.u32 %v1504, 7
    %v1506 = vsub.s32 0, %v1505
    %v1507 = vrot.slane %v1473, %v1506
    %v1508 = vadd.f32 %v582, %v1479
    %v1509 = vadd.f32 %v585, %v1479
    %v1510 = vadd.f32 %v588, %v1479
    %v1511 = vadd.f32 %v591, %v1479
    %v1512 = vadd.f32 %v594, %v1479
    %v1513 = vadd.f32 %v597, %v1479
    %v1514 = vadd.f32 %v600, %v1479
    %v1515 = vadd.f32 %v603, %v1479
    %v1516 = vadd.f32 %v606, %v1483
    %v1517 = vadd.f32 %v609, %v1483
    %v1518 = vadd.f32 %v612, %v1483
    %v1519 = vadd.f32 %v615, %v1483
    %v1520 = vadd.f32 %v618, %v1483
    %v1521 = vadd.f32 %v621, %v1483
    %v1522 = vadd.f32 %v624, %v1483
    %v1523 = vadd.f32 %v627, %v1483
    %v1524 = vadd.f32 %v630, %v1487
    %v1525 = vadd.f32 %v633, %v1487
    %v1526 = vadd.f32 %v636, %v1487
    %v1527 = vadd.f32 %v639, %v1487
    %v1528 = vadd.f32 %v642, %v1487
    %v1529 = vadd.f32 %v645, %v1487
    %v1530 = vadd.f32 %v648, %v1487
    %v1531 = vadd.f32 %v651, %v1487
    %v1532 = vadd.f32 %v654, %v1491
    %v1533 = vadd.f32 %v657, %v1491
    %v1534 = vadd.f32 %v660, %v1491
    %v1535 = vadd.f32 %v663, %v1491
    %v1536 = vadd.f32 %v666, %v1491
    %v1537 = vadd.f32 %v669, %v1491
    %v1538 = vadd.f32 %v672, %v1491
    %v1539 = vadd.f32 %v675, %v1491
    %v1540 = vadd.f32 %v678, %v1495
    %v1541 = vadd.f32 %v681, %v1495
    %v1542 = vadd.f32 %v684, %v1495
    %v1543 = vadd.f32 %v687, %v1495
    %v1544 = vadd.f32 %v690, %v1495
    %v1545 = vadd.f32 %v693, %v1495
    %v1546 = vadd.f32 %v696, %v1495
    %v1547 = vadd.f32 %v699, %v1495
    %v1548 = vadd.f32 %v702, %v1499
    %v1549 = vadd.f32 %v705, %v1499
    %v1550 = vadd.f32 %v708, %v1499
    %v1551 = vadd.f32 %v711, %v1499
    %v1552 = vadd.f32 %v714, %v1499
    %v1553 = vadd.f32 %v717, %v1499
    %v1554 = vadd.f32 %v720, %v1499
    %v1555 = vadd.f32 %v723, %v1499
    %v1556 = vadd.f32 %v726, %v1503
    %v1557 = vadd.f32 %v729, %v1503
    %v1558 = vadd.f32 %v732, %v1503
    %v1559 = vadd.f32 %v735, %v1503
    %v1560 = vadd.f32 %v738, %v1503
    %v1561 = vadd.f32 %v741, %v1503
    %v1562 = vadd.f32 %v744, %v1503
    %v1563 = vadd.f32 %v747, %v1503
    %v1564 = vadd.f32 %v750, %v1507
    %v1565 = vadd.f32 %v753, %v1507
    %v1566 = vadd.f32 %v756, %v1507
    %v1567 = vadd.f32 %v759, %v1507
    %v1568 = vadd.f32 %v762, %v1507
    %v1569 = vadd.f32 %v765, %v1507
    %v1570 = vadd.f32 %v768, %v1507
    %v1571 = vadd.f32 %v771, %v1507
    %vm1572 = vcmp.ge.f32.partialorder %v1508, 0.0
    %vm1573 = vcmp.ge.f32.partialorder %v1509, 0.0
    %vm1574 = vcmp.ge.f32.partialorder %v1510, 0.0
    %vm1575 = vcmp.ge.f32.partialorder %v1511, 0.0
    %vm1576 = vcmp.ge.f32.partialorder %v1512, 0.0
    %vm1577 = vcmp.ge.f32.partialorder %v1513, 0.0
    %vm1578 = vcmp.ge.f32.partialorder %v1514, 0.0
    %vm1579 = vcmp.ge.f32.partialorder %v1515, 0.0
    %vm1580 = vcmp.ge.f32.partialorder %v1516, 0.0
    %vm1581 = vcmp.ge.f32.partialorder %v1517, 0.0
    %vm1582 = vcmp.ge.f32.partialorder %v1518, 0.0
    %vm1583 = vcmp.ge.f32.partialorder %v1519, 0.0
    %vm1584 = vcmp.ge.f32.partialorder %v1520, 0.0
    %vm1585 = vcmp.ge.f32.partialorder %v1521, 0.0
    %vm1586 = vcmp.ge.f32.partialorder %v1522, 0.0
    %vm1587 = vcmp.ge.f32.partialorder %v1523, 0.0
    %vm1588 = vcmp.ge.f32.partialorder %v1524, 0.0
    %vm1589 = vcmp.ge.f32.partialorder %v1525, 0.0
    %vm1590 = vcmp.ge.f32.partialorder %v1526, 0.0
    %vm1591 = vcmp.ge.f32.partialorder %v1527, 0.0
    %vm1592 = vcmp.ge.f32.partialorder %v1528, 0.0
    %vm1593 = vcmp.ge.f32.partialorder %v1529, 0.0
    %vm1594 = vcmp.ge.f32.partialorder %v1530, 0.0
    %vm1595 = vcmp.ge.f32.partialorder %v1531, 0.0
    %vm1596 = vcmp.ge.f32.partialorder %v1532, 0.0
    %vm1597 = vcmp.ge.f32.partialorder %v1533, 0.0
    %vm1598 = vcmp.ge.f32.partialorder %v1534, 0.0
    %vm1599 = vcmp.ge.f32.partialorder %v1535, 0.0
    %vm1600 = vcmp.ge.f32.partialorder %v1536, 0.0
    %vm1601 = vcmp.ge.f32.partialorder %v1537, 0.0
    %vm1602 = vcmp.ge.f32.partialorder %v1538, 0.0
    %vm1603 = vcmp.ge.f32.partialorder %v1539, 0.0
    %vm1604 = vcmp.ge.f32.partialorder %v1540, 0.0
    %vm1605 = vcmp.ge.f32.partialorder %v1541, 0.0
    %vm1606 = vcmp.ge.f32.partialorder %v1542, 0.0
    %vm1607 = vcmp.ge.f32.partialorder %v1543, 0.0
    %vm1608 = vcmp.ge.f32.partialorder %v1544, 0.0
    %vm1609 = vcmp.ge.f32.partialorder %v1545, 0.0
    %vm1610 = vcmp.ge.f32.partialorder %v1546, 0.0
    %vm1611 = vcmp.ge.f32.partialorder %v1547, 0.0
    %vm1612 = vcmp.ge.f32.partialorder %v1548, 0.0
    %vm1613 = vcmp.ge.f32.partialorder %v1549, 0.0
    %vm1614 = vcmp.ge.f32.partialorder %v1550, 0.0
    %vm1615 = vcmp.ge.f32.partialorder %v1551, 0.0
    %vm1616 = vcmp.ge.f32.partialorder %v1552, 0.0
    %vm1617 = vcmp.ge.f32.partialorder %v1553, 0.0
    %vm1618 = vcmp.ge.f32.partialorder %v1554, 0.0
    %vm1619 = vcmp.ge.f32.partialorder %v1555, 0.0
    %vm1620 = vcmp.ge.f32.partialorder %v1556, 0.0
    %vm1621 = vcmp.ge.f32.partialorder %v1557, 0.0
    %vm1622 = vcmp.ge.f32.partialorder %v1558, 0.0
    %vm1623 = vcmp.ge.f32.partialorder %v1559, 0.0
    %vm1624 = vcmp.ge.f32.partialorder %v1560, 0.0
    %vm1625 = vcmp.ge.f32.partialorder %v1561, 0.0
    %vm1626 = vcmp.ge.f32.partialorder %v1562, 0.0
    %vm1627 = vcmp.ge.f32.partialorder %v1563, 0.0
    %vm1628 = vcmp.ge.f32.partialorder %v1564, 0.0
    %vm1629 = vcmp.ge.f32.partialorder %v1565, 0.0
    %vm1630 = vcmp.ge.f32.partialorder %v1566, 0.0
    %vm1631 = vcmp.ge.f32.partialorder %v1567, 0.0
    %vm1632 = vcmp.ge.f32.partialorder %v1568, 0.0
    %vm1633 = vcmp.ge.f32.partialorder %v1569, 0.0
    %vm1634 = vcmp.ge.f32.partialorder %v1570, 0.0
    %vm1635 = vcmp.ge.f32.partialorder %v1571, 0.0
    %v1636 = vmul.f32 %v1508, 0.2
    %v1637 = vmul.f32 %v1509, 0.2
    %v1638 = vmul.f32 %v1510, 0.2
    %v1639 = vmul.f32 %v1511, 0.2
    %v1640 = vmul.f32 %v1512, 0.2
    %v1641 = vmul.f32 %v1513, 0.2
    %v1642 = vmul.f32 %v1514, 0.2
    %v1643 = vmul.f32 %v1515, 0.2
    %v1644 = vmul.f32 %v1516, 0.2
    %v1645 = vmul.f32 %v1517, 0.2
    %v1646 = vmul.f32 %v1518, 0.2
    %v1647 = vmul.f32 %v1519, 0.2
    %v1648 = vmul.f32 %v1520, 0.2
    %v1649 = vmul.f32 %v1521, 0.2
    %v1650 = vmul.f32 %v1522, 0.2
    %v1651 = vmul.f32 %v1523, 0.2
    %v1652 = vmul.f32 %v1524, 0.2
    %v1653 = vmul.f32 %v1525, 0.2
    %v1654 = vmul.f32 %v1526, 0.2
    %v1655 = vmul.f32 %v1527, 0.2
    %v1656 = vmul.f32 %v1528, 0.2
    %v1657 = vmul.f32 %v1529, 0.2
    %v1658 = vmul.f32 %v1530, 0.2
    %v1659 = vmul.f32 %v1531, 0.2
    %v1660 = vmul.f32 %v1532, 0.2
    %v1661 = vmul.f32 %v1533, 0.2
    %v1662 = vmul.f32 %v1534, 0.2
    %v1663 = vmul.f32 %v1535, 0.2
    %v1664 = vmul.f32 %v1536, 0.2
    %v1665 = vmul.f32 %v1537, 0.2
    %v1666 = vmul.f32 %v1538, 0.2
    %v1667 = vmul.f32 %v1539, 0.2
    %v1668 = vmul.f32 %v1540, 0.2
    %v1669 = vmul.f32 %v1541, 0.2
    %v1670 = vmul.f32 %v1542, 0.2
    %v1671 = vmul.f32 %v1543, 0.2
    %v1672 = vmul.f32 %v1544, 0.2
    %v1673 = vmul.f32 %v1545, 0.2
    %v1674 = vmul.f32 %v1546, 0.2
    %v1675 = vmul.f32 %v1547, 0.2
    %v1676 = vmul.f32 %v1548, 0.2
    %v1677 = vmul.f32 %v1549, 0.2
    %v1678 = vmul.f32 %v1550, 0.2
    %v1679 = vmul.f32 %v1551, 0.2
    %v1680 = vmul.f32 %v1552, 0.2
    %v1681 = vmul.f32 %v1553, 0.2
    %v1682 = vmul.f32 %v1554, 0.2
    %v1683 = vmul.f32 %v1555, 0.2
    %v1684 = vmul.f32 %v1556, 0.2
    %v1685 = vmul.f32 %v1557, 0.2
    %v1686 = vmul.f32 %v1558, 0.2
    %v1687 = vmul.f32 %v1559, 0.2
    %v1688 = vmul.f32 %v1560, 0.2
    %v1689 = vmul.f32 %v1561, 0.2
    %v1690 = vmul.f32 %v1562, 0.2
    %v1691 = vmul.f32 %v1563, 0.2
    %v1692 = vmul.f32 %v1564, 0.2
    %v1693 = vmul.f32 %v1565, 0.2
    %v1694 = vmul.f32 %v1566, 0.2
    %v1695 = vmul.f32 %v1567, 0.2
    %v1696 = vmul.f32 %v1568, 0.2
    %v1697 = vmul.f32 %v1569, 0.2
    %v1698 = vmul.f32 %v1570, 0.2
    %v1699 = vmul.f32 %v1571, 0.2
    %v1700 = vsel %vm1572, %v1508, %v1636
    %v1701 = vsel %vm1573, %v1509, %v1637
    %v1702 = vsel %vm1574, %v1510, %v1638
    %v1703 = vsel %vm1575, %v1511, %v1639
    %v1704 = vsel %vm1576, %v1512, %v1640
    %v1705 = vsel %vm1577, %v1513, %v1641
    %v1706 = vsel %vm1578, %v1514, %v1642
    %v1707 = vsel %vm1579, %v1515, %v1643
    %v1708 = vsel %vm1580, %v1516, %v1644
    %v1709 = vsel %vm1581, %v1517, %v1645
    %v1710 = vsel %vm1582, %v1518, %v1646
    %v1711 = vsel %vm1583, %v1519, %v1647
    %v1712 = vsel %vm1584, %v1520, %v1648
    %v1713 = vsel %vm1585, %v1521, %v1649
    %v1714 = vsel %vm1586, %v1522, %v1650
    %v1715 = vsel %vm1587, %v1523, %v1651
    %v1716 = vsel %vm1588, %v1524, %v1652
    %v1717 = vsel %vm1589, %v1525, %v1653
    %v1718 = vsel %vm1590, %v1526, %v1654
    %v1719 = vsel %vm1591, %v1527, %v1655
    %v1720 = vsel %vm1592, %v1528, %v1656
    %v1721 = vsel %vm1593, %v1529, %v1657
    %v1722 = vsel %vm1594, %v1530, %v1658
    %v1723 = vsel %vm1595, %v1531, %v1659
    %v1724 = vsel %vm1596, %v1532, %v1660
    %v1725 = vsel %vm1597, %v1533, %v1661
    %v1726 = vsel %vm1598, %v1534, %v1662
    %v1727 = vsel %vm1599, %v1535, %v1663
    %v1728 = vsel %vm1600, %v1536, %v1664
    %v1729 = vsel %vm1601, %v1537, %v1665
    %v1730 = vsel %vm1602, %v1538, %v1666
    %v1731 = vsel %vm1603, %v1539, %v1667
    %v1732 = vsel %vm1604, %v1540, %v1668
    %v1733 = vsel %vm1605, %v1541, %v1669
    %v1734 = vsel %vm1606, %v1542, %v1670
    %v1735 = vsel %vm1607, %v1543, %v1671
    %v1736 = vsel %vm1608, %v1544, %v1672
    %v1737 = vsel %vm1609, %v1545, %v1673
    %v1738 = vsel %vm1610, %v1546, %v1674
    %v1739 = vsel %vm1611, %v1547, %v1675
    %v1740 = vsel %vm1612, %v1548, %v1676
    %v1741 = vsel %vm1613, %v1549, %v1677
    %v1742 = vsel %vm1614, %v1550, %v1678
    %v1743 = vsel %vm1615, %v1551, %v1679
    %v1744 = vsel %vm1616, %v1552, %v1680
    %v1745 = vsel %vm1617, %v1553, %v1681
    %v1746 = vsel %vm1618, %v1554, %v1682
    %v1747 = vsel %vm1619, %v1555, %v1683
    %v1748 = vsel %vm1620, %v1556, %v1684
    %v1749 = vsel %vm1621, %v1557, %v1685
    %v1750 = vsel %vm1622, %v1558, %v1686
    %v1751 = vsel %vm1623, %v1559, %v1687
    %v1752 = vsel %vm1624, %v1560, %v1688
    %v1753 = vsel %vm1625, %v1561, %v1689
    %v1754 = vsel %vm1626, %v1562, %v1690
    %v1755 = vsel %vm1627, %v1563, %v1691
    %v1756 = vsel %vm1628, %v1564, %v1692
    %v1757 = vsel %vm1629, %v1565, %v1693
    %v1758 = vsel %vm1630, %v1566, %v1694
    %v1759 = vsel %vm1631, %v1567, %v1695
    %v1760 = vsel %vm1632, %v1568, %v1696
    %v1761 = vsel %vm1633, %v1569, %v1697
    %v1762 = vsel %vm1634, %v1570, %v1698
    %v1763 = vsel %vm1635, %v1571, %v1699
    %vm1764 = vcmp.gt.f32.partialorder %v55, 0.0
    %vm1765 = vcmp.gt.f32.partialorder %v56, 0.0
    %vm1766 = vcmp.gt.f32.partialorder %v57, 0.0
    %vm1767 = vcmp.gt.f32.partialorder %v58, 0.0
    %vm1768 = vcmp.gt.f32.partialorder %v59, 0.0
    %vm1769 = vcmp.gt.f32.partialorder %v60, 0.0
    %vm1770 = vcmp.gt.f32.partialorder %v61, 0.0
    %vm1771 = vcmp.gt.f32.partialorder %v62, 0.0
    %v1772 = vsel %vm1764, 1, 0
    %v1773 = vsel %vm1765, 1, 0
    %v1774 = vsel %vm1766, 1, 0
    %v1775 = vsel %vm1767, 1, 0
    %v1776 = vsel %vm1768, 1, 0
    %v1777 = vsel %vm1769, 1, 0
    %v1778 = vsel %vm1770, 1, 0
    %v1779 = vsel %vm1771, 1, 0
    %vm1780 = vcmp.eq.s32.totalorder %v1772, 1
    %vm1781 = vcmp.eq.s32.totalorder %v1773, 1
    %vm1782 = vcmp.eq.s32.totalorder %v1774, 1
    %vm1783 = vcmp.eq.s32.totalorder %v1775, 1
    %vm1784 = vcmp.eq.s32.totalorder %v1776, 1
    %vm1785 = vcmp.eq.s32.totalorder %v1777, 1
    %vm1786 = vcmp.eq.s32.totalorder %v1778, 1
    %vm1787 = vcmp.eq.s32.totalorder %v1779, 1
    %v1788 = vsel %vm1780, %v1700, -1e+30
    %v1789 = vsel %vm1781, %v1701, -1e+30
    %v1790 = vsel %vm1782, %v1702, -1e+30
    %v1791 = vsel %vm1783, %v1703, -1e+30
    %v1792 = vsel %vm1784, %v1704, -1e+30
    %v1793 = vsel %vm1785, %v1705, -1e+30
    %v1794 = vsel %vm1786, %v1706, -1e+30
    %v1795 = vsel %vm1787, %v1707, -1e+30
    %v1796 = vsel %vm1780, %v1708, -1e+30
    %v1797 = vsel %vm1781, %v1709, -1e+30
    %v1798 = vsel %vm1782, %v1710, -1e+30
    %v1799 = vsel %vm1783, %v1711, -1e+30
    %v1800 = vsel %vm1784, %v1712, -1e+30
    %v1801 = vsel %vm1785, %v1713, -1e+30
    %v1802 = vsel %vm1786, %v1714, -1e+30
    %v1803 = vsel %vm1787, %v1715, -1e+30
    %v1804 = vsel %vm1780, %v1716, -1e+30
    %v1805 = vsel %vm1781, %v1717, -1e+30
    %v1806 = vsel %vm1782, %v1718, -1e+30
    %v1807 = vsel %vm1783, %v1719, -1e+30
    %v1808 = vsel %vm1784, %v1720, -1e+30
    %v1809 = vsel %vm1785, %v1721, -1e+30
    %v1810 = vsel %vm1786, %v1722, -1e+30
    %v1811 = vsel %vm1787, %v1723, -1e+30
    %v1812 = vsel %vm1780, %v1724, -1e+30
    %v1813 = vsel %vm1781, %v1725, -1e+30
    %v1814 = vsel %vm1782, %v1726, -1e+30
    %v1815 = vsel %vm1783, %v1727, -1e+30
    %v1816 = vsel %vm1784, %v1728, -1e+30
    %v1817 = vsel %vm1785, %v1729, -1e+30
    %v1818 = vsel %vm1786, %v1730, -1e+30
    %v1819 = vsel %vm1787, %v1731, -1e+30
    %v1820 = vsel %vm1780, %v1732, -1e+30
    %v1821 = vsel %vm1781, %v1733, -1e+30
    %v1822 = vsel %vm1782, %v1734, -1e+30
    %v1823 = vsel %vm1783, %v1735, -1e+30
    %v1824 = vsel %vm1784, %v1736, -1e+30
    %v1825 = vsel %vm1785, %v1737, -1e+30
    %v1826 = vsel %vm1786, %v1738, -1e+30
    %v1827 = vsel %vm1787, %v1739, -1e+30
    %v1828 = vsel %vm1780, %v1740, -1e+30
    %v1829 = vsel %vm1781, %v1741, -1e+30
    %v1830 = vsel %vm1782, %v1742, -1e+30
    %v1831 = vsel %vm1783, %v1743, -1e+30
    %v1832 = vsel %vm1784, %v1744, -1e+30
    %v1833 = vsel %vm1785, %v1745, -1e+30
    %v1834 = vsel %vm1786, %v1746, -1e+30
    %v1835 = vsel %vm1787, %v1747, -1e+30
    %v1836 = vsel %vm1780, %v1748, -1e+30
    %v1837 = vsel %vm1781, %v1749, -1e+30
    %v1838 = vsel %vm1782, %v1750, -1e+30
    %v1839 = vsel %vm1783, %v1751, -1e+30
    %v1840 = vsel %vm1784, %v1752, -1e+30
    %v1841 = vsel %vm1785, %v1753, -1e+30
    %v1842 = vsel %vm1786, %v1754, -1e+30
    %v1843 = vsel %vm1787, %v1755, -1e+30
    %v1844 = vsel %vm1780, %v1756, -1e+30
    %v1845 = vsel %vm1781, %v1757, -1e+30
    %v1846 = vsel %vm1782, %v1758, -1e+30
    %v1847 = vsel %vm1783, %v1759, -1e+30
    %v1848 = vsel %vm1784, %v1760, -1e+30
    %v1849 = vsel %vm1785, %v1761, -1e+30
    %v1850 = vsel %vm1786, %v1762, -1e+30
    %v1851 = vsel %vm1787, %v1763, -1e+30
    %vm1852 = vcmask 523264
    %v1853 = vsel %vm1852, %v1788, -inf
    %1854 = vmax.xlane.f32.xlu0 %v1853
    %v1855 = vpop.xlane.xlu0 %1854
    %v1856 = vsel %vm1852, %v1789, -inf
    %1857 = vmax.xlane.f32.xlu0 %v1856
    %v1858 = vpop.xlane.xlu0 %1857
    %v1859 = vsel %vm1852, %v1790, -inf
    %1860 = vmax.xlane.f32.xlu0 %v1859
    %v1861 = vpop.xlane.xlu0 %1860
    %v1862 = vsel %vm1852, %v1791, -inf
    %1863 = vmax.xlane.f32.xlu0 %v1862
    %v1864 = vpop.xlane.xlu0 %1863
    %v1865 = vsel %vm1852, %v1792, -inf
    %1866 = vmax.xlane.f32.xlu0 %v1865
    %v1867 = vpop.xlane.xlu0 %1866
    %v1868 = vsel %vm1852, %v1793, -inf
    %1869 = vmax.xlane.f32.xlu0 %v1868
    %v1870 = vpop.xlane.xlu0 %1869
    %v1871 = vsel %vm1852, %v1794, -inf
    %1872 = vmax.xlane.f32.xlu0 %v1871
    %v1873 = vpop.xlane.xlu0 %1872
    %v1874 = vsel %vm1852, %v1795, -inf
    %1875 = vmax.xlane.f32.xlu0 %v1874
    %v1876 = vpop.xlane.xlu0 %1875
    %v1877 = vsel %vm1852, %v1796, -inf
    %1878 = vmax.xlane.f32.xlu0 %v1877
    %v1879 = vpop.xlane.xlu0 %1878
    %v1880 = vsel %vm1852, %v1797, -inf
    %1881 = vmax.xlane.f32.xlu0 %v1880
    %v1882 = vpop.xlane.xlu0 %1881
    %v1883 = vsel %vm1852, %v1798, -inf
    %1884 = vmax.xlane.f32.xlu0 %v1883
    %v1885 = vpop.xlane.xlu0 %1884
    %v1886 = vsel %vm1852, %v1799, -inf
    %1887 = vmax.xlane.f32.xlu0 %v1886
    %v1888 = vpop.xlane.xlu0 %1887
    %v1889 = vsel %vm1852, %v1800, -inf
    %1890 = vmax.xlane.f32.xlu0 %v1889
    %v1891 = vpop.xlane.xlu0 %1890
    %v1892 = vsel %vm1852, %v1801, -inf
    %1893 = vmax.xlane.f32.xlu0 %v1892
    %v1894 = vpop.xlane.xlu0 %1893
    %v1895 = vsel %vm1852, %v1802, -inf
    %1896 = vmax.xlane.f32.xlu0 %v1895
    %v1897 = vpop.xlane.xlu0 %1896
    %v1898 = vsel %vm1852, %v1803, -inf
    %1899 = vmax.xlane.f32.xlu0 %v1898
    %v1900 = vpop.xlane.xlu0 %1899
    %v1901 = vsel %vm1852, %v1804, -inf
    %1902 = vmax.xlane.f32.xlu0 %v1901
    %v1903 = vpop.xlane.xlu0 %1902
    %v1904 = vsel %vm1852, %v1805, -inf
    %1905 = vmax.xlane.f32.xlu0 %v1904
    %v1906 = vpop.xlane.xlu0 %1905
    %v1907 = vsel %vm1852, %v1806, -inf
    %1908 = vmax.xlane.f32.xlu0 %v1907
    %v1909 = vpop.xlane.xlu0 %1908
    %v1910 = vsel %vm1852, %v1807, -inf
    %1911 = vmax.xlane.f32.xlu0 %v1910
    %v1912 = vpop.xlane.xlu0 %1911
    %v1913 = vsel %vm1852, %v1808, -inf
    %1914 = vmax.xlane.f32.xlu0 %v1913
    %v1915 = vpop.xlane.xlu0 %1914
    %v1916 = vsel %vm1852, %v1809, -inf
    %1917 = vmax.xlane.f32.xlu0 %v1916
    %v1918 = vpop.xlane.xlu0 %1917
    %v1919 = vsel %vm1852, %v1810, -inf
    %1920 = vmax.xlane.f32.xlu0 %v1919
    %v1921 = vpop.xlane.xlu0 %1920
    %v1922 = vsel %vm1852, %v1811, -inf
    %1923 = vmax.xlane.f32.xlu0 %v1922
    %v1924 = vpop.xlane.xlu0 %1923
    %v1925 = vsel %vm1852, %v1812, -inf
    %1926 = vmax.xlane.f32.xlu0 %v1925
    %v1927 = vpop.xlane.xlu0 %1926
    %v1928 = vsel %vm1852, %v1813, -inf
    %1929 = vmax.xlane.f32.xlu0 %v1928
    %v1930 = vpop.xlane.xlu0 %1929
    %v1931 = vsel %vm1852, %v1814, -inf
    %1932 = vmax.xlane.f32.xlu0 %v1931
    %v1933 = vpop.xlane.xlu0 %1932
    %v1934 = vsel %vm1852, %v1815, -inf
    %1935 = vmax.xlane.f32.xlu0 %v1934
    %v1936 = vpop.xlane.xlu0 %1935
    %v1937 = vsel %vm1852, %v1816, -inf
    %1938 = vmax.xlane.f32.xlu0 %v1937
    %v1939 = vpop.xlane.xlu0 %1938
    %v1940 = vsel %vm1852, %v1817, -inf
    %1941 = vmax.xlane.f32.xlu0 %v1940
    %v1942 = vpop.xlane.xlu0 %1941
    %v1943 = vsel %vm1852, %v1818, -inf
    %1944 = vmax.xlane.f32.xlu0 %v1943
    %v1945 = vpop.xlane.xlu0 %1944
    %v1946 = vsel %vm1852, %v1819, -inf
    %1947 = vmax.xlane.f32.xlu0 %v1946
    %v1948 = vpop.xlane.xlu0 %1947
    %v1949 = vsel %vm1852, %v1820, -inf
    %1950 = vmax.xlane.f32.xlu0 %v1949
    %v1951 = vpop.xlane.xlu0 %1950
    %v1952 = vsel %vm1852, %v1821, -inf
    %1953 = vmax.xlane.f32.xlu0 %v1952
    %v1954 = vpop.xlane.xlu0 %1953
    %v1955 = vsel %vm1852, %v1822, -inf
    %1956 = vmax.xlane.f32.xlu0 %v1955
    %v1957 = vpop.xlane.xlu0 %1956
    %v1958 = vsel %vm1852, %v1823, -inf
    %1959 = vmax.xlane.f32.xlu0 %v1958
    %v1960 = vpop.xlane.xlu0 %1959
    %v1961 = vsel %vm1852, %v1824, -inf
    %1962 = vmax.xlane.f32.xlu0 %v1961
    %v1963 = vpop.xlane.xlu0 %1962
    %v1964 = vsel %vm1852, %v1825, -inf
    %1965 = vmax.xlane.f32.xlu0 %v1964
    %v1966 = vpop.xlane.xlu0 %1965
    %v1967 = vsel %vm1852, %v1826, -inf
    %1968 = vmax.xlane.f32.xlu0 %v1967
    %v1969 = vpop.xlane.xlu0 %1968
    %v1970 = vsel %vm1852, %v1827, -inf
    %1971 = vmax.xlane.f32.xlu0 %v1970
    %v1972 = vpop.xlane.xlu0 %1971
    %v1973 = vsel %vm1852, %v1828, -inf
    %1974 = vmax.xlane.f32.xlu0 %v1973
    %v1975 = vpop.xlane.xlu0 %1974
    %v1976 = vsel %vm1852, %v1829, -inf
    %1977 = vmax.xlane.f32.xlu0 %v1976
    %v1978 = vpop.xlane.xlu0 %1977
    %v1979 = vsel %vm1852, %v1830, -inf
    %1980 = vmax.xlane.f32.xlu0 %v1979
    %v1981 = vpop.xlane.xlu0 %1980
    %v1982 = vsel %vm1852, %v1831, -inf
    %1983 = vmax.xlane.f32.xlu0 %v1982
    %v1984 = vpop.xlane.xlu0 %1983
    %v1985 = vsel %vm1852, %v1832, -inf
    %1986 = vmax.xlane.f32.xlu0 %v1985
    %v1987 = vpop.xlane.xlu0 %1986
    %v1988 = vsel %vm1852, %v1833, -inf
    %1989 = vmax.xlane.f32.xlu0 %v1988
    %v1990 = vpop.xlane.xlu0 %1989
    %v1991 = vsel %vm1852, %v1834, -inf
    %1992 = vmax.xlane.f32.xlu0 %v1991
    %v1993 = vpop.xlane.xlu0 %1992
    %v1994 = vsel %vm1852, %v1835, -inf
    %1995 = vmax.xlane.f32.xlu0 %v1994
    %v1996 = vpop.xlane.xlu0 %1995
    %v1997 = vsel %vm1852, %v1836, -inf
    %1998 = vmax.xlane.f32.xlu0 %v1997
    %v1999 = vpop.xlane.xlu0 %1998
    %v2000 = vsel %vm1852, %v1837, -inf
    %2001 = vmax.xlane.f32.xlu0 %v2000
    %v2002 = vpop.xlane.xlu0 %2001
    %v2003 = vsel %vm1852, %v1838, -inf
    %2004 = vmax.xlane.f32.xlu0 %v2003
    %v2005 = vpop.xlane.xlu0 %2004
    %v2006 = vsel %vm1852, %v1839, -inf
    %2007 = vmax.xlane.f32.xlu0 %v2006
    %v2008 = vpop.xlane.xlu0 %2007
    %v2009 = vsel %vm1852, %v1840, -inf
    %2010 = vmax.xlane.f32.xlu0 %v2009
    %v2011 = vpop.xlane.xlu0 %2010
    %v2012 = vsel %vm1852, %v1841, -inf
    %2013 = vmax.xlane.f32.xlu0 %v2012
    %v2014 = vpop.xlane.xlu0 %2013
    %v2015 = vsel %vm1852, %v1842, -inf
    %2016 = vmax.xlane.f32.xlu0 %v2015
    %v2017 = vpop.xlane.xlu0 %2016
    %v2018 = vsel %vm1852, %v1843, -inf
    %2019 = vmax.xlane.f32.xlu0 %v2018
    %v2020 = vpop.xlane.xlu0 %2019
    %v2021 = vsel %vm1852, %v1844, -inf
    %2022 = vmax.xlane.f32.xlu0 %v2021
    %v2023 = vpop.xlane.xlu0 %2022
    %v2024 = vsel %vm1852, %v1845, -inf
    %2025 = vmax.xlane.f32.xlu0 %v2024
    %v2026 = vpop.xlane.xlu0 %2025
    %v2027 = vsel %vm1852, %v1846, -inf
    %2028 = vmax.xlane.f32.xlu0 %v2027
    %v2029 = vpop.xlane.xlu0 %2028
    %v2030 = vsel %vm1852, %v1847, -inf
    %2031 = vmax.xlane.f32.xlu0 %v2030
    %v2032 = vpop.xlane.xlu0 %2031
    %v2033 = vsel %vm1852, %v1848, -inf
    %2034 = vmax.xlane.f32.xlu0 %v2033
    %v2035 = vpop.xlane.xlu0 %2034
    %v2036 = vsel %vm1852, %v1849, -inf
    %2037 = vmax.xlane.f32.xlu0 %v2036
    %v2038 = vpop.xlane.xlu0 %2037
    %v2039 = vsel %vm1852, %v1850, -inf
    %2040 = vmax.xlane.f32.xlu0 %v2039
    %v2041 = vpop.xlane.xlu0 %2040
    %v2042 = vsel %vm1852, %v1851, -inf
    %2043 = vmax.xlane.f32.xlu0 %v2042
    %v2044 = vpop.xlane.xlu0 %2043
    %v2045 = vsub.f32 %v1788, %v1855
    %v2046 = vsub.f32 %v1789, %v1858
    %v2047 = vsub.f32 %v1790, %v1861
    %v2048 = vsub.f32 %v1791, %v1864
    %v2049 = vsub.f32 %v1792, %v1867
    %v2050 = vsub.f32 %v1793, %v1870
    %v2051 = vsub.f32 %v1794, %v1873
    %v2052 = vsub.f32 %v1795, %v1876
    %v2053 = vsub.f32 %v1796, %v1879
    %v2054 = vsub.f32 %v1797, %v1882
    %v2055 = vsub.f32 %v1798, %v1885
    %v2056 = vsub.f32 %v1799, %v1888
    %v2057 = vsub.f32 %v1800, %v1891
    %v2058 = vsub.f32 %v1801, %v1894
    %v2059 = vsub.f32 %v1802, %v1897
    %v2060 = vsub.f32 %v1803, %v1900
    %v2061 = vsub.f32 %v1804, %v1903
    %v2062 = vsub.f32 %v1805, %v1906
    %v2063 = vsub.f32 %v1806, %v1909
    %v2064 = vsub.f32 %v1807, %v1912
    %v2065 = vsub.f32 %v1808, %v1915
    %v2066 = vsub.f32 %v1809, %v1918
    %v2067 = vsub.f32 %v1810, %v1921
    %v2068 = vsub.f32 %v1811, %v1924
    %v2069 = vsub.f32 %v1812, %v1927
    %v2070 = vsub.f32 %v1813, %v1930
    %v2071 = vsub.f32 %v1814, %v1933
    %v2072 = vsub.f32 %v1815, %v1936
    %v2073 = vsub.f32 %v1816, %v1939
    %v2074 = vsub.f32 %v1817, %v1942
    %v2075 = vsub.f32 %v1818, %v1945
    %v2076 = vsub.f32 %v1819, %v1948
    %v2077 = vsub.f32 %v1820, %v1951
    %v2078 = vsub.f32 %v1821, %v1954
    %v2079 = vsub.f32 %v1822, %v1957
    %v2080 = vsub.f32 %v1823, %v1960
    %v2081 = vsub.f32 %v1824, %v1963
    %v2082 = vsub.f32 %v1825, %v1966
    %v2083 = vsub.f32 %v1826, %v1969
    %v2084 = vsub.f32 %v1827, %v1972
    %v2085 = vsub.f32 %v1828, %v1975
    %v2086 = vsub.f32 %v1829, %v1978
    %v2087 = vsub.f32 %v1830, %v1981
    %v2088 = vsub.f32 %v1831, %v1984
    %v2089 = vsub.f32 %v1832, %v1987
    %v2090 = vsub.f32 %v1833, %v1990
    %v2091 = vsub.f32 %v1834, %v1993
    %v2092 = vsub.f32 %v1835, %v1996
    %v2093 = vsub.f32 %v1836, %v1999
    %v2094 = vsub.f32 %v1837, %v2002
    %v2095 = vsub.f32 %v1838, %v2005
    %v2096 = vsub.f32 %v1839, %v2008
    %v2097 = vsub.f32 %v1840, %v2011
    %v2098 = vsub.f32 %v1841, %v2014
    %v2099 = vsub.f32 %v1842, %v2017
    %v2100 = vsub.f32 %v1843, %v2020
    %v2101 = vsub.f32 %v1844, %v2023
    %v2102 = vsub.f32 %v1845, %v2026
    %v2103 = vsub.f32 %v1846, %v2029
    %v2104 = vsub.f32 %v1847, %v2032
    %v2105 = vsub.f32 %v1848, %v2035
    %v2106 = vsub.f32 %v1849, %v2038
    %v2107 = vsub.f32 %v1850, %v2041
    %v2108 = vsub.f32 %v1851, %v2044
    %v2109 = vmul.f32 %v2045, 1.442695
    %v2110 = vpow.pop %v2109
    %v2111 = vmul.f32 %v2046, 1.442695
    %v2112 = vpow.pop %v2111
    %v2113 = vmul.f32 %v2047, 1.442695
    %v2114 = vpow.pop %v2113
    %v2115 = vmul.f32 %v2048, 1.442695
    %v2116 = vpow.pop %v2115
    %v2117 = vmul.f32 %v2049, 1.442695
    %v2118 = vpow.pop %v2117
    %v2119 = vmul.f32 %v2050, 1.442695
    %v2120 = vpow.pop %v2119
    %v2121 = vmul.f32 %v2051, 1.442695
    %v2122 = vpow.pop %v2121
    %v2123 = vmul.f32 %v2052, 1.442695
    %v2124 = vpow.pop %v2123
    %v2125 = vmul.f32 %v2053, 1.442695
    %v2126 = vpow.pop %v2125
    %v2127 = vmul.f32 %v2054, 1.442695
    %v2128 = vpow.pop %v2127
    %v2129 = vmul.f32 %v2055, 1.442695
    %v2130 = vpow.pop %v2129
    %v2131 = vmul.f32 %v2056, 1.442695
    %v2132 = vpow.pop %v2131
    %v2133 = vmul.f32 %v2057, 1.442695
    %v2134 = vpow.pop %v2133
    %v2135 = vmul.f32 %v2058, 1.442695
    %v2136 = vpow.pop %v2135
    %v2137 = vmul.f32 %v2059, 1.442695
    %v2138 = vpow.pop %v2137
    %v2139 = vmul.f32 %v2060, 1.442695
    %v2140 = vpow.pop %v2139
    %v2141 = vmul.f32 %v2061, 1.442695
    %v2142 = vpow.pop %v2141
    %v2143 = vmul.f32 %v2062, 1.442695
    %v2144 = vpow.pop %v2143
    %v2145 = vmul.f32 %v2063, 1.442695
    %v2146 = vpow.pop %v2145
    %v2147 = vmul.f32 %v2064, 1.442695
    %v2148 = vpow.pop %v2147
    %v2149 = vmul.f32 %v2065, 1.442695
    %v2150 = vpow.pop %v2149
    %v2151 = vmul.f32 %v2066, 1.442695
    %v2152 = vpow.pop %v2151
    %v2153 = vmul.f32 %v2067, 1.442695
    %v2154 = vpow.pop %v2153
    %v2155 = vmul.f32 %v2068, 1.442695
    %v2156 = vpow.pop %v2155
    %v2157 = vmul.f32 %v2069, 1.442695
    %v2158 = vpow.pop %v2157
    %v2159 = vmul.f32 %v2070, 1.442695
    %v2160 = vpow.pop %v2159
    %v2161 = vmul.f32 %v2071, 1.442695
    %v2162 = vpow.pop %v2161
    %v2163 = vmul.f32 %v2072, 1.442695
    %v2164 = vpow.pop %v2163
    %v2165 = vmul.f32 %v2073, 1.442695
    %v2166 = vpow.pop %v2165
    %v2167 = vmul.f32 %v2074, 1.442695
    %v2168 = vpow.pop %v2167
    %v2169 = vmul.f32 %v2075, 1.442695
    %v2170 = vpow.pop %v2169
    %v2171 = vmul.f32 %v2076, 1.442695
    %v2172 = vpow.pop %v2171
    %v2173 = vmul.f32 %v2077, 1.442695
    %v2174 = vpow.pop %v2173
    %v2175 = vmul.f32 %v2078, 1.442695
    %v2176 = vpow.pop %v2175
    %v2177 = vmul.f32 %v2079, 1.442695
    %v2178 = vpow.pop %v2177
    %v2179 = vmul.f32 %v2080, 1.442695
    %v2180 = vpow.pop %v2179
    %v2181 = vmul.f32 %v2081, 1.442695
    %v2182 = vpow.pop %v2181
    %v2183 = vmul.f32 %v2082, 1.442695
    %v2184 = vpow.pop %v2183
    %v2185 = vmul.f32 %v2083, 1.442695
    %v2186 = vpow.pop %v2185
    %v2187 = vmul.f32 %v2084, 1.442695
    %v2188 = vpow.pop %v2187
    %v2189 = vmul.f32 %v2085, 1.442695
    %v2190 = vpow.pop %v2189
    %v2191 = vmul.f32 %v2086, 1.442695
    %v2192 = vpow.pop %v2191
    %v2193 = vmul.f32 %v2087, 1.442695
    %v2194 = vpow.pop %v2193
    %v2195 = vmul.f32 %v2088, 1.442695
    %v2196 = vpow.pop %v2195
    %v2197 = vmul.f32 %v2089, 1.442695
    %v2198 = vpow.pop %v2197
    %v2199 = vmul.f32 %v2090, 1.442695
    %v2200 = vpow.pop %v2199
    %v2201 = vmul.f32 %v2091, 1.442695
    %v2202 = vpow.pop %v2201
    %v2203 = vmul.f32 %v2092, 1.442695
    %v2204 = vpow.pop %v2203
    %v2205 = vmul.f32 %v2093, 1.442695
    %v2206 = vpow.pop %v2205
    %v2207 = vmul.f32 %v2094, 1.442695
    %v2208 = vpow.pop %v2207
    %v2209 = vmul.f32 %v2095, 1.442695
    %v2210 = vpow.pop %v2209
    %v2211 = vmul.f32 %v2096, 1.442695
    %v2212 = vpow.pop %v2211
    %v2213 = vmul.f32 %v2097, 1.442695
    %v2214 = vpow.pop %v2213
    %v2215 = vmul.f32 %v2098, 1.442695
    %v2216 = vpow.pop %v2215
    %v2217 = vmul.f32 %v2099, 1.442695
    %v2218 = vpow.pop %v2217
    %v2219 = vmul.f32 %v2100, 1.442695
    %v2220 = vpow.pop %v2219
    %v2221 = vmul.f32 %v2101, 1.442695
    %v2222 = vpow.pop %v2221
    %v2223 = vmul.f32 %v2102, 1.442695
    %v2224 = vpow.pop %v2223
    %v2225 = vmul.f32 %v2103, 1.442695
    %v2226 = vpow.pop %v2225
    %v2227 = vmul.f32 %v2104, 1.442695
    %v2228 = vpow.pop %v2227
    %v2229 = vmul.f32 %v2105, 1.442695
    %v2230 = vpow.pop %v2229
    %v2231 = vmul.f32 %v2106, 1.442695
    %v2232 = vpow.pop %v2231
    %v2233 = vmul.f32 %v2107, 1.442695
    %v2234 = vpow.pop %v2233
    %v2235 = vmul.f32 %v2108, 1.442695
    %v2236 = vpow.pop %v2235
    %v2237 = vsel %vm1852, %v2110, 0.0
    %2238 = vadd.xlane.f32.xlu0 %v2237
    %v2239 = vpop.xlane.xlu0 %2238
    %v2240 = vsel %vm1852, %v2112, 0.0
    %2241 = vadd.xlane.f32.xlu0 %v2240
    %v2242 = vpop.xlane.xlu0 %2241
    %v2243 = vsel %vm1852, %v2114, 0.0
    %2244 = vadd.xlane.f32.xlu0 %v2243
    %v2245 = vpop.xlane.xlu0 %2244
    %v2246 = vsel %vm1852, %v2116, 0.0
    %2247 = vadd.xlane.f32.xlu0 %v2246
    %v2248 = vpop.xlane.xlu0 %2247
    %v2249 = vsel %vm1852, %v2118, 0.0
    %2250 = vadd.xlane.f32.xlu0 %v2249
    %v2251 = vpop.xlane.xlu0 %2250
    %v2252 = vsel %vm1852, %v2120, 0.0
    %2253 = vadd.xlane.f32.xlu0 %v2252
    %v2254 = vpop.xlane.xlu0 %2253
    %v2255 = vsel %vm1852, %v2122, 0.0
    %2256 = vadd.xlane.f32.xlu0 %v2255
    %v2257 = vpop.xlane.xlu0 %2256
    %v2258 = vsel %vm1852, %v2124, 0.0
    %2259 = vadd.xlane.f32.xlu0 %v2258
    %v2260 = vpop.xlane.xlu0 %2259
    %v2261 = vsel %vm1852, %v2126, 0.0
    %2262 = vadd.xlane.f32.xlu0 %v2261
    %v2263 = vpop.xlane.xlu0 %2262
    %v2264 = vsel %vm1852, %v2128, 0.0
    %2265 = vadd.xlane.f32.xlu0 %v2264
    %v2266 = vpop.xlane.xlu0 %2265
    %v2267 = vsel %vm1852, %v2130, 0.0
    %2268 = vadd.xlane.f32.xlu0 %v2267
    %v2269 = vpop.xlane.xlu0 %2268
    %v2270 = vsel %vm1852, %v2132, 0.0
    %2271 = vadd.xlane.f32.xlu0 %v2270
    %v2272 = vpop.xlane.xlu0 %2271
    %v2273 = vsel %vm1852, %v2134, 0.0
    %2274 = vadd.xlane.f32.xlu0 %v2273
    %v2275 = vpop.xlane.xlu0 %2274
    %v2276 = vsel %vm1852, %v2136, 0.0
    %2277 = vadd.xlane.f32.xlu0 %v2276
    %v2278 = vpop.xlane.xlu0 %2277
    %v2279 = vsel %vm1852, %v2138, 0.0
    %2280 = vadd.xlane.f32.xlu0 %v2279
    %v2281 = vpop.xlane.xlu0 %2280
    %v2282 = vsel %vm1852, %v2140, 0.0
    %2283 = vadd.xlane.f32.xlu0 %v2282
    %v2284 = vpop.xlane.xlu0 %2283
    %v2285 = vsel %vm1852, %v2142, 0.0
    %2286 = vadd.xlane.f32.xlu0 %v2285
    %v2287 = vpop.xlane.xlu0 %2286
    %v2288 = vsel %vm1852, %v2144, 0.0
    %2289 = vadd.xlane.f32.xlu0 %v2288
    %v2290 = vpop.xlane.xlu0 %2289
    %v2291 = vsel %vm1852, %v2146, 0.0
    %2292 = vadd.xlane.f32.xlu0 %v2291
    %v2293 = vpop.xlane.xlu0 %2292
    %v2294 = vsel %vm1852, %v2148, 0.0
    %2295 = vadd.xlane.f32.xlu0 %v2294
    %v2296 = vpop.xlane.xlu0 %2295
    %v2297 = vsel %vm1852, %v2150, 0.0
    %2298 = vadd.xlane.f32.xlu0 %v2297
    %v2299 = vpop.xlane.xlu0 %2298
    %v2300 = vsel %vm1852, %v2152, 0.0
    %2301 = vadd.xlane.f32.xlu0 %v2300
    %v2302 = vpop.xlane.xlu0 %2301
    %v2303 = vsel %vm1852, %v2154, 0.0
    %2304 = vadd.xlane.f32.xlu0 %v2303
    %v2305 = vpop.xlane.xlu0 %2304
    %v2306 = vsel %vm1852, %v2156, 0.0
    %2307 = vadd.xlane.f32.xlu0 %v2306
    %v2308 = vpop.xlane.xlu0 %2307
    %v2309 = vsel %vm1852, %v2158, 0.0
    %2310 = vadd.xlane.f32.xlu0 %v2309
    %v2311 = vpop.xlane.xlu0 %2310
    %v2312 = vsel %vm1852, %v2160, 0.0
    %2313 = vadd.xlane.f32.xlu0 %v2312
    %v2314 = vpop.xlane.xlu0 %2313
    %v2315 = vsel %vm1852, %v2162, 0.0
    %2316 = vadd.xlane.f32.xlu0 %v2315
    %v2317 = vpop.xlane.xlu0 %2316
    %v2318 = vsel %vm1852, %v2164, 0.0
    %2319 = vadd.xlane.f32.xlu0 %v2318
    %v2320 = vpop.xlane.xlu0 %2319
    %v2321 = vsel %vm1852, %v2166, 0.0
    %2322 = vadd.xlane.f32.xlu0 %v2321
    %v2323 = vpop.xlane.xlu0 %2322
    %v2324 = vsel %vm1852, %v2168, 0.0
    %2325 = vadd.xlane.f32.xlu0 %v2324
    %v2326 = vpop.xlane.xlu0 %2325
    %v2327 = vsel %vm1852, %v2170, 0.0
    %2328 = vadd.xlane.f32.xlu0 %v2327
    %v2329 = vpop.xlane.xlu0 %2328
    %v2330 = vsel %vm1852, %v2172, 0.0
    %2331 = vadd.xlane.f32.xlu0 %v2330
    %v2332 = vpop.xlane.xlu0 %2331
    %v2333 = vsel %vm1852, %v2174, 0.0
    %2334 = vadd.xlane.f32.xlu0 %v2333
    %v2335 = vpop.xlane.xlu0 %2334
    %v2336 = vsel %vm1852, %v2176, 0.0
    %2337 = vadd.xlane.f32.xlu0 %v2336
    %v2338 = vpop.xlane.xlu0 %2337
    %v2339 = vsel %vm1852, %v2178, 0.0
    %2340 = vadd.xlane.f32.xlu0 %v2339
    %v2341 = vpop.xlane.xlu0 %2340
    %v2342 = vsel %vm1852, %v2180, 0.0
    %2343 = vadd.xlane.f32.xlu0 %v2342
    %v2344 = vpop.xlane.xlu0 %2343
    %v2345 = vsel %vm1852, %v2182, 0.0
    %2346 = vadd.xlane.f32.xlu0 %v2345
    %v2347 = vpop.xlane.xlu0 %2346
    %v2348 = vsel %vm1852, %v2184, 0.0
    %2349 = vadd.xlane.f32.xlu0 %v2348
    %v2350 = vpop.xlane.xlu0 %2349
    %v2351 = vsel %vm1852, %v2186, 0.0
    %2352 = vadd.xlane.f32.xlu0 %v2351
    %v2353 = vpop.xlane.xlu0 %2352
    %v2354 = vsel %vm1852, %v2188, 0.0
    %2355 = vadd.xlane.f32.xlu0 %v2354
    %v2356 = vpop.xlane.xlu0 %2355
    %v2357 = vsel %vm1852, %v2190, 0.0
    %2358 = vadd.xlane.f32.xlu0 %v2357
    %v2359 = vpop.xlane.xlu0 %2358
    %v2360 = vsel %vm1852, %v2192, 0.0
    %2361 = vadd.xlane.f32.xlu0 %v2360
    %v2362 = vpop.xlane.xlu0 %2361
    %v2363 = vsel %vm1852, %v2194, 0.0
    %2364 = vadd.xlane.f32.xlu0 %v2363
    %v2365 = vpop.xlane.xlu0 %2364
    %v2366 = vsel %vm1852, %v2196, 0.0
    %2367 = vadd.xlane.f32.xlu0 %v2366
    %v2368 = vpop.xlane.xlu0 %2367
    %v2369 = vsel %vm1852, %v2198, 0.0
    %2370 = vadd.xlane.f32.xlu0 %v2369
    %v2371 = vpop.xlane.xlu0 %2370
    %v2372 = vsel %vm1852, %v2200, 0.0
    %2373 = vadd.xlane.f32.xlu0 %v2372
    %v2374 = vpop.xlane.xlu0 %2373
    %v2375 = vsel %vm1852, %v2202, 0.0
    %2376 = vadd.xlane.f32.xlu0 %v2375
    %v2377 = vpop.xlane.xlu0 %2376
    %v2378 = vsel %vm1852, %v2204, 0.0
    %2379 = vadd.xlane.f32.xlu0 %v2378
    %v2380 = vpop.xlane.xlu0 %2379
    %v2381 = vsel %vm1852, %v2206, 0.0
    %2382 = vadd.xlane.f32.xlu0 %v2381
    %v2383 = vpop.xlane.xlu0 %2382
    %v2384 = vsel %vm1852, %v2208, 0.0
    %2385 = vadd.xlane.f32.xlu0 %v2384
    %v2386 = vpop.xlane.xlu0 %2385
    %v2387 = vsel %vm1852, %v2210, 0.0
    %2388 = vadd.xlane.f32.xlu0 %v2387
    %v2389 = vpop.xlane.xlu0 %2388
    %v2390 = vsel %vm1852, %v2212, 0.0
    %2391 = vadd.xlane.f32.xlu0 %v2390
    %v2392 = vpop.xlane.xlu0 %2391
    %v2393 = vsel %vm1852, %v2214, 0.0
    %2394 = vadd.xlane.f32.xlu0 %v2393
    %v2395 = vpop.xlane.xlu0 %2394
    %v2396 = vsel %vm1852, %v2216, 0.0
    %2397 = vadd.xlane.f32.xlu0 %v2396
    %v2398 = vpop.xlane.xlu0 %2397
    %v2399 = vsel %vm1852, %v2218, 0.0
    %2400 = vadd.xlane.f32.xlu0 %v2399
    %v2401 = vpop.xlane.xlu0 %2400
    %v2402 = vsel %vm1852, %v2220, 0.0
    %2403 = vadd.xlane.f32.xlu0 %v2402
    %v2404 = vpop.xlane.xlu0 %2403
    %v2405 = vsel %vm1852, %v2222, 0.0
    %2406 = vadd.xlane.f32.xlu0 %v2405
    %v2407 = vpop.xlane.xlu0 %2406
    %v2408 = vsel %vm1852, %v2224, 0.0
    %2409 = vadd.xlane.f32.xlu0 %v2408
    %v2410 = vpop.xlane.xlu0 %2409
    %v2411 = vsel %vm1852, %v2226, 0.0
    %2412 = vadd.xlane.f32.xlu0 %v2411
    %v2413 = vpop.xlane.xlu0 %2412
    %v2414 = vsel %vm1852, %v2228, 0.0
    %2415 = vadd.xlane.f32.xlu0 %v2414
    %v2416 = vpop.xlane.xlu0 %2415
    %v2417 = vsel %vm1852, %v2230, 0.0
    %2418 = vadd.xlane.f32.xlu0 %v2417
    %v2419 = vpop.xlane.xlu0 %2418
    %v2420 = vsel %vm1852, %v2232, 0.0
    %2421 = vadd.xlane.f32.xlu0 %v2420
    %v2422 = vpop.xlane.xlu0 %2421
    %v2423 = vsel %vm1852, %v2234, 0.0
    %2424 = vadd.xlane.f32.xlu0 %v2423
    %v2425 = vpop.xlane.xlu0 %2424
    %v2426 = vsel %vm1852, %v2236, 0.0
    %2427 = vadd.xlane.f32.xlu0 %v2426
    %v2428 = vpop.xlane.xlu0 %2427
    %v2429 = vrcp.pop %v2239
    %v2430 = vrcp.pop %v2242
    %v2431 = vrcp.pop %v2245
    %v2432 = vrcp.pop %v2248
    %v2433 = vrcp.pop %v2251
    %v2434 = vrcp.pop %v2254
    %v2435 = vrcp.pop %v2257
    %v2436 = vrcp.pop %v2260
    %v2437 = vrcp.pop %v2263
    %v2438 = vrcp.pop %v2266
    %v2439 = vrcp.pop %v2269
    %v2440 = vrcp.pop %v2272
    %v2441 = vrcp.pop %v2275
    %v2442 = vrcp.pop %v2278
    %v2443 = vrcp.pop %v2281
    %v2444 = vrcp.pop %v2284
    %v2445 = vrcp.pop %v2287
    %v2446 = vrcp.pop %v2290
    %v2447 = vrcp.pop %v2293
    %v2448 = vrcp.pop %v2296
    %v2449 = vrcp.pop %v2299
    %v2450 = vrcp.pop %v2302
    %v2451 = vrcp.pop %v2305
    %v2452 = vrcp.pop %v2308
    %v2453 = vrcp.pop %v2311
    %v2454 = vrcp.pop %v2314
    %v2455 = vrcp.pop %v2317
    %v2456 = vrcp.pop %v2320
    %v2457 = vrcp.pop %v2323
    %v2458 = vrcp.pop %v2326
    %v2459 = vrcp.pop %v2329
    %v2460 = vrcp.pop %v2332
    %v2461 = vrcp.pop %v2335
    %v2462 = vrcp.pop %v2338
    %v2463 = vrcp.pop %v2341
    %v2464 = vrcp.pop %v2344
    %v2465 = vrcp.pop %v2347
    %v2466 = vrcp.pop %v2350
    %v2467 = vrcp.pop %v2353
    %v2468 = vrcp.pop %v2356
    %v2469 = vrcp.pop %v2359
    %v2470 = vrcp.pop %v2362
    %v2471 = vrcp.pop %v2365
    %v2472 = vrcp.pop %v2368
    %v2473 = vrcp.pop %v2371
    %v2474 = vrcp.pop %v2374
    %v2475 = vrcp.pop %v2377
    %v2476 = vrcp.pop %v2380
    %v2477 = vrcp.pop %v2383
    %v2478 = vrcp.pop %v2386
    %v2479 = vrcp.pop %v2389
    %v2480 = vrcp.pop %v2392
    %v2481 = vrcp.pop %v2395
    %v2482 = vrcp.pop %v2398
    %v2483 = vrcp.pop %v2401
    %v2484 = vrcp.pop %v2404
    %v2485 = vrcp.pop %v2407
    %v2486 = vrcp.pop %v2410
    %v2487 = vrcp.pop %v2413
    %v2488 = vrcp.pop %v2416
    %v2489 = vrcp.pop %v2419
    %v2490 = vrcp.pop %v2422
    %v2491 = vrcp.pop %v2425
    %v2492 = vrcp.pop %v2428
    %v2493 = vmul.f32 %v2110, %v2429
    %v2494 = vmul.f32 %v2112, %v2430
    %v2495 = vmul.f32 %v2114, %v2431
    %v2496 = vmul.f32 %v2116, %v2432
    %v2497 = vmul.f32 %v2118, %v2433
    %v2498 = vmul.f32 %v2120, %v2434
    %v2499 = vmul.f32 %v2122, %v2435
    %v2500 = vmul.f32 %v2124, %v2436
    %v2501 = vmul.f32 %v2126, %v2437
    %v2502 = vmul.f32 %v2128, %v2438
    %v2503 = vmul.f32 %v2130, %v2439
    %v2504 = vmul.f32 %v2132, %v2440
    %v2505 = vmul.f32 %v2134, %v2441
    %v2506 = vmul.f32 %v2136, %v2442
    %v2507 = vmul.f32 %v2138, %v2443
    %v2508 = vmul.f32 %v2140, %v2444
    %v2509 = vmul.f32 %v2142, %v2445
    %v2510 = vmul.f32 %v2144, %v2446
    %v2511 = vmul.f32 %v2146, %v2447
    %v2512 = vmul.f32 %v2148, %v2448
    %v2513 = vmul.f32 %v2150, %v2449
    %v2514 = vmul.f32 %v2152, %v2450
    %v2515 = vmul.f32 %v2154, %v2451
    %v2516 = vmul.f32 %v2156, %v2452
    %v2517 = vmul.f32 %v2158, %v2453
    %v2518 = vmul.f32 %v2160, %v2454
    %v2519 = vmul.f32 %v2162, %v2455
    %v2520 = vmul.f32 %v2164, %v2456
    %v2521 = vmul.f32 %v2166, %v2457
    %v2522 = vmul.f32 %v2168, %v2458
    %v2523 = vmul.f32 %v2170, %v2459
    %v2524 = vmul.f32 %v2172, %v2460
    %v2525 = vmul.f32 %v2174, %v2461
    %v2526 = vmul.f32 %v2176, %v2462
    %v2527 = vmul.f32 %v2178, %v2463
    %v2528 = vmul.f32 %v2180, %v2464
    %v2529 = vmul.f32 %v2182, %v2465
    %v2530 = vmul.f32 %v2184, %v2466
    %v2531 = vmul.f32 %v2186, %v2467
    %v2532 = vmul.f32 %v2188, %v2468
    %v2533 = vmul.f32 %v2190, %v2469
    %v2534 = vmul.f32 %v2192, %v2470
    %v2535 = vmul.f32 %v2194, %v2471
    %v2536 = vmul.f32 %v2196, %v2472
    %v2537 = vmul.f32 %v2198, %v2473
    %v2538 = vmul.f32 %v2200, %v2474
    %v2539 = vmul.f32 %v2202, %v2475
    %v2540 = vmul.f32 %v2204, %v2476
    %v2541 = vmul.f32 %v2206, %v2477
    %v2542 = vmul.f32 %v2208, %v2478
    %v2543 = vmul.f32 %v2210, %v2479
    %v2544 = vmul.f32 %v2212, %v2480
    %v2545 = vmul.f32 %v2214, %v2481
    %v2546 = vmul.f32 %v2216, %v2482
    %v2547 = vmul.f32 %v2218, %v2483
    %v2548 = vmul.f32 %v2220, %v2484
    %v2549 = vmul.f32 %v2222, %v2485
    %v2550 = vmul.f32 %v2224, %v2486
    %v2551 = vmul.f32 %v2226, %v2487
    %v2552 = vmul.f32 %v2228, %v2488
    %v2553 = vmul.f32 %v2230, %v2489
    %v2554 = vmul.f32 %v2232, %v2490
    %v2555 = vmul.f32 %v2234, %v2491
    %v2556 = vmul.f32 %v2236, %v2492
    %v2558 = vsel %vm1852, %v2493, 0
    %v2561 = vsel %vm1852, %v2494, 0
    %v2564 = vsel %vm1852, %v2495, 0
    %v2567 = vsel %vm1852, %v2496, 0
    %v2570 = vsel %vm1852, %v2497, 0
    %v2573 = vsel %vm1852, %v2498, 0
    %v2576 = vsel %vm1852, %v2499, 0
    %v2579 = vsel %vm1852, %v2500, 0
    %2581 = vmatprep.subr.mxu0 0.0
    %2582 = vmatpush1.msra.mxu0 0.0
    %2583 = vmatprep.subr.mxu0 0.0
    %2584 = vmatpush1.msra.mxu0 0.0
    %2585 = vmatprep.subr.mxu0 0.0
    %2586 = vmatpush1.msra.mxu0 0.0
    %2587 = vmatprep.subr.mxu0 0.0
    %2588 = vmatpush1.msra.mxu0 0.0
    %2589 = vmatprep.subr.mxu0 0.0
    %2590 = vmatpush1.msra.mxu0 0.0
    %2591 = vmatprep.subr.mxu0 0.0
    %2592 = vmatpush1.msra.mxu0 0.0
    %2593 = vmatprep.subr.mxu0 0.0
    %2594 = vmatpush1.msra.mxu0 0.0
    %2595 = vmatprep.subr.mxu0 0.0
    %2596 = vmatpush1.msra.mxu0 0.0
    %2597 = vmatprep.subr.mxu0 0.0
    %2598 = vmatpush1.msra.mxu0 %v209
    %2599 = vmatprep.subr.mxu0 0.0
    %2600 = vmatpush1.msra.mxu0 %v203
    %2601 = vmatprep.subr.mxu0 0.0
    %2602 = vmatpush1.msra.mxu0 %v197
    %2603 = vmatprep.subr.mxu0 0.0
    %2604 = vmatpush1.msra.mxu0 %v191
    %2605 = vmatprep.subr.mxu0 0.0
    %2606 = vmatpush1.msra.mxu0 %v185
    %2607 = vmatprep.subr.mxu0 0.0
    %2608 = vmatpush1.msra.mxu0 %v179
    %2609 = vmatprep.subr.mxu0 0.0
    %2610 = vmatpush1.msra.mxu0 %v173
    %2611 = vmatprep.subr.mxu0 0.0
    %2612 = vmatpush1.msra.mxu0 %v167
    %2613 = vmatprep.subr.mxu0 0.0
    %2614 = vmatpush2.msra.mxu0 0.0
    %2615 = vmatprep.subr.mxu0 0.0
    %2616 = vmatpush2.msra.mxu0 0.0
    %2617 = vmatprep.subr.mxu0 0.0
    %2618 = vmatpush2.msra.mxu0 0.0
    %2619 = vmatprep.subr.mxu0 0.0
    %2620 = vmatpush2.msra.mxu0 0.0
    %2621 = vmatprep.subr.mxu0 0.0
    %2622 = vmatpush2.msra.mxu0 0.0
    %2623 = vmatprep.subr.mxu0 0.0
    %2624 = vmatpush2.msra.mxu0 0.0
    %2625 = vmatprep.subr.mxu0 0.0
    %2626 = vmatpush2.msra.mxu0 0.0
    %2627 = vmatprep.subr.mxu0 0.0
    %2628 = vmatpush2.msra.mxu0 0.0
    %2629 = vmatprep.subr.mxu0 0.0
    %2630 = vmatpush2.msra.mxu0 0.0
    %2631 = vmatprep.subr.mxu0 0.0
    %2632 = vmatpush2.msra.mxu0 0.0
    %2633 = vmatprep.subr.mxu0 0.0
    %2634 = vmatpush2.msra.mxu0 0.0
    %2635 = vmatprep.subr.mxu0 0.0
    %2636 = vmatpush2.msra.mxu0 0.0
    %2637 = vmatprep.subr.mxu0 0.0
    %2638 = vmatpush2.msra.mxu0 0.0
    %2639 = vmatprep.subr.mxu0 0.0
    %2640 = vmatpush2.msra.mxu0 0.0
    %2641 = vmatprep.subr.mxu0 0.0
    %2642 = vmatpush2.msra.mxu0 0.0
    %2643 = vmatprep.subr.mxu0 0.0
    %2644 = vmatpush2.msra.mxu0 0.0
    %2645 = vmatprep.mubr.f32.mxu0 0.0
    %2646 = vmatmul.mubr.f32.gmra.mxu0 %v2558
    %v2647 = vpop.f32.mrf.mxu0
    %v2648 = vadd.f32 0.0, %v2647
    %v2649 = vpop.f32.mrf.mxu0
    %2650 = vmatprep.mubr.f32.mxu0 0.0
    %2651 = vmatmul.mubr.f32.gmra.mxu0 %v2561
    %v2652 = vpop.f32.mrf.mxu0
    %v2653 = vadd.f32 0.0, %v2652
    %v2654 = vpop.f32.mrf.mxu0
    %2655 = vmatprep.mubr.f32.mxu0 0.0
    %2656 = vmatmul.mubr.f32.gmra.mxu0 %v2564
    %v2657 = vpop.f32.mrf.mxu0
    %v2658 = vadd.f32 0.0, %v2657
    %v2659 = vpop.f32.mrf.mxu0
    %2660 = vmatprep.mubr.f32.mxu0 0.0
    %2661 = vmatmul.mubr.f32.gmra.mxu0 %v2567
    %v2662 = vpop.f32.mrf.mxu0
    %v2663 = vadd.f32 0.0, %v2662
    %v2664 = vpop.f32.mrf.mxu0
    %2665 = vmatprep.mubr.f32.mxu0 0.0
    %2666 = vmatmul.mubr.f32.gmra.mxu0 %v2570
    %v2667 = vpop.f32.mrf.mxu0
    %v2668 = vadd.f32 0.0, %v2667
    %v2669 = vpop.f32.mrf.mxu0
    %2670 = vmatprep.mubr.f32.mxu0 0.0
    %2671 = vmatmul.mubr.f32.gmra.mxu0 %v2573
    %v2672 = vpop.f32.mrf.mxu0
    %v2673 = vadd.f32 0.0, %v2672
    %v2674 = vpop.f32.mrf.mxu0
    %2675 = vmatprep.mubr.f32.mxu0 0.0
    %2676 = vmatmul.mubr.f32.gmra.mxu0 %v2576
    %v2677 = vpop.f32.mrf.mxu0
    %v2678 = vadd.f32 0.0, %v2677
    %v2679 = vpop.f32.mrf.mxu0
    %2680 = vmatprep.mubr.f32.mxu0 0.0
    %2681 = vmatmul.mubr.f32.gmra.mxu0 %v2579
    %v2682 = vpop.f32.mrf.mxu0
    %v2683 = vadd.f32 0.0, %v2682
    %v2684 = vpop.f32.mrf.mxu0
    %2685 = vdwg.mxu0
    %v2687 = vsel %vm1852, %v2501, 0
    %v2690 = vsel %vm1852, %v2502, 0
    %v2693 = vsel %vm1852, %v2503, 0
    %v2696 = vsel %vm1852, %v2504, 0
    %v2699 = vsel %vm1852, %v2505, 0
    %v2702 = vsel %vm1852, %v2506, 0
    %v2705 = vsel %vm1852, %v2507, 0
    %v2708 = vsel %vm1852, %v2508, 0
    %2710 = vmatprep.subr.mxu0 0.0
    %2711 = vmatpush1.msra.mxu0 0.0
    %2712 = vmatprep.subr.mxu0 0.0
    %2713 = vmatpush1.msra.mxu0 0.0
    %2714 = vmatprep.subr.mxu0 0.0
    %2715 = vmatpush1.msra.mxu0 0.0
    %2716 = vmatprep.subr.mxu0 0.0
    %2717 = vmatpush1.msra.mxu0 0.0
    %2718 = vmatprep.subr.mxu0 0.0
    %2719 = vmatpush1.msra.mxu0 0.0
    %2720 = vmatprep.subr.mxu0 0.0
    %2721 = vmatpush1.msra.mxu0 0.0
    %2722 = vmatprep.subr.mxu0 0.0
    %2723 = vmatpush1.msra.mxu0 0.0
    %2724 = vmatprep.subr.mxu0 0.0
    %2725 = vmatpush1.msra.mxu0 0.0
    %2726 = vmatprep.subr.mxu0 0.0
    %2727 = vmatpush1.msra.mxu0 %v236
    %2728 = vmatprep.subr.mxu0 0.0
    %2729 = vmatpush1.msra.mxu0 %v234
    %2730 = vmatprep.subr.mxu0 0.0
    %2731 = vmatpush1.msra.mxu0 %v232
    %2732 = vmatprep.subr.mxu0 0.0
    %2733 = vmatpush1.msra.mxu0 %v230
    %2734 = vmatprep.subr.mxu0 0.0
    %2735 = vmatpush1.msra.mxu0 %v228
    %2736 = vmatprep.subr.mxu0 0.0
    %2737 = vmatpush1.msra.mxu0 %v226
    %2738 = vmatprep.subr.mxu0 0.0
    %2739 = vmatpush1.msra.mxu0 %v224
    %2740 = vmatprep.subr.mxu0 0.0
    %2741 = vmatpush1.msra.mxu0 %v222
    %2742 = vmatprep.subr.mxu0 0.0
    %2743 = vmatpush2.msra.mxu0 0.0
    %2744 = vmatprep.subr.mxu0 0.0
    %2745 = vmatpush2.msra.mxu0 0.0
    %2746 = vmatprep.subr.mxu0 0.0
    %2747 = vmatpush2.msra.mxu0 0.0
    %2748 = vmatprep.subr.mxu0 0.0
    %2749 = vmatpush2.msra.mxu0 0.0
    %2750 = vmatprep.subr.mxu0 0.0
    %2751 = vmatpush2.msra.mxu0 0.0
    %2752 = vmatprep.subr.mxu0 0.0
    %2753 = vmatpush2.msra.mxu0 0.0
    %2754 = vmatprep.subr.mxu0 0.0
    %2755 = vmatpush2.msra.mxu0 0.0
    %2756 = vmatprep.subr.mxu0 0.0
    %2757 = vmatpush2.msra.mxu0 0.0
    %2758 = vmatprep.subr.mxu0 0.0
    %2759 = vmatpush2.msra.mxu0 0.0
    %2760 = vmatprep.subr.mxu0 0.0
    %2761 = vmatpush2.msra.mxu0 0.0
    %2762 = vmatprep.subr.mxu0 0.0
    %2763 = vmatpush2.msra.mxu0 0.0
    %2764 = vmatprep.subr.mxu0 0.0
    %2765 = vmatpush2.msra.mxu0 0.0
    %2766 = vmatprep.subr.mxu0 0.0
    %2767 = vmatpush2.msra.mxu0 0.0
    %2768 = vmatprep.subr.mxu0 0.0
    %2769 = vmatpush2.msra.mxu0 0.0
    %2770 = vmatprep.subr.mxu0 0.0
    %2771 = vmatpush2.msra.mxu0 0.0
    %2772 = vmatprep.subr.mxu0 0.0
    %2773 = vmatpush2.msra.mxu0 0.0
    %2774 = vmatprep.mubr.f32.mxu0 0.0
    %2775 = vmatmul.mubr.f32.gmra.mxu0 %v2687
    %v2776 = vpop.f32.mrf.mxu0
    %v2777 = vadd.f32 0.0, %v2776
    %v2778 = vpop.f32.mrf.mxu0
    %2779 = vmatprep.mubr.f32.mxu0 0.0
    %2780 = vmatmul.mubr.f32.gmra.mxu0 %v2690
    %v2781 = vpop.f32.mrf.mxu0
    %v2782 = vadd.f32 0.0, %v2781
    %v2783 = vpop.f32.mrf.mxu0
    %2784 = vmatprep.mubr.f32.mxu0 0.0
    %2785 = vmatmul.mubr.f32.gmra.mxu0 %v2693
    %v2786 = vpop.f32.mrf.mxu0
    %v2787 = vadd.f32 0.0, %v2786
    %v2788 = vpop.f32.mrf.mxu0
    %2789 = vmatprep.mubr.f32.mxu0 0.0
    %2790 = vmatmul.mubr.f32.gmra.mxu0 %v2696
    %v2791 = vpop.f32.mrf.mxu0
    %v2792 = vadd.f32 0.0, %v2791
    %v2793 = vpop.f32.mrf.mxu0
    %2794 = vmatprep.mubr.f32.mxu0 0.0
    %2795 = vmatmul.mubr.f32.gmra.mxu0 %v2699
    %v2796 = vpop.f32.mrf.mxu0
    %v2797 = vadd.f32 0.0, %v2796
    %v2798 = vpop.f32.mrf.mxu0
    %2799 = vmatprep.mubr.f32.mxu0 0.0
    %2800 = vmatmul.mubr.f32.gmra.mxu0 %v2702
    %v2801 = vpop.f32.mrf.mxu0
    %v2802 = vadd.f32 0.0, %v2801
    %v2803 = vpop.f32.mrf.mxu0
    %2804 = vmatprep.mubr.f32.mxu0 0.0
    %2805 = vmatmul.mubr.f32.gmra.mxu0 %v2705
    %v2806 = vpop.f32.mrf.mxu0
    %v2807 = vadd.f32 0.0, %v2806
    %v2808 = vpop.f32.mrf.mxu0
    %2809 = vmatprep.mubr.f32.mxu0 0.0
    %2810 = vmatmul.mubr.f32.gmra.mxu0 %v2708
    %v2811 = vpop.f32.mrf.mxu0
    %v2812 = vadd.f32 0.0, %v2811
    %v2813 = vpop.f32.mrf.mxu0
    %2814 = vdwg.mxu0
    %v2816 = vsel %vm1852, %v2509, 0
    %v2819 = vsel %vm1852, %v2510, 0
    %v2822 = vsel %vm1852, %v2511, 0
    %v2825 = vsel %vm1852, %v2512, 0
    %v2828 = vsel %vm1852, %v2513, 0
    %v2831 = vsel %vm1852, %v2514, 0
    %v2834 = vsel %vm1852, %v2515, 0
    %v2837 = vsel %vm1852, %v2516, 0
    %2839 = vmatprep.subr.mxu0 0.0
    %2840 = vmatpush1.msra.mxu0 0.0
    %2841 = vmatprep.subr.mxu0 0.0
    %2842 = vmatpush1.msra.mxu0 0.0
    %2843 = vmatprep.subr.mxu0 0.0
    %2844 = vmatpush1.msra.mxu0 0.0
    %2845 = vmatprep.subr.mxu0 0.0
    %2846 = vmatpush1.msra.mxu0 0.0
    %2847 = vmatprep.subr.mxu0 0.0
    %2848 = vmatpush1.msra.mxu0 0.0
    %2849 = vmatprep.subr.mxu0 0.0
    %2850 = vmatpush1.msra.mxu0 0.0
    %2851 = vmatprep.subr.mxu0 0.0
    %2852 = vmatpush1.msra.mxu0 0.0
    %2853 = vmatprep.subr.mxu0 0.0
    %2854 = vmatpush1.msra.mxu0 0.0
    %2855 = vmatprep.subr.mxu0 0.0
    %2856 = vmatpush1.msra.mxu0 %v260
    %2857 = vmatprep.subr.mxu0 0.0
    %2858 = vmatpush1.msra.mxu0 %v258
    %2859 = vmatprep.subr.mxu0 0.0
    %2860 = vmatpush1.msra.mxu0 %v256
    %2861 = vmatprep.subr.mxu0 0.0
    %2862 = vmatpush1.msra.mxu0 %v254
    %2863 = vmatprep.subr.mxu0 0.0
    %2864 = vmatpush1.msra.mxu0 %v252
    %2865 = vmatprep.subr.mxu0 0.0
    %2866 = vmatpush1.msra.mxu0 %v250
    %2867 = vmatprep.subr.mxu0 0.0
    %2868 = vmatpush1.msra.mxu0 %v248
    %2869 = vmatprep.subr.mxu0 0.0
    %2870 = vmatpush1.msra.mxu0 %v246
    %2871 = vmatprep.subr.mxu0 0.0
    %2872 = vmatpush2.msra.mxu0 0.0
    %2873 = vmatprep.subr.mxu0 0.0
    %2874 = vmatpush2.msra.mxu0 0.0
    %2875 = vmatprep.subr.mxu0 0.0
    %2876 = vmatpush2.msra.mxu0 0.0
    %2877 = vmatprep.subr.mxu0 0.0
    %2878 = vmatpush2.msra.mxu0 0.0
    %2879 = vmatprep.subr.mxu0 0.0
    %2880 = vmatpush2.msra.mxu0 0.0
    %2881 = vmatprep.subr.mxu0 0.0
    %2882 = vmatpush2.msra.mxu0 0.0
    %2883 = vmatprep.subr.mxu0 0.0
    %2884 = vmatpush2.msra.mxu0 0.0
    %2885 = vmatprep.subr.mxu0 0.0
    %2886 = vmatpush2.msra.mxu0 0.0
    %2887 = vmatprep.subr.mxu0 0.0
    %2888 = vmatpush2.msra.mxu0 0.0
    %2889 = vmatprep.subr.mxu0 0.0
    %2890 = vmatpush2.msra.mxu0 0.0
    %2891 = vmatprep.subr.mxu0 0.0
    %2892 = vmatpush2.msra.mxu0 0.0
    %2893 = vmatprep.subr.mxu0 0.0
    %2894 = vmatpush2.msra.mxu0 0.0
    %2895 = vmatprep.subr.mxu0 0.0
    %2896 = vmatpush2.msra.mxu0 0.0
    %2897 = vmatprep.subr.mxu0 0.0
    %2898 = vmatpush2.msra.mxu0 0.0
    %2899 = vmatprep.subr.mxu0 0.0
    %2900 = vmatpush2.msra.mxu0 0.0
    %2901 = vmatprep.subr.mxu0 0.0
    %2902 = vmatpush2.msra.mxu0 0.0
    %2903 = vmatprep.mubr.f32.mxu0 0.0
    %2904 = vmatmul.mubr.f32.gmra.mxu0 %v2816
    %v2905 = vpop.f32.mrf.mxu0
    %v2906 = vadd.f32 0.0, %v2905
    %v2907 = vpop.f32.mrf.mxu0
    %2908 = vmatprep.mubr.f32.mxu0 0.0
    %2909 = vmatmul.mubr.f32.gmra.mxu0 %v2819
    %v2910 = vpop.f32.mrf.mxu0
    %v2911 = vadd.f32 0.0, %v2910
    %v2912 = vpop.f32.mrf.mxu0
    %2913 = vmatprep.mubr.f32.mxu0 0.0
    %2914 = vmatmul.mubr.f32.gmra.mxu0 %v2822
    %v2915 = vpop.f32.mrf.mxu0
    %v2916 = vadd.f32 0.0, %v2915
    %v2917 = vpop.f32.mrf.mxu0
    %2918 = vmatprep.mubr.f32.mxu0 0.0
    %2919 = vmatmul.mubr.f32.gmra.mxu0 %v2825
    %v2920 = vpop.f32.mrf.mxu0
    %v2921 = vadd.f32 0.0, %v2920
    %v2922 = vpop.f32.mrf.mxu0
    %2923 = vmatprep.mubr.f32.mxu0 0.0
    %2924 = vmatmul.mubr.f32.gmra.mxu0 %v2828
    %v2925 = vpop.f32.mrf.mxu0
    %v2926 = vadd.f32 0.0, %v2925
    %v2927 = vpop.f32.mrf.mxu0
    %2928 = vmatprep.mubr.f32.mxu0 0.0
    %2929 = vmatmul.mubr.f32.gmra.mxu0 %v2831
    %v2930 = vpop.f32.mrf.mxu0
    %v2931 = vadd.f32 0.0, %v2930
    %v2932 = vpop.f32.mrf.mxu0
    %2933 = vmatprep.mubr.f32.mxu0 0.0
    %2934 = vmatmul.mubr.f32.gmra.mxu0 %v2834
    %v2935 = vpop.f32.mrf.mxu0
    %v2936 = vadd.f32 0.0, %v2935
    %v2937 = vpop.f32.mrf.mxu0
    %2938 = vmatprep.mubr.f32.mxu0 0.0
    %2939 = vmatmul.mubr.f32.gmra.mxu0 %v2837
    %v2940 = vpop.f32.mrf.mxu0
    %v2941 = vadd.f32 0.0, %v2940
    %v2942 = vpop.f32.mrf.mxu0
    %2943 = vdwg.mxu0
    %v2945 = vsel %vm1852, %v2517, 0
    %v2948 = vsel %vm1852, %v2518, 0
    %v2951 = vsel %vm1852, %v2519, 0
    %v2954 = vsel %vm1852, %v2520, 0
    %v2957 = vsel %vm1852, %v2521, 0
    %v2960 = vsel %vm1852, %v2522, 0
    %v2963 = vsel %vm1852, %v2523, 0
    %v2966 = vsel %vm1852, %v2524, 0
    %2968 = vmatprep.subr.mxu0 0.0
    %2969 = vmatpush1.msra.mxu0 0.0
    %2970 = vmatprep.subr.mxu0 0.0
    %2971 = vmatpush1.msra.mxu0 0.0
    %2972 = vmatprep.subr.mxu0 0.0
    %2973 = vmatpush1.msra.mxu0 0.0
    %2974 = vmatprep.subr.mxu0 0.0
    %2975 = vmatpush1.msra.mxu0 0.0
    %2976 = vmatprep.subr.mxu0 0.0
    %2977 = vmatpush1.msra.mxu0 0.0
    %2978 = vmatprep.subr.mxu0 0.0
    %2979 = vmatpush1.msra.mxu0 0.0
    %2980 = vmatprep.subr.mxu0 0.0
    %2981 = vmatpush1.msra.mxu0 0.0
    %2982 = vmatprep.subr.mxu0 0.0
    %2983 = vmatpush1.msra.mxu0 0.0
    %2984 = vmatprep.subr.mxu0 0.0
    %2985 = vmatpush1.msra.mxu0 %v284
    %2986 = vmatprep.subr.mxu0 0.0
    %2987 = vmatpush1.msra.mxu0 %v282
    %2988 = vmatprep.subr.mxu0 0.0
    %2989 = vmatpush1.msra.mxu0 %v280
    %2990 = vmatprep.subr.mxu0 0.0
    %2991 = vmatpush1.msra.mxu0 %v278
    %2992 = vmatprep.subr.mxu0 0.0
    %2993 = vmatpush1.msra.mxu0 %v276
    %2994 = vmatprep.subr.mxu0 0.0
    %2995 = vmatpush1.msra.mxu0 %v274
    %2996 = vmatprep.subr.mxu0 0.0
    %2997 = vmatpush1.msra.mxu0 %v272
    %2998 = vmatprep.subr.mxu0 0.0
    %2999 = vmatpush1.msra.mxu0 %v270
    %3000 = vmatprep.subr.mxu0 0.0
    %3001 = vmatpush2.msra.mxu0 0.0
    %3002 = vmatprep.subr.mxu0 0.0
    %3003 = vmatpush2.msra.mxu0 0.0
    %3004 = vmatprep.subr.mxu0 0.0
    %3005 = vmatpush2.msra.mxu0 0.0
    %3006 = vmatprep.subr.mxu0 0.0
    %3007 = vmatpush2.msra.mxu0 0.0
    %3008 = vmatprep.subr.mxu0 0.0
    %3009 = vmatpush2.msra.mxu0 0.0
    %3010 = vmatprep.subr.mxu0 0.0
    %3011 = vmatpush2.msra.mxu0 0.0
    %3012 = vmatprep.subr.mxu0 0.0
    %3013 = vmatpush2.msra.mxu0 0.0
    %3014 = vmatprep.subr.mxu0 0.0
    %3015 = vmatpush2.msra.mxu0 0.0
    %3016 = vmatprep.subr.mxu0 0.0
    %3017 = vmatpush2.msra.mxu0 0.0
    %3018 = vmatprep.subr.mxu0 0.0
    %3019 = vmatpush2.msra.mxu0 0.0
    %3020 = vmatprep.subr.mxu0 0.0
    %3021 = vmatpush2.msra.mxu0 0.0
    %3022 = vmatprep.subr.mxu0 0.0
    %3023 = vmatpush2.msra.mxu0 0.0
    %3024 = vmatprep.subr.mxu0 0.0
    %3025 = vmatpush2.msra.mxu0 0.0
    %3026 = vmatprep.subr.mxu0 0.0
    %3027 = vmatpush2.msra.mxu0 0.0
    %3028 = vmatprep.subr.mxu0 0.0
    %3029 = vmatpush2.msra.mxu0 0.0
    %3030 = vmatprep.subr.mxu0 0.0
    %3031 = vmatpush2.msra.mxu0 0.0
    %3032 = vmatprep.mubr.f32.mxu0 0.0
    %3033 = vmatmul.mubr.f32.gmra.mxu0 %v2945
    %v3034 = vpop.f32.mrf.mxu0
    %v3035 = vadd.f32 0.0, %v3034
    %v3036 = vpop.f32.mrf.mxu0
    %3037 = vmatprep.mubr.f32.mxu0 0.0
    %3038 = vmatmul.mubr.f32.gmra.mxu0 %v2948
    %v3039 = vpop.f32.mrf.mxu0
    %v3040 = vadd.f32 0.0, %v3039
    %v3041 = vpop.f32.mrf.mxu0
    %3042 = vmatprep.mubr.f32.mxu0 0.0
    %3043 = vmatmul.mubr.f32.gmra.mxu0 %v2951
    %v3044 = vpop.f32.mrf.mxu0
    %v3045 = vadd.f32 0.0, %v3044
    %v3046 = vpop.f32.mrf.mxu0
    %3047 = vmatprep.mubr.f32.mxu0 0.0
    %3048 = vmatmul.mubr.f32.gmra.mxu0 %v2954
    %v3049 = vpop.f32.mrf.mxu0
    %v3050 = vadd.f32 0.0, %v3049
    %v3051 = vpop.f32.mrf.mxu0
    %3052 = vmatprep.mubr.f32.mxu0 0.0
    %3053 = vmatmul.mubr.f32.gmra.mxu0 %v2957
    %v3054 = vpop.f32.mrf.mxu0
    %v3055 = vadd.f32 0.0, %v3054
    %v3056 = vpop.f32.mrf.mxu0
    %3057 = vmatprep.mubr.f32.mxu0 0.0
    %3058 = vmatmul.mubr.f32.gmra.mxu0 %v2960
    %v3059 = vpop.f32.mrf.mxu0
    %v3060 = vadd.f32 0.0, %v3059
    %v3061 = vpop.f32.mrf.mxu0
    %3062 = vmatprep.mubr.f32.mxu0 0.0
    %3063 = vmatmul.mubr.f32.gmra.mxu0 %v2963
    %v3064 = vpop.f32.mrf.mxu0
    %v3065 = vadd.f32 0.0, %v3064
    %v3066 = vpop.f32.mrf.mxu0
    %3067 = vmatprep.mubr.f32.mxu0 0.0
    %3068 = vmatmul.mubr.f32.gmra.mxu0 %v2966
    %v3069 = vpop.f32.mrf.mxu0
    %v3070 = vadd.f32 0.0, %v3069
    %v3071 = vpop.f32.mrf.mxu0
    %3072 = vdwg.mxu0
    %v3074 = vsel %vm1852, %v2525, 0
    %v3077 = vsel %vm1852, %v2526, 0
    %v3080 = vsel %vm1852, %v2527, 0
    %v3083 = vsel %vm1852, %v2528, 0
    %v3086 = vsel %vm1852, %v2529, 0
    %v3089 = vsel %vm1852, %v2530, 0
    %v3092 = vsel %vm1852, %v2531, 0
    %v3095 = vsel %vm1852, %v2532, 0
    %3097 = vmatprep.subr.mxu0 0.0
    %3098 = vmatpush1.msra.mxu0 0.0
    %3099 = vmatprep.subr.mxu0 0.0
    %3100 = vmatpush1.msra.mxu0 0.0
    %3101 = vmatprep.subr.mxu0 0.0
    %3102 = vmatpush1.msra.mxu0 0.0
    %3103 = vmatprep.subr.mxu0 0.0
    %3104 = vmatpush1.msra.mxu0 0.0
    %3105 = vmatprep.subr.mxu0 0.0
    %3106 = vmatpush1.msra.mxu0 0.0
    %3107 = vmatprep.subr.mxu0 0.0
    %3108 = vmatpush1.msra.mxu0 0.0
    %3109 = vmatprep.subr.mxu0 0.0
    %3110 = vmatpush1.msra.mxu0 0.0
    %3111 = vmatprep.subr.mxu0 0.0
    %3112 = vmatpush1.msra.mxu0 0.0
    %3113 = vmatprep.subr.mxu0 0.0
    %3114 = vmatpush1.msra.mxu0 %v211
    %3115 = vmatprep.subr.mxu0 0.0
    %3116 = vmatpush1.msra.mxu0 %v205
    %3117 = vmatprep.subr.mxu0 0.0
    %3118 = vmatpush1.msra.mxu0 %v199
    %3119 = vmatprep.subr.mxu0 0.0
    %3120 = vmatpush1.msra.mxu0 %v193
    %3121 = vmatprep.subr.mxu0 0.0
    %3122 = vmatpush1.msra.mxu0 %v187
    %3123 = vmatprep.subr.mxu0 0.0
    %3124 = vmatpush1.msra.mxu0 %v181
    %3125 = vmatprep.subr.mxu0 0.0
    %3126 = vmatpush1.msra.mxu0 %v175
    %3127 = vmatprep.subr.mxu0 0.0
    %3128 = vmatpush1.msra.mxu0 %v169
    %3129 = vmatprep.subr.mxu0 0.0
    %3130 = vmatpush2.msra.mxu0 0.0
    %3131 = vmatprep.subr.mxu0 0.0
    %3132 = vmatpush2.msra.mxu0 0.0
    %3133 = vmatprep.subr.mxu0 0.0
    %3134 = vmatpush2.msra.mxu0 0.0
    %3135 = vmatprep.subr.mxu0 0.0
    %3136 = vmatpush2.msra.mxu0 0.0
    %3137 = vmatprep.subr.mxu0 0.0
    %3138 = vmatpush2.msra.mxu0 0.0
    %3139 = vmatprep.subr.mxu0 0.0
    %3140 = vmatpush2.msra.mxu0 0.0
    %3141 = vmatprep.subr.mxu0 0.0
    %3142 = vmatpush2.msra.mxu0 0.0
    %3143 = vmatprep.subr.mxu0 0.0
    %3144 = vmatpush2.msra.mxu0 0.0
    %3145 = vmatprep.subr.mxu0 0.0
    %3146 = vmatpush2.msra.mxu0 0.0
    %3147 = vmatprep.subr.mxu0 0.0
    %3148 = vmatpush2.msra.mxu0 0.0
    %3149 = vmatprep.subr.mxu0 0.0
    %3150 = vmatpush2.msra.mxu0 0.0
    %3151 = vmatprep.subr.mxu0 0.0
    %3152 = vmatpush2.msra.mxu0 0.0
    %3153 = vmatprep.subr.mxu0 0.0
    %3154 = vmatpush2.msra.mxu0 0.0
    %3155 = vmatprep.subr.mxu0 0.0
    %3156 = vmatpush2.msra.mxu0 0.0
    %3157 = vmatprep.subr.mxu0 0.0
    %3158 = vmatpush2.msra.mxu0 0.0
    %3159 = vmatprep.subr.mxu0 0.0
    %3160 = vmatpush2.msra.mxu0 0.0
    %3161 = vmatprep.mubr.f32.mxu0 0.0
    %3162 = vmatmul.mubr.f32.gmra.mxu0 %v3074
    %v3163 = vpop.f32.mrf.mxu0
    %v3164 = vadd.f32 0.0, %v3163
    %v3165 = vpop.f32.mrf.mxu0
    %3166 = vmatprep.mubr.f32.mxu0 0.0
    %3167 = vmatmul.mubr.f32.gmra.mxu0 %v3077
    %v3168 = vpop.f32.mrf.mxu0
    %v3169 = vadd.f32 0.0, %v3168
    %v3170 = vpop.f32.mrf.mxu0
    %3171 = vmatprep.mubr.f32.mxu0 0.0
    %3172 = vmatmul.mubr.f32.gmra.mxu0 %v3080
    %v3173 = vpop.f32.mrf.mxu0
    %v3174 = vadd.f32 0.0, %v3173
    %v3175 = vpop.f32.mrf.mxu0
    %3176 = vmatprep.mubr.f32.mxu0 0.0
    %3177 = vmatmul.mubr.f32.gmra.mxu0 %v3083
    %v3178 = vpop.f32.mrf.mxu0
    %v3179 = vadd.f32 0.0, %v3178
    %v3180 = vpop.f32.mrf.mxu0
    %3181 = vmatprep.mubr.f32.mxu0 0.0
    %3182 = vmatmul.mubr.f32.gmra.mxu0 %v3086
    %v3183 = vpop.f32.mrf.mxu0
    %v3184 = vadd.f32 0.0, %v3183
    %v3185 = vpop.f32.mrf.mxu0
    %3186 = vmatprep.mubr.f32.mxu0 0.0
    %3187 = vmatmul.mubr.f32.gmra.mxu0 %v3089
    %v3188 = vpop.f32.mrf.mxu0
    %v3189 = vadd.f32 0.0, %v3188
    %v3190 = vpop.f32.mrf.mxu0
    %3191 = vmatprep.mubr.f32.mxu0 0.0
    %3192 = vmatmul.mubr.f32.gmra.mxu0 %v3092
    %v3193 = vpop.f32.mrf.mxu0
    %v3194 = vadd.f32 0.0, %v3193
    %v3195 = vpop.f32.mrf.mxu0
    %3196 = vmatprep.mubr.f32.mxu0 0.0
    %3197 = vmatmul.mubr.f32.gmra.mxu0 %v3095
    %v3198 = vpop.f32.mrf.mxu0
    %v3199 = vadd.f32 0.0, %v3198
    %v3200 = vpop.f32.mrf.mxu0
    %3201 = vdwg.mxu0
    %v3203 = vsel %vm1852, %v2533, 0
    %v3206 = vsel %vm1852, %v2534, 0
    %v3209 = vsel %vm1852, %v2535, 0
    %v3212 = vsel %vm1852, %v2536, 0
    %v3215 = vsel %vm1852, %v2537, 0
    %v3218 = vsel %vm1852, %v2538, 0
    %v3221 = vsel %vm1852, %v2539, 0
    %v3224 = vsel %vm1852, %v2540, 0
    %3226 = vmatprep.subr.mxu0 0.0
    %3227 = vmatpush1.msra.mxu0 0.0
    %3228 = vmatprep.subr.mxu0 0.0
    %3229 = vmatpush1.msra.mxu0 0.0
    %3230 = vmatprep.subr.mxu0 0.0
    %3231 = vmatpush1.msra.mxu0 0.0
    %3232 = vmatprep.subr.mxu0 0.0
    %3233 = vmatpush1.msra.mxu0 0.0
    %3234 = vmatprep.subr.mxu0 0.0
    %3235 = vmatpush1.msra.mxu0 0.0
    %3236 = vmatprep.subr.mxu0 0.0
    %3237 = vmatpush1.msra.mxu0 0.0
    %3238 = vmatprep.subr.mxu0 0.0
    %3239 = vmatpush1.msra.mxu0 0.0
    %3240 = vmatprep.subr.mxu0 0.0
    %3241 = vmatpush1.msra.mxu0 0.0
    %3242 = vmatprep.subr.mxu0 0.0
    %3243 = vmatpush1.msra.mxu0 %v316
    %3244 = vmatprep.subr.mxu0 0.0
    %3245 = vmatpush1.msra.mxu0 %v314
    %3246 = vmatprep.subr.mxu0 0.0
    %3247 = vmatpush1.msra.mxu0 %v312
    %3248 = vmatprep.subr.mxu0 0.0
    %3249 = vmatpush1.msra.mxu0 %v310
    %3250 = vmatprep.subr.mxu0 0.0
    %3251 = vmatpush1.msra.mxu0 %v308
    %3252 = vmatprep.subr.mxu0 0.0
    %3253 = vmatpush1.msra.mxu0 %v306
    %3254 = vmatprep.subr.mxu0 0.0
    %3255 = vmatpush1.msra.mxu0 %v304
    %3256 = vmatprep.subr.mxu0 0.0
    %3257 = vmatpush1.msra.mxu0 %v302
    %3258 = vmatprep.subr.mxu0 0.0
    %3259 = vmatpush2.msra.mxu0 0.0
    %3260 = vmatprep.subr.mxu0 0.0
    %3261 = vmatpush2.msra.mxu0 0.0
    %3262 = vmatprep.subr.mxu0 0.0
    %3263 = vmatpush2.msra.mxu0 0.0
    %3264 = vmatprep.subr.mxu0 0.0
    %3265 = vmatpush2.msra.mxu0 0.0
    %3266 = vmatprep.subr.mxu0 0.0
    %3267 = vmatpush2.msra.mxu0 0.0
    %3268 = vmatprep.subr.mxu0 0.0
    %3269 = vmatpush2.msra.mxu0 0.0
    %3270 = vmatprep.subr.mxu0 0.0
    %3271 = vmatpush2.msra.mxu0 0.0
    %3272 = vmatprep.subr.mxu0 0.0
    %3273 = vmatpush2.msra.mxu0 0.0
    %3274 = vmatprep.subr.mxu0 0.0
    %3275 = vmatpush2.msra.mxu0 0.0
    %3276 = vmatprep.subr.mxu0 0.0
    %3277 = vmatpush2.msra.mxu0 0.0
    %3278 = vmatprep.subr.mxu0 0.0
    %3279 = vmatpush2.msra.mxu0 0.0
    %3280 = vmatprep.subr.mxu0 0.0
    %3281 = vmatpush2.msra.mxu0 0.0
    %3282 = vmatprep.subr.mxu0 0.0
    %3283 = vmatpush2.msra.mxu0 0.0
    %3284 = vmatprep.subr.mxu0 0.0
    %3285 = vmatpush2.msra.mxu0 0.0
    %3286 = vmatprep.subr.mxu0 0.0
    %3287 = vmatpush2.msra.mxu0 0.0
    %3288 = vmatprep.subr.mxu0 0.0
    %3289 = vmatpush2.msra.mxu0 0.0
    %3290 = vmatprep.mubr.f32.mxu0 0.0
    %3291 = vmatmul.mubr.f32.gmra.mxu0 %v3203
    %v3292 = vpop.f32.mrf.mxu0
    %v3293 = vadd.f32 0.0, %v3292
    %v3294 = vpop.f32.mrf.mxu0
    %3295 = vmatprep.mubr.f32.mxu0 0.0
    %3296 = vmatmul.mubr.f32.gmra.mxu0 %v3206
    %v3297 = vpop.f32.mrf.mxu0
    %v3298 = vadd.f32 0.0, %v3297
    %v3299 = vpop.f32.mrf.mxu0
    %3300 = vmatprep.mubr.f32.mxu0 0.0
    %3301 = vmatmul.mubr.f32.gmra.mxu0 %v3209
    %v3302 = vpop.f32.mrf.mxu0
    %v3303 = vadd.f32 0.0, %v3302
    %v3304 = vpop.f32.mrf.mxu0
    %3305 = vmatprep.mubr.f32.mxu0 0.0
    %3306 = vmatmul.mubr.f32.gmra.mxu0 %v3212
    %v3307 = vpop.f32.mrf.mxu0
    %v3308 = vadd.f32 0.0, %v3307
    %v3309 = vpop.f32.mrf.mxu0
    %3310 = vmatprep.mubr.f32.mxu0 0.0
    %3311 = vmatmul.mubr.f32.gmra.mxu0 %v3215
    %v3312 = vpop.f32.mrf.mxu0
    %v3313 = vadd.f32 0.0, %v3312
    %v3314 = vpop.f32.mrf.mxu0
    %3315 = vmatprep.mubr.f32.mxu0 0.0
    %3316 = vmatmul.mubr.f32.gmra.mxu0 %v3218
    %v3317 = vpop.f32.mrf.mxu0
    %v3318 = vadd.f32 0.0, %v3317
    %v3319 = vpop.f32.mrf.mxu0
    %3320 = vmatprep.mubr.f32.mxu0 0.0
    %3321 = vmatmul.mubr.f32.gmra.mxu0 %v3221
    %v3322 = vpop.f32.mrf.mxu0
    %v3323 = vadd.f32 0.0, %v3322
    %v3324 = vpop.f32.mrf.mxu0
    %3325 = vmatprep.mubr.f32.mxu0 0.0
    %3326 = vmatmul.mubr.f32.gmra.mxu0 %v3224
    %v3327 = vpop.f32.mrf.mxu0
    %v3328 = vadd.f32 0.0, %v3327
    %v3329 = vpop.f32.mrf.mxu0
    %3330 = vdwg.mxu0
    %v3332 = vsel %vm1852, %v2541, 0
    %v3335 = vsel %vm1852, %v2542, 0
    %v3338 = vsel %vm1852, %v2543, 0
    %v3341 = vsel %vm1852, %v2544, 0
    %v3344 = vsel %vm1852, %v2545, 0
    %v3347 = vsel %vm1852, %v2546, 0
    %v3350 = vsel %vm1852, %v2547, 0
    %v3353 = vsel %vm1852, %v2548, 0
    %3355 = vmatprep.subr.mxu0 0.0
    %3356 = vmatpush1.msra.mxu0 0.0
    %3357 = vmatprep.subr.mxu0 0.0
    %3358 = vmatpush1.msra.mxu0 0.0
    %3359 = vmatprep.subr.mxu0 0.0
    %3360 = vmatpush1.msra.mxu0 0.0
    %3361 = vmatprep.subr.mxu0 0.0
    %3362 = vmatpush1.msra.mxu0 0.0
    %3363 = vmatprep.subr.mxu0 0.0
    %3364 = vmatpush1.msra.mxu0 0.0
    %3365 = vmatprep.subr.mxu0 0.0
    %3366 = vmatpush1.msra.mxu0 0.0
    %3367 = vmatprep.subr.mxu0 0.0
    %3368 = vmatpush1.msra.mxu0 0.0
    %3369 = vmatprep.subr.mxu0 0.0
    %3370 = vmatpush1.msra.mxu0 0.0
    %3371 = vmatprep.subr.mxu0 0.0
    %3372 = vmatpush1.msra.mxu0 %v340
    %3373 = vmatprep.subr.mxu0 0.0
    %3374 = vmatpush1.msra.mxu0 %v338
    %3375 = vmatprep.subr.mxu0 0.0
    %3376 = vmatpush1.msra.mxu0 %v336
    %3377 = vmatprep.subr.mxu0 0.0
    %3378 = vmatpush1.msra.mxu0 %v334
    %3379 = vmatprep.subr.mxu0 0.0
    %3380 = vmatpush1.msra.mxu0 %v332
    %3381 = vmatprep.subr.mxu0 0.0
    %3382 = vmatpush1.msra.mxu0 %v330
    %3383 = vmatprep.subr.mxu0 0.0
    %3384 = vmatpush1.msra.mxu0 %v328
    %3385 = vmatprep.subr.mxu0 0.0
    %3386 = vmatpush1.msra.mxu0 %v326
    %3387 = vmatprep.subr.mxu0 0.0
    %3388 = vmatpush2.msra.mxu0 0.0
    %3389 = vmatprep.subr.mxu0 0.0
    %3390 = vmatpush2.msra.mxu0 0.0
    %3391 = vmatprep.subr.mxu0 0.0
    %3392 = vmatpush2.msra.mxu0 0.0
    %3393 = vmatprep.subr.mxu0 0.0
    %3394 = vmatpush2.msra.mxu0 0.0
    %3395 = vmatprep.subr.mxu0 0.0
    %3396 = vmatpush2.msra.mxu0 0.0
    %3397 = vmatprep.subr.mxu0 0.0
    %3398 = vmatpush2.msra.mxu0 0.0
    %3399 = vmatprep.subr.mxu0 0.0
    %3400 = vmatpush2.msra.mxu0 0.0
    %3401 = vmatprep.subr.mxu0 0.0
    %3402 = vmatpush2.msra.mxu0 0.0
    %3403 = vmatprep.subr.mxu0 0.0
    %3404 = vmatpush2.msra.mxu0 0.0
    %3405 = vmatprep.subr.mxu0 0.0
    %3406 = vmatpush2.msra.mxu0 0.0
    %3407 = vmatprep.subr.mxu0 0.0
    %3408 = vmatpush2.msra.mxu0 0.0
    %3409 = vmatprep.subr.mxu0 0.0
    %3410 = vmatpush2.msra.mxu0 0.0
    %3411 = vmatprep.subr.mxu0 0.0
    %3412 = vmatpush2.msra.mxu0 0.0
    %3413 = vmatprep.subr.mxu0 0.0
    %3414 = vmatpush2.msra.mxu0 0.0
    %3415 = vmatprep.subr.mxu0 0.0
    %3416 = vmatpush2.msra.mxu0 0.0
    %3417 = vmatprep.subr.mxu0 0.0
    %3418 = vmatpush2.msra.mxu0 0.0
    %3419 = vmatprep.mubr.f32.mxu0 0.0
    %3420 = vmatmul.mubr.f32.gmra.mxu0 %v3332
    %v3421 = vpop.f32.mrf.mxu0
    %v3422 = vadd.f32 0.0, %v3421
    %v3423 = vpop.f32.mrf.mxu0
    %3424 = vmatprep.mubr.f32.mxu0 0.0
    %3425 = vmatmul.mubr.f32.gmra.mxu0 %v3335
    %v3426 = vpop.f32.mrf.mxu0
    %v3427 = vadd.f32 0.0, %v3426
    %v3428 = vpop.f32.mrf.mxu0
    %3429 = vmatprep.mubr.f32.mxu0 0.0
    %3430 = vmatmul.mubr.f32.gmra.mxu0 %v3338
    %v3431 = vpop.f32.mrf.mxu0
    %v3432 = vadd.f32 0.0, %v3431
    %v3433 = vpop.f32.mrf.mxu0
    %3434 = vmatprep.mubr.f32.mxu0 0.0
    %3435 = vmatmul.mubr.f32.gmra.mxu0 %v3341
    %v3436 = vpop.f32.mrf.mxu0
    %v3437 = vadd.f32 0.0, %v3436
    %v3438 = vpop.f32.mrf.mxu0
    %3439 = vmatprep.mubr.f32.mxu0 0.0
    %3440 = vmatmul.mubr.f32.gmra.mxu0 %v3344
    %v3441 = vpop.f32.mrf.mxu0
    %v3442 = vadd.f32 0.0, %v3441
    %v3443 = vpop.f32.mrf.mxu0
    %3444 = vmatprep.mubr.f32.mxu0 0.0
    %3445 = vmatmul.mubr.f32.gmra.mxu0 %v3347
    %v3446 = vpop.f32.mrf.mxu0
    %v3447 = vadd.f32 0.0, %v3446
    %v3448 = vpop.f32.mrf.mxu0
    %3449 = vmatprep.mubr.f32.mxu0 0.0
    %3450 = vmatmul.mubr.f32.gmra.mxu0 %v3350
    %v3451 = vpop.f32.mrf.mxu0
    %v3452 = vadd.f32 0.0, %v3451
    %v3453 = vpop.f32.mrf.mxu0
    %3454 = vmatprep.mubr.f32.mxu0 0.0
    %3455 = vmatmul.mubr.f32.gmra.mxu0 %v3353
    %v3456 = vpop.f32.mrf.mxu0
    %v3457 = vadd.f32 0.0, %v3456
    %v3458 = vpop.f32.mrf.mxu0
    %3459 = vdwg.mxu0
    %v3461 = vsel %vm1852, %v2549, 0
    %v3464 = vsel %vm1852, %v2550, 0
    %v3467 = vsel %vm1852, %v2551, 0
    %v3470 = vsel %vm1852, %v2552, 0
    %v3473 = vsel %vm1852, %v2553, 0
    %v3476 = vsel %vm1852, %v2554, 0
    %v3479 = vsel %vm1852, %v2555, 0
    %v3482 = vsel %vm1852, %v2556, 0
    %3484 = vmatprep.subr.mxu0 0.0
    %3485 = vmatpush1.msra.mxu0 0.0
    %3486 = vmatprep.subr.mxu0 0.0
    %3487 = vmatpush1.msra.mxu0 0.0
    %3488 = vmatprep.subr.mxu0 0.0
    %3489 = vmatpush1.msra.mxu0 0.0
    %3490 = vmatprep.subr.mxu0 0.0
    %3491 = vmatpush1.msra.mxu0 0.0
    %3492 = vmatprep.subr.mxu0 0.0
    %3493 = vmatpush1.msra.mxu0 0.0
    %3494 = vmatprep.subr.mxu0 0.0
    %3495 = vmatpush1.msra.mxu0 0.0
    %3496 = vmatprep.subr.mxu0 0.0
    %3497 = vmatpush1.msra.mxu0 0.0
    %3498 = vmatprep.subr.mxu0 0.0
    %3499 = vmatpush1.msra.mxu0 0.0
    %3500 = vmatprep.subr.mxu0 0.0
    %3501 = vmatpush1.msra.mxu0 %v364
    %3502 = vmatprep.subr.mxu0 0.0
    %3503 = vmatpush1.msra.mxu0 %v362
    %3504 = vmatprep.subr.mxu0 0.0
    %3505 = vmatpush1.msra.mxu0 %v360
    %3506 = vmatprep.subr.mxu0 0.0
    %3507 = vmatpush1.msra.mxu0 %v358
    %3508 = vmatprep.subr.mxu0 0.0
    %3509 = vmatpush1.msra.mxu0 %v356
    %3510 = vmatprep.subr.mxu0 0.0
    %3511 = vmatpush1.msra.mxu0 %v354
    %3512 = vmatprep.subr.mxu0 0.0
    %3513 = vmatpush1.msra.mxu0 %v352
    %3514 = vmatprep.subr.mxu0 0.0
    %3515 = vmatpush1.msra.mxu0 %v350
    %3516 = vmatprep.subr.mxu0 0.0
    %3517 = vmatpush2.msra.mxu0 0.0
    %3518 = vmatprep.subr.mxu0 0.0
    %3519 = vmatpush2.msra.mxu0 0.0
    %3520 = vmatprep.subr.mxu0 0.0
    %3521 = vmatpush2.msra.mxu0 0.0
    %3522 = vmatprep.subr.mxu0 0.0
    %3523 = vmatpush2.msra.mxu0 0.0
    %3524 = vmatprep.subr.mxu0 0.0
    %3525 = vmatpush2.msra.mxu0 0.0
    %3526 = vmatprep.subr.mxu0 0.0
    %3527 = vmatpush2.msra.mxu0 0.0
    %3528 = vmatprep.subr.mxu0 0.0
    %3529 = vmatpush2.msra.mxu0 0.0
    %3530 = vmatprep.subr.mxu0 0.0
    %3531 = vmatpush2.msra.mxu0 0.0
    %3532 = vmatprep.subr.mxu0 0.0
    %3533 = vmatpush2.msra.mxu0 0.0
    %3534 = vmatprep.subr.mxu0 0.0
    %3535 = vmatpush2.msra.mxu0 0.0
    %3536 = vmatprep.subr.mxu0 0.0
    %3537 = vmatpush2.msra.mxu0 0.0
    %3538 = vmatprep.subr.mxu0 0.0
    %3539 = vmatpush2.msra.mxu0 0.0
    %3540 = vmatprep.subr.mxu0 0.0
    %3541 = vmatpush2.msra.mxu0 0.0
    %3542 = vmatprep.subr.mxu0 0.0
    %3543 = vmatpush2.msra.mxu0 0.0
    %3544 = vmatprep.subr.mxu0 0.0
    %3545 = vmatpush2.msra.mxu0 0.0
    %3546 = vmatprep.subr.mxu0 0.0
    %3547 = vmatpush2.msra.mxu0 0.0
    %3548 = vmatprep.mubr.f32.mxu0 0.0
    %3549 = vmatmul.mubr.f32.gmra.mxu0 %v3461
    %v3550 = vpop.f32.mrf.mxu0
    %v3551 = vadd.f32 0.0, %v3550
    %v3552 = vpop.f32.mrf.mxu0
    %3553 = vmatprep.mubr.f32.mxu0 0.0
    %3554 = vmatmul.mubr.f32.gmra.mxu0 %v3464
    %v3555 = vpop.f32.mrf.mxu0
    %v3556 = vadd.f32 0.0, %v3555
    %v3557 = vpop.f32.mrf.mxu0
    %3558 = vmatprep.mubr.f32.mxu0 0.0
    %3559 = vmatmul.mubr.f32.gmra.mxu0 %v3467
    %v3560 = vpop.f32.mrf.mxu0
    %v3561 = vadd.f32 0.0, %v3560
    %v3562 = vpop.f32.mrf.mxu0
    %3563 = vmatprep.mubr.f32.mxu0 0.0
    %3564 = vmatmul.mubr.f32.gmra.mxu0 %v3470
    %v3565 = vpop.f32.mrf.mxu0
    %v3566 = vadd.f32 0.0, %v3565
    %v3567 = vpop.f32.mrf.mxu0
    %3568 = vmatprep.mubr.f32.mxu0 0.0
    %3569 = vmatmul.mubr.f32.gmra.mxu0 %v3473
    %v3570 = vpop.f32.mrf.mxu0
    %v3571 = vadd.f32 0.0, %v3570
    %v3572 = vpop.f32.mrf.mxu0
    %3573 = vmatprep.mubr.f32.mxu0 0.0
    %3574 = vmatmul.mubr.f32.gmra.mxu0 %v3476
    %v3575 = vpop.f32.mrf.mxu0
    %v3576 = vadd.f32 0.0, %v3575
    %v3577 = vpop.f32.mrf.mxu0
    %3578 = vmatprep.mubr.f32.mxu0 0.0
    %3579 = vmatmul.mubr.f32.gmra.mxu0 %v3479
    %v3580 = vpop.f32.mrf.mxu0
    %v3581 = vadd.f32 0.0, %v3580
    %v3582 = vpop.f32.mrf.mxu0
    %3583 = vmatprep.mubr.f32.mxu0 0.0
    %3584 = vmatmul.mubr.f32.gmra.mxu0 %v3482
    %v3585 = vpop.f32.mrf.mxu0
    %v3586 = vadd.f32 0.0, %v3585
    %v3587 = vpop.f32.mrf.mxu0
    %3588 = vdwg.mxu0
    %v3589 = vsel %vm579, %v2648, 0.0
    %v3590 = vsel %vm579, %v2777, 0.0
    %v3591 = vadd.f32 %v3589, %v3590
    %v3592 = vsel %vm579, %v2906, 0.0
    %v3593 = vadd.f32 %v3591, %v3592
    %v3594 = vsel %vm579, %v3035, 0.0
    %v3595 = vadd.f32 %v3593, %v3594
    %v3596 = vsel %vm579, %v3164, 0.0
    %v3597 = vadd.f32 %v3595, %v3596
    %v3598 = vsel %vm579, %v3293, 0.0
    %v3599 = vadd.f32 %v3597, %v3598
    %v3600 = vsel %vm579, %v3422, 0.0
    %v3601 = vadd.f32 %v3599, %v3600
    %v3602 = vsel %vm579, %v3551, 0.0
    %v3603 = vadd.f32 %v3601, %v3602
    %v3604 = vsel %vm579, %v2653, 0.0
    %v3605 = vsel %vm579, %v2782, 0.0
    %v3606 = vadd.f32 %v3604, %v3605
    %v3607 = vsel %vm579, %v2911, 0.0
    %v3608 = vadd.f32 %v3606, %v3607
    %v3609 = vsel %vm579, %v3040, 0.0
    %v3610 = vadd.f32 %v3608, %v3609
    %v3611 = vsel %vm579, %v3169, 0.0
    %v3612 = vadd.f32 %v3610, %v3611
    %v3613 = vsel %vm579, %v3298, 0.0
    %v3614 = vadd.f32 %v3612, %v3613
    %v3615 = vsel %vm579, %v3427, 0.0
    %v3616 = vadd.f32 %v3614, %v3615
    %v3617 = vsel %vm579, %v3556, 0.0
    %v3618 = vadd.f32 %v3616, %v3617
    %v3619 = vsel %vm579, %v2658, 0.0
    %v3620 = vsel %vm579, %v2787, 0.0
    %v3621 = vadd.f32 %v3619, %v3620
    %v3622 = vsel %vm579, %v2916, 0.0
    %v3623 = vadd.f32 %v3621, %v3622
    %v3624 = vsel %vm579, %v3045, 0.0
    %v3625 = vadd.f32 %v3623, %v3624
    %v3626 = vsel %vm579, %v3174, 0.0
    %v3627 = vadd.f32 %v3625, %v3626
    %v3628 = vsel %vm579, %v3303, 0.0
    %v3629 = vadd.f32 %v3627, %v3628
    %v3630 = vsel %vm579, %v3432, 0.0
    %v3631 = vadd.f32 %v3629, %v3630
    %v3632 = vsel %vm579, %v3561, 0.0
    %v3633 = vadd.f32 %v3631, %v3632
    %v3634 = vsel %vm579, %v2663, 0.0
    %v3635 = vsel %vm579, %v2792, 0.0
    %v3636 = vadd.f32 %v3634, %v3635
    %v3637 = vsel %vm579, %v2921, 0.0
    %v3638 = vadd.f32 %v3636, %v3637
    %v3639 = vsel %vm579, %v3050, 0.0
    %v3640 = vadd.f32 %v3638, %v3639
    %v3641 = vsel %vm579, %v3179, 0.0
    %v3642 = vadd.f32 %v3640, %v3641
    %v3643 = vsel %vm579, %v3308, 0.0
    %v3644 = vadd.f32 %v3642, %v3643
    %v3645 = vsel %vm579, %v3437, 0.0
    %v3646 = vadd.f32 %v3644, %v3645
    %v3647 = vsel %vm579, %v3566, 0.0
    %v3648 = vadd.f32 %v3646, %v3647
    %v3649 = vsel %vm579, %v2668, 0.0
    %v3650 = vsel %vm579, %v2797, 0.0
    %v3651 = vadd.f32 %v3649, %v3650
    %v3652 = vsel %vm579, %v2926, 0.0
    %v3653 = vadd.f32 %v3651, %v3652
    %v3654 = vsel %vm579, %v3055, 0.0
    %v3655 = vadd.f32 %v3653, %v3654
    %v3656 = vsel %vm579, %v3184, 0.0
    %v3657 = vadd.f32 %v3655, %v3656
    %v3658 = vsel %vm579, %v3313, 0.0
    %v3659 = vadd.f32 %v3657, %v3658
    %v3660 = vsel %vm579, %v3442, 0.0
    %v3661 = vadd.f32 %v3659, %v3660
    %v3662 = vsel %vm579, %v3571, 0.0
    %v3663 = vadd.f32 %v3661, %v3662
    %v3664 = vsel %vm579, %v2673, 0.0
    %v3665 = vsel %vm579, %v2802, 0.0
    %v3666 = vadd.f32 %v3664, %v3665
    %v3667 = vsel %vm579, %v2931, 0.0
    %v3668 = vadd.f32 %v3666, %v3667
    %v3669 = vsel %vm579, %v3060, 0.0
    %v3670 = vadd.f32 %v3668, %v3669
    %v3671 = vsel %vm579, %v3189, 0.0
    %v3672 = vadd.f32 %v3670, %v3671
    %v3673 = vsel %vm579, %v3318, 0.0
    %v3674 = vadd.f32 %v3672, %v3673
    %v3675 = vsel %vm579, %v3447, 0.0
    %v3676 = vadd.f32 %v3674, %v3675
    %v3677 = vsel %vm579, %v3576, 0.0
    %v3678 = vadd.f32 %v3676, %v3677
    %v3679 = vsel %vm579, %v2678, 0.0
    %v3680 = vsel %vm579, %v2807, 0.0
    %v3681 = vadd.f32 %v3679, %v3680
    %v3682 = vsel %vm579, %v2936, 0.0
    %v3683 = vadd.f32 %v3681, %v3682
    %v3684 = vsel %vm579, %v3065, 0.0
    %v3685 = vadd.f32 %v3683, %v3684
    %v3686 = vsel %vm579, %v3194, 0.0
    %v3687 = vadd.f32 %v3685, %v3686
    %v3688 = vsel %vm579, %v3323, 0.0
    %v3689 = vadd.f32 %v3687, %v3688
    %v3690 = vsel %vm579, %v3452, 0.0
    %v3691 = vadd.f32 %v3689, %v3690
    %v3692 = vsel %vm579, %v3581, 0.0
    %v3693 = vadd.f32 %v3691, %v3692
    %v3694 = vsel %vm579, %v2683, 0.0
    %v3695 = vsel %vm579, %v2812, 0.0
    %v3696 = vadd.f32 %v3694, %v3695
    %v3697 = vsel %vm579, %v2941, 0.0
    %v3698 = vadd.f32 %v3696, %v3697
    %v3699 = vsel %vm579, %v3070, 0.0
    %v3700 = vadd.f32 %v3698, %v3699
    %v3701 = vsel %vm579, %v3199, 0.0
    %v3702 = vadd.f32 %v3700, %v3701
    %v3703 = vsel %vm579, %v3328, 0.0
    %v3704 = vadd.f32 %v3702, %v3703
    %v3705 = vsel %vm579, %v3457, 0.0
    %v3706 = vadd.f32 %v3704, %v3705
    %v3707 = vsel %vm579, %v3586, 0.0
    %v3708 = vadd.f32 %v3706, %v3707
    %v3709 = vld [vmem:[#allocation5] sm:$0x1]
    %v3710 = vld [vmem:[#allocation5 + $0x3] sm:$0x1]
    %v3711 = vlaneseq
    %v3712 = vshrl.u32 %v3711, 7
    %v3713 = vsub.s32 0, %v3712
    %v3714 = vrot.slane %v3709, %v3713
    %v3715 = vmul.f32 %v3603, %v3714
    %v3716 = vmul.f32 %v3618, %v3714
    %v3717 = vmul.f32 %v3633, %v3714
    %v3718 = vmul.f32 %v3648, %v3714
    %v3719 = vmul.f32 %v3663, %v3714
    %v3720 = vmul.f32 %v3678, %v3714
    %v3721 = vmul.f32 %v3693, %v3714
    %v3722 = vmul.f32 %v3708, %v3714
    %v3723 = vlaneseq
    %v3724 = vshrl.u32 %v3723, 7
    %v3725 = vsub.s32 0, %v3724
    %v3726 = vrot.slane %v3710, %v3725
    %v3727 = vadd.f32 %v3715, %v3726
    %v3728 = vadd.f32 %v3716, %v3726
    %v3729 = vadd.f32 %v3717, %v3726
    %v3730 = vadd.f32 %v3718, %v3726
    %v3731 = vadd.f32 %v3719, %v3726
    %v3732 = vadd.f32 %v3720, %v3726
    %v3733 = vadd.f32 %v3721, %v3726
    %v3734 = vadd.f32 %v3722, %v3726
    %v3735 = vmax.f32 %v3727, 0.0
    %v3736 = vmax.f32 %v3728, 0.0
    %v3737 = vmax.f32 %v3729, 0.0
    %v3738 = vmax.f32 %v3730, 0.0
    %v3739 = vmax.f32 %v3731, 0.0
    %v3740 = vmax.f32 %v3732, 0.0
    %v3741 = vmax.f32 %v3733, 0.0
    %v3742 = vmax.f32 %v3734, 0.0
    %v3743 = vld [vmem:[#allocation2 + $0x40] sm:$0xff]
    %v3744 = vld [vmem:[#allocation2 + $0x48] sm:$0xff]
    %v3745 = vld [vmem:[#allocation2 + $0x50] sm:$0xff]
    %v3746 = vld [vmem:[#allocation2 + $0x58] sm:$0xff]
    %v3747 = vld [vmem:[#allocation2 + $0x60] sm:$0xff]
    %v3748 = vld [vmem:[#allocation2 + $0x68] sm:$0xff]
    %v3749 = vld [vmem:[#allocation2 + $0x70] sm:$0xff]
    %v3750 = vld [vmem:[#allocation2 + $0x78] sm:$0xff]
    %v3752 = vsel %vm579, %v3735, 0
    %v3755 = vsel %vm579, %v3736, 0
    %v3758 = vsel %vm579, %v3737, 0
    %v3761 = vsel %vm579, %v3738, 0
    %v3764 = vsel %vm579, %v3739, 0
    %v3767 = vsel %vm579, %v3740, 0
    %v3770 = vsel %vm579, %v3741, 0
    %v3773 = vsel %vm579, %v3742, 0
    %3775 = vmatprep.subr.mxu0 0.0
    %3776 = vmatpush1.msra.mxu0 0.0
    %3777 = vmatprep.subr.mxu0 0.0
    %3778 = vmatpush1.msra.mxu0 0.0
    %3779 = vmatprep.subr.mxu0 0.0
    %3780 = vmatpush1.msra.mxu0 0.0
    %3781 = vmatprep.subr.mxu0 0.0
    %3782 = vmatpush1.msra.mxu0 0.0
    %3783 = vmatprep.subr.mxu0 0.0
    %3784 = vmatpush1.msra.mxu0 0.0
    %3785 = vmatprep.subr.mxu0 0.0
    %3786 = vmatpush1.msra.mxu0 0.0
    %3787 = vmatprep.subr.mxu0 0.0
    %3788 = vmatpush1.msra.mxu0 0.0
    %3789 = vmatprep.subr.mxu0 0.0
    %3790 = vmatpush1.msra.mxu0 0.0
    %3791 = vmatprep.subr.mxu0 0.0
    %3792 = vmatpush1.msra.mxu0 0.0
    %3793 = vmatprep.subr.mxu0 0.0
    %3794 = vmatpush1.msra.mxu0 0.0
    %3795 = vmatprep.subr.mxu0 0.0
    %3796 = vmatpush1.msra.mxu0 0.0
    %3797 = vmatprep.subr.mxu0 0.0
    %3798 = vmatpush1.msra.mxu0 0.0
    %3799 = vmatprep.subr.mxu0 %v3750
    %3800 = vmatpush1.msra.mxu0 %v3749
    %3801 = vmatprep.subr.mxu0 %v3748
    %3802 = vmatpush1.msra.mxu0 %v3747
    %3803 = vmatprep.subr.mxu0 %v3746
    %3804 = vmatpush1.msra.mxu0 %v3745
    %3805 = vmatprep.subr.mxu0 %v3744
    %3806 = vmatpush1.msra.mxu0 %v3743
    %3807 = vmatprep.subr.mxu0 0.0
    %3808 = vmatpush2.msra.mxu0 0.0
    %3809 = vmatprep.subr.mxu0 0.0
    %3810 = vmatpush2.msra.mxu0 0.0
    %3811 = vmatprep.subr.mxu0 0.0
    %3812 = vmatpush2.msra.mxu0 0.0
    %3813 = vmatprep.subr.mxu0 0.0
    %3814 = vmatpush2.msra.mxu0 0.0
    %3815 = vmatprep.subr.mxu0 0.0
    %3816 = vmatpush2.msra.mxu0 0.0
    %3817 = vmatprep.subr.mxu0 0.0
    %3818 = vmatpush2.msra.mxu0 0.0
    %3819 = vmatprep.subr.mxu0 0.0
    %3820 = vmatpush2.msra.mxu0 0.0
    %3821 = vmatprep.subr.mxu0 0.0
    %3822 = vmatpush2.msra.mxu0 0.0
    %3823 = vmatprep.subr.mxu0 0.0
    %3824 = vmatpush2.msra.mxu0 0.0
    %3825 = vmatprep.subr.mxu0 0.0
    %3826 = vmatpush2.msra.mxu0 0.0
    %3827 = vmatprep.subr.mxu0 0.0
    %3828 = vmatpush2.msra.mxu0 0.0
    %3829 = vmatprep.subr.mxu0 0.0
    %3830 = vmatpush2.msra.mxu0 0.0
    %3831 = vmatprep.subr.mxu0 0.0
    %3832 = vmatpush2.msra.mxu0 0.0
    %3833 = vmatprep.subr.mxu0 0.0
    %3834 = vmatpush2.msra.mxu0 0.0
    %3835 = vmatprep.subr.mxu0 0.0
    %3836 = vmatpush2.msra.mxu0 0.0
    %3837 = vmatprep.subr.mxu0 0.0
    %3838 = vmatpush2.msra.mxu0 0.0
    %3839 = vmatprep.mubr.f32.mxu0 0.0
    %3840 = vmatmul.mubr.f32.gmra.mxu0 %v3752
    %v3841 = vpop.f32.mrf.mxu0
    %v3842 = vadd.f32 0.0, %v3841
    %v3843 = vpop.f32.mrf.mxu0
    %v3844 = vadd.f32 0.0, %v3843
    %3845 = vmatprep.mubr.f32.mxu0 0.0
    %3846 = vmatmul.mubr.f32.gmra.mxu0 %v3755
    %v3847 = vpop.f32.mrf.mxu0
    %v3848 = vadd.f32 0.0, %v3847
    %v3849 = vpop.f32.mrf.mxu0
    %v3850 = vadd.f32 0.0, %v3849
    %3851 = vmatprep.mubr.f32.mxu0 0.0
    %3852 = vmatmul.mubr.f32.gmra.mxu0 %v3758
    %v3853 = vpop.f32.mrf.mxu0
    %v3854 = vadd.f32 0.0, %v3853
    %v3855 = vpop.f32.mrf.mxu0
    %v3856 = vadd.f32 0.0, %v3855
    %3857 = vmatprep.mubr.f32.mxu0 0.0
    %3858 = vmatmul.mubr.f32.gmra.mxu0 %v3761
    %v3859 = vpop.f32.mrf.mxu0
    %v3860 = vadd.f32 0.0, %v3859
    %v3861 = vpop.f32.mrf.mxu0
    %v3862 = vadd.f32 0.0, %v3861
    %3863 = vmatprep.mubr.f32.mxu0 0.0
    %3864 = vmatmul.mubr.f32.gmra.mxu0 %v3764
    %v3865 = vpop.f32.mrf.mxu0
    %v3866 = vadd.f32 0.0, %v3865
    %v3867 = vpop.f32.mrf.mxu0
    %v3868 = vadd.f32 0.0, %v3867
    %3869 = vmatprep.mubr.f32.mxu0 0.0
    %3870 = vmatmul.mubr.f32.gmra.mxu0 %v3767
    %v3871 = vpop.f32.mrf.mxu0
    %v3872 = vadd.f32 0.0, %v3871
    %v3873 = vpop.f32.mrf.mxu0
    %v3874 = vadd.f32 0.0, %v3873
    %3875 = vmatprep.mubr.f32.mxu0 0.0
    %3876 = vmatmul.mubr.f32.gmra.mxu0 %v3770
    %v3877 = vpop.f32.mrf.mxu0
    %v3878 = vadd.f32 0.0, %v3877
    %v3879 = vpop.f32.mrf.mxu0
    %v3880 = vadd.f32 0.0, %v3879
    %3881 = vmatprep.mubr.f32.mxu0 0.0
    %3882 = vmatmul.mubr.f32.gmra.mxu0 %v3773
    %v3883 = vpop.f32.mrf.mxu0
    %v3884 = vadd.f32 0.0, %v3883
    %v3885 = vpop.f32.mrf.mxu0
    %v3886 = vadd.f32 0.0, %v3885
    %3887 = vdwg.mxu0
    %3896 = vrot.lane.b32.xlu0 %v3842, 96
    %v3897 = vpop.permute.xlu0 %3896
    %3898 = vrot.lane.b32.xlu0 %v3848, 96
    %v3899 = vpop.permute.xlu0 %3898
    %3900 = vrot.lane.b32.xlu0 %v3854, 96
    %v3901 = vpop.permute.xlu0 %3900
    %3902 = vrot.lane.b32.xlu0 %v3860, 96
    %v3903 = vpop.permute.xlu0 %3902
    %3904 = vrot.lane.b32.xlu0 %v3866, 96
    %v3905 = vpop.permute.xlu0 %3904
    %3906 = vrot.lane.b32.xlu0 %v3872, 96
    %v3907 = vpop.permute.xlu0 %3906
    %3908 = vrot.lane.b32.xlu0 %v3878, 96
    %v3909 = vpop.permute.xlu0 %3908
    %3910 = vrot.lane.b32.xlu0 %v3884, 96
    %v3911 = vpop.permute.xlu0 %3910
    %3920 = vrot.lane.b32.xlu0 %v3842, 64
    %v3921 = vpop.permute.xlu0 %3920
    %3922 = vrot.lane.b32.xlu0 %v3848, 64
    %v3923 = vpop.permute.xlu0 %3922
    %3924 = vrot.lane.b32.xlu0 %v3854, 64
    %v3925 = vpop.permute.xlu0 %3924
    %3926 = vrot.lane.b32.xlu0 %v3860, 64
    %v3927 = vpop.permute.xlu0 %3926
    %3928 = vrot.lane.b32.xlu0 %v3866, 64
    %v3929 = vpop.permute.xlu0 %3928
    %3930 = vrot.lane.b32.xlu0 %v3872, 64
    %v3931 = vpop.permute.xlu0 %3930
    %3932 = vrot.lane.b32.xlu0 %v3878, 64
    %v3933 = vpop.permute.xlu0 %3932
    %3934 = vrot.lane.b32.xlu0 %v3884, 64
    %v3935 = vpop.permute.xlu0 %3934
    %3944 = vrot.lane.b32.xlu0 %v3842, 32
    %v3945 = vpop.permute.xlu0 %3944
    %3946 = vrot.lane.b32.xlu0 %v3848, 32
    %v3947 = vpop.permute.xlu0 %3946
    %3948 = vrot.lane.b32.xlu0 %v3854, 32
    %v3949 = vpop.permute.xlu0 %3948
    %3950 = vrot.lane.b32.xlu0 %v3860, 32
    %v3951 = vpop.permute.xlu0 %3950
    %3952 = vrot.lane.b32.xlu0 %v3866, 32
    %v3953 = vpop.permute.xlu0 %3952
    %3954 = vrot.lane.b32.xlu0 %v3872, 32
    %v3955 = vpop.permute.xlu0 %3954
    %3956 = vrot.lane.b32.xlu0 %v3878, 32
    %v3957 = vpop.permute.xlu0 %3956
    %3958 = vrot.lane.b32.xlu0 %v3884, 32
    %v3959 = vpop.permute.xlu0 %3958
    %3976 = vrot.lane.b32.xlu0 %v3844, 96
    %v3977 = vpop.permute.xlu0 %3976
    %3978 = vrot.lane.b32.xlu0 %v3850, 96
    %v3979 = vpop.permute.xlu0 %3978
    %3980 = vrot.lane.b32.xlu0 %v3856, 96
    %v3981 = vpop.permute.xlu0 %3980
    %3982 = vrot.lane.b32.xlu0 %v3862, 96
    %v3983 = vpop.permute.xlu0 %3982
    %3984 = vrot.lane.b32.xlu0 %v3868, 96
    %v3985 = vpop.permute.xlu0 %3984
    %3986 = vrot.lane.b32.xlu0 %v3874, 96
    %v3987 = vpop.permute.xlu0 %3986
    %3988 = vrot.lane.b32.xlu0 %v3880, 96
    %v3989 = vpop.permute.xlu0 %3988
    %3990 = vrot.lane.b32.xlu0 %v3886, 96
    %v3991 = vpop.permute.xlu0 %3990
    %4000 = vrot.lane.b32.xlu0 %v3844, 64
    %v4001 = vpop.permute.xlu0 %4000
    %4002 = vrot.lane.b32.xlu0 %v3850, 64
    %v4003 = vpop.permute.xlu0 %4002
    %4004 = vrot.lane.b32.xlu0 %v3856, 64
    %v4005 = vpop.permute.xlu0 %4004
    %4006 = vrot.lane.b32.xlu0 %v3862, 64
    %v4007 = vpop.permute.xlu0 %4006
    %4008 = vrot.lane.b32.xlu0 %v3868, 64
    %v4009 = vpop.permute.xlu0 %4008
    %4010 = vrot.lane.b32.xlu0 %v3874, 64
    %v4011 = vpop.permute.xlu0 %4010
    %4012 = vrot.lane.b32.xlu0 %v3880, 64
    %v4013 = vpop.permute.xlu0 %4012
    %4014 = vrot.lane.b32.xlu0 %v3886, 64
    %v4015 = vpop.permute.xlu0 %4014
    %4024 = vrot.lane.b32.xlu0 %v3844, 32
    %v4025 = vpop.permute.xlu0 %4024
    %4026 = vrot.lane.b32.xlu0 %v3850, 32
    %v4027 = vpop.permute.xlu0 %4026
    %4028 = vrot.lane.b32.xlu0 %v3856, 32
    %v4029 = vpop.permute.xlu0 %4028
    %4030 = vrot.lane.b32.xlu0 %v3862, 32
    %v4031 = vpop.permute.xlu0 %4030
    %4032 = vrot.lane.b32.xlu0 %v3868, 32
    %v4033 = vpop.permute.xlu0 %4032
    %4034 = vrot.lane.b32.xlu0 %v3874, 32
    %v4035 = vpop.permute.xlu0 %4034
    %4036 = vrot.lane.b32.xlu0 %v3880, 32
    %v4037 = vpop.permute.xlu0 %4036
    %4038 = vrot.lane.b32.xlu0 %v3886, 32
    %v4039 = vpop.permute.xlu0 %4038
    %v4048 = vld [vmem:[%s3 + $0x10] sm:$0xff]
    %v4050 = vcombine.high %v4048, %v4048
    %v4052 = vunpack.c.l.s4 1966171168
    %v4053 = vunpack.c.0.s8 %v4052
    %v4054 = vlaneseq
    %v4055 = vshrl.u32 %v4054, 7
    %v4056 = vsub.s32 %v4053, %v4055
    %v4057 = vrot.slane %v4048, %v4056
    %v4059 = vunpack.c.l.s4 1966171168
    %v4060 = vunpack.c.0.s8 %v4059
    %v4061 = vlaneseq
    %v4062 = vshrl.u32 %v4061, 7
    %v4063 = vsub.s32 %v4060, %v4062
    %v4064 = vrot.slane %v4050, %v4063
    %v4065 = vcombine.high %v4057, %v4057
    %v4066 = vcombine.high %v4064, %v4064
    %v4068 = vunpack.c.l.s4 1966171168
    %v4069 = vunpack.c.0.s8 %v4068
    %v4070 = vlaneseq
    %v4071 = vshrl.u32 %v4070, 7
    %v4072 = vsub.s32 %v4069, %v4071
    %v4073 = vrot.slane %v4057, %v4072
    %v4075 = vunpack.c.l.s4 1966171168
    %v4076 = vunpack.c.0.s8 %v4075
    %v4077 = vlaneseq
    %v4078 = vshrl.u32 %v4077, 7
    %v4079 = vsub.s32 %v4076, %v4078
    %v4080 = vrot.slane %v4064, %v4079
    %v4082 = vunpack.c.l.s4 1966171168
    %v4083 = vunpack.c.0.s8 %v4082
    %v4084 = vlaneseq
    %v4085 = vshrl.u32 %v4084, 7
    %v4086 = vsub.s32 %v4083, %v4085
    %v4087 = vrot.slane %v4065, %v4086
    %v4089 = vunpack.c.l.s4 1966171168
    %v4090 = vunpack.c.0.s8 %v4089
    %v4091 = vlaneseq
    %v4092 = vshrl.u32 %v4091, 7
    %v4093 = vsub.s32 %v4090, %v4092
    %v4094 = vrot.slane %v4066, %v4093
    %v4095 = vcombine.high %v4073, %v4073
    %v4096 = vcombine.high %v4080, %v4080
    %v4097 = vcombine.high %v4087, %v4087
    %v4098 = vcombine.high %v4094, %v4094
    %v4099 = vld [vmem:[%s3 + $0x18] sm:$0xff]
    %v4101 = vcombine.high %v4099, %v4099
    %v4103 = vunpack.c.l.s4 1966171168
    %v4104 = vunpack.c.0.s8 %v4103
    %v4105 = vlaneseq
    %v4106 = vshrl.u32 %v4105, 7
    %v4107 = vsub.s32 %v4104, %v4106
    %v4108 = vrot.slane %v4099, %v4107
    %v4110 = vunpack.c.l.s4 1966171168
    %v4111 = vunpack.c.0.s8 %v4110
    %v4112 = vlaneseq
    %v4113 = vshrl.u32 %v4112, 7
    %v4114 = vsub.s32 %v4111, %v4113
    %v4115 = vrot.slane %v4101, %v4114
    %v4116 = vcombine.high %v4108, %v4108
    %v4117 = vcombine.high %v4115, %v4115
    %v4119 = vunpack.c.l.s4 1966171168
    %v4120 = vunpack.c.0.s8 %v4119
    %v4121 = vlaneseq
    %v4122 = vshrl.u32 %v4121, 7
    %v4123 = vsub.s32 %v4120, %v4122
    %v4124 = vrot.slane %v4108, %v4123
    %v4126 = vunpack.c.l.s4 1966171168
    %v4127 = vunpack.c.0.s8 %v4126
    %v4128 = vlaneseq
    %v4129 = vshrl.u32 %v4128, 7
    %v4130 = vsub.s32 %v4127, %v4129
    %v4131 = vrot.slane %v4115, %v4130
    %v4133 = vunpack.c.l.s4 1966171168
    %v4134 = vunpack.c.0.s8 %v4133
    %v4135 = vlaneseq
    %v4136 = vshrl.u32 %v4135, 7
    %v4137 = vsub.s32 %v4134, %v4136
    %v4138 = vrot.slane %v4116, %v4137
    %v4140 = vunpack.c.l.s4 1966171168
    %v4141 = vunpack.c.0.s8 %v4140
    %v4142 = vlaneseq
    %v4143 = vshrl.u32 %v4142, 7
    %v4144 = vsub.s32 %v4141, %v4143
    %v4145 = vrot.slane %v4117, %v4144
    %v4146 = vcombine.high %v4124, %v4124
    %v4147 = vcombine.high %v4131, %v4131
    %v4148 = vcombine.high %v4138, %v4138
    %v4149 = vcombine.high %v4145, %v4145
    %v4150 = vlaneseq
    %v4151 = vshrl.u32 %v4150, 7
    %v4152 = vsub.s32 0, %v4151
    %v4153 = vrot.slane %v4073, %v4152
    %v4154 = vlaneseq
    %v4155 = vshrl.u32 %v4154, 7
    %v4156 = vsub.s32 0, %v4155
    %v4157 = vrot.slane %v4087, %v4156
    %v4158 = vlaneseq
    %v4159 = vshrl.u32 %v4158, 7
    %v4160 = vsub.s32 0, %v4159
    %v4161 = vrot.slane %v4095, %v4160
    %v4162 = vlaneseq
    %v4163 = vshrl.u32 %v4162, 7
    %v4164 = vsub.s32 0, %v4163
    %v4165 = vrot.slane %v4097, %v4164
    %v4166 = vlaneseq
    %v4167 = vshrl.u32 %v4166, 7
    %v4168 = vsub.s32 0, %v4167
    %v4169 = vrot.slane %v4080, %v4168
    %v4170 = vlaneseq
    %v4171 = vshrl.u32 %v4170, 7
    %v4172 = vsub.s32 0, %v4171
    %v4173 = vrot.slane %v4094, %v4172
    %v4174 = vlaneseq
    %v4175 = vshrl.u32 %v4174, 7
    %v4176 = vsub.s32 0, %v4175
    %v4177 = vrot.slane %v4096, %v4176
    %v4178 = vlaneseq
    %v4179 = vshrl.u32 %v4178, 7
    %v4180 = vsub.s32 0, %v4179
    %v4181 = vrot.slane %v4098, %v4180
    %v4190 = vmul.f32 %v3842, %v4153
    %v4191 = vmul.f32 %v3848, %v4153
    %v4192 = vmul.f32 %v3854, %v4153
    %v4193 = vmul.f32 %v3860, %v4153
    %v4194 = vmul.f32 %v3866, %v4153
    %v4195 = vmul.f32 %v3872, %v4153
    %v4196 = vmul.f32 %v3878, %v4153
    %v4197 = vmul.f32 %v3884, %v4153
    %v4198 = vmul.f32 %v3897, %v4157
    %v4199 = vmul.f32 %v3899, %v4157
    %v4200 = vmul.f32 %v3901, %v4157
    %v4201 = vmul.f32 %v3903, %v4157
    %v4202 = vmul.f32 %v3905, %v4157
    %v4203 = vmul.f32 %v3907, %v4157
    %v4204 = vmul.f32 %v3909, %v4157
    %v4205 = vmul.f32 %v3911, %v4157
    %v4206 = vmul.f32 %v3921, %v4161
    %v4207 = vmul.f32 %v3923, %v4161
    %v4208 = vmul.f32 %v3925, %v4161
    %v4209 = vmul.f32 %v3927, %v4161
    %v4210 = vmul.f32 %v3929, %v4161
    %v4211 = vmul.f32 %v3931, %v4161
    %v4212 = vmul.f32 %v3933, %v4161
    %v4213 = vmul.f32 %v3935, %v4161
    %v4214 = vmul.f32 %v3945, %v4165
    %v4215 = vmul.f32 %v3947, %v4165
    %v4216 = vmul.f32 %v3949, %v4165
    %v4217 = vmul.f32 %v3951, %v4165
    %v4218 = vmul.f32 %v3953, %v4165
    %v4219 = vmul.f32 %v3955, %v4165
    %v4220 = vmul.f32 %v3957, %v4165
    %v4221 = vmul.f32 %v3959, %v4165
    %v4222 = vmul.f32 %v3844, %v4169
    %v4223 = vmul.f32 %v3850, %v4169
    %v4224 = vmul.f32 %v3856, %v4169
    %v4225 = vmul.f32 %v3862, %v4169
    %v4226 = vmul.f32 %v3868, %v4169
    %v4227 = vmul.f32 %v3874, %v4169
    %v4228 = vmul.f32 %v3880, %v4169
    %v4229 = vmul.f32 %v3886, %v4169
    %v4230 = vmul.f32 %v3977, %v4173
    %v4231 = vmul.f32 %v3979, %v4173
    %v4232 = vmul.f32 %v3981, %v4173
    %v4233 = vmul.f32 %v3983, %v4173
    %v4234 = vmul.f32 %v3985, %v4173
    %v4235 = vmul.f32 %v3987, %v4173
    %v4236 = vmul.f32 %v3989, %v4173
    %v4237 = vmul.f32 %v3991, %v4173
    %v4238 = vmul.f32 %v4001, %v4177
    %v4239 = vmul.f32 %v4003, %v4177
    %v4240 = vmul.f32 %v4005, %v4177
    %v4241 = vmul.f32 %v4007, %v4177
    %v4242 = vmul.f32 %v4009, %v4177
    %v4243 = vmul.f32 %v4011, %v4177
    %v4244 = vmul.f32 %v4013, %v4177
    %v4245 = vmul.f32 %v4015, %v4177
    %v4246 = vmul.f32 %v4025, %v4181
    %v4247 = vmul.f32 %v4027, %v4181
    %v4248 = vmul.f32 %v4029, %v4181
    %v4249 = vmul.f32 %v4031, %v4181
    %v4250 = vmul.f32 %v4033, %v4181
    %v4251 = vmul.f32 %v4035, %v4181
    %v4252 = vmul.f32 %v4037, %v4181
    %v4253 = vmul.f32 %v4039, %v4181
    %v4254 = vsel %vm579, %v4190, 0.0
    %4255 = vadd.xlane.f32.xlu0 %v4254
    %v4256 = vpop.xlane.xlu0 %4255
    %v4257 = vsel %vm579, %v4191, 0.0
    %4258 = vadd.xlane.f32.xlu0 %v4257
    %v4259 = vpop.xlane.xlu0 %4258
    %v4260 = vsel %vm579, %v4192, 0.0
    %4261 = vadd.xlane.f32.xlu0 %v4260
    %v4262 = vpop.xlane.xlu0 %4261
    %v4263 = vsel %vm579, %v4193, 0.0
    %4264 = vadd.xlane.f32.xlu0 %v4263
    %v4265 = vpop.xlane.xlu0 %4264
    %v4266 = vsel %vm579, %v4194, 0.0
    %4267 = vadd.xlane.f32.xlu0 %v4266
    %v4268 = vpop.xlane.xlu0 %4267
    %v4269 = vsel %vm579, %v4195, 0.0
    %4270 = vadd.xlane.f32.xlu0 %v4269
    %v4271 = vpop.xlane.xlu0 %4270
    %v4272 = vsel %vm579, %v4196, 0.0
    %4273 = vadd.xlane.f32.xlu0 %v4272
    %v4274 = vpop.xlane.xlu0 %4273
    %v4275 = vsel %vm579, %v4197, 0.0
    %4276 = vadd.xlane.f32.xlu0 %v4275
    %v4277 = vpop.xlane.xlu0 %4276
    %v4278 = vsel %vm579, %v4198, 0.0
    %4279 = vadd.xlane.f32.xlu0 %v4278
    %v4280 = vpop.xlane.xlu0 %4279
    %v4281 = vsel %vm579, %v4199, 0.0
    %4282 = vadd.xlane.f32.xlu0 %v4281
    %v4283 = vpop.xlane.xlu0 %4282
    %v4284 = vsel %vm579, %v4200, 0.0
    %4285 = vadd.xlane.f32.xlu0 %v4284
    %v4286 = vpop.xlane.xlu0 %4285
    %v4287 = vsel %vm579, %v4201, 0.0
    %4288 = vadd.xlane.f32.xlu0 %v4287
    %v4289 = vpop.xlane.xlu0 %4288
    %v4290 = vsel %vm579, %v4202, 0.0
    %4291 = vadd.xlane.f32.xlu0 %v4290
    %v4292 = vpop.xlane.xlu0 %4291
    %v4293 = vsel %vm579, %v4203, 0.0
    %4294 = vadd.xlane.f32.xlu0 %v4293
    %v4295 = vpop.xlane.xlu0 %4294
    %v4296 = vsel %vm579, %v4204, 0.0
    %4297 = vadd.xlane.f32.xlu0 %v4296
    %v4298 = vpop.xlane.xlu0 %4297
    %v4299 = vsel %vm579, %v4205, 0.0
    %4300 = vadd.xlane.f32.xlu0 %v4299
    %v4301 = vpop.xlane.xlu0 %4300
    %v4302 = vsel %vm579, %v4206, 0.0
    %4303 = vadd.xlane.f32.xlu0 %v4302
    %v4304 = vpop.xlane.xlu0 %4303
    %v4305 = vsel %vm579, %v4207, 0.0
    %4306 = vadd.xlane.f32.xlu0 %v4305
    %v4307 = vpop.xlane.xlu0 %4306
    %v4308 = vsel %vm579, %v4208, 0.0
    %4309 = vadd.xlane.f32.xlu0 %v4308
    %v4310 = vpop.xlane.xlu0 %4309
    %v4311 = vsel %vm579, %v4209, 0.0
    %4312 = vadd.xlane.f32.xlu0 %v4311
    %v4313 = vpop.xlane.xlu0 %4312
    %v4314 = vsel %vm579, %v4210, 0.0
    %4315 = vadd.xlane.f32.xlu0 %v4314
    %v4316 = vpop.xlane.xlu0 %4315
    %v4317 = vsel %vm579, %v4211, 0.0
    %4318 = vadd.xlane.f32.xlu0 %v4317
    %v4319 = vpop.xlane.xlu0 %4318
    %v4320 = vsel %vm579, %v4212, 0.0
    %4321 = vadd.xlane.f32.xlu0 %v4320
    %v4322 = vpop.xlane.xlu0 %4321
    %v4323 = vsel %vm579, %v4213, 0.0
    %4324 = vadd.xlane.f32.xlu0 %v4323
    %v4325 = vpop.xlane.xlu0 %4324
    %v4326 = vsel %vm579, %v4214, 0.0
    %4327 = vadd.xlane.f32.xlu0 %v4326
    %v4328 = vpop.xlane.xlu0 %4327
    %v4329 = vsel %vm579, %v4215, 0.0
    %4330 = vadd.xlane.f32.xlu0 %v4329
    %v4331 = vpop.xlane.xlu0 %4330
    %v4332 = vsel %vm579, %v4216, 0.0
    %4333 = vadd.xlane.f32.xlu0 %v4332
    %v4334 = vpop.xlane.xlu0 %4333
    %v4335 = vsel %vm579, %v4217, 0.0
    %4336 = vadd.xlane.f32.xlu0 %v4335
    %v4337 = vpop.xlane.xlu0 %4336
    %v4338 = vsel %vm579, %v4218, 0.0
    %4339 = vadd.xlane.f32.xlu0 %v4338
    %v4340 = vpop.xlane.xlu0 %4339
    %v4341 = vsel %vm579, %v4219, 0.0
    %4342 = vadd.xlane.f32.xlu0 %v4341
    %v4343 = vpop.xlane.xlu0 %4342
    %v4344 = vsel %vm579, %v4220, 0.0
    %4345 = vadd.xlane.f32.xlu0 %v4344
    %v4346 = vpop.xlane.xlu0 %4345
    %v4347 = vsel %vm579, %v4221, 0.0
    %4348 = vadd.xlane.f32.xlu0 %v4347
    %v4349 = vpop.xlane.xlu0 %4348
    %v4350 = vsel %vm579, %v4222, 0.0
    %4351 = vadd.xlane.f32.xlu0 %v4350
    %v4352 = vpop.xlane.xlu0 %4351
    %v4353 = vsel %vm579, %v4223, 0.0
    %4354 = vadd.xlane.f32.xlu0 %v4353
    %v4355 = vpop.xlane.xlu0 %4354
    %v4356 = vsel %vm579, %v4224, 0.0
    %4357 = vadd.xlane.f32.xlu0 %v4356
    %v4358 = vpop.xlane.xlu0 %4357
    %v4359 = vsel %vm579, %v4225, 0.0
    %4360 = vadd.xlane.f32.xlu0 %v4359
    %v4361 = vpop.xlane.xlu0 %4360
    %v4362 = vsel %vm579, %v4226, 0.0
    %4363 = vadd.xlane.f32.xlu0 %v4362
    %v4364 = vpop.xlane.xlu0 %4363
    %v4365 = vsel %vm579, %v4227, 0.0
    %4366 = vadd.xlane.f32.xlu0 %v4365
    %v4367 = vpop.xlane.xlu0 %4366
    %v4368 = vsel %vm579, %v4228, 0.0
    %4369 = vadd.xlane.f32.xlu0 %v4368
    %v4370 = vpop.xlane.xlu0 %4369
    %v4371 = vsel %vm579, %v4229, 0.0
    %4372 = vadd.xlane.f32.xlu0 %v4371
    %v4373 = vpop.xlane.xlu0 %4372
    %v4374 = vsel %vm579, %v4230, 0.0
    %4375 = vadd.xlane.f32.xlu0 %v4374
    %v4376 = vpop.xlane.xlu0 %4375
    %v4377 = vsel %vm579, %v4231, 0.0
    %4378 = vadd.xlane.f32.xlu0 %v4377
    %v4379 = vpop.xlane.xlu0 %4378
    %v4380 = vsel %vm579, %v4232, 0.0
    %4381 = vadd.xlane.f32.xlu0 %v4380
    %v4382 = vpop.xlane.xlu0 %4381
    %v4383 = vsel %vm579, %v4233, 0.0
    %4384 = vadd.xlane.f32.xlu0 %v4383
    %v4385 = vpop.xlane.xlu0 %4384
    %v4386 = vsel %vm579, %v4234, 0.0
    %4387 = vadd.xlane.f32.xlu0 %v4386
    %v4388 = vpop.xlane.xlu0 %4387
    %v4389 = vsel %vm579, %v4235, 0.0
    %4390 = vadd.xlane.f32.xlu0 %v4389
    %v4391 = vpop.xlane.xlu0 %4390
    %v4392 = vsel %vm579, %v4236, 0.0
    %4393 = vadd.xlane.f32.xlu0 %v4392
    %v4394 = vpop.xlane.xlu0 %4393
    %v4395 = vsel %vm579, %v4237, 0.0
    %4396 = vadd.xlane.f32.xlu0 %v4395
    %v4397 = vpop.xlane.xlu0 %4396
    %v4398 = vsel %vm579, %v4238, 0.0
    %4399 = vadd.xlane.f32.xlu0 %v4398
    %v4400 = vpop.xlane.xlu0 %4399
    %v4401 = vsel %vm579, %v4239, 0.0
    %4402 = vadd.xlane.f32.xlu0 %v4401
    %v4403 = vpop.xlane.xlu0 %4402
    %v4404 = vsel %vm579, %v4240, 0.0
    %4405 = vadd.xlane.f32.xlu0 %v4404
    %v4406 = vpop.xlane.xlu0 %4405
    %v4407 = vsel %vm579, %v4241, 0.0
    %4408 = vadd.xlane.f32.xlu0 %v4407
    %v4409 = vpop.xlane.xlu0 %4408
    %v4410 = vsel %vm579, %v4242, 0.0
    %4411 = vadd.xlane.f32.xlu0 %v4410
    %v4412 = vpop.xlane.xlu0 %4411
    %v4413 = vsel %vm579, %v4243, 0.0
    %4414 = vadd.xlane.f32.xlu0 %v4413
    %v4415 = vpop.xlane.xlu0 %4414
    %v4416 = vsel %vm579, %v4244, 0.0
    %4417 = vadd.xlane.f32.xlu0 %v4416
    %v4418 = vpop.xlane.xlu0 %4417
    %v4419 = vsel %vm579, %v4245, 0.0
    %4420 = vadd.xlane.f32.xlu0 %v4419
    %v4421 = vpop.xlane.xlu0 %4420
    %v4422 = vsel %vm579, %v4246, 0.0
    %4423 = vadd.xlane.f32.xlu0 %v4422
    %v4424 = vpop.xlane.xlu0 %4423
    %v4425 = vsel %vm579, %v4247, 0.0
    %4426 = vadd.xlane.f32.xlu0 %v4425
    %v4427 = vpop.xlane.xlu0 %4426
    %v4428 = vsel %vm579, %v4248, 0.0
    %4429 = vadd.xlane.f32.xlu0 %v4428
    %v4430 = vpop.xlane.xlu0 %4429
    %v4431 = vsel %vm579, %v4249, 0.0
    %4432 = vadd.xlane.f32.xlu0 %v4431
    %v4433 = vpop.xlane.xlu0 %4432
    %v4434 = vsel %vm579, %v4250, 0.0
    %4435 = vadd.xlane.f32.xlu0 %v4434
    %v4436 = vpop.xlane.xlu0 %4435
    %v4437 = vsel %vm579, %v4251, 0.0
    %4438 = vadd.xlane.f32.xlu0 %v4437
    %v4439 = vpop.xlane.xlu0 %4438
    %v4440 = vsel %vm579, %v4252, 0.0
    %4441 = vadd.xlane.f32.xlu0 %v4440
    %v4442 = vpop.xlane.xlu0 %4441
    %v4443 = vsel %vm579, %v4253, 0.0
    %4444 = vadd.xlane.f32.xlu0 %v4443
    %v4445 = vpop.xlane.xlu0 %4444
    %v4446 = vsel %vm579, %v4124, 0
    %v4448 = vsel %vm579, %v3842, 0
    %v4450 = vsel %vm579, %v3848, 0
    %v4452 = vsel %vm579, %v3854, 0
    %v4454 = vsel %vm579, %v3860, 0
    %v4456 = vsel %vm579, %v3866, 0
    %v4458 = vsel %vm579, %v3872, 0
    %v4460 = vsel %vm579, %v3878, 0
    %v4462 = vsel %vm579, %v3884, 0
    %4464 = vmatprep.subr.mxu0 0.0
    %4465 = vmatpush1.xpose.msra.mxu0 0.0
    %4466 = vmatprep.subr.mxu0 0.0
    %4467 = vmatpush1.xpose.msra.mxu0 0.0
    %4468 = vmatprep.subr.mxu0 0.0
    %4469 = vmatpush1.xpose.msra.mxu0 0.0
    %4470 = vmatprep.subr.mxu0 0.0
    %4471 = vmatpush1.xpose.msra.mxu0 0.0
    %4472 = vmatprep.subr.mxu0 0.0
    %4473 = vmatpush1.xpose.msra.mxu0 0.0
    %4474 = vmatprep.subr.mxu0 0.0
    %4475 = vmatpush1.xpose.msra.mxu0 0.0
    %4476 = vmatprep.subr.mxu0 0.0
    %4477 = vmatpush1.xpose.msra.mxu0 0.0
    %4478 = vmatprep.subr.mxu0 0.0
    %4479 = vmatpush1.xpose.msra.mxu0 0.0
    %4480 = vmatprep.subr.mxu0 0.0
    %4481 = vmatpush1.xpose.msra.mxu0 %v4462
    %4482 = vmatprep.subr.mxu0 0.0
    %4483 = vmatpush1.xpose.msra.mxu0 %v4460
    %4484 = vmatprep.subr.mxu0 0.0
    %4485 = vmatpush1.xpose.msra.mxu0 %v4458
    %4486 = vmatprep.subr.mxu0 0.0
    %4487 = vmatpush1.xpose.msra.mxu0 %v4456
    %4488 = vmatprep.subr.mxu0 0.0
    %4489 = vmatpush1.xpose.msra.mxu0 %v4454
    %4490 = vmatprep.subr.mxu0 0.0
    %4491 = vmatpush1.xpose.msra.mxu0 %v4452
    %4492 = vmatprep.subr.mxu0 0.0
    %4493 = vmatpush1.xpose.msra.mxu0 %v4450
    %4494 = vmatprep.subr.mxu0 0.0
    %4495 = vmatpush1.xpose.msra.mxu0 %v4448
    %4496 = vmatprep.subr.mxu0 0.0
    %4497 = vmatpush2.xpose.msra.mxu0 0.0
    %4498 = vmatprep.subr.mxu0 0.0
    %4499 = vmatpush2.xpose.msra.mxu0 0.0
    %4500 = vmatprep.subr.mxu0 0.0
    %4501 = vmatpush2.xpose.msra.mxu0 0.0
    %4502 = vmatprep.subr.mxu0 0.0
    %4503 = vmatpush2.xpose.msra.mxu0 0.0
    %4504 = vmatprep.subr.mxu0 0.0
    %4505 = vmatpush2.xpose.msra.mxu0 0.0
    %4506 = vmatprep.subr.mxu0 0.0
    %4507 = vmatpush2.xpose.msra.mxu0 0.0
    %4508 = vmatprep.subr.mxu0 0.0
    %4509 = vmatpush2.xpose.msra.mxu0 0.0
    %4510 = vmatprep.subr.mxu0 0.0
    %4511 = vmatpush2.xpose.msra.mxu0 0.0
    %4512 = vmatprep.subr.mxu0 0.0
    %4513 = vmatpush2.xpose.msra.mxu0 0.0
    %4514 = vmatprep.subr.mxu0 0.0
    %4515 = vmatpush2.xpose.msra.mxu0 0.0
    %4516 = vmatprep.subr.mxu0 0.0
    %4517 = vmatpush2.xpose.msra.mxu0 0.0
    %4518 = vmatprep.subr.mxu0 0.0
    %4519 = vmatpush2.xpose.msra.mxu0 0.0
    %4520 = vmatprep.subr.mxu0 0.0
    %4521 = vmatpush2.xpose.msra.mxu0 0.0
    %4522 = vmatprep.subr.mxu0 0.0
    %4523 = vmatpush2.xpose.msra.mxu0 0.0
    %4524 = vmatprep.subr.mxu0 0.0
    %4525 = vmatpush2.xpose.msra.mxu0 0.0
    %4526 = vmatprep.subr.mxu0 0.0
    %4527 = vmatpush2.xpose.msra.mxu0 0.0
    %4528 = vmatprep.mubr.f32.mxu0 0.0
    %4529 = vmatmul.mubr.f32.gmra.mxu0 %v4446
    %v4530 = vpop.f32.mrf.mxu0
    %v4531 = vadd.f32 0.0, %v4530
    %v4532 = vpop.f32.mrf.mxu0
    %4533 = vdwg.mxu0
    %v4534 = vsel %vm579, %v4138, 0
    %v4536 = vsel %vm579, %v3897, 0
    %v4538 = vsel %vm579, %v3899, 0
    %v4540 = vsel %vm579, %v3901, 0
    %v4542 = vsel %vm579, %v3903, 0
    %v4544 = vsel %vm579, %v3905, 0
    %v4546 = vsel %vm579, %v3907, 0
    %v4548 = vsel %vm579, %v3909, 0
    %v4550 = vsel %vm579, %v3911, 0
    %4552 = vmatprep.subr.mxu0 0.0
    %4553 = vmatpush1.xpose.msra.mxu0 0.0
    %4554 = vmatprep.subr.mxu0 0.0
    %4555 = vmatpush1.xpose.msra.mxu0 0.0
    %4556 = vmatprep.subr.mxu0 0.0
    %4557 = vmatpush1.xpose.msra.mxu0 0.0
    %4558 = vmatprep.subr.mxu0 0.0
    %4559 = vmatpush1.xpose.msra.mxu0 0.0
    %4560 = vmatprep.subr.mxu0 0.0
    %4561 = vmatpush1.xpose.msra.mxu0 0.0
    %4562 = vmatprep.subr.mxu0 0.0
    %4563 = vmatpush1.xpose.msra.mxu0 0.0
    %4564 = vmatprep.subr.mxu0 0.0
    %4565 = vmatpush1.xpose.msra.mxu0 0.0
    %4566 = vmatprep.subr.mxu0 0.0
    %4567 = vmatpush1.xpose.msra.mxu0 0.0
    %4568 = vmatprep.subr.mxu0 0.0
    %4569 = vmatpush1.xpose.msra.mxu0 %v4550
    %4570 = vmatprep.subr.mxu0 0.0
    %4571 = vmatpush1.xpose.msra.mxu0 %v4548
    %4572 = vmatprep.subr.mxu0 0.0
    %4573 = vmatpush1.xpose.msra.mxu0 %v4546
    %4574 = vmatprep.subr.mxu0 0.0
    %4575 = vmatpush1.xpose.msra.mxu0 %v4544
    %4576 = vmatprep.subr.mxu0 0.0
    %4577 = vmatpush1.xpose.msra.mxu0 %v4542
    %4578 = vmatprep.subr.mxu0 0.0
    %4579 = vmatpush1.xpose.msra.mxu0 %v4540
    %4580 = vmatprep.subr.mxu0 0.0
    %4581 = vmatpush1.xpose.msra.mxu0 %v4538
    %4582 = vmatprep.subr.mxu0 0.0
    %4583 = vmatpush1.xpose.msra.mxu0 %v4536
    %4584 = vmatprep.subr.mxu0 0.0
    %4585 = vmatpush2.xpose.msra.mxu0 0.0
    %4586 = vmatprep.subr.mxu0 0.0
    %4587 = vmatpush2.xpose.msra.mxu0 0.0
    %4588 = vmatprep.subr.mxu0 0.0
    %4589 = vmatpush2.xpose.msra.mxu0 0.0
    %4590 = vmatprep.subr.mxu0 0.0
    %4591 = vmatpush2.xpose.msra.mxu0 0.0
    %4592 = vmatprep.subr.mxu0 0.0
    %4593 = vmatpush2.xpose.msra.mxu0 0.0
    %4594 = vmatprep.subr.mxu0 0.0
    %4595 = vmatpush2.xpose.msra.mxu0 0.0
    %4596 = vmatprep.subr.mxu0 0.0
    %4597 = vmatpush2.xpose.msra.mxu0 0.0
    %4598 = vmatprep.subr.mxu0 0.0
    %4599 = vmatpush2.xpose.msra.mxu0 0.0
    %4600 = vmatprep.subr.mxu0 0.0
    %4601 = vmatpush2.xpose.msra.mxu0 0.0
    %4602 = vmatprep.subr.mxu0 0.0
    %4603 = vmatpush2.xpose.msra.mxu0 0.0
    %4604 = vmatprep.subr.mxu0 0.0
    %4605 = vmatpush2.xpose.msra.mxu0 0.0
    %4606 = vmatprep.subr.mxu0 0.0
    %4607 = vmatpush2.xpose.msra.mxu0 0.0
    %4608 = vmatprep.subr.mxu0 0.0
    %4609 = vmatpush2.xpose.msra.mxu0 0.0
    %4610 = vmatprep.subr.mxu0 0.0
    %4611 = vmatpush2.xpose.msra.mxu0 0.0
    %4612 = vmatprep.subr.mxu0 0.0
    %4613 = vmatpush2.xpose.msra.mxu0 0.0
    %4614 = vmatprep.subr.mxu0 0.0
    %4615 = vmatpush2.xpose.msra.mxu0 0.0
    %4616 = vmatprep.mubr.f32.mxu0 0.0
    %4617 = vmatmul.mubr.f32.gmra.mxu0 %v4534
    %v4618 = vpop.f32.mrf.mxu0
    %v4619 = vadd.f32 0.0, %v4618
    %v4620 = vpop.f32.mrf.mxu0
    %4621 = vdwg.mxu0
    %v4622 = vsel %vm579, %v4146, 0
    %v4624 = vsel %vm579, %v3921, 0
    %v4626 = vsel %vm579, %v3923, 0
    %v4628 = vsel %vm579, %v3925, 0
    %v4630 = vsel %vm579, %v3927, 0
    %v4632 = vsel %vm579, %v3929, 0
    %v4634 = vsel %vm579, %v3931, 0
    %v4636 = vsel %vm579, %v3933, 0
    %v4638 = vsel %vm579, %v3935, 0
    %4640 = vmatprep.subr.mxu0 0.0
    %4641 = vmatpush1.xpose.msra.mxu0 0.0
    %4642 = vmatprep.subr.mxu0 0.0
    %4643 = vmatpush1.xpose.msra.mxu0 0.0
    %4644 = vmatprep.subr.mxu0 0.0
    %4645 = vmatpush1.xpose.msra.mxu0 0.0
    %4646 = vmatprep.subr.mxu0 0.0
    %4647 = vmatpush1.xpose.msra.mxu0 0.0
    %4648 = vmatprep.subr.mxu0 0.0
    %4649 = vmatpush1.xpose.msra.mxu0 0.0
    %4650 = vmatprep.subr.mxu0 0.0
    %4651 = vmatpush1.xpose.msra.mxu0 0.0
    %4652 = vmatprep.subr.mxu0 0.0
    %4653 = vmatpush1.xpose.msra.mxu0 0.0
    %4654 = vmatprep.subr.mxu0 0.0
    %4655 = vmatpush1.xpose.msra.mxu0 0.0
    %4656 = vmatprep.subr.mxu0 0.0
    %4657 = vmatpush1.xpose.msra.mxu0 %v4638
    %4658 = vmatprep.subr.mxu0 0.0
    %4659 = vmatpush1.xpose.msra.mxu0 %v4636
    %4660 = vmatprep.subr.mxu0 0.0
    %4661 = vmatpush1.xpose.msra.mxu0 %v4634
    %4662 = vmatprep.subr.mxu0 0.0
    %4663 = vmatpush1.xpose.msra.mxu0 %v4632
    %4664 = vmatprep.subr.mxu0 0.0
    %4665 = vmatpush1.xpose.msra.mxu0 %v4630
    %4666 = vmatprep.subr.mxu0 0.0
    %4667 = vmatpush1.xpose.msra.mxu0 %v4628
    %4668 = vmatprep.subr.mxu0 0.0
    %4669 = vmatpush1.xpose.msra.mxu0 %v4626
    %4670 = vmatprep.subr.mxu0 0.0
    %4671 = vmatpush1.xpose.msra.mxu0 %v4624
    %4672 = vmatprep.subr.mxu0 0.0
    %4673 = vmatpush2.xpose.msra.mxu0 0.0
    %4674 = vmatprep.subr.mxu0 0.0
    %4675 = vmatpush2.xpose.msra.mxu0 0.0
    %4676 = vmatprep.subr.mxu0 0.0
    %4677 = vmatpush2.xpose.msra.mxu0 0.0
    %4678 = vmatprep.subr.mxu0 0.0
    %4679 = vmatpush2.xpose.msra.mxu0 0.0
    %4680 = vmatprep.subr.mxu0 0.0
    %4681 = vmatpush2.xpose.msra.mxu0 0.0
    %4682 = vmatprep.subr.mxu0 0.0
    %4683 = vmatpush2.xpose.msra.mxu0 0.0
    %4684 = vmatprep.subr.mxu0 0.0
    %4685 = vmatpush2.xpose.msra.mxu0 0.0
    %4686 = vmatprep.subr.mxu0 0.0
    %4687 = vmatpush2.xpose.msra.mxu0 0.0
    %4688 = vmatprep.subr.mxu0 0.0
    %4689 = vmatpush2.xpose.msra.mxu0 0.0
    %4690 = vmatprep.subr.mxu0 0.0
    %4691 = vmatpush2.xpose.msra.mxu0 0.0
    %4692 = vmatprep.subr.mxu0 0.0
    %4693 = vmatpush2.xpose.msra.mxu0 0.0
    %4694 = vmatprep.subr.mxu0 0.0
    %4695 = vmatpush2.xpose.msra.mxu0 0.0
    %4696 = vmatprep.subr.mxu0 0.0
    %4697 = vmatpush2.xpose.msra.mxu0 0.0
    %4698 = vmatprep.subr.mxu0 0.0
    %4699 = vmatpush2.xpose.msra.mxu0 0.0
    %4700 = vmatprep.subr.mxu0 0.0
    %4701 = vmatpush2.xpose.msra.mxu0 0.0
    %4702 = vmatprep.subr.mxu0 0.0
    %4703 = vmatpush2.xpose.msra.mxu0 0.0
    %4704 = vmatprep.mubr.f32.mxu0 0.0
    %4705 = vmatmul.mubr.f32.gmra.mxu0 %v4622
    %v4706 = vpop.f32.mrf.mxu0
    %v4707 = vadd.f32 0.0, %v4706
    %v4708 = vpop.f32.mrf.mxu0
    %4709 = vdwg.mxu0
    %v4710 = vsel %vm579, %v4148, 0
    %v4712 = vsel %vm579, %v3945, 0
    %v4714 = vsel %vm579, %v3947, 0
    %v4716 = vsel %vm579, %v3949, 0
    %v4718 = vsel %vm579, %v3951, 0
    %v4720 = vsel %vm579, %v3953, 0
    %v4722 = vsel %vm579, %v3955, 0
    %v4724 = vsel %vm579, %v3957, 0
    %v4726 = vsel %vm579, %v3959, 0
    %4728 = vmatprep.subr.mxu0 0.0
    %4729 = vmatpush1.xpose.msra.mxu0 0.0
    %4730 = vmatprep.subr.mxu0 0.0
    %4731 = vmatpush1.xpose.msra.mxu0 0.0
    %4732 = vmatprep.subr.mxu0 0.0
    %4733 = vmatpush1.xpose.msra.mxu0 0.0
    %4734 = vmatprep.subr.mxu0 0.0
    %4735 = vmatpush1.xpose.msra.mxu0 0.0
    %4736 = vmatprep.subr.mxu0 0.0
    %4737 = vmatpush1.xpose.msra.mxu0 0.0
    %4738 = vmatprep.subr.mxu0 0.0
    %4739 = vmatpush1.xpose.msra.mxu0 0.0
    %4740 = vmatprep.subr.mxu0 0.0
    %4741 = vmatpush1.xpose.msra.mxu0 0.0
    %4742 = vmatprep.subr.mxu0 0.0
    %4743 = vmatpush1.xpose.msra.mxu0 0.0
    %4744 = vmatprep.subr.mxu0 0.0
    %4745 = vmatpush1.xpose.msra.mxu0 %v4726
    %4746 = vmatprep.subr.mxu0 0.0
    %4747 = vmatpush1.xpose.msra.mxu0 %v4724
    %4748 = vmatprep.subr.mxu0 0.0
    %4749 = vmatpush1.xpose.msra.mxu0 %v4722
    %4750 = vmatprep.subr.mxu0 0.0
    %4751 = vmatpush1.xpose.msra.mxu0 %v4720
    %4752 = vmatprep.subr.mxu0 0.0
    %4753 = vmatpush1.xpose.msra.mxu0 %v4718
    %4754 = vmatprep.subr.mxu0 0.0
    %4755 = vmatpush1.xpose.msra.mxu0 %v4716
    %4756 = vmatprep.subr.mxu0 0.0
    %4757 = vmatpush1.xpose.msra.mxu0 %v4714
    %4758 = vmatprep.subr.mxu0 0.0
    %4759 = vmatpush1.xpose.msra.mxu0 %v4712
    %4760 = vmatprep.subr.mxu0 0.0
    %4761 = vmatpush2.xpose.msra.mxu0 0.0
    %4762 = vmatprep.subr.mxu0 0.0
    %4763 = vmatpush2.xpose.msra.mxu0 0.0
    %4764 = vmatprep.subr.mxu0 0.0
    %4765 = vmatpush2.xpose.msra.mxu0 0.0
    %4766 = vmatprep.subr.mxu0 0.0
    %4767 = vmatpush2.xpose.msra.mxu0 0.0
    %4768 = vmatprep.subr.mxu0 0.0
    %4769 = vmatpush2.xpose.msra.mxu0 0.0
    %4770 = vmatprep.subr.mxu0 0.0
    %4771 = vmatpush2.xpose.msra.mxu0 0.0
    %4772 = vmatprep.subr.mxu0 0.0
    %4773 = vmatpush2.xpose.msra.mxu0 0.0
    %4774 = vmatprep.subr.mxu0 0.0
    %4775 = vmatpush2.xpose.msra.mxu0 0.0
    %4776 = vmatprep.subr.mxu0 0.0
    %4777 = vmatpush2.xpose.msra.mxu0 0.0
    %4778 = vmatprep.subr.mxu0 0.0
    %4779 = vmatpush2.xpose.msra.mxu0 0.0
    %4780 = vmatprep.subr.mxu0 0.0
    %4781 = vmatpush2.xpose.msra.mxu0 0.0
    %4782 = vmatprep.subr.mxu0 0.0
    %4783 = vmatpush2.xpose.msra.mxu0 0.0
    %4784 = vmatprep.subr.mxu0 0.0
    %4785 = vmatpush2.xpose.msra.mxu0 0.0
    %4786 = vmatprep.subr.mxu0 0.0
    %4787 = vmatpush2.xpose.msra.mxu0 0.0
    %4788 = vmatprep.subr.mxu0 0.0
    %4789 = vmatpush2.xpose.msra.mxu0 0.0
    %4790 = vmatprep.subr.mxu0 0.0
    %4791 = vmatpush2.xpose.msra.mxu0 0.0
    %4792 = vmatprep.mubr.f32.mxu0 0.0
    %4793 = vmatmul.mubr.f32.gmra.mxu0 %v4710
    %v4794 = vpop.f32.mrf.mxu0
    %v4795 = vadd.f32 0.0, %v4794
    %v4796 = vpop.f32.mrf.mxu0
    %4797 = vdwg.mxu0
    %v4798 = vsel %vm579, %v4131, 0
    %v4800 = vsel %vm579, %v3844, 0
    %v4802 = vsel %vm579, %v3850, 0
    %v4804 = vsel %vm579, %v3856, 0
    %v4806 = vsel %vm579, %v3862, 0
    %v4808 = vsel %vm579, %v3868, 0
    %v4810 = vsel %vm579, %v3874, 0
    %v4812 = vsel %vm579, %v3880, 0
    %v4814 = vsel %vm579, %v3886, 0
    %4816 = vmatprep.subr.mxu0 0.0
    %4817 = vmatpush1.xpose.msra.mxu0 0.0
    %4818 = vmatprep.subr.mxu0 0.0
    %4819 = vmatpush1.xpose.msra.mxu0 0.0
    %4820 = vmatprep.subr.mxu0 0.0
    %4821 = vmatpush1.xpose.msra.mxu0 0.0
    %4822 = vmatprep.subr.mxu0 0.0
    %4823 = vmatpush1.xpose.msra.mxu0 0.0
    %4824 = vmatprep.subr.mxu0 0.0
    %4825 = vmatpush1.xpose.msra.mxu0 0.0
    %4826 = vmatprep.subr.mxu0 0.0
    %4827 = vmatpush1.xpose.msra.mxu0 0.0
    %4828 = vmatprep.subr.mxu0 0.0
    %4829 = vmatpush1.xpose.msra.mxu0 0.0
    %4830 = vmatprep.subr.mxu0 0.0
    %4831 = vmatpush1.xpose.msra.mxu0 0.0
    %4832 = vmatprep.subr.mxu0 0.0
    %4833 = vmatpush1.xpose.msra.mxu0 %v4814
    %4834 = vmatprep.subr.mxu0 0.0
    %4835 = vmatpush1.xpose.msra.mxu0 %v4812
    %4836 = vmatprep.subr.mxu0 0.0
    %4837 = vmatpush1.xpose.msra.mxu0 %v4810
    %4838 = vmatprep.subr.mxu0 0.0
    %4839 = vmatpush1.xpose.msra.mxu0 %v4808
    %4840 = vmatprep.subr.mxu0 0.0
    %4841 = vmatpush1.xpose.msra.mxu0 %v4806
    %4842 = vmatprep.subr.mxu0 0.0
    %4843 = vmatpush1.xpose.msra.mxu0 %v4804
    %4844 = vmatprep.subr.mxu0 0.0
    %4845 = vmatpush1.xpose.msra.mxu0 %v4802
    %4846 = vmatprep.subr.mxu0 0.0
    %4847 = vmatpush1.xpose.msra.mxu0 %v4800
    %4848 = vmatprep.subr.mxu0 0.0
    %4849 = vmatpush2.xpose.msra.mxu0 0.0
    %4850 = vmatprep.subr.mxu0 0.0
    %4851 = vmatpush2.xpose.msra.mxu0 0.0
    %4852 = vmatprep.subr.mxu0 0.0
    %4853 = vmatpush2.xpose.msra.mxu0 0.0
    %4854 = vmatprep.subr.mxu0 0.0
    %4855 = vmatpush2.xpose.msra.mxu0 0.0
    %4856 = vmatprep.subr.mxu0 0.0
    %4857 = vmatpush2.xpose.msra.mxu0 0.0
    %4858 = vmatprep.subr.mxu0 0.0
    %4859 = vmatpush2.xpose.msra.mxu0 0.0
    %4860 = vmatprep.subr.mxu0 0.0
    %4861 = vmatpush2.xpose.msra.mxu0 0.0
    %4862 = vmatprep.subr.mxu0 0.0
    %4863 = vmatpush2.xpose.msra.mxu0 0.0
    %4864 = vmatprep.subr.mxu0 0.0
    %4865 = vmatpush2.xpose.msra.mxu0 0.0
    %4866 = vmatprep.subr.mxu0 0.0
    %4867 = vmatpush2.xpose.msra.mxu0 0.0
    %4868 = vmatprep.subr.mxu0 0.0
    %4869 = vmatpush2.xpose.msra.mxu0 0.0
    %4870 = vmatprep.subr.mxu0 0.0
    %4871 = vmatpush2.xpose.msra.mxu0 0.0
    %4872 = vmatprep.subr.mxu0 0.0
    %4873 = vmatpush2.xpose.msra.mxu0 0.0
    %4874 = vmatprep.subr.mxu0 0.0
    %4875 = vmatpush2.xpose.msra.mxu0 0.0
    %4876 = vmatprep.subr.mxu0 0.0
    %4877 = vmatpush2.xpose.msra.mxu0 0.0
    %4878 = vmatprep.subr.mxu0 0.0
    %4879 = vmatpush2.xpose.msra.mxu0 0.0
    %4880 = vmatprep.mubr.f32.mxu0 0.0
    %4881 = vmatmul.mubr.f32.gmra.mxu0 %v4798
    %v4882 = vpop.f32.mrf.mxu0
    %v4883 = vadd.f32 0.0, %v4882
    %v4884 = vpop.f32.mrf.mxu0
    %4885 = vdwg.mxu0
    %v4886 = vsel %vm579, %v4145, 0
    %v4888 = vsel %vm579, %v3977, 0
    %v4890 = vsel %vm579, %v3979, 0
    %v4892 = vsel %vm579, %v3981, 0
    %v4894 = vsel %vm579, %v3983, 0
    %v4896 = vsel %vm579, %v3985, 0
    %v4898 = vsel %vm579, %v3987, 0
    %v4900 = vsel %vm579, %v3989, 0
    %v4902 = vsel %vm579, %v3991, 0
    %4904 = vmatprep.subr.mxu0 0.0
    %4905 = vmatpush1.xpose.msra.mxu0 0.0
    %4906 = vmatprep.subr.mxu0 0.0
    %4907 = vmatpush1.xpose.msra.mxu0 0.0
    %4908 = vmatprep.subr.mxu0 0.0
    %4909 = vmatpush1.xpose.msra.mxu0 0.0
    %4910 = vmatprep.subr.mxu0 0.0
    %4911 = vmatpush1.xpose.msra.mxu0 0.0
    %4912 = vmatprep.subr.mxu0 0.0
    %4913 = vmatpush1.xpose.msra.mxu0 0.0
    %4914 = vmatprep.subr.mxu0 0.0
    %4915 = vmatpush1.xpose.msra.mxu0 0.0
    %4916 = vmatprep.subr.mxu0 0.0
    %4917 = vmatpush1.xpose.msra.mxu0 0.0
    %4918 = vmatprep.subr.mxu0 0.0
    %4919 = vmatpush1.xpose.msra.mxu0 0.0
    %4920 = vmatprep.subr.mxu0 0.0
    %4921 = vmatpush1.xpose.msra.mxu0 %v4902
    %4922 = vmatprep.subr.mxu0 0.0
    %4923 = vmatpush1.xpose.msra.mxu0 %v4900
    %4924 = vmatprep.subr.mxu0 0.0
    %4925 = vmatpush1.xpose.msra.mxu0 %v4898
    %4926 = vmatprep.subr.mxu0 0.0
    %4927 = vmatpush1.xpose.msra.mxu0 %v4896
    %4928 = vmatprep.subr.mxu0 0.0
    %4929 = vmatpush1.xpose.msra.mxu0 %v4894
    %4930 = vmatprep.subr.mxu0 0.0
    %4931 = vmatpush1.xpose.msra.mxu0 %v4892
    %4932 = vmatprep.subr.mxu0 0.0
    %4933 = vmatpush1.xpose.msra.mxu0 %v4890
    %4934 = vmatprep.subr.mxu0 0.0
    %4935 = vmatpush1.xpose.msra.mxu0 %v4888
    %4936 = vmatprep.subr.mxu0 0.0
    %4937 = vmatpush2.xpose.msra.mxu0 0.0
    %4938 = vmatprep.subr.mxu0 0.0
    %4939 = vmatpush2.xpose.msra.mxu0 0.0
    %4940 = vmatprep.subr.mxu0 0.0
    %4941 = vmatpush2.xpose.msra.mxu0 0.0
    %4942 = vmatprep.subr.mxu0 0.0
    %4943 = vmatpush2.xpose.msra.mxu0 0.0
    %4944 = vmatprep.subr.mxu0 0.0
    %4945 = vmatpush2.xpose.msra.mxu0 0.0
    %4946 = vmatprep.subr.mxu0 0.0
    %4947 = vmatpush2.xpose.msra.mxu0 0.0
    %4948 = vmatprep.subr.mxu0 0.0
    %4949 = vmatpush2.xpose.msra.mxu0 0.0
    %4950 = vmatprep.subr.mxu0 0.0
    %4951 = vmatpush2.xpose.msra.mxu0 0.0
    %4952 = vmatprep.subr.mxu0 0.0
    %4953 = vmatpush2.xpose.msra.mxu0 0.0
    %4954 = vmatprep.subr.mxu0 0.0
    %4955 = vmatpush2.xpose.msra.mxu0 0.0
    %4956 = vmatprep.subr.mxu0 0.0
    %4957 = vmatpush2.xpose.msra.mxu0 0.0
    %4958 = vmatprep.subr.mxu0 0.0
    %4959 = vmatpush2.xpose.msra.mxu0 0.0
    %4960 = vmatprep.subr.mxu0 0.0
    %4961 = vmatpush2.xpose.msra.mxu0 0.0
    %4962 = vmatprep.subr.mxu0 0.0
    %4963 = vmatpush2.xpose.msra.mxu0 0.0
    %4964 = vmatprep.subr.mxu0 0.0
    %4965 = vmatpush2.xpose.msra.mxu0 0.0
    %4966 = vmatprep.subr.mxu0 0.0
    %4967 = vmatpush2.xpose.msra.mxu0 0.0
    %4968 = vmatprep.mubr.f32.mxu0 0.0
    %4969 = vmatmul.mubr.f32.gmra.mxu0 %v4886
    %v4970 = vpop.f32.mrf.mxu0
    %v4971 = vadd.f32 0.0, %v4970
    %v4972 = vpop.f32.mrf.mxu0
    %4973 = vdwg.mxu0
    %v4974 = vsel %vm579, %v4147, 0
    %v4976 = vsel %vm579, %v4001, 0
    %v4978 = vsel %vm579, %v4003, 0
    %v4980 = vsel %vm579, %v4005, 0
    %v4982 = vsel %vm579, %v4007, 0
    %v4984 = vsel %vm579, %v4009, 0
    %v4986 = vsel %vm579, %v4011, 0
    %v4988 = vsel %vm579, %v4013, 0
    %v4990 = vsel %vm579, %v4015, 0
    %4992 = vmatprep.subr.mxu0 0.0
    %4993 = vmatpush1.xpose.msra.mxu0 0.0
    %4994 = vmatprep.subr.mxu0 0.0
    %4995 = vmatpush1.xpose.msra.mxu0 0.0
    %4996 = vmatprep.subr.mxu0 0.0
    %4997 = vmatpush1.xpose.msra.mxu0 0.0
    %4998 = vmatprep.subr.mxu0 0.0
    %4999 = vmatpush1.xpose.msra.mxu0 0.0
    %5000 = vmatprep.subr.mxu0 0.0
    %5001 = vmatpush1.xpose.msra.mxu0 0.0
    %5002 = vmatprep.subr.mxu0 0.0
    %5003 = vmatpush1.xpose.msra.mxu0 0.0
    %5004 = vmatprep.subr.mxu0 0.0
    %5005 = vmatpush1.xpose.msra.mxu0 0.0
    %5006 = vmatprep.subr.mxu0 0.0
    %5007 = vmatpush1.xpose.msra.mxu0 0.0
    %5008 = vmatprep.subr.mxu0 0.0
    %5009 = vmatpush1.xpose.msra.mxu0 %v4990
    %5010 = vmatprep.subr.mxu0 0.0
    %5011 = vmatpush1.xpose.msra.mxu0 %v4988
    %5012 = vmatprep.subr.mxu0 0.0
    %5013 = vmatpush1.xpose.msra.mxu0 %v4986
    %5014 = vmatprep.subr.mxu0 0.0
    %5015 = vmatpush1.xpose.msra.mxu0 %v4984
    %5016 = vmatprep.subr.mxu0 0.0
    %5017 = vmatpush1.xpose.msra.mxu0 %v4982
    %5018 = vmatprep.subr.mxu0 0.0
    %5019 = vmatpush1.xpose.msra.mxu0 %v4980
    %5020 = vmatprep.subr.mxu0 0.0
    %5021 = vmatpush1.xpose.msra.mxu0 %v4978
    %5022 = vmatprep.subr.mxu0 0.0
    %5023 = vmatpush1.xpose.msra.mxu0 %v4976
    %5024 = vmatprep.subr.mxu0 0.0
    %5025 = vmatpush2.xpose.msra.mxu0 0.0
    %5026 = vmatprep.subr.mxu0 0.0
    %5027 = vmatpush2.xpose.msra.mxu0 0.0
    %5028 = vmatprep.subr.mxu0 0.0
    %5029 = vmatpush2.xpose.msra.mxu0 0.0
    %5030 = vmatprep.subr.mxu0 0.0
    %5031 = vmatpush2.xpose.msra.mxu0 0.0
    %5032 = vmatprep.subr.mxu0 0.0
    %5033 = vmatpush2.xpose.msra.mxu0 0.0
    %5034 = vmatprep.subr.mxu0 0.0
    %5035 = vmatpush2.xpose.msra.mxu0 0.0
    %5036 = vmatprep.subr.mxu0 0.0
    %5037 = vmatpush2.xpose.msra.mxu0 0.0
    %5038 = vmatprep.subr.mxu0 0.0
    %5039 = vmatpush2.xpose.msra.mxu0 0.0
    %5040 = vmatprep.subr.mxu0 0.0
    %5041 = vmatpush2.xpose.msra.mxu0 0.0
    %5042 = vmatprep.subr.mxu0 0.0
    %5043 = vmatpush2.xpose.msra.mxu0 0.0
    %5044 = vmatprep.subr.mxu0 0.0
    %5045 = vmatpush2.xpose.msra.mxu0 0.0
    %5046 = vmatprep.subr.mxu0 0.0
    %5047 = vmatpush2.xpose.msra.mxu0 0.0
    %5048 = vmatprep.subr.mxu0 0.0
    %5049 = vmatpush2.xpose.msra.mxu0 0.0
    %5050 = vmatprep.subr.mxu0 0.0
    %5051 = vmatpush2.xpose.msra.mxu0 0.0
    %5052 = vmatprep.subr.mxu0 0.0
    %5053 = vmatpush2.xpose.msra.mxu0 0.0
    %5054 = vmatprep.subr.mxu0 0.0
    %5055 = vmatpush2.xpose.msra.mxu0 0.0
    %5056 = vmatprep.mubr.f32.mxu0 0.0
    %5057 = vmatmul.mubr.f32.gmra.mxu0 %v4974
    %v5058 = vpop.f32.mrf.mxu0
    %v5059 = vadd.f32 0.0, %v5058
    %v5060 = vpop.f32.mrf.mxu0
    %5061 = vdwg.mxu0
    %v5062 = vsel %vm579, %v4149, 0
    %v5064 = vsel %vm579, %v4025, 0
    %v5066 = vsel %vm579, %v4027, 0
    %v5068 = vsel %vm579, %v4029, 0
    %v5070 = vsel %vm579, %v4031, 0
    %v5072 = vsel %vm579, %v4033, 0
    %v5074 = vsel %vm579, %v4035, 0
    %v5076 = vsel %vm579, %v4037, 0
    %v5078 = vsel %vm579, %v4039, 0
    %5080 = vmatprep.subr.mxu0 0.0
    %5081 = vmatpush1.xpose.msra.mxu0 0.0
    %5082 = vmatprep.subr.mxu0 0.0
    %5083 = vmatpush1.xpose.msra.mxu0 0.0
    %5084 = vmatprep.subr.mxu0 0.0
    %5085 = vmatpush1.xpose.msra.mxu0 0.0
    %5086 = vmatprep.subr.mxu0 0.0
    %5087 = vmatpush1.xpose.msra.mxu0 0.0
    %5088 = vmatprep.subr.mxu0 0.0
    %5089 = vmatpush1.xpose.msra.mxu0 0.0
    %5090 = vmatprep.subr.mxu0 0.0
    %5091 = vmatpush1.xpose.msra.mxu0 0.0
    %5092 = vmatprep.subr.mxu0 0.0
    %5093 = vmatpush1.xpose.msra.mxu0 0.0
    %5094 = vmatprep.subr.mxu0 0.0
    %5095 = vmatpush1.xpose.msra.mxu0 0.0
    %5096 = vmatprep.subr.mxu0 0.0
    %5097 = vmatpush1.xpose.msra.mxu0 %v5078
    %5098 = vmatprep.subr.mxu0 0.0
    %5099 = vmatpush1.xpose.msra.mxu0 %v5076
    %5100 = vmatprep.subr.mxu0 0.0
    %5101 = vmatpush1.xpose.msra.mxu0 %v5074
    %5102 = vmatprep.subr.mxu0 0.0
    %5103 = vmatpush1.xpose.msra.mxu0 %v5072
    %5104 = vmatprep.subr.mxu0 0.0
    %5105 = vmatpush1.xpose.msra.mxu0 %v5070
    %5106 = vmatprep.subr.mxu0 0.0
    %5107 = vmatpush1.xpose.msra.mxu0 %v5068
    %5108 = vmatprep.subr.mxu0 0.0
    %5109 = vmatpush1.xpose.msra.mxu0 %v5066
    %5110 = vmatprep.subr.mxu0 0.0
    %5111 = vmatpush1.xpose.msra.mxu0 %v5064
    %5112 = vmatprep.subr.mxu0 0.0
    %5113 = vmatpush2.xpose.msra.mxu0 0.0
    %5114 = vmatprep.subr.mxu0 0.0
    %5115 = vmatpush2.xpose.msra.mxu0 0.0
    %5116 = vmatprep.subr.mxu0 0.0
    %5117 = vmatpush2.xpose.msra.mxu0 0.0
    %5118 = vmatprep.subr.mxu0 0.0
    %5119 = vmatpush2.xpose.msra.mxu0 0.0
    %5120 = vmatprep.subr.mxu0 0.0
    %5121 = vmatpush2.xpose.msra.mxu0 0.0
    %5122 = vmatprep.subr.mxu0 0.0
    %5123 = vmatpush2.xpose.msra.mxu0 0.0
    %5124 = vmatprep.subr.mxu0 0.0
    %5125 = vmatpush2.xpose.msra.mxu0 0.0
    %5126 = vmatprep.subr.mxu0 0.0
    %5127 = vmatpush2.xpose.msra.mxu0 0.0
    %5128 = vmatprep.subr.mxu0 0.0
    %5129 = vmatpush2.xpose.msra.mxu0 0.0
    %5130 = vmatprep.subr.mxu0 0.0
    %5131 = vmatpush2.xpose.msra.mxu0 0.0
    %5132 = vmatprep.subr.mxu0 0.0
    %5133 = vmatpush2.xpose.msra.mxu0 0.0
    %5134 = vmatprep.subr.mxu0 0.0
    %5135 = vmatpush2.xpose.msra.mxu0 0.0
    %5136 = vmatprep.subr.mxu0 0.0
    %5137 = vmatpush2.xpose.msra.mxu0 0.0
    %5138 = vmatprep.subr.mxu0 0.0
    %5139 = vmatpush2.xpose.msra.mxu0 0.0
    %5140 = vmatprep.subr.mxu0 0.0
    %5141 = vmatpush2.xpose.msra.mxu0 0.0
    %5142 = vmatprep.subr.mxu0 0.0
    %5143 = vmatpush2.xpose.msra.mxu0 0.0
    %5144 = vmatprep.mubr.f32.mxu0 0.0
    %5145 = vmatmul.mubr.f32.gmra.mxu0 %v5062
    %v5146 = vpop.f32.mrf.mxu0
    %v5147 = vadd.f32 0.0, %v5146
    %v5148 = vpop.f32.mrf.mxu0
    %5149 = vdwg.mxu0
    %v5150 = vlaneseq
    %v5151 = vshrl.u32 %v5150, 7
    %v5152 = vsub.s32 0, %v5151
    %v5153 = vrot.slane %v4531, %v5152
    %v5154 = vlaneseq
    %v5155 = vshrl.u32 %v5154, 7
    %v5156 = vsub.s32 0, %v5155
    %v5157 = vrot.slane %v4619, %v5156
    %v5158 = vlaneseq
    %v5159 = vshrl.u32 %v5158, 7
    %v5160 = vsub.s32 0, %v5159
    %v5161 = vrot.slane %v4707, %v5160
    %v5162 = vlaneseq
    %v5163 = vshrl.u32 %v5162, 7
    %v5164 = vsub.s32 0, %v5163
    %v5165 = vrot.slane %v4795, %v5164
    %v5166 = vlaneseq
    %v5167 = vshrl.u32 %v5166, 7
    %v5168 = vsub.s32 0, %v5167
    %v5169 = vrot.slane %v4883, %v5168
    %v5170 = vlaneseq
    %v5171 = vshrl.u32 %v5170, 7
    %v5172 = vsub.s32 0, %v5171
    %v5173 = vrot.slane %v4971, %v5172
    %v5174 = vlaneseq
    %v5175 = vshrl.u32 %v5174, 7
    %v5176 = vsub.s32 0, %v5175
    %v5177 = vrot.slane %v5059, %v5176
    %v5178 = vlaneseq
    %v5179 = vshrl.u32 %v5178, 7
    %v5180 = vsub.s32 0, %v5179
    %v5181 = vrot.slane %v5147, %v5180
    %v5182 = vadd.f32 %v4256, %v5153
    %v5183 = vadd.f32 %v4259, %v5153
    %v5184 = vadd.f32 %v4262, %v5153
    %v5185 = vadd.f32 %v4265, %v5153
    %v5186 = vadd.f32 %v4268, %v5153
    %v5187 = vadd.f32 %v4271, %v5153
    %v5188 = vadd.f32 %v4274, %v5153
    %v5189 = vadd.f32 %v4277, %v5153
    %v5190 = vadd.f32 %v4280, %v5157
    %v5191 = vadd.f32 %v4283, %v5157
    %v5192 = vadd.f32 %v4286, %v5157
    %v5193 = vadd.f32 %v4289, %v5157
    %v5194 = vadd.f32 %v4292, %v5157
    %v5195 = vadd.f32 %v4295, %v5157
    %v5196 = vadd.f32 %v4298, %v5157
    %v5197 = vadd.f32 %v4301, %v5157
    %v5198 = vadd.f32 %v4304, %v5161
    %v5199 = vadd.f32 %v4307, %v5161
    %v5200 = vadd.f32 %v4310, %v5161
    %v5201 = vadd.f32 %v4313, %v5161
    %v5202 = vadd.f32 %v4316, %v5161
    %v5203 = vadd.f32 %v4319, %v5161
    %v5204 = vadd.f32 %v4322, %v5161
    %v5205 = vadd.f32 %v4325, %v5161
    %v5206 = vadd.f32 %v4328, %v5165
    %v5207 = vadd.f32 %v4331, %v5165
    %v5208 = vadd.f32 %v4334, %v5165
    %v5209 = vadd.f32 %v4337, %v5165
    %v5210 = vadd.f32 %v4340, %v5165
    %v5211 = vadd.f32 %v4343, %v5165
    %v5212 = vadd.f32 %v4346, %v5165
    %v5213 = vadd.f32 %v4349, %v5165
    %v5214 = vadd.f32 %v4352, %v5169
    %v5215 = vadd.f32 %v4355, %v5169
    %v5216 = vadd.f32 %v4358, %v5169
    %v5217 = vadd.f32 %v4361, %v5169
    %v5218 = vadd.f32 %v4364, %v5169
    %v5219 = vadd.f32 %v4367, %v5169
    %v5220 = vadd.f32 %v4370, %v5169
    %v5221 = vadd.f32 %v4373, %v5169
    %v5222 = vadd.f32 %v4376, %v5173
    %v5223 = vadd.f32 %v4379, %v5173
    %v5224 = vadd.f32 %v4382, %v5173
    %v5225 = vadd.f32 %v4385, %v5173
    %v5226 = vadd.f32 %v4388, %v5173
    %v5227 = vadd.f32 %v4391, %v5173
    %v5228 = vadd.f32 %v4394, %v5173
    %v5229 = vadd.f32 %v4397, %v5173
    %v5230 = vadd.f32 %v4400, %v5177
    %v5231 = vadd.f32 %v4403, %v5177
    %v5232 = vadd.f32 %v4406, %v5177
    %v5233 = vadd.f32 %v4409, %v5177
    %v5234 = vadd.f32 %v4412, %v5177
    %v5235 = vadd.f32 %v4415, %v5177
    %v5236 = vadd.f32 %v4418, %v5177
    %v5237 = vadd.f32 %v4421, %v5177
    %v5238 = vadd.f32 %v4424, %v5181
    %v5239 = vadd.f32 %v4427, %v5181
    %v5240 = vadd.f32 %v4430, %v5181
    %v5241 = vadd.f32 %v4433, %v5181
    %v5242 = vadd.f32 %v4436, %v5181
    %v5243 = vadd.f32 %v4439, %v5181
    %v5244 = vadd.f32 %v4442, %v5181
    %v5245 = vadd.f32 %v4445, %v5181
    %vm5246 = vcmp.ge.f32.partialorder %v5182, 0.0
    %vm5247 = vcmp.ge.f32.partialorder %v5183, 0.0
    %vm5248 = vcmp.ge.f32.partialorder %v5184, 0.0
    %vm5249 = vcmp.ge.f32.partialorder %v5185, 0.0
    %vm5250 = vcmp.ge.f32.partialorder %v5186, 0.0
    %vm5251 = vcmp.ge.f32.partialorder %v5187, 0.0
    %vm5252 = vcmp.ge.f32.partialorder %v5188, 0.0
    %vm5253 = vcmp.ge.f32.partialorder %v5189, 0.0
    %vm5254 = vcmp.ge.f32.partialorder %v5190, 0.0
    %vm5255 = vcmp.ge.f32.partialorder %v5191, 0.0
    %vm5256 = vcmp.ge.f32.partialorder %v5192, 0.0
    %vm5257 = vcmp.ge.f32.partialorder %v5193, 0.0
    %vm5258 = vcmp.ge.f32.partialorder %v5194, 0.0
    %vm5259 = vcmp.ge.f32.partialorder %v5195, 0.0
    %vm5260 = vcmp.ge.f32.partialorder %v5196, 0.0
    %vm5261 = vcmp.ge.f32.partialorder %v5197, 0.0
    %vm5262 = vcmp.ge.f32.partialorder %v5198, 0.0
    %vm5263 = vcmp.ge.f32.partialorder %v5199, 0.0
    %vm5264 = vcmp.ge.f32.partialorder %v5200, 0.0
    %vm5265 = vcmp.ge.f32.partialorder %v5201, 0.0
    %vm5266 = vcmp.ge.f32.partialorder %v5202, 0.0
    %vm5267 = vcmp.ge.f32.partialorder %v5203, 0.0
    %vm5268 = vcmp.ge.f32.partialorder %v5204, 0.0
    %vm5269 = vcmp.ge.f32.partialorder %v5205, 0.0
    %vm5270 = vcmp.ge.f32.partialorder %v5206, 0.0
    %vm5271 = vcmp.ge.f32.partialorder %v5207, 0.0
    %vm5272 = vcmp.ge.f32.partialorder %v5208, 0.0
    %vm5273 = vcmp.ge.f32.partialorder %v5209, 0.0
    %vm5274 = vcmp.ge.f32.partialorder %v5210, 0.0
    %vm5275 = vcmp.ge.f32.partialorder %v5211, 0.0
    %vm5276 = vcmp.ge.f32.partialorder %v5212, 0.0
    %vm5277 = vcmp.ge.f32.partialorder %v5213, 0.0
    %vm5278 = vcmp.ge.f32.partialorder %v5214, 0.0
    %vm5279 = vcmp.ge.f32.partialorder %v5215, 0.0
    %vm5280 = vcmp.ge.f32.partialorder %v5216, 0.0
    %vm5281 = vcmp.ge.f32.partialorder %v5217, 0.0
    %vm5282 = vcmp.ge.f32.partialorder %v5218, 0.0
    %vm5283 = vcmp.ge.f32.partialorder %v5219, 0.0
    %vm5284 = vcmp.ge.f32.partialorder %v5220, 0.0
    %vm5285 = vcmp.ge.f32.partialorder %v5221, 0.0
    %vm5286 = vcmp.ge.f32.partialorder %v5222, 0.0
    %vm5287 = vcmp.ge.f32.partialorder %v5223, 0.0
    %vm5288 = vcmp.ge.f32.partialorder %v5224, 0.0
    %vm5289 = vcmp.ge.f32.partialorder %v5225, 0.0
    %vm5290 = vcmp.ge.f32.partialorder %v5226, 0.0
    %vm5291 = vcmp.ge.f32.partialorder %v5227, 0.0
    %vm5292 = vcmp.ge.f32.partialorder %v5228, 0.0
    %vm5293 = vcmp.ge.f32.partialorder %v5229, 0.0
    %vm5294 = vcmp.ge.f32.partialorder %v5230, 0.0
    %vm5295 = vcmp.ge.f32.partialorder %v5231, 0.0
    %vm5296 = vcmp.ge.f32.partialorder %v5232, 0.0
    %vm5297 = vcmp.ge.f32.partialorder %v5233, 0.0
    %vm5298 = vcmp.ge.f32.partialorder %v5234, 0.0
    %vm5299 = vcmp.ge.f32.partialorder %v5235, 0.0
    %vm5300 = vcmp.ge.f32.partialorder %v5236, 0.0
    %vm5301 = vcmp.ge.f32.partialorder %v5237, 0.0
    %vm5302 = vcmp.ge.f32.partialorder %v5238, 0.0
    %vm5303 = vcmp.ge.f32.partialorder %v5239, 0.0
    %vm5304 = vcmp.ge.f32.partialorder %v5240, 0.0
    %vm5305 = vcmp.ge.f32.partialorder %v5241, 0.0
    %vm5306 = vcmp.ge.f32.partialorder %v5242, 0.0
    %vm5307 = vcmp.ge.f32.partialorder %v5243, 0.0
    %vm5308 = vcmp.ge.f32.partialorder %v5244, 0.0
    %vm5309 = vcmp.ge.f32.partialorder %v5245, 0.0
    %v5310 = vmul.f32 %v5182, 0.2
    %v5311 = vmul.f32 %v5183, 0.2
    %v5312 = vmul.f32 %v5184, 0.2
    %v5313 = vmul.f32 %v5185, 0.2
    %v5314 = vmul.f32 %v5186, 0.2
    %v5315 = vmul.f32 %v5187, 0.2
    %v5316 = vmul.f32 %v5188, 0.2
    %v5317 = vmul.f32 %v5189, 0.2
    %v5318 = vmul.f32 %v5190, 0.2
    %v5319 = vmul.f32 %v5191, 0.2
    %v5320 = vmul.f32 %v5192, 0.2
    %v5321 = vmul.f32 %v5193, 0.2
    %v5322 = vmul.f32 %v5194, 0.2
    %v5323 = vmul.f32 %v5195, 0.2
    %v5324 = vmul.f32 %v5196, 0.2
    %v5325 = vmul.f32 %v5197, 0.2
    %v5326 = vmul.f32 %v5198, 0.2
    %v5327 = vmul.f32 %v5199, 0.2
    %v5328 = vmul.f32 %v5200, 0.2
    %v5329 = vmul.f32 %v5201, 0.2
    %v5330 = vmul.f32 %v5202, 0.2
    %v5331 = vmul.f32 %v5203, 0.2
    %v5332 = vmul.f32 %v5204, 0.2
    %v5333 = vmul.f32 %v5205, 0.2
    %v5334 = vmul.f32 %v5206, 0.2
    %v5335 = vmul.f32 %v5207, 0.2
    %v5336 = vmul.f32 %v5208, 0.2
    %v5337 = vmul.f32 %v5209, 0.2
    %v5338 = vmul.f32 %v5210, 0.2
    %v5339 = vmul.f32 %v5211, 0.2
    %v5340 = vmul.f32 %v5212, 0.2
    %v5341 = vmul.f32 %v5213, 0.2
    %v5342 = vmul.f32 %v5214, 0.2
    %v5343 = vmul.f32 %v5215, 0.2
    %v5344 = vmul.f32 %v5216, 0.2
    %v5345 = vmul.f32 %v5217, 0.2
    %v5346 = vmul.f32 %v5218, 0.2
    %v5347 = vmul.f32 %v5219, 0.2
    %v5348 = vmul.f32 %v5220, 0.2
    %v5349 = vmul.f32 %v5221, 0.2
    %v5350 = vmul.f32 %v5222, 0.2
    %v5351 = vmul.f32 %v5223, 0.2
    %v5352 = vmul.f32 %v5224, 0.2
    %v5353 = vmul.f32 %v5225, 0.2
    %v5354 = vmul.f32 %v5226, 0.2
    %v5355 = vmul.f32 %v5227, 0.2
    %v5356 = vmul.f32 %v5228, 0.2
    %v5357 = vmul.f32 %v5229, 0.2
    %v5358 = vmul.f32 %v5230, 0.2
    %v5359 = vmul.f32 %v5231, 0.2
    %v5360 = vmul.f32 %v5232, 0.2
    %v5361 = vmul.f32 %v5233, 0.2
    %v5362 = vmul.f32 %v5234, 0.2
    %v5363 = vmul.f32 %v5235, 0.2
    %v5364 = vmul.f32 %v5236, 0.2
    %v5365 = vmul.f32 %v5237, 0.2
    %v5366 = vmul.f32 %v5238, 0.2
    %v5367 = vmul.f32 %v5239, 0.2
    %v5368 = vmul.f32 %v5240, 0.2
    %v5369 = vmul.f32 %v5241, 0.2
    %v5370 = vmul.f32 %v5242, 0.2
    %v5371 = vmul.f32 %v5243, 0.2
    %v5372 = vmul.f32 %v5244, 0.2
    %v5373 = vmul.f32 %v5245, 0.2
    %v5374 = vsel %vm5246, %v5182, %v5310
    %v5375 = vsel %vm5247, %v5183, %v5311
    %v5376 = vsel %vm5248, %v5184, %v5312
    %v5377 = vsel %vm5249, %v5185, %v5313
    %v5378 = vsel %vm5250, %v5186, %v5314
    %v5379 = vsel %vm5251, %v5187, %v5315
    %v5380 = vsel %vm5252, %v5188, %v5316
    %v5381 = vsel %vm5253, %v5189, %v5317
    %v5382 = vsel %vm5254, %v5190, %v5318
    %v5383 = vsel %vm5255, %v5191, %v5319
    %v5384 = vsel %vm5256, %v5192, %v5320
    %v5385 = vsel %vm5257, %v5193, %v5321
    %v5386 = vsel %vm5258, %v5194, %v5322
    %v5387 = vsel %vm5259, %v5195, %v5323
    %v5388 = vsel %vm5260, %v5196, %v5324
    %v5389 = vsel %vm5261, %v5197, %v5325
    %v5390 = vsel %vm5262, %v5198, %v5326
    %v5391 = vsel %vm5263, %v5199, %v5327
    %v5392 = vsel %vm5264, %v5200, %v5328
    %v5393 = vsel %vm5265, %v5201, %v5329
    %v5394 = vsel %vm5266, %v5202, %v5330
    %v5395 = vsel %vm5267, %v5203, %v5331
    %v5396 = vsel %vm5268, %v5204, %v5332
    %v5397 = vsel %vm5269, %v5205, %v5333
    %v5398 = vsel %vm5270, %v5206, %v5334
    %v5399 = vsel %vm5271, %v5207, %v5335
    %v5400 = vsel %vm5272, %v5208, %v5336
    %v5401 = vsel %vm5273, %v5209, %v5337
    %v5402 = vsel %vm5274, %v5210, %v5338
    %v5403 = vsel %vm5275, %v5211, %v5339
    %v5404 = vsel %vm5276, %v5212, %v5340
    %v5405 = vsel %vm5277, %v5213, %v5341
    %v5406 = vsel %vm5278, %v5214, %v5342
    %v5407 = vsel %vm5279, %v5215, %v5343
    %v5408 = vsel %vm5280, %v5216, %v5344
    %v5409 = vsel %vm5281, %v5217, %v5345
    %v5410 = vsel %vm5282, %v5218, %v5346
    %v5411 = vsel %vm5283, %v5219, %v5347
    %v5412 = vsel %vm5284, %v5220, %v5348
    %v5413 = vsel %vm5285, %v5221, %v5349
    %v5414 = vsel %vm5286, %v5222, %v5350
    %v5415 = vsel %vm5287, %v5223, %v5351
    %v5416 = vsel %vm5288, %v5224, %v5352
    %v5417 = vsel %vm5289, %v5225, %v5353
    %v5418 = vsel %vm5290, %v5226, %v5354
    %v5419 = vsel %vm5291, %v5227, %v5355
    %v5420 = vsel %vm5292, %v5228, %v5356
    %v5421 = vsel %vm5293, %v5229, %v5357
    %v5422 = vsel %vm5294, %v5230, %v5358
    %v5423 = vsel %vm5295, %v5231, %v5359
    %v5424 = vsel %vm5296, %v5232, %v5360
    %v5425 = vsel %vm5297, %v5233, %v5361
    %v5426 = vsel %vm5298, %v5234, %v5362
    %v5427 = vsel %vm5299, %v5235, %v5363
    %v5428 = vsel %vm5300, %v5236, %v5364
    %v5429 = vsel %vm5301, %v5237, %v5365
    %v5430 = vsel %vm5302, %v5238, %v5366
    %v5431 = vsel %vm5303, %v5239, %v5367
    %v5432 = vsel %vm5304, %v5240, %v5368
    %v5433 = vsel %vm5305, %v5241, %v5369
    %v5434 = vsel %vm5306, %v5242, %v5370
    %v5435 = vsel %vm5307, %v5243, %v5371
    %v5436 = vsel %vm5308, %v5244, %v5372
    %v5437 = vsel %vm5309, %v5245, %v5373
    %v5438 = vsel %vm1780, %v5374, -1e+30
    %v5439 = vsel %vm1781, %v5375, -1e+30
    %v5440 = vsel %vm1782, %v5376, -1e+30
    %v5441 = vsel %vm1783, %v5377, -1e+30
    %v5442 = vsel %vm1784, %v5378, -1e+30
    %v5443 = vsel %vm1785, %v5379, -1e+30
    %v5444 = vsel %vm1786, %v5380, -1e+30
    %v5445 = vsel %vm1787, %v5381, -1e+30
    %v5446 = vsel %vm1780, %v5382, -1e+30
    %v5447 = vsel %vm1781, %v5383, -1e+30
    %v5448 = vsel %vm1782, %v5384, -1e+30
    %v5449 = vsel %vm1783, %v5385, -1e+30
    %v5450 = vsel %vm1784, %v5386, -1e+30
    %v5451 = vsel %vm1785, %v5387, -1e+30
    %v5452 = vsel %vm1786, %v5388, -1e+30
    %v5453 = vsel %vm1787, %v5389, -1e+30
    %v5454 = vsel %vm1780, %v5390, -1e+30
    %v5455 = vsel %vm1781, %v5391, -1e+30
    %v5456 = vsel %vm1782, %v5392, -1e+30
    %v5457 = vsel %vm1783, %v5393, -1e+30
    %v5458 = vsel %vm1784, %v5394, -1e+30
    %v5459 = vsel %vm1785, %v5395, -1e+30
    %v5460 = vsel %vm1786, %v5396, -1e+30
    %v5461 = vsel %vm1787, %v5397, -1e+30
    %v5462 = vsel %vm1780, %v5398, -1e+30
    %v5463 = vsel %vm1781, %v5399, -1e+30
    %v5464 = vsel %vm1782, %v5400, -1e+30
    %v5465 = vsel %vm1783, %v5401, -1e+30
    %v5466 = vsel %vm1784, %v5402, -1e+30
    %v5467 = vsel %vm1785, %v5403, -1e+30
    %v5468 = vsel %vm1786, %v5404, -1e+30
    %v5469 = vsel %vm1787, %v5405, -1e+30
    %v5470 = vsel %vm1780, %v5406, -1e+30
    %v5471 = vsel %vm1781, %v5407, -1e+30
    %v5472 = vsel %vm1782, %v5408, -1e+30
    %v5473 = vsel %vm1783, %v5409, -1e+30
    %v5474 = vsel %vm1784, %v5410, -1e+30
    %v5475 = vsel %vm1785, %v5411, -1e+30
    %v5476 = vsel %vm1786, %v5412, -1e+30
    %v5477 = vsel %vm1787, %v5413, -1e+30
    %v5478 = vsel %vm1780, %v5414, -1e+30
    %v5479 = vsel %vm1781, %v5415, -1e+30
    %v5480 = vsel %vm1782, %v5416, -1e+30
    %v5481 = vsel %vm1783, %v5417, -1e+30
    %v5482 = vsel %vm1784, %v5418, -1e+30
    %v5483 = vsel %vm1785, %v5419, -1e+30
    %v5484 = vsel %vm1786, %v5420, -1e+30
    %v5485 = vsel %vm1787, %v5421, -1e+30
    %v5486 = vsel %vm1780, %v5422, -1e+30
    %v5487 = vsel %vm1781, %v5423, -1e+30
    %v5488 = vsel %vm1782, %v5424, -1e+30
    %v5489 = vsel %vm1783, %v5425, -1e+30
    %v5490 = vsel %vm1784, %v5426, -1e+30
    %v5491 = vsel %vm1785, %v5427, -1e+30
    %v5492 = vsel %vm1786, %v5428, -1e+30
    %v5493 = vsel %vm1787, %v5429, -1e+30
    %v5494 = vsel %vm1780, %v5430, -1e+30
    %v5495 = vsel %vm1781, %v5431, -1e+30
    %v5496 = vsel %vm1782, %v5432, -1e+30
    %v5497 = vsel %vm1783, %v5433, -1e+30
    %v5498 = vsel %vm1784, %v5434, -1e+30
    %v5499 = vsel %vm1785, %v5435, -1e+30
    %v5500 = vsel %vm1786, %v5436, -1e+30
    %v5501 = vsel %vm1787, %v5437, -1e+30
    %v5502 = vsel %vm1852, %v5438, -inf
    %5503 = vmax.xlane.f32.xlu0 %v5502
    %v5504 = vpop.xlane.xlu0 %5503
    %v5505 = vsel %vm1852, %v5439, -inf
    %5506 = vmax.xlane.f32.xlu0 %v5505
    %v5507 = vpop.xlane.xlu0 %5506
    %v5508 = vsel %vm1852, %v5440, -inf
    %5509 = vmax.xlane.f32.xlu0 %v5508
    %v5510 = vpop.xlane.xlu0 %5509
    %v5511 = vsel %vm1852, %v5441, -inf
    %5512 = vmax.xlane.f32.xlu0 %v5511
    %v5513 = vpop.xlane.xlu0 %5512
    %v5514 = vsel %vm1852, %v5442, -inf
    %5515 = vmax.xlane.f32.xlu0 %v5514
    %v5516 = vpop.xlane.xlu0 %5515
    %v5517 = vsel %vm1852, %v5443, -inf
    %5518 = vmax.xlane.f32.xlu0 %v5517
    %v5519 = vpop.xlane.xlu0 %5518
    %v5520 = vsel %vm1852, %v5444, -inf
    %5521 = vmax.xlane.f32.xlu0 %v5520
    %v5522 = vpop.xlane.xlu0 %5521
    %v5523 = vsel %vm1852, %v5445, -inf
    %5524 = vmax.xlane.f32.xlu0 %v5523
    %v5525 = vpop.xlane.xlu0 %5524
    %v5526 = vsel %vm1852, %v5446, -inf
    %5527 = vmax.xlane.f32.xlu0 %v5526
    %v5528 = vpop.xlane.xlu0 %5527
    %v5529 = vsel %vm1852, %v5447, -inf
    %5530 = vmax.xlane.f32.xlu0 %v5529
    %v5531 = vpop.xlane.xlu0 %5530
    %v5532 = vsel %vm1852, %v5448, -inf
    %5533 = vmax.xlane.f32.xlu0 %v5532
    %v5534 = vpop.xlane.xlu0 %5533
    %v5535 = vsel %vm1852, %v5449, -inf
    %5536 = vmax.xlane.f32.xlu0 %v5535
    %v5537 = vpop.xlane.xlu0 %5536
    %v5538 = vsel %vm1852, %v5450, -inf
    %5539 = vmax.xlane.f32.xlu0 %v5538
    %v5540 = vpop.xlane.xlu0 %5539
    %v5541 = vsel %vm1852, %v5451, -inf
    %5542 = vmax.xlane.f32.xlu0 %v5541
    %v5543 = vpop.xlane.xlu0 %5542
    %v5544 = vsel %vm1852, %v5452, -inf
    %5545 = vmax.xlane.f32.xlu0 %v5544
    %v5546 = vpop.xlane.xlu0 %5545
    %v5547 = vsel %vm1852, %v5453, -inf
    %5548 = vmax.xlane.f32.xlu0 %v5547
    %v5549 = vpop.xlane.xlu0 %5548
    %v5550 = vsel %vm1852, %v5454, -inf
    %5551 = vmax.xlane.f32.xlu0 %v5550
    %v5552 = vpop.xlane.xlu0 %5551
    %v5553 = vsel %vm1852, %v5455, -inf
    %5554 = vmax.xlane.f32.xlu0 %v5553
    %v5555 = vpop.xlane.xlu0 %5554
    %v5556 = vsel %vm1852, %v5456, -inf
    %5557 = vmax.xlane.f32.xlu0 %v5556
    %v5558 = vpop.xlane.xlu0 %5557
    %v5559 = vsel %vm1852, %v5457, -inf
    %5560 = vmax.xlane.f32.xlu0 %v5559
    %v5561 = vpop.xlane.xlu0 %5560
    %v5562 = vsel %vm1852, %v5458, -inf
    %5563 = vmax.xlane.f32.xlu0 %v5562
    %v5564 = vpop.xlane.xlu0 %5563
    %v5565 = vsel %vm1852, %v5459, -inf
    %5566 = vmax.xlane.f32.xlu0 %v5565
    %v5567 = vpop.xlane.xlu0 %5566
    %v5568 = vsel %vm1852, %v5460, -inf
    %5569 = vmax.xlane.f32.xlu0 %v5568
    %v5570 = vpop.xlane.xlu0 %5569
    %v5571 = vsel %vm1852, %v5461, -inf
    %5572 = vmax.xlane.f32.xlu0 %v5571
    %v5573 = vpop.xlane.xlu0 %5572
    %v5574 = vsel %vm1852, %v5462, -inf
    %5575 = vmax.xlane.f32.xlu0 %v5574
    %v5576 = vpop.xlane.xlu0 %5575
    %v5577 = vsel %vm1852, %v5463, -inf
    %5578 = vmax.xlane.f32.xlu0 %v5577
    %v5579 = vpop.xlane.xlu0 %5578
    %v5580 = vsel %vm1852, %v5464, -inf
    %5581 = vmax.xlane.f32.xlu0 %v5580
    %v5582 = vpop.xlane.xlu0 %5581
    %v5583 = vsel %vm1852, %v5465, -inf
    %5584 = vmax.xlane.f32.xlu0 %v5583
    %v5585 = vpop.xlane.xlu0 %5584
    %v5586 = vsel %vm1852, %v5466, -inf
    %5587 = vmax.xlane.f32.xlu0 %v5586
    %v5588 = vpop.xlane.xlu0 %5587
    %v5589 = vsel %vm1852, %v5467, -inf
    %5590 = vmax.xlane.f32.xlu0 %v5589
    %v5591 = vpop.xlane.xlu0 %5590
    %v5592 = vsel %vm1852, %v5468, -inf
    %5593 = vmax.xlane.f32.xlu0 %v5592
    %v5594 = vpop.xlane.xlu0 %5593
    %v5595 = vsel %vm1852, %v5469, -inf
    %5596 = vmax.xlane.f32.xlu0 %v5595
    %v5597 = vpop.xlane.xlu0 %5596
    %v5598 = vsel %vm1852, %v5470, -inf
    %5599 = vmax.xlane.f32.xlu0 %v5598
    %v5600 = vpop.xlane.xlu0 %5599
    %v5601 = vsel %vm1852, %v5471, -inf
    %5602 = vmax.xlane.f32.xlu0 %v5601
    %v5603 = vpop.xlane.xlu0 %5602
    %v5604 = vsel %vm1852, %v5472, -inf
    %5605 = vmax.xlane.f32.xlu0 %v5604
    %v5606 = vpop.xlane.xlu0 %5605
    %v5607 = vsel %vm1852, %v5473, -inf
    %5608 = vmax.xlane.f32.xlu0 %v5607
    %v5609 = vpop.xlane.xlu0 %5608
    %v5610 = vsel %vm1852, %v5474, -inf
    %5611 = vmax.xlane.f32.xlu0 %v5610
    %v5612 = vpop.xlane.xlu0 %5611
    %v5613 = vsel %vm1852, %v5475, -inf
    %5614 = vmax.xlane.f32.xlu0 %v5613
    %v5615 = vpop.xlane.xlu0 %5614
    %v5616 = vsel %vm1852, %v5476, -inf
    %5617 = vmax.xlane.f32.xlu0 %v5616
    %v5618 = vpop.xlane.xlu0 %5617
    %v5619 = vsel %vm1852, %v5477, -inf
    %5620 = vmax.xlane.f32.xlu0 %v5619
    %v5621 = vpop.xlane.xlu0 %5620
    %v5622 = vsel %vm1852, %v5478, -inf
    %5623 = vmax.xlane.f32.xlu0 %v5622
    %v5624 = vpop.xlane.xlu0 %5623
    %v5625 = vsel %vm1852, %v5479, -inf
    %5626 = vmax.xlane.f32.xlu0 %v5625
    %v5627 = vpop.xlane.xlu0 %5626
    %v5628 = vsel %vm1852, %v5480, -inf
    %5629 = vmax.xlane.f32.xlu0 %v5628
    %v5630 = vpop.xlane.xlu0 %5629
    %v5631 = vsel %vm1852, %v5481, -inf
    %5632 = vmax.xlane.f32.xlu0 %v5631
    %v5633 = vpop.xlane.xlu0 %5632
    %v5634 = vsel %vm1852, %v5482, -inf
    %5635 = vmax.xlane.f32.xlu0 %v5634
    %v5636 = vpop.xlane.xlu0 %5635
    %v5637 = vsel %vm1852, %v5483, -inf
    %5638 = vmax.xlane.f32.xlu0 %v5637
    %v5639 = vpop.xlane.xlu0 %5638
    %v5640 = vsel %vm1852, %v5484, -inf
    %5641 = vmax.xlane.f32.xlu0 %v5640
    %v5642 = vpop.xlane.xlu0 %5641
    %v5643 = vsel %vm1852, %v5485, -inf
    %5644 = vmax.xlane.f32.xlu0 %v5643
    %v5645 = vpop.xlane.xlu0 %5644
    %v5646 = vsel %vm1852, %v5486, -inf
    %5647 = vmax.xlane.f32.xlu0 %v5646
    %v5648 = vpop.xlane.xlu0 %5647
    %v5649 = vsel %vm1852, %v5487, -inf
    %5650 = vmax.xlane.f32.xlu0 %v5649
    %v5651 = vpop.xlane.xlu0 %5650
    %v5652 = vsel %vm1852, %v5488, -inf
    %5653 = vmax.xlane.f32.xlu0 %v5652
    %v5654 = vpop.xlane.xlu0 %5653
    %v5655 = vsel %vm1852, %v5489, -inf
    %5656 = vmax.xlane.f32.xlu0 %v5655
    %v5657 = vpop.xlane.xlu0 %5656
    %v5658 = vsel %vm1852, %v5490, -inf
    %5659 = vmax.xlane.f32.xlu0 %v5658
    %v5660 = vpop.xlane.xlu0 %5659
    %v5661 = vsel %vm1852, %v5491, -inf
    %5662 = vmax.xlane.f32.xlu0 %v5661
    %v5663 = vpop.xlane.xlu0 %5662
    %v5664 = vsel %vm1852, %v5492, -inf
    %5665 = vmax.xlane.f32.xlu0 %v5664
    %v5666 = vpop.xlane.xlu0 %5665
    %v5667 = vsel %vm1852, %v5493, -inf
    %5668 = vmax.xlane.f32.xlu0 %v5667
    %v5669 = vpop.xlane.xlu0 %5668
    %v5670 = vsel %vm1852, %v5494, -inf
    %5671 = vmax.xlane.f32.xlu0 %v5670
    %v5672 = vpop.xlane.xlu0 %5671
    %v5673 = vsel %vm1852, %v5495, -inf
    %5674 = vmax.xlane.f32.xlu0 %v5673
    %v5675 = vpop.xlane.xlu0 %5674
    %v5676 = vsel %vm1852, %v5496, -inf
    %5677 = vmax.xlane.f32.xlu0 %v5676
    %v5678 = vpop.xlane.xlu0 %5677
    %v5679 = vsel %vm1852, %v5497, -inf
    %5680 = vmax.xlane.f32.xlu0 %v5679
    %v5681 = vpop.xlane.xlu0 %5680
    %v5682 = vsel %vm1852, %v5498, -inf
    %5683 = vmax.xlane.f32.xlu0 %v5682
    %v5684 = vpop.xlane.xlu0 %5683
    %v5685 = vsel %vm1852, %v5499, -inf
    %5686 = vmax.xlane.f32.xlu0 %v5685
    %v5687 = vpop.xlane.xlu0 %5686
    %v5688 = vsel %vm1852, %v5500, -inf
    %5689 = vmax.xlane.f32.xlu0 %v5688
    %v5690 = vpop.xlane.xlu0 %5689
    %v5691 = vsel %vm1852, %v5501, -inf
    %5692 = vmax.xlane.f32.xlu0 %v5691
    %v5693 = vpop.xlane.xlu0 %5692
    %v5694 = vsub.f32 %v5438, %v5504
    %v5695 = vsub.f32 %v5439, %v5507
    %v5696 = vsub.f32 %v5440, %v5510
    %v5697 = vsub.f32 %v5441, %v5513
    %v5698 = vsub.f32 %v5442, %v5516
    %v5699 = vsub.f32 %v5443, %v5519
    %v5700 = vsub.f32 %v5444, %v5522
    %v5701 = vsub.f32 %v5445, %v5525
    %v5702 = vsub.f32 %v5446, %v5528
    %v5703 = vsub.f32 %v5447, %v5531
    %v5704 = vsub.f32 %v5448, %v5534
    %v5705 = vsub.f32 %v5449, %v5537
    %v5706 = vsub.f32 %v5450, %v5540
    %v5707 = vsub.f32 %v5451, %v5543
    %v5708 = vsub.f32 %v5452, %v5546
    %v5709 = vsub.f32 %v5453, %v5549
    %v5710 = vsub.f32 %v5454, %v5552
    %v5711 = vsub.f32 %v5455, %v5555
    %v5712 = vsub.f32 %v5456, %v5558
    %v5713 = vsub.f32 %v5457, %v5561
    %v5714 = vsub.f32 %v5458, %v5564
    %v5715 = vsub.f32 %v5459, %v5567
    %v5716 = vsub.f32 %v5460, %v5570
    %v5717 = vsub.f32 %v5461, %v5573
    %v5718 = vsub.f32 %v5462, %v5576
    %v5719 = vsub.f32 %v5463, %v5579
    %v5720 = vsub.f32 %v5464, %v5582
    %v5721 = vsub.f32 %v5465, %v5585
    %v5722 = vsub.f32 %v5466, %v5588
    %v5723 = vsub.f32 %v5467, %v5591
    %v5724 = vsub.f32 %v5468, %v5594
    %v5725 = vsub.f32 %v5469, %v5597
    %v5726 = vsub.f32 %v5470, %v5600
    %v5727 = vsub.f32 %v5471, %v5603
    %v5728 = vsub.f32 %v5472, %v5606
    %v5729 = vsub.f32 %v5473, %v5609
    %v5730 = vsub.f32 %v5474, %v5612
    %v5731 = vsub.f32 %v5475, %v5615
    %v5732 = vsub.f32 %v5476, %v5618
    %v5733 = vsub.f32 %v5477, %v5621
    %v5734 = vsub.f32 %v5478, %v5624
    %v5735 = vsub.f32 %v5479, %v5627
    %v5736 = vsub.f32 %v5480, %v5630
    %v5737 = vsub.f32 %v5481, %v5633
    %v5738 = vsub.f32 %v5482, %v5636
    %v5739 = vsub.f32 %v5483, %v5639
    %v5740 = vsub.f32 %v5484, %v5642
    %v5741 = vsub.f32 %v5485, %v5645
    %v5742 = vsub.f32 %v5486, %v5648
    %v5743 = vsub.f32 %v5487, %v5651
    %v5744 = vsub.f32 %v5488, %v5654
    %v5745 = vsub.f32 %v5489, %v5657
    %v5746 = vsub.f32 %v5490, %v5660
    %v5747 = vsub.f32 %v5491, %v5663
    %v5748 = vsub.f32 %v5492, %v5666
    %v5749 = vsub.f32 %v5493, %v5669
    %v5750 = vsub.f32 %v5494, %v5672
    %v5751 = vsub.f32 %v5495, %v5675
    %v5752 = vsub.f32 %v5496, %v5678
    %v5753 = vsub.f32 %v5497, %v5681
    %v5754 = vsub.f32 %v5498, %v5684
    %v5755 = vsub.f32 %v5499, %v5687
    %v5756 = vsub.f32 %v5500, %v5690
    %v5757 = vsub.f32 %v5501, %v5693
    %v5758 = vmul.f32 %v5694, 1.442695
    %v5759 = vpow.pop %v5758
    %v5760 = vmul.f32 %v5695, 1.442695
    %v5761 = vpow.pop %v5760
    %v5762 = vmul.f32 %v5696, 1.442695
    %v5763 = vpow.pop %v5762
    %v5764 = vmul.f32 %v5697, 1.442695
    %v5765 = vpow.pop %v5764
    %v5766 = vmul.f32 %v5698, 1.442695
    %v5767 = vpow.pop %v5766
    %v5768 = vmul.f32 %v5699, 1.442695
    %v5769 = vpow.pop %v5768
    %v5770 = vmul.f32 %v5700, 1.442695
    %v5771 = vpow.pop %v5770
    %v5772 = vmul.f32 %v5701, 1.442695
    %v5773 = vpow.pop %v5772
    %v5774 = vmul.f32 %v5702, 1.442695
    %v5775 = vpow.pop %v5774
    %v5776 = vmul.f32 %v5703, 1.442695
    %v5777 = vpow.pop %v5776
    %v5778 = vmul.f32 %v5704, 1.442695
    %v5779 = vpow.pop %v5778
    %v5780 = vmul.f32 %v5705, 1.442695
    %v5781 = vpow.pop %v5780
    %v5782 = vmul.f32 %v5706, 1.442695
    %v5783 = vpow.pop %v5782
    %v5784 = vmul.f32 %v5707, 1.442695
    %v5785 = vpow.pop %v5784
    %v5786 = vmul.f32 %v5708, 1.442695
    %v5787 = vpow.pop %v5786
    %v5788 = vmul.f32 %v5709, 1.442695
    %v5789 = vpow.pop %v5788
    %v5790 = vmul.f32 %v5710, 1.442695
    %v5791 = vpow.pop %v5790
    %v5792 = vmul.f32 %v5711, 1.442695
    %v5793 = vpow.pop %v5792
    %v5794 = vmul.f32 %v5712, 1.442695
    %v5795 = vpow.pop %v5794
    %v5796 = vmul.f32 %v5713, 1.442695
    %v5797 = vpow.pop %v5796
    %v5798 = vmul.f32 %v5714, 1.442695
    %v5799 = vpow.pop %v5798
    %v5800 = vmul.f32 %v5715, 1.442695
    %v5801 = vpow.pop %v5800
    %v5802 = vmul.f32 %v5716, 1.442695
    %v5803 = vpow.pop %v5802
    %v5804 = vmul.f32 %v5717, 1.442695
    %v5805 = vpow.pop %v5804
    %v5806 = vmul.f32 %v5718, 1.442695
    %v5807 = vpow.pop %v5806
    %v5808 = vmul.f32 %v5719, 1.442695
    %v5809 = vpow.pop %v5808
    %v5810 = vmul.f32 %v5720, 1.442695
    %v5811 = vpow.pop %v5810
    %v5812 = vmul.f32 %v5721, 1.442695
    %v5813 = vpow.pop %v5812
    %v5814 = vmul.f32 %v5722, 1.442695
    %v5815 = vpow.pop %v5814
    %v5816 = vmul.f32 %v5723, 1.442695
    %v5817 = vpow.pop %v5816
    %v5818 = vmul.f32 %v5724, 1.442695
    %v5819 = vpow.pop %v5818
    %v5820 = vmul.f32 %v5725, 1.442695
    %v5821 = vpow.pop %v5820
    %v5822 = vmul.f32 %v5726, 1.442695
    %v5823 = vpow.pop %v5822
    %v5824 = vmul.f32 %v5727, 1.442695
    %v5825 = vpow.pop %v5824
    %v5826 = vmul.f32 %v5728, 1.442695
    %v5827 = vpow.pop %v5826
    %v5828 = vmul.f32 %v5729, 1.442695
    %v5829 = vpow.pop %v5828
    %v5830 = vmul.f32 %v5730, 1.442695
    %v5831 = vpow.pop %v5830
    %v5832 = vmul.f32 %v5731, 1.442695
    %v5833 = vpow.pop %v5832
    %v5834 = vmul.f32 %v5732, 1.442695
    %v5835 = vpow.pop %v5834
    %v5836 = vmul.f32 %v5733, 1.442695
    %v5837 = vpow.pop %v5836
    %v5838 = vmul.f32 %v5734, 1.442695
    %v5839 = vpow.pop %v5838
    %v5840 = vmul.f32 %v5735, 1.442695
    %v5841 = vpow.pop %v5840
    %v5842 = vmul.f32 %v5736, 1.442695
    %v5843 = vpow.pop %v5842
    %v5844 = vmul.f32 %v5737, 1.442695
    %v5845 = vpow.pop %v5844
    %v5846 = vmul.f32 %v5738, 1.442695
    %v5847 = vpow.pop %v5846
    %v5848 = vmul.f32 %v5739, 1.442695
    %v5849 = vpow.pop %v5848
    %v5850 = vmul.f32 %v5740, 1.442695
    %v5851 = vpow.pop %v5850
    %v5852 = vmul.f32 %v5741, 1.442695
    %v5853 = vpow.pop %v5852
    %v5854 = vmul.f32 %v5742, 1.442695
    %v5855 = vpow.pop %v5854
    %v5856 = vmul.f32 %v5743, 1.442695
    %v5857 = vpow.pop %v5856
    %v5858 = vmul.f32 %v5744, 1.442695
    %v5859 = vpow.pop %v5858
    %v5860 = vmul.f32 %v5745, 1.442695
    %v5861 = vpow.pop %v5860
    %v5862 = vmul.f32 %v5746, 1.442695
    %v5863 = vpow.pop %v5862
    %v5864 = vmul.f32 %v5747, 1.442695
    %v5865 = vpow.pop %v5864
    %v5866 = vmul.f32 %v5748, 1.442695
    %v5867 = vpow.pop %v5866
    %v5868 = vmul.f32 %v5749, 1.442695
    %v5869 = vpow.pop %v5868
    %v5870 = vmul.f32 %v5750, 1.442695
    %v5871 = vpow.pop %v5870
    %v5872 = vmul.f32 %v5751, 1.442695
    %v5873 = vpow.pop %v5872
    %v5874 = vmul.f32 %v5752, 1.442695
    %v5875 = vpow.pop %v5874
    %v5876 = vmul.f32 %v5753, 1.442695
    %v5877 = vpow.pop %v5876
    %v5878 = vmul.f32 %v5754, 1.442695
    %v5879 = vpow.pop %v5878
    %v5880 = vmul.f32 %v5755, 1.442695
    %v5881 = vpow.pop %v5880
    %v5882 = vmul.f32 %v5756, 1.442695
    %v5883 = vpow.pop %v5882
    %v5884 = vmul.f32 %v5757, 1.442695
    %v5885 = vpow.pop %v5884
    %v5886 = vsel %vm1852, %v5759, 0.0
    %5887 = vadd.xlane.f32.xlu0 %v5886
    %v5888 = vpop.xlane.xlu0 %5887
    %v5889 = vsel %vm1852, %v5761, 0.0
    %5890 = vadd.xlane.f32.xlu0 %v5889
    %v5891 = vpop.xlane.xlu0 %5890
    %v5892 = vsel %vm1852, %v5763, 0.0
    %5893 = vadd.xlane.f32.xlu0 %v5892
    %v5894 = vpop.xlane.xlu0 %5893
    %v5895 = vsel %vm1852, %v5765, 0.0
    %5896 = vadd.xlane.f32.xlu0 %v5895
    %v5897 = vpop.xlane.xlu0 %5896
    %v5898 = vsel %vm1852, %v5767, 0.0
    %5899 = vadd.xlane.f32.xlu0 %v5898
    %v5900 = vpop.xlane.xlu0 %5899
    %v5901 = vsel %vm1852, %v5769, 0.0
    %5902 = vadd.xlane.f32.xlu0 %v5901
    %v5903 = vpop.xlane.xlu0 %5902
    %v5904 = vsel %vm1852, %v5771, 0.0
    %5905 = vadd.xlane.f32.xlu0 %v5904
    %v5906 = vpop.xlane.xlu0 %5905
    %v5907 = vsel %vm1852, %v5773, 0.0
    %5908 = vadd.xlane.f32.xlu0 %v5907
    %v5909 = vpop.xlane.xlu0 %5908
    %v5910 = vsel %vm1852, %v5775, 0.0
    %5911 = vadd.xlane.f32.xlu0 %v5910
    %v5912 = vpop.xlane.xlu0 %5911
    %v5913 = vsel %vm1852, %v5777, 0.0
    %5914 = vadd.xlane.f32.xlu0 %v5913
    %v5915 = vpop.xlane.xlu0 %5914
    %v5916 = vsel %vm1852, %v5779, 0.0
    %5917 = vadd.xlane.f32.xlu0 %v5916
    %v5918 = vpop.xlane.xlu0 %5917
    %v5919 = vsel %vm1852, %v5781, 0.0
    %5920 = vadd.xlane.f32.xlu0 %v5919
    %v5921 = vpop.xlane.xlu0 %5920
    %v5922 = vsel %vm1852, %v5783, 0.0
    %5923 = vadd.xlane.f32.xlu0 %v5922
    %v5924 = vpop.xlane.xlu0 %5923
    %v5925 = vsel %vm1852, %v5785, 0.0
    %5926 = vadd.xlane.f32.xlu0 %v5925
    %v5927 = vpop.xlane.xlu0 %5926
    %v5928 = vsel %vm1852, %v5787, 0.0
    %5929 = vadd.xlane.f32.xlu0 %v5928
    %v5930 = vpop.xlane.xlu0 %5929
    %v5931 = vsel %vm1852, %v5789, 0.0
    %5932 = vadd.xlane.f32.xlu0 %v5931
    %v5933 = vpop.xlane.xlu0 %5932
    %v5934 = vsel %vm1852, %v5791, 0.0
    %5935 = vadd.xlane.f32.xlu0 %v5934
    %v5936 = vpop.xlane.xlu0 %5935
    %v5937 = vsel %vm1852, %v5793, 0.0
    %5938 = vadd.xlane.f32.xlu0 %v5937
    %v5939 = vpop.xlane.xlu0 %5938
    %v5940 = vsel %vm1852, %v5795, 0.0
    %5941 = vadd.xlane.f32.xlu0 %v5940
    %v5942 = vpop.xlane.xlu0 %5941
    %v5943 = vsel %vm1852, %v5797, 0.0
    %5944 = vadd.xlane.f32.xlu0 %v5943
    %v5945 = vpop.xlane.xlu0 %5944
    %v5946 = vsel %vm1852, %v5799, 0.0
    %5947 = vadd.xlane.f32.xlu0 %v5946
    %v5948 = vpop.xlane.xlu0 %5947
    %v5949 = vsel %vm1852, %v5801, 0.0
    %5950 = vadd.xlane.f32.xlu0 %v5949
    %v5951 = vpop.xlane.xlu0 %5950
    %v5952 = vsel %vm1852, %v5803, 0.0
    %5953 = vadd.xlane.f32.xlu0 %v5952
    %v5954 = vpop.xlane.xlu0 %5953
    %v5955 = vsel %vm1852, %v5805, 0.0
    %5956 = vadd.xlane.f32.xlu0 %v5955
    %v5957 = vpop.xlane.xlu0 %5956
    %v5958 = vsel %vm1852, %v5807, 0.0
    %5959 = vadd.xlane.f32.xlu0 %v5958
    %v5960 = vpop.xlane.xlu0 %5959
    %v5961 = vsel %vm1852, %v5809, 0.0
    %5962 = vadd.xlane.f32.xlu0 %v5961
    %v5963 = vpop.xlane.xlu0 %5962
    %v5964 = vsel %vm1852, %v5811, 0.0
    %5965 = vadd.xlane.f32.xlu0 %v5964
    %v5966 = vpop.xlane.xlu0 %5965
    %v5967 = vsel %vm1852, %v5813, 0.0
    %5968 = vadd.xlane.f32.xlu0 %v5967
    %v5969 = vpop.xlane.xlu0 %5968
    %v5970 = vsel %vm1852, %v5815, 0.0
    %5971 = vadd.xlane.f32.xlu0 %v5970
    %v5972 = vpop.xlane.xlu0 %5971
    %v5973 = vsel %vm1852, %v5817, 0.0
    %5974 = vadd.xlane.f32.xlu0 %v5973
    %v5975 = vpop.xlane.xlu0 %5974
    %v5976 = vsel %vm1852, %v5819, 0.0
    %5977 = vadd.xlane.f32.xlu0 %v5976
    %v5978 = vpop.xlane.xlu0 %5977
    %v5979 = vsel %vm1852, %v5821, 0.0
    %5980 = vadd.xlane.f32.xlu0 %v5979
    %v5981 = vpop.xlane.xlu0 %5980
    %v5982 = vsel %vm1852, %v5823, 0.0
    %5983 = vadd.xlane.f32.xlu0 %v5982
    %v5984 = vpop.xlane.xlu0 %5983
    %v5985 = vsel %vm1852, %v5825, 0.0
    %5986 = vadd.xlane.f32.xlu0 %v5985
    %v5987 = vpop.xlane.xlu0 %5986
    %v5988 = vsel %vm1852, %v5827, 0.0
    %5989 = vadd.xlane.f32.xlu0 %v5988
    %v5990 = vpop.xlane.xlu0 %5989
    %v5991 = vsel %vm1852, %v5829, 0.0
    %5992 = vadd.xlane.f32.xlu0 %v5991
    %v5993 = vpop.xlane.xlu0 %5992
    %v5994 = vsel %vm1852, %v5831, 0.0
    %5995 = vadd.xlane.f32.xlu0 %v5994
    %v5996 = vpop.xlane.xlu0 %5995
    %v5997 = vsel %vm1852, %v5833, 0.0
    %5998 = vadd.xlane.f32.xlu0 %v5997
    %v5999 = vpop.xlane.xlu0 %5998
    %v6000 = vsel %vm1852, %v5835, 0.0
    %6001 = vadd.xlane.f32.xlu0 %v6000
    %v6002 = vpop.xlane.xlu0 %6001
    %v6003 = vsel %vm1852, %v5837, 0.0
    %6004 = vadd.xlane.f32.xlu0 %v6003
    %v6005 = vpop.xlane.xlu0 %6004
    %v6006 = vsel %vm1852, %v5839, 0.0
    %6007 = vadd.xlane.f32.xlu0 %v6006
    %v6008 = vpop.xlane.xlu0 %6007
    %v6009 = vsel %vm1852, %v5841, 0.0
    %6010 = vadd.xlane.f32.xlu0 %v6009
    %v6011 = vpop.xlane.xlu0 %6010
    %v6012 = vsel %vm1852, %v5843, 0.0
    %6013 = vadd.xlane.f32.xlu0 %v6012
    %v6014 = vpop.xlane.xlu0 %6013
    %v6015 = vsel %vm1852, %v5845, 0.0
    %6016 = vadd.xlane.f32.xlu0 %v6015
    %v6017 = vpop.xlane.xlu0 %6016
    %v6018 = vsel %vm1852, %v5847, 0.0
    %6019 = vadd.xlane.f32.xlu0 %v6018
    %v6020 = vpop.xlane.xlu0 %6019
    %v6021 = vsel %vm1852, %v5849, 0.0
    %6022 = vadd.xlane.f32.xlu0 %v6021
    %v6023 = vpop.xlane.xlu0 %6022
    %v6024 = vsel %vm1852, %v5851, 0.0
    %6025 = vadd.xlane.f32.xlu0 %v6024
    %v6026 = vpop.xlane.xlu0 %6025
    %v6027 = vsel %vm1852, %v5853, 0.0
    %6028 = vadd.xlane.f32.xlu0 %v6027
    %v6029 = vpop.xlane.xlu0 %6028
    %v6030 = vsel %vm1852, %v5855, 0.0
    %6031 = vadd.xlane.f32.xlu0 %v6030
    %v6032 = vpop.xlane.xlu0 %6031
    %v6033 = vsel %vm1852, %v5857, 0.0
    %6034 = vadd.xlane.f32.xlu0 %v6033
    %v6035 = vpop.xlane.xlu0 %6034
    %v6036 = vsel %vm1852, %v5859, 0.0
    %6037 = vadd.xlane.f32.xlu0 %v6036
    %v6038 = vpop.xlane.xlu0 %6037
    %v6039 = vsel %vm1852, %v5861, 0.0
    %6040 = vadd.xlane.f32.xlu0 %v6039
    %v6041 = vpop.xlane.xlu0 %6040
    %v6042 = vsel %vm1852, %v5863, 0.0
    %6043 = vadd.xlane.f32.xlu0 %v6042
    %v6044 = vpop.xlane.xlu0 %6043
    %v6045 = vsel %vm1852, %v5865, 0.0
    %6046 = vadd.xlane.f32.xlu0 %v6045
    %v6047 = vpop.xlane.xlu0 %6046
    %v6048 = vsel %vm1852, %v5867, 0.0
    %6049 = vadd.xlane.f32.xlu0 %v6048
    %v6050 = vpop.xlane.xlu0 %6049
    %v6051 = vsel %vm1852, %v5869, 0.0
    %6052 = vadd.xlane.f32.xlu0 %v6051
    %v6053 = vpop.xlane.xlu0 %6052
    %v6054 = vsel %vm1852, %v5871, 0.0
    %6055 = vadd.xlane.f32.xlu0 %v6054
    %v6056 = vpop.xlane.xlu0 %6055
    %v6057 = vsel %vm1852, %v5873, 0.0
    %6058 = vadd.xlane.f32.xlu0 %v6057
    %v6059 = vpop.xlane.xlu0 %6058
    %v6060 = vsel %vm1852, %v5875, 0.0
    %6061 = vadd.xlane.f32.xlu0 %v6060
    %v6062 = vpop.xlane.xlu0 %6061
    %v6063 = vsel %vm1852, %v5877, 0.0
    %6064 = vadd.xlane.f32.xlu0 %v6063
    %v6065 = vpop.xlane.xlu0 %6064
    %v6066 = vsel %vm1852, %v5879, 0.0
    %6067 = vadd.xlane.f32.xlu0 %v6066
    %v6068 = vpop.xlane.xlu0 %6067
    %v6069 = vsel %vm1852, %v5881, 0.0
    %6070 = vadd.xlane.f32.xlu0 %v6069
    %v6071 = vpop.xlane.xlu0 %6070
    %v6072 = vsel %vm1852, %v5883, 0.0
    %6073 = vadd.xlane.f32.xlu0 %v6072
    %v6074 = vpop.xlane.xlu0 %6073
    %v6075 = vsel %vm1852, %v5885, 0.0
    %6076 = vadd.xlane.f32.xlu0 %v6075
    %v6077 = vpop.xlane.xlu0 %6076
    %v6078 = vrcp.pop %v5888
    %v6079 = vrcp.pop %v5891
    %v6080 = vrcp.pop %v5894
    %v6081 = vrcp.pop %v5897
    %v6082 = vrcp.pop %v5900
    %v6083 = vrcp.pop %v5903
    %v6084 = vrcp.pop %v5906
    %v6085 = vrcp.pop %v5909
    %v6086 = vrcp.pop %v5912
    %v6087 = vrcp.pop %v5915
    %v6088 = vrcp.pop %v5918
    %v6089 = vrcp.pop %v5921
    %v6090 = vrcp.pop %v5924
    %v6091 = vrcp.pop %v5927
    %v6092 = vrcp.pop %v5930
    %v6093 = vrcp.pop %v5933
    %v6094 = vrcp.pop %v5936
    %v6095 = vrcp.pop %v5939
    %v6096 = vrcp.pop %v5942
    %v6097 = vrcp.pop %v5945
    %v6098 = vrcp.pop %v5948
    %v6099 = vrcp.pop %v5951
    %v6100 = vrcp.pop %v5954
    %v6101 = vrcp.pop %v5957
    %v6102 = vrcp.pop %v5960
    %v6103 = vrcp.pop %v5963
    %v6104 = vrcp.pop %v5966
    %v6105 = vrcp.pop %v5969
    %v6106 = vrcp.pop %v5972
    %v6107 = vrcp.pop %v5975
    %v6108 = vrcp.pop %v5978
    %v6109 = vrcp.pop %v5981
    %v6110 = vrcp.pop %v5984
    %v6111 = vrcp.pop %v5987
    %v6112 = vrcp.pop %v5990
    %v6113 = vrcp.pop %v5993
    %v6114 = vrcp.pop %v5996
    %v6115 = vrcp.pop %v5999
    %v6116 = vrcp.pop %v6002
    %v6117 = vrcp.pop %v6005
    %v6118 = vrcp.pop %v6008
    %v6119 = vrcp.pop %v6011
    %v6120 = vrcp.pop %v6014
    %v6121 = vrcp.pop %v6017
    %v6122 = vrcp.pop %v6020
    %v6123 = vrcp.pop %v6023
    %v6124 = vrcp.pop %v6026
    %v6125 = vrcp.pop %v6029
    %v6126 = vrcp.pop %v6032
    %v6127 = vrcp.pop %v6035
    %v6128 = vrcp.pop %v6038
    %v6129 = vrcp.pop %v6041
    %v6130 = vrcp.pop %v6044
    %v6131 = vrcp.pop %v6047
    %v6132 = vrcp.pop %v6050
    %v6133 = vrcp.pop %v6053
    %v6134 = vrcp.pop %v6056
    %v6135 = vrcp.pop %v6059
    %v6136 = vrcp.pop %v6062
    %v6137 = vrcp.pop %v6065
    %v6138 = vrcp.pop %v6068
    %v6139 = vrcp.pop %v6071
    %v6140 = vrcp.pop %v6074
    %v6141 = vrcp.pop %v6077
    %v6142 = vmul.f32 %v5759, %v6078
    %v6143 = vmul.f32 %v5761, %v6079
    %v6144 = vmul.f32 %v5763, %v6080
    %v6145 = vmul.f32 %v5765, %v6081
    %v6146 = vmul.f32 %v5767, %v6082
    %v6147 = vmul.f32 %v5769, %v6083
    %v6148 = vmul.f32 %v5771, %v6084
    %v6149 = vmul.f32 %v5773, %v6085
    %v6150 = vmul.f32 %v5775, %v6086
    %v6151 = vmul.f32 %v5777, %v6087
    %v6152 = vmul.f32 %v5779, %v6088
    %v6153 = vmul.f32 %v5781, %v6089
    %v6154 = vmul.f32 %v5783, %v6090
    %v6155 = vmul.f32 %v5785, %v6091
    %v6156 = vmul.f32 %v5787, %v6092
    %v6157 = vmul.f32 %v5789, %v6093
    %v6158 = vmul.f32 %v5791, %v6094
    %v6159 = vmul.f32 %v5793, %v6095
    %v6160 = vmul.f32 %v5795, %v6096
    %v6161 = vmul.f32 %v5797, %v6097
    %v6162 = vmul.f32 %v5799, %v6098
    %v6163 = vmul.f32 %v5801, %v6099
    %v6164 = vmul.f32 %v5803, %v6100
    %v6165 = vmul.f32 %v5805, %v6101
    %v6166 = vmul.f32 %v5807, %v6102
    %v6167 = vmul.f32 %v5809, %v6103
    %v6168 = vmul.f32 %v5811, %v6104
    %v6169 = vmul.f32 %v5813, %v6105
    %v6170 = vmul.f32 %v5815, %v6106
    %v6171 = vmul.f32 %v5817, %v6107
    %v6172 = vmul.f32 %v5819, %v6108
    %v6173 = vmul.f32 %v5821, %v6109
    %v6174 = vmul.f32 %v5823, %v6110
    %v6175 = vmul.f32 %v5825, %v6111
    %v6176 = vmul.f32 %v5827, %v6112
    %v6177 = vmul.f32 %v5829, %v6113
    %v6178 = vmul.f32 %v5831, %v6114
    %v6179 = vmul.f32 %v5833, %v6115
    %v6180 = vmul.f32 %v5835, %v6116
    %v6181 = vmul.f32 %v5837, %v6117
    %v6182 = vmul.f32 %v5839, %v6118
    %v6183 = vmul.f32 %v5841, %v6119
    %v6184 = vmul.f32 %v5843, %v6120
    %v6185 = vmul.f32 %v5845, %v6121
    %v6186 = vmul.f32 %v5847, %v6122
    %v6187 = vmul.f32 %v5849, %v6123
    %v6188 = vmul.f32 %v5851, %v6124
    %v6189 = vmul.f32 %v5853, %v6125
    %v6190 = vmul.f32 %v5855, %v6126
    %v6191 = vmul.f32 %v5857, %v6127
    %v6192 = vmul.f32 %v5859, %v6128
    %v6193 = vmul.f32 %v5861, %v6129
    %v6194 = vmul.f32 %v5863, %v6130
    %v6195 = vmul.f32 %v5865, %v6131
    %v6196 = vmul.f32 %v5867, %v6132
    %v6197 = vmul.f32 %v5869, %v6133
    %v6198 = vmul.f32 %v5871, %v6134
    %v6199 = vmul.f32 %v5873, %v6135
    %v6200 = vmul.f32 %v5875, %v6136
    %v6201 = vmul.f32 %v5877, %v6137
    %v6202 = vmul.f32 %v5879, %v6138
    %v6203 = vmul.f32 %v5881, %v6139
    %v6204 = vmul.f32 %v5883, %v6140
    %v6205 = vmul.f32 %v5885, %v6141
    %v6207 = vsel %vm1852, %v6142, 0
    %v6210 = vsel %vm1852, %v6143, 0
    %v6213 = vsel %vm1852, %v6144, 0
    %v6216 = vsel %vm1852, %v6145, 0
    %v6219 = vsel %vm1852, %v6146, 0
    %v6222 = vsel %vm1852, %v6147, 0
    %v6225 = vsel %vm1852, %v6148, 0
    %v6228 = vsel %vm1852, %v6149, 0
    %6230 = vmatprep.subr.mxu0 0.0
    %6231 = vmatpush1.msra.mxu0 0.0
    %6232 = vmatprep.subr.mxu0 0.0
    %6233 = vmatpush1.msra.mxu0 0.0
    %6234 = vmatprep.subr.mxu0 0.0
    %6235 = vmatpush1.msra.mxu0 0.0
    %6236 = vmatprep.subr.mxu0 0.0
    %6237 = vmatpush1.msra.mxu0 0.0
    %6238 = vmatprep.subr.mxu0 0.0
    %6239 = vmatpush1.msra.mxu0 0.0
    %6240 = vmatprep.subr.mxu0 0.0
    %6241 = vmatpush1.msra.mxu0 0.0
    %6242 = vmatprep.subr.mxu0 0.0
    %6243 = vmatpush1.msra.mxu0 0.0
    %6244 = vmatprep.subr.mxu0 0.0
    %6245 = vmatpush1.msra.mxu0 0.0
    %6246 = vmatprep.subr.mxu0 0.0
    %6247 = vmatpush1.msra.mxu0 %v3884
    %6248 = vmatprep.subr.mxu0 0.0
    %6249 = vmatpush1.msra.mxu0 %v3878
    %6250 = vmatprep.subr.mxu0 0.0
    %6251 = vmatpush1.msra.mxu0 %v3872
    %6252 = vmatprep.subr.mxu0 0.0
    %6253 = vmatpush1.msra.mxu0 %v3866
    %6254 = vmatprep.subr.mxu0 0.0
    %6255 = vmatpush1.msra.mxu0 %v3860
    %6256 = vmatprep.subr.mxu0 0.0
    %6257 = vmatpush1.msra.mxu0 %v3854
    %6258 = vmatprep.subr.mxu0 0.0
    %6259 = vmatpush1.msra.mxu0 %v3848
    %6260 = vmatprep.subr.mxu0 0.0
    %6261 = vmatpush1.msra.mxu0 %v3842
    %6262 = vmatprep.subr.mxu0 0.0
    %6263 = vmatpush2.msra.mxu0 0.0
    %6264 = vmatprep.subr.mxu0 0.0
    %6265 = vmatpush2.msra.mxu0 0.0
    %6266 = vmatprep.subr.mxu0 0.0
    %6267 = vmatpush2.msra.mxu0 0.0
    %6268 = vmatprep.subr.mxu0 0.0
    %6269 = vmatpush2.msra.mxu0 0.0
    %6270 = vmatprep.subr.mxu0 0.0
    %6271 = vmatpush2.msra.mxu0 0.0
    %6272 = vmatprep.subr.mxu0 0.0
    %6273 = vmatpush2.msra.mxu0 0.0
    %6274 = vmatprep.subr.mxu0 0.0
    %6275 = vmatpush2.msra.mxu0 0.0
    %6276 = vmatprep.subr.mxu0 0.0
    %6277 = vmatpush2.msra.mxu0 0.0
    %6278 = vmatprep.subr.mxu0 0.0
    %6279 = vmatpush2.msra.mxu0 0.0
    %6280 = vmatprep.subr.mxu0 0.0
    %6281 = vmatpush2.msra.mxu0 0.0
    %6282 = vmatprep.subr.mxu0 0.0
    %6283 = vmatpush2.msra.mxu0 0.0
    %6284 = vmatprep.subr.mxu0 0.0
    %6285 = vmatpush2.msra.mxu0 0.0
    %6286 = vmatprep.subr.mxu0 0.0
    %6287 = vmatpush2.msra.mxu0 0.0
    %6288 = vmatprep.subr.mxu0 0.0
    %6289 = vmatpush2.msra.mxu0 0.0
    %6290 = vmatprep.subr.mxu0 0.0
    %6291 = vmatpush2.msra.mxu0 0.0
    %6292 = vmatprep.subr.mxu0 0.0
    %6293 = vmatpush2.msra.mxu0 0.0
    %6294 = vmatprep.mubr.f32.mxu0 0.0
    %6295 = vmatmul.mubr.f32.gmra.mxu0 %v6207
    %v6296 = vpop.f32.mrf.mxu0
    %v6297 = vadd.f32 0.0, %v6296
    %v6298 = vpop.f32.mrf.mxu0
    %6299 = vmatprep.mubr.f32.mxu0 0.0
    %6300 = vmatmul.mubr.f32.gmra.mxu0 %v6210
    %v6301 = vpop.f32.mrf.mxu0
    %v6302 = vadd.f32 0.0, %v6301
    %v6303 = vpop.f32.mrf.mxu0
    %6304 = vmatprep.mubr.f32.mxu0 0.0
    %6305 = vmatmul.mubr.f32.gmra.mxu0 %v6213
    %v6306 = vpop.f32.mrf.mxu0
    %v6307 = vadd.f32 0.0, %v6306
    %v6308 = vpop.f32.mrf.mxu0
    %6309 = vmatprep.mubr.f32.mxu0 0.0
    %6310 = vmatmul.mubr.f32.gmra.mxu0 %v6216
    %v6311 = vpop.f32.mrf.mxu0
    %v6312 = vadd.f32 0.0, %v6311
    %v6313 = vpop.f32.mrf.mxu0
    %6314 = vmatprep.mubr.f32.mxu0 0.0
    %6315 = vmatmul.mubr.f32.gmra.mxu0 %v6219
    %v6316 = vpop.f32.mrf.mxu0
    %v6317 = vadd.f32 0.0, %v6316
    %v6318 = vpop.f32.mrf.mxu0
    %6319 = vmatprep.mubr.f32.mxu0 0.0
    %6320 = vmatmul.mubr.f32.gmra.mxu0 %v6222
    %v6321 = vpop.f32.mrf.mxu0
    %v6322 = vadd.f32 0.0, %v6321
    %v6323 = vpop.f32.mrf.mxu0
    %6324 = vmatprep.mubr.f32.mxu0 0.0
    %6325 = vmatmul.mubr.f32.gmra.mxu0 %v6225
    %v6326 = vpop.f32.mrf.mxu0
    %v6327 = vadd.f32 0.0, %v6326
    %v6328 = vpop.f32.mrf.mxu0
    %6329 = vmatprep.mubr.f32.mxu0 0.0
    %6330 = vmatmul.mubr.f32.gmra.mxu0 %v6228
    %v6331 = vpop.f32.mrf.mxu0
    %v6332 = vadd.f32 0.0, %v6331
    %v6333 = vpop.f32.mrf.mxu0
    %6334 = vdwg.mxu0
    %v6336 = vsel %vm1852, %v6150, 0
    %v6339 = vsel %vm1852, %v6151, 0
    %v6342 = vsel %vm1852, %v6152, 0
    %v6345 = vsel %vm1852, %v6153, 0
    %v6348 = vsel %vm1852, %v6154, 0
    %v6351 = vsel %vm1852, %v6155, 0
    %v6354 = vsel %vm1852, %v6156, 0
    %v6357 = vsel %vm1852, %v6157, 0
    %6359 = vmatprep.subr.mxu0 0.0
    %6360 = vmatpush1.msra.mxu0 0.0
    %6361 = vmatprep.subr.mxu0 0.0
    %6362 = vmatpush1.msra.mxu0 0.0
    %6363 = vmatprep.subr.mxu0 0.0
    %6364 = vmatpush1.msra.mxu0 0.0
    %6365 = vmatprep.subr.mxu0 0.0
    %6366 = vmatpush1.msra.mxu0 0.0
    %6367 = vmatprep.subr.mxu0 0.0
    %6368 = vmatpush1.msra.mxu0 0.0
    %6369 = vmatprep.subr.mxu0 0.0
    %6370 = vmatpush1.msra.mxu0 0.0
    %6371 = vmatprep.subr.mxu0 0.0
    %6372 = vmatpush1.msra.mxu0 0.0
    %6373 = vmatprep.subr.mxu0 0.0
    %6374 = vmatpush1.msra.mxu0 0.0
    %6375 = vmatprep.subr.mxu0 0.0
    %6376 = vmatpush1.msra.mxu0 %v3911
    %6377 = vmatprep.subr.mxu0 0.0
    %6378 = vmatpush1.msra.mxu0 %v3909
    %6379 = vmatprep.subr.mxu0 0.0
    %6380 = vmatpush1.msra.mxu0 %v3907
    %6381 = vmatprep.subr.mxu0 0.0
    %6382 = vmatpush1.msra.mxu0 %v3905
    %6383 = vmatprep.subr.mxu0 0.0
    %6384 = vmatpush1.msra.mxu0 %v3903
    %6385 = vmatprep.subr.mxu0 0.0
    %6386 = vmatpush1.msra.mxu0 %v3901
    %6387 = vmatprep.subr.mxu0 0.0
    %6388 = vmatpush1.msra.mxu0 %v3899
    %6389 = vmatprep.subr.mxu0 0.0
    %6390 = vmatpush1.msra.mxu0 %v3897
    %6391 = vmatprep.subr.mxu0 0.0
    %6392 = vmatpush2.msra.mxu0 0.0
    %6393 = vmatprep.subr.mxu0 0.0
    %6394 = vmatpush2.msra.mxu0 0.0
    %6395 = vmatprep.subr.mxu0 0.0
    %6396 = vmatpush2.msra.mxu0 0.0
    %6397 = vmatprep.subr.mxu0 0.0
    %6398 = vmatpush2.msra.mxu0 0.0
    %6399 = vmatprep.subr.mxu0 0.0
    %6400 = vmatpush2.msra.mxu0 0.0
    %6401 = vmatprep.subr.mxu0 0.0
    %6402 = vmatpush2.msra.mxu0 0.0
    %6403 = vmatprep.subr.mxu0 0.0
    %6404 = vmatpush2.msra.mxu0 0.0
    %6405 = vmatprep.subr.mxu0 0.0
    %6406 = vmatpush2.msra.mxu0 0.0
    %6407 = vmatprep.subr.mxu0 0.0
    %6408 = vmatpush2.msra.mxu0 0.0
    %6409 = vmatprep.subr.mxu0 0.0
    %6410 = vmatpush2.msra.mxu0 0.0
    %6411 = vmatprep.subr.mxu0 0.0
    %6412 = vmatpush2.msra.mxu0 0.0
    %6413 = vmatprep.subr.mxu0 0.0
    %6414 = vmatpush2.msra.mxu0 0.0
    %6415 = vmatprep.subr.mxu0 0.0
    %6416 = vmatpush2.msra.mxu0 0.0
    %6417 = vmatprep.subr.mxu0 0.0
    %6418 = vmatpush2.msra.mxu0 0.0
    %6419 = vmatprep.subr.mxu0 0.0
    %6420 = vmatpush2.msra.mxu0 0.0
    %6421 = vmatprep.subr.mxu0 0.0
    %6422 = vmatpush2.msra.mxu0 0.0
    %6423 = vmatprep.mubr.f32.mxu0 0.0
    %6424 = vmatmul.mubr.f32.gmra.mxu0 %v6336
    %v6425 = vpop.f32.mrf.mxu0
    %v6426 = vadd.f32 0.0, %v6425
    %v6427 = vpop.f32.mrf.mxu0
    %6428 = vmatprep.mubr.f32.mxu0 0.0
    %6429 = vmatmul.mubr.f32.gmra.mxu0 %v6339
    %v6430 = vpop.f32.mrf.mxu0
    %v6431 = vadd.f32 0.0, %v6430
    %v6432 = vpop.f32.mrf.mxu0
    %6433 = vmatprep.mubr.f32.mxu0 0.0
    %6434 = vmatmul.mubr.f32.gmra.mxu0 %v6342
    %v6435 = vpop.f32.mrf.mxu0
    %v6436 = vadd.f32 0.0, %v6435
    %v6437 = vpop.f32.mrf.mxu0
    %6438 = vmatprep.mubr.f32.mxu0 0.0
    %6439 = vmatmul.mubr.f32.gmra.mxu0 %v6345
    %v6440 = vpop.f32.mrf.mxu0
    %v6441 = vadd.f32 0.0, %v6440
    %v6442 = vpop.f32.mrf.mxu0
    %6443 = vmatprep.mubr.f32.mxu0 0.0
    %6444 = vmatmul.mubr.f32.gmra.mxu0 %v6348
    %v6445 = vpop.f32.mrf.mxu0
    %v6446 = vadd.f32 0.0, %v6445
    %v6447 = vpop.f32.mrf.mxu0
    %6448 = vmatprep.mubr.f32.mxu0 0.0
    %6449 = vmatmul.mubr.f32.gmra.mxu0 %v6351
    %v6450 = vpop.f32.mrf.mxu0
    %v6451 = vadd.f32 0.0, %v6450
    %v6452 = vpop.f32.mrf.mxu0
    %6453 = vmatprep.mubr.f32.mxu0 0.0
    %6454 = vmatmul.mubr.f32.gmra.mxu0 %v6354
    %v6455 = vpop.f32.mrf.mxu0
    %v6456 = vadd.f32 0.0, %v6455
    %v6457 = vpop.f32.mrf.mxu0
    %6458 = vmatprep.mubr.f32.mxu0 0.0
    %6459 = vmatmul.mubr.f32.gmra.mxu0 %v6357
    %v6460 = vpop.f32.mrf.mxu0
    %v6461 = vadd.f32 0.0, %v6460
    %v6462 = vpop.f32.mrf.mxu0
    %6463 = vdwg.mxu0
    %v6465 = vsel %vm1852, %v6158, 0
    %v6468 = vsel %vm1852, %v6159, 0
    %v6471 = vsel %vm1852, %v6160, 0
    %v6474 = vsel %vm1852, %v6161, 0
    %v6477 = vsel %vm1852, %v6162, 0
    %v6480 = vsel %vm1852, %v6163, 0
    %v6483 = vsel %vm1852, %v6164, 0
    %v6486 = vsel %vm1852, %v6165, 0
    %6488 = vmatprep.subr.mxu0 0.0
    %6489 = vmatpush1.msra.mxu0 0.0
    %6490 = vmatprep.subr.mxu0 0.0
    %6491 = vmatpush1.msra.mxu0 0.0
    %6492 = vmatprep.subr.mxu0 0.0
    %6493 = vmatpush1.msra.mxu0 0.0
    %6494 = vmatprep.subr.mxu0 0.0
    %6495 = vmatpush1.msra.mxu0 0.0
    %6496 = vmatprep.subr.mxu0 0.0
    %6497 = vmatpush1.msra.mxu0 0.0
    %6498 = vmatprep.subr.mxu0 0.0
    %6499 = vmatpush1.msra.mxu0 0.0
    %6500 = vmatprep.subr.mxu0 0.0
    %6501 = vmatpush1.msra.mxu0 0.0
    %6502 = vmatprep.subr.mxu0 0.0
    %6503 = vmatpush1.msra.mxu0 0.0
    %6504 = vmatprep.subr.mxu0 0.0
    %6505 = vmatpush1.msra.mxu0 %v3935
    %6506 = vmatprep.subr.mxu0 0.0
    %6507 = vmatpush1.msra.mxu0 %v3933
    %6508 = vmatprep.subr.mxu0 0.0
    %6509 = vmatpush1.msra.mxu0 %v3931
    %6510 = vmatprep.subr.mxu0 0.0
    %6511 = vmatpush1.msra.mxu0 %v3929
    %6512 = vmatprep.subr.mxu0 0.0
    %6513 = vmatpush1.msra.mxu0 %v3927
    %6514 = vmatprep.subr.mxu0 0.0
    %6515 = vmatpush1.msra.mxu0 %v3925
    %6516 = vmatprep.subr.mxu0 0.0
    %6517 = vmatpush1.msra.mxu0 %v3923
    %6518 = vmatprep.subr.mxu0 0.0
    %6519 = vmatpush1.msra.mxu0 %v3921
    %6520 = vmatprep.subr.mxu0 0.0
    %6521 = vmatpush2.msra.mxu0 0.0
    %6522 = vmatprep.subr.mxu0 0.0
    %6523 = vmatpush2.msra.mxu0 0.0
    %6524 = vmatprep.subr.mxu0 0.0
    %6525 = vmatpush2.msra.mxu0 0.0
    %6526 = vmatprep.subr.mxu0 0.0
    %6527 = vmatpush2.msra.mxu0 0.0
    %6528 = vmatprep.subr.mxu0 0.0
    %6529 = vmatpush2.msra.mxu0 0.0
    %6530 = vmatprep.subr.mxu0 0.0
    %6531 = vmatpush2.msra.mxu0 0.0
    %6532 = vmatprep.subr.mxu0 0.0
    %6533 = vmatpush2.msra.mxu0 0.0
    %6534 = vmatprep.subr.mxu0 0.0
    %6535 = vmatpush2.msra.mxu0 0.0
    %6536 = vmatprep.subr.mxu0 0.0
    %6537 = vmatpush2.msra.mxu0 0.0
    %6538 = vmatprep.subr.mxu0 0.0
    %6539 = vmatpush2.msra.mxu0 0.0
    %6540 = vmatprep.subr.mxu0 0.0
    %6541 = vmatpush2.msra.mxu0 0.0
    %6542 = vmatprep.subr.mxu0 0.0
    %6543 = vmatpush2.msra.mxu0 0.0
    %6544 = vmatprep.subr.mxu0 0.0
    %6545 = vmatpush2.msra.mxu0 0.0
    %6546 = vmatprep.subr.mxu0 0.0
    %6547 = vmatpush2.msra.mxu0 0.0
    %6548 = vmatprep.subr.mxu0 0.0
    %6549 = vmatpush2.msra.mxu0 0.0
    %6550 = vmatprep.subr.mxu0 0.0
    %6551 = vmatpush2.msra.mxu0 0.0
    %6552 = vmatprep.mubr.f32.mxu0 0.0
    %6553 = vmatmul.mubr.f32.gmra.mxu0 %v6465
    %v6554 = vpop.f32.mrf.mxu0
    %v6555 = vadd.f32 0.0, %v6554
    %v6556 = vpop.f32.mrf.mxu0
    %6557 = vmatprep.mubr.f32.mxu0 0.0
    %6558 = vmatmul.mubr.f32.gmra.mxu0 %v6468
    %v6559 = vpop.f32.mrf.mxu0
    %v6560 = vadd.f32 0.0, %v6559
    %v6561 = vpop.f32.mrf.mxu0
    %6562 = vmatprep.mubr.f32.mxu0 0.0
    %6563 = vmatmul.mubr.f32.gmra.mxu0 %v6471
    %v6564 = vpop.f32.mrf.mxu0
    %v6565 = vadd.f32 0.0, %v6564
    %v6566 = vpop.f32.mrf.mxu0
    %6567 = vmatprep.mubr.f32.mxu0 0.0
    %6568 = vmatmul.mubr.f32.gmra.mxu0 %v6474
    %v6569 = vpop.f32.mrf.mxu0
    %v6570 = vadd.f32 0.0, %v6569
    %v6571 = vpop.f32.mrf.mxu0
    %6572 = vmatprep.mubr.f32.mxu0 0.0
    %6573 = vmatmul.mubr.f32.gmra.mxu0 %v6477
    %v6574 = vpop.f32.mrf.mxu0
    %v6575 = vadd.f32 0.0, %v6574
    %v6576 = vpop.f32.mrf.mxu0
    %6577 = vmatprep.mubr.f32.mxu0 0.0
    %6578 = vmatmul.mubr.f32.gmra.mxu0 %v6480
    %v6579 = vpop.f32.mrf.mxu0
    %v6580 = vadd.f32 0.0, %v6579
    %v6581 = vpop.f32.mrf.mxu0
    %6582 = vmatprep.mubr.f32.mxu0 0.0
    %6583 = vmatmul.mubr.f32.gmra.mxu0 %v6483
    %v6584 = vpop.f32.mrf.mxu0
    %v6585 = vadd.f32 0.0, %v6584
    %v6586 = vpop.f32.mrf.mxu0
    %6587 = vmatprep.mubr.f32.mxu0 0.0
    %6588 = vmatmul.mubr.f32.gmra.mxu0 %v6486
    %v6589 = vpop.f32.mrf.mxu0
    %v6590 = vadd.f32 0.0, %v6589
    %v6591 = vpop.f32.mrf.mxu0
    %6592 = vdwg.mxu0
    %v6594 = vsel %vm1852, %v6166, 0
    %v6597 = vsel %vm1852, %v6167, 0
    %v6600 = vsel %vm1852, %v6168, 0
    %v6603 = vsel %vm1852, %v6169, 0
    %v6606 = vsel %vm1852, %v6170, 0
    %v6609 = vsel %vm1852, %v6171, 0
    %v6612 = vsel %vm1852, %v6172, 0
    %v6615 = vsel %vm1852, %v6173, 0
    %6617 = vmatprep.subr.mxu0 0.0
    %6618 = vmatpush1.msra.mxu0 0.0
    %6619 = vmatprep.subr.mxu0 0.0
    %6620 = vmatpush1.msra.mxu0 0.0
    %6621 = vmatprep.subr.mxu0 0.0
    %6622 = vmatpush1.msra.mxu0 0.0
    %6623 = vmatprep.subr.mxu0 0.0
    %6624 = vmatpush1.msra.mxu0 0.0
    %6625 = vmatprep.subr.mxu0 0.0
    %6626 = vmatpush1.msra.mxu0 0.0
    %6627 = vmatprep.subr.mxu0 0.0
    %6628 = vmatpush1.msra.mxu0 0.0
    %6629 = vmatprep.subr.mxu0 0.0
    %6630 = vmatpush1.msra.mxu0 0.0
    %6631 = vmatprep.subr.mxu0 0.0
    %6632 = vmatpush1.msra.mxu0 0.0
    %6633 = vmatprep.subr.mxu0 0.0
    %6634 = vmatpush1.msra.mxu0 %v3959
    %6635 = vmatprep.subr.mxu0 0.0
    %6636 = vmatpush1.msra.mxu0 %v3957
    %6637 = vmatprep.subr.mxu0 0.0
    %6638 = vmatpush1.msra.mxu0 %v3955
    %6639 = vmatprep.subr.mxu0 0.0
    %6640 = vmatpush1.msra.mxu0 %v3953
    %6641 = vmatprep.subr.mxu0 0.0
    %6642 = vmatpush1.msra.mxu0 %v3951
    %6643 = vmatprep.subr.mxu0 0.0
    %6644 = vmatpush1.msra.mxu0 %v3949
    %6645 = vmatprep.subr.mxu0 0.0
    %6646 = vmatpush1.msra.mxu0 %v3947
    %6647 = vmatprep.subr.mxu0 0.0
    %6648 = vmatpush1.msra.mxu0 %v3945
    %6649 = vmatprep.subr.mxu0 0.0
    %6650 = vmatpush2.msra.mxu0 0.0
    %6651 = vmatprep.subr.mxu0 0.0
    %6652 = vmatpush2.msra.mxu0 0.0
    %6653 = vmatprep.subr.mxu0 0.0
    %6654 = vmatpush2.msra.mxu0 0.0
    %6655 = vmatprep.subr.mxu0 0.0
    %6656 = vmatpush2.msra.mxu0 0.0
    %6657 = vmatprep.subr.mxu0 0.0
    %6658 = vmatpush2.msra.mxu0 0.0
    %6659 = vmatprep.subr.mxu0 0.0
    %6660 = vmatpush2.msra.mxu0 0.0
    %6661 = vmatprep.subr.mxu0 0.0
    %6662 = vmatpush2.msra.mxu0 0.0
    %6663 = vmatprep.subr.mxu0 0.0
    %6664 = vmatpush2.msra.mxu0 0.0
    %6665 = vmatprep.subr.mxu0 0.0
    %6666 = vmatpush2.msra.mxu0 0.0
    %6667 = vmatprep.subr.mxu0 0.0
    %6668 = vmatpush2.msra.mxu0 0.0
    %6669 = vmatprep.subr.mxu0 0.0
    %6670 = vmatpush2.msra.mxu0 0.0
    %6671 = vmatprep.subr.mxu0 0.0
    %6672 = vmatpush2.msra.mxu0 0.0
    %6673 = vmatprep.subr.mxu0 0.0
    %6674 = vmatpush2.msra.mxu0 0.0
    %6675 = vmatprep.subr.mxu0 0.0
    %6676 = vmatpush2.msra.mxu0 0.0
    %6677 = vmatprep.subr.mxu0 0.0
    %6678 = vmatpush2.msra.mxu0 0.0
    %6679 = vmatprep.subr.mxu0 0.0
    %6680 = vmatpush2.msra.mxu0 0.0
    %6681 = vmatprep.mubr.f32.mxu0 0.0
    %6682 = vmatmul.mubr.f32.gmra.mxu0 %v6594
    %v6683 = vpop.f32.mrf.mxu0
    %v6684 = vadd.f32 0.0, %v6683
    %v6685 = vpop.f32.mrf.mxu0
    %6686 = vmatprep.mubr.f32.mxu0 0.0
    %6687 = vmatmul.mubr.f32.gmra.mxu0 %v6597
    %v6688 = vpop.f32.mrf.mxu0
    %v6689 = vadd.f32 0.0, %v6688
    %v6690 = vpop.f32.mrf.mxu0
    %6691 = vmatprep.mubr.f32.mxu0 0.0
    %6692 = vmatmul.mubr.f32.gmra.mxu0 %v6600
    %v6693 = vpop.f32.mrf.mxu0
    %v6694 = vadd.f32 0.0, %v6693
    %v6695 = vpop.f32.mrf.mxu0
    %6696 = vmatprep.mubr.f32.mxu0 0.0
    %6697 = vmatmul.mubr.f32.gmra.mxu0 %v6603
    %v6698 = vpop.f32.mrf.mxu0
    %v6699 = vadd.f32 0.0, %v6698
    %v6700 = vpop.f32.mrf.mxu0
    %6701 = vmatprep.mubr.f32.mxu0 0.0
    %6702 = vmatmul.mubr.f32.gmra.mxu0 %v6606
    %v6703 = vpop.f32.mrf.mxu0
    %v6704 = vadd.f32 0.0, %v6703
    %v6705 = vpop.f32.mrf.mxu0
    %6706 = vmatprep.mubr.f32.mxu0 0.0
    %6707 = vmatmul.mubr.f32.gmra.mxu0 %v6609
    %v6708 = vpop.f32.mrf.mxu0
    %v6709 = vadd.f32 0.0, %v6708
    %v6710 = vpop.f32.mrf.mxu0
    %6711 = vmatprep.mubr.f32.mxu0 0.0
    %6712 = vmatmul.mubr.f32.gmra.mxu0 %v6612
    %v6713 = vpop.f32.mrf.mxu0
    %v6714 = vadd.f32 0.0, %v6713
    %v6715 = vpop.f32.mrf.mxu0
    %6716 = vmatprep.mubr.f32.mxu0 0.0
    %6717 = vmatmul.mubr.f32.gmra.mxu0 %v6615
    %v6718 = vpop.f32.mrf.mxu0
    %v6719 = vadd.f32 0.0, %v6718
    %v6720 = vpop.f32.mrf.mxu0
    %6721 = vdwg.mxu0
    %v6723 = vsel %vm1852, %v6174, 0
    %v6726 = vsel %vm1852, %v6175, 0
    %v6729 = vsel %vm1852, %v6176, 0
    %v6732 = vsel %vm1852, %v6177, 0
    %v6735 = vsel %vm1852, %v6178, 0
    %v6738 = vsel %vm1852, %v6179, 0
    %v6741 = vsel %vm1852, %v6180, 0
    %v6744 = vsel %vm1852, %v6181, 0
    %6746 = vmatprep.subr.mxu0 0.0
    %6747 = vmatpush1.msra.mxu0 0.0
    %6748 = vmatprep.subr.mxu0 0.0
    %6749 = vmatpush1.msra.mxu0 0.0
    %6750 = vmatprep.subr.mxu0 0.0
    %6751 = vmatpush1.msra.mxu0 0.0
    %6752 = vmatprep.subr.mxu0 0.0
    %6753 = vmatpush1.msra.mxu0 0.0
    %6754 = vmatprep.subr.mxu0 0.0
    %6755 = vmatpush1.msra.mxu0 0.0
    %6756 = vmatprep.subr.mxu0 0.0
    %6757 = vmatpush1.msra.mxu0 0.0
    %6758 = vmatprep.subr.mxu0 0.0
    %6759 = vmatpush1.msra.mxu0 0.0
    %6760 = vmatprep.subr.mxu0 0.0
    %6761 = vmatpush1.msra.mxu0 0.0
    %6762 = vmatprep.subr.mxu0 0.0
    %6763 = vmatpush1.msra.mxu0 %v3886
    %6764 = vmatprep.subr.mxu0 0.0
    %6765 = vmatpush1.msra.mxu0 %v3880
    %6766 = vmatprep.subr.mxu0 0.0
    %6767 = vmatpush1.msra.mxu0 %v3874
    %6768 = vmatprep.subr.mxu0 0.0
    %6769 = vmatpush1.msra.mxu0 %v3868
    %6770 = vmatprep.subr.mxu0 0.0
    %6771 = vmatpush1.msra.mxu0 %v3862
    %6772 = vmatprep.subr.mxu0 0.0
    %6773 = vmatpush1.msra.mxu0 %v3856
    %6774 = vmatprep.subr.mxu0 0.0
    %6775 = vmatpush1.msra.mxu0 %v3850
    %6776 = vmatprep.subr.mxu0 0.0
    %6777 = vmatpush1.msra.mxu0 %v3844
    %6778 = vmatprep.subr.mxu0 0.0
    %6779 = vmatpush2.msra.mxu0 0.0
    %6780 = vmatprep.subr.mxu0 0.0
    %6781 = vmatpush2.msra.mxu0 0.0
    %6782 = vmatprep.subr.mxu0 0.0
    %6783 = vmatpush2.msra.mxu0 0.0
    %6784 = vmatprep.subr.mxu0 0.0
    %6785 = vmatpush2.msra.mxu0 0.0
    %6786 = vmatprep.subr.mxu0 0.0
    %6787 = vmatpush2.msra.mxu0 0.0
    %6788 = vmatprep.subr.mxu0 0.0
    %6789 = vmatpush2.msra.mxu0 0.0
    %6790 = vmatprep.subr.mxu0 0.0
    %6791 = vmatpush2.msra.mxu0 0.0
    %6792 = vmatprep.subr.mxu0 0.0
    %6793 = vmatpush2.msra.mxu0 0.0
    %6794 = vmatprep.subr.mxu0 0.0
    %6795 = vmatpush2.msra.mxu0 0.0
    %6796 = vmatprep.subr.mxu0 0.0
    %6797 = vmatpush2.msra.mxu0 0.0
    %6798 = vmatprep.subr.mxu0 0.0
    %6799 = vmatpush2.msra.mxu0 0.0
    %6800 = vmatprep.subr.mxu0 0.0
    %6801 = vmatpush2.msra.mxu0 0.0
    %6802 = vmatprep.subr.mxu0 0.0
    %6803 = vmatpush2.msra.mxu0 0.0
    %6804 = vmatprep.subr.mxu0 0.0
    %6805 = vmatpush2.msra.mxu0 0.0
    %6806 = vmatprep.subr.mxu0 0.0
    %6807 = vmatpush2.msra.mxu0 0.0
    %6808 = vmatprep.subr.mxu0 0.0
    %6809 = vmatpush2.msra.mxu0 0.0
    %6810 = vmatprep.mubr.f32.mxu0 0.0
    %6811 = vmatmul.mubr.f32.gmra.mxu0 %v6723
    %v6812 = vpop.f32.mrf.mxu0
    %v6813 = vadd.f32 0.0, %v6812
    %v6814 = vpop.f32.mrf.mxu0
    %6815 = vmatprep.mubr.f32.mxu0 0.0
    %6816 = vmatmul.mubr.f32.gmra.mxu0 %v6726
    %v6817 = vpop.f32.mrf.mxu0
    %v6818 = vadd.f32 0.0, %v6817
    %v6819 = vpop.f32.mrf.mxu0
    %6820 = vmatprep.mubr.f32.mxu0 0.0
    %6821 = vmatmul.mubr.f32.gmra.mxu0 %v6729
    %v6822 = vpop.f32.mrf.mxu0
    %v6823 = vadd.f32 0.0, %v6822
    %v6824 = vpop.f32.mrf.mxu0
    %6825 = vmatprep.mubr.f32.mxu0 0.0
    %6826 = vmatmul.mubr.f32.gmra.mxu0 %v6732
    %v6827 = vpop.f32.mrf.mxu0
    %v6828 = vadd.f32 0.0, %v6827
    %v6829 = vpop.f32.mrf.mxu0
    %6830 = vmatprep.mubr.f32.mxu0 0.0
    %6831 = vmatmul.mubr.f32.gmra.mxu0 %v6735
    %v6832 = vpop.f32.mrf.mxu0
    %v6833 = vadd.f32 0.0, %v6832
    %v6834 = vpop.f32.mrf.mxu0
    %6835 = vmatprep.mubr.f32.mxu0 0.0
    %6836 = vmatmul.mubr.f32.gmra.mxu0 %v6738
    %v6837 = vpop.f32.mrf.mxu0
    %v6838 = vadd.f32 0.0, %v6837
    %v6839 = vpop.f32.mrf.mxu0
    %6840 = vmatprep.mubr.f32.mxu0 0.0
    %6841 = vmatmul.mubr.f32.gmra.mxu0 %v6741
    %v6842 = vpop.f32.mrf.mxu0
    %v6843 = vadd.f32 0.0, %v6842
    %v6844 = vpop.f32.mrf.mxu0
    %6845 = vmatprep.mubr.f32.mxu0 0.0
    %6846 = vmatmul.mubr.f32.gmra.mxu0 %v6744
    %v6847 = vpop.f32.mrf.mxu0
    %v6848 = vadd.f32 0.0, %v6847
    %v6849 = vpop.f32.mrf.mxu0
    %6850 = vdwg.mxu0
    %v6852 = vsel %vm1852, %v6182, 0
    %v6855 = vsel %vm1852, %v6183, 0
    %v6858 = vsel %vm1852, %v6184, 0
    %v6861 = vsel %vm1852, %v6185, 0
    %v6864 = vsel %vm1852, %v6186, 0
    %v6867 = vsel %vm1852, %v6187, 0
    %v6870 = vsel %vm1852, %v6188, 0
    %v6873 = vsel %vm1852, %v6189, 0
    %6875 = vmatprep.subr.mxu0 0.0
    %6876 = vmatpush1.msra.mxu0 0.0
    %6877 = vmatprep.subr.mxu0 0.0
    %6878 = vmatpush1.msra.mxu0 0.0
    %6879 = vmatprep.subr.mxu0 0.0
    %6880 = vmatpush1.msra.mxu0 0.0
    %6881 = vmatprep.subr.mxu0 0.0
    %6882 = vmatpush1.msra.mxu0 0.0
    %6883 = vmatprep.subr.mxu0 0.0
    %6884 = vmatpush1.msra.mxu0 0.0
    %6885 = vmatprep.subr.mxu0 0.0
    %6886 = vmatpush1.msra.mxu0 0.0
    %6887 = vmatprep.subr.mxu0 0.0
    %6888 = vmatpush1.msra.mxu0 0.0
    %6889 = vmatprep.subr.mxu0 0.0
    %6890 = vmatpush1.msra.mxu0 0.0
    %6891 = vmatprep.subr.mxu0 0.0
    %6892 = vmatpush1.msra.mxu0 %v3991
    %6893 = vmatprep.subr.mxu0 0.0
    %6894 = vmatpush1.msra.mxu0 %v3989
    %6895 = vmatprep.subr.mxu0 0.0
    %6896 = vmatpush1.msra.mxu0 %v3987
    %6897 = vmatprep.subr.mxu0 0.0
    %6898 = vmatpush1.msra.mxu0 %v3985
    %6899 = vmatprep.subr.mxu0 0.0
    %6900 = vmatpush1.msra.mxu0 %v3983
    %6901 = vmatprep.subr.mxu0 0.0
    %6902 = vmatpush1.msra.mxu0 %v3981
    %6903 = vmatprep.subr.mxu0 0.0
    %6904 = vmatpush1.msra.mxu0 %v3979
    %6905 = vmatprep.subr.mxu0 0.0
    %6906 = vmatpush1.msra.mxu0 %v3977
    %6907 = vmatprep.subr.mxu0 0.0
    %6908 = vmatpush2.msra.mxu0 0.0
    %6909 = vmatprep.subr.mxu0 0.0
    %6910 = vmatpush2.msra.mxu0 0.0
    %6911 = vmatprep.subr.mxu0 0.0
    %6912 = vmatpush2.msra.mxu0 0.0
    %6913 = vmatprep.subr.mxu0 0.0
    %6914 = vmatpush2.msra.mxu0 0.0
    %6915 = vmatprep.subr.mxu0 0.0
    %6916 = vmatpush2.msra.mxu0 0.0
    %6917 = vmatprep.subr.mxu0 0.0
    %6918 = vmatpush2.msra.mxu0 0.0
    %6919 = vmatprep.subr.mxu0 0.0
    %6920 = vmatpush2.msra.mxu0 0.0
    %6921 = vmatprep.subr.mxu0 0.0
    %6922 = vmatpush2.msra.mxu0 0.0
    %6923 = vmatprep.subr.mxu0 0.0
    %6924 = vmatpush2.msra.mxu0 0.0
    %6925 = vmatprep.subr.mxu0 0.0
    %6926 = vmatpush2.msra.mxu0 0.0
    %6927 = vmatprep.subr.mxu0 0.0
    %6928 = vmatpush2.msra.mxu0 0.0
    %6929 = vmatprep.subr.mxu0 0.0
    %6930 = vmatpush2.msra.mxu0 0.0
    %6931 = vmatprep.subr.mxu0 0.0
    %6932 = vmatpush2.msra.mxu0 0.0
    %6933 = vmatprep.subr.mxu0 0.0
    %6934 = vmatpush2.msra.mxu0 0.0
    %6935 = vmatprep.subr.mxu0 0.0
    %6936 = vmatpush2.msra.mxu0 0.0
    %6937 = vmatprep.subr.mxu0 0.0
    %6938 = vmatpush2.msra.mxu0 0.0
    %6939 = vmatprep.mubr.f32.mxu0 0.0
    %6940 = vmatmul.mubr.f32.gmra.mxu0 %v6852
    %v6941 = vpop.f32.mrf.mxu0
    %v6942 = vadd.f32 0.0, %v6941
    %v6943 = vpop.f32.mrf.mxu0
    %6944 = vmatprep.mubr.f32.mxu0 0.0
    %6945 = vmatmul.mubr.f32.gmra.mxu0 %v6855
    %v6946 = vpop.f32.mrf.mxu0
    %v6947 = vadd.f32 0.0, %v6946
    %v6948 = vpop.f32.mrf.mxu0
    %6949 = vmatprep.mubr.f32.mxu0 0.0
    %6950 = vmatmul.mubr.f32.gmra.mxu0 %v6858
    %v6951 = vpop.f32.mrf.mxu0
    %v6952 = vadd.f32 0.0, %v6951
    %v6953 = vpop.f32.mrf.mxu0
    %6954 = vmatprep.mubr.f32.mxu0 0.0
    %6955 = vmatmul.mubr.f32.gmra.mxu0 %v6861
    %v6956 = vpop.f32.mrf.mxu0
    %v6957 = vadd.f32 0.0, %v6956
    %v6958 = vpop.f32.mrf.mxu0
    %6959 = vmatprep.mubr.f32.mxu0 0.0
    %6960 = vmatmul.mubr.f32.gmra.mxu0 %v6864
    %v6961 = vpop.f32.mrf.mxu0
    %v6962 = vadd.f32 0.0, %v6961
    %v6963 = vpop.f32.mrf.mxu0
    %6964 = vmatprep.mubr.f32.mxu0 0.0
    %6965 = vmatmul.mubr.f32.gmra.mxu0 %v6867
    %v6966 = vpop.f32.mrf.mxu0
    %v6967 = vadd.f32 0.0, %v6966
    %v6968 = vpop.f32.mrf.mxu0
    %6969 = vmatprep.mubr.f32.mxu0 0.0
    %6970 = vmatmul.mubr.f32.gmra.mxu0 %v6870
    %v6971 = vpop.f32.mrf.mxu0
    %v6972 = vadd.f32 0.0, %v6971
    %v6973 = vpop.f32.mrf.mxu0
    %6974 = vmatprep.mubr.f32.mxu0 0.0
    %6975 = vmatmul.mubr.f32.gmra.mxu0 %v6873
    %v6976 = vpop.f32.mrf.mxu0
    %v6977 = vadd.f32 0.0, %v6976
    %v6978 = vpop.f32.mrf.mxu0
    %6979 = vdwg.mxu0
    %v6981 = vsel %vm1852, %v6190, 0
    %v6984 = vsel %vm1852, %v6191, 0
    %v6987 = vsel %vm1852, %v6192, 0
    %v6990 = vsel %vm1852, %v6193, 0
    %v6993 = vsel %vm1852, %v6194, 0
    %v6996 = vsel %vm1852, %v6195, 0
    %v6999 = vsel %vm1852, %v6196, 0
    %v7002 = vsel %vm1852, %v6197, 0
    %7004 = vmatprep.subr.mxu0 0.0
    %7005 = vmatpush1.msra.mxu0 0.0
    %7006 = vmatprep.subr.mxu0 0.0
    %7007 = vmatpush1.msra.mxu0 0.0
    %7008 = vmatprep.subr.mxu0 0.0
    %7009 = vmatpush1.msra.mxu0 0.0
    %7010 = vmatprep.subr.mxu0 0.0
    %7011 = vmatpush1.msra.mxu0 0.0
    %7012 = vmatprep.subr.mxu0 0.0
    %7013 = vmatpush1.msra.mxu0 0.0
    %7014 = vmatprep.subr.mxu0 0.0
    %7015 = vmatpush1.msra.mxu0 0.0
    %7016 = vmatprep.subr.mxu0 0.0
    %7017 = vmatpush1.msra.mxu0 0.0
    %7018 = vmatprep.subr.mxu0 0.0
    %7019 = vmatpush1.msra.mxu0 0.0
    %7020 = vmatprep.subr.mxu0 0.0
    %7021 = vmatpush1.msra.mxu0 %v4015
    %7022 = vmatprep.subr.mxu0 0.0
    %7023 = vmatpush1.msra.mxu0 %v4013
    %7024 = vmatprep.subr.mxu0 0.0
    %7025 = vmatpush1.msra.mxu0 %v4011
    %7026 = vmatprep.subr.mxu0 0.0
    %7027 = vmatpush1.msra.mxu0 %v4009
    %7028 = vmatprep.subr.mxu0 0.0
    %7029 = vmatpush1.msra.mxu0 %v4007
    %7030 = vmatprep.subr.mxu0 0.0
    %7031 = vmatpush1.msra.mxu0 %v4005
    %7032 = vmatprep.subr.mxu0 0.0
    %7033 = vmatpush1.msra.mxu0 %v4003
    %7034 = vmatprep.subr.mxu0 0.0
    %7035 = vmatpush1.msra.mxu0 %v4001
    %7036 = vmatprep.subr.mxu0 0.0
    %7037 = vmatpush2.msra.mxu0 0.0
    %7038 = vmatprep.subr.mxu0 0.0
    %7039 = vmatpush2.msra.mxu0 0.0
    %7040 = vmatprep.subr.mxu0 0.0
    %7041 = vmatpush2.msra.mxu0 0.0
    %7042 = vmatprep.subr.mxu0 0.0
    %7043 = vmatpush2.msra.mxu0 0.0
    %7044 = vmatprep.subr.mxu0 0.0
    %7045 = vmatpush2.msra.mxu0 0.0
    %7046 = vmatprep.subr.mxu0 0.0
    %7047 = vmatpush2.msra.mxu0 0.0
    %7048 = vmatprep.subr.mxu0 0.0
    %7049 = vmatpush2.msra.mxu0 0.0
    %7050 = vmatprep.subr.mxu0 0.0
    %7051 = vmatpush2.msra.mxu0 0.0
    %7052 = vmatprep.subr.mxu0 0.0
    %7053 = vmatpush2.msra.mxu0 0.0
    %7054 = vmatprep.subr.mxu0 0.0
    %7055 = vmatpush2.msra.mxu0 0.0
    %7056 = vmatprep.subr.mxu0 0.0
    %7057 = vmatpush2.msra.mxu0 0.0
    %7058 = vmatprep.subr.mxu0 0.0
    %7059 = vmatpush2.msra.mxu0 0.0
    %7060 = vmatprep.subr.mxu0 0.0
    %7061 = vmatpush2.msra.mxu0 0.0
    %7062 = vmatprep.subr.mxu0 0.0
    %7063 = vmatpush2.msra.mxu0 0.0
    %7064 = vmatprep.subr.mxu0 0.0
    %7065 = vmatpush2.msra.mxu0 0.0
    %7066 = vmatprep.subr.mxu0 0.0
    %7067 = vmatpush2.msra.mxu0 0.0
    %7068 = vmatprep.mubr.f32.mxu0 0.0
    %7069 = vmatmul.mubr.f32.gmra.mxu0 %v6981
    %v7070 = vpop.f32.mrf.mxu0
    %v7071 = vadd.f32 0.0, %v7070
    %v7072 = vpop.f32.mrf.mxu0
    %7073 = vmatprep.mubr.f32.mxu0 0.0
    %7074 = vmatmul.mubr.f32.gmra.mxu0 %v6984
    %v7075 = vpop.f32.mrf.mxu0
    %v7076 = vadd.f32 0.0, %v7075
    %v7077 = vpop.f32.mrf.mxu0
    %7078 = vmatprep.mubr.f32.mxu0 0.0
    %7079 = vmatmul.mubr.f32.gmra.mxu0 %v6987
    %v7080 = vpop.f32.mrf.mxu0
    %v7081 = vadd.f32 0.0, %v7080
    %v7082 = vpop.f32.mrf.mxu0
    %7083 = vmatprep.mubr.f32.mxu0 0.0
    %7084 = vmatmul.mubr.f32.gmra.mxu0 %v6990
    %v7085 = vpop.f32.mrf.mxu0
    %v7086 = vadd.f32 0.0, %v7085
    %v7087 = vpop.f32.mrf.mxu0
    %7088 = vmatprep.mubr.f32.mxu0 0.0
    %7089 = vmatmul.mubr.f32.gmra.mxu0 %v6993
    %v7090 = vpop.f32.mrf.mxu0
    %v7091 = vadd.f32 0.0, %v7090
    %v7092 = vpop.f32.mrf.mxu0
    %7093 = vmatprep.mubr.f32.mxu0 0.0
    %7094 = vmatmul.mubr.f32.gmra.mxu0 %v6996
    %v7095 = vpop.f32.mrf.mxu0
    %v7096 = vadd.f32 0.0, %v7095
    %v7097 = vpop.f32.mrf.mxu0
    %7098 = vmatprep.mubr.f32.mxu0 0.0
    %7099 = vmatmul.mubr.f32.gmra.mxu0 %v6999
    %v7100 = vpop.f32.mrf.mxu0
    %v7101 = vadd.f32 0.0, %v7100
    %v7102 = vpop.f32.mrf.mxu0
    %7103 = vmatprep.mubr.f32.mxu0 0.0
    %7104 = vmatmul.mubr.f32.gmra.mxu0 %v7002
    %v7105 = vpop.f32.mrf.mxu0
    %v7106 = vadd.f32 0.0, %v7105
    %v7107 = vpop.f32.mrf.mxu0
    %7108 = vdwg.mxu0
    %v7110 = vsel %vm1852, %v6198, 0
    %v7113 = vsel %vm1852, %v6199, 0
    %v7116 = vsel %vm1852, %v6200, 0
    %v7119 = vsel %vm1852, %v6201, 0
    %v7122 = vsel %vm1852, %v6202, 0
    %v7125 = vsel %vm1852, %v6203, 0
    %v7128 = vsel %vm1852, %v6204, 0
    %v7131 = vsel %vm1852, %v6205, 0
    %7133 = vmatprep.subr.mxu0 0.0
    %7134 = vmatpush1.msra.mxu0 0.0
    %7135 = vmatprep.subr.mxu0 0.0
    %7136 = vmatpush1.msra.mxu0 0.0
    %7137 = vmatprep.subr.mxu0 0.0
    %7138 = vmatpush1.msra.mxu0 0.0
    %7139 = vmatprep.subr.mxu0 0.0
    %7140 = vmatpush1.msra.mxu0 0.0
    %7141 = vmatprep.subr.mxu0 0.0
    %7142 = vmatpush1.msra.mxu0 0.0
    %7143 = vmatprep.subr.mxu0 0.0
    %7144 = vmatpush1.msra.mxu0 0.0
    %7145 = vmatprep.subr.mxu0 0.0
    %7146 = vmatpush1.msra.mxu0 0.0
    %7147 = vmatprep.subr.mxu0 0.0
    %7148 = vmatpush1.msra.mxu0 0.0
    %7149 = vmatprep.subr.mxu0 0.0
    %7150 = vmatpush1.msra.mxu0 %v4039
    %7151 = vmatprep.subr.mxu0 0.0
    %7152 = vmatpush1.msra.mxu0 %v4037
    %7153 = vmatprep.subr.mxu0 0.0
    %7154 = vmatpush1.msra.mxu0 %v4035
    %7155 = vmatprep.subr.mxu0 0.0
    %7156 = vmatpush1.msra.mxu0 %v4033
    %7157 = vmatprep.subr.mxu0 0.0
    %7158 = vmatpush1.msra.mxu0 %v4031
    %7159 = vmatprep.subr.mxu0 0.0
    %7160 = vmatpush1.msra.mxu0 %v4029
    %7161 = vmatprep.subr.mxu0 0.0
    %7162 = vmatpush1.msra.mxu0 %v4027
    %7163 = vmatprep.subr.mxu0 0.0
    %7164 = vmatpush1.msra.mxu0 %v4025
    %7165 = vmatprep.subr.mxu0 0.0
    %7166 = vmatpush2.msra.mxu0 0.0
    %7167 = vmatprep.subr.mxu0 0.0
    %7168 = vmatpush2.msra.mxu0 0.0
    %7169 = vmatprep.subr.mxu0 0.0
    %7170 = vmatpush2.msra.mxu0 0.0
    %7171 = vmatprep.subr.mxu0 0.0
    %7172 = vmatpush2.msra.mxu0 0.0
    %7173 = vmatprep.subr.mxu0 0.0
    %7174 = vmatpush2.msra.mxu0 0.0
    %7175 = vmatprep.subr.mxu0 0.0
    %7176 = vmatpush2.msra.mxu0 0.0
    %7177 = vmatprep.subr.mxu0 0.0
    %7178 = vmatpush2.msra.mxu0 0.0
    %7179 = vmatprep.subr.mxu0 0.0
    %7180 = vmatpush2.msra.mxu0 0.0
    %7181 = vmatprep.subr.mxu0 0.0
    %7182 = vmatpush2.msra.mxu0 0.0
    %7183 = vmatprep.subr.mxu0 0.0
    %7184 = vmatpush2.msra.mxu0 0.0
    %7185 = vmatprep.subr.mxu0 0.0
    %7186 = vmatpush2.msra.mxu0 0.0
    %7187 = vmatprep.subr.mxu0 0.0
    %7188 = vmatpush2.msra.mxu0 0.0
    %7189 = vmatprep.subr.mxu0 0.0
    %7190 = vmatpush2.msra.mxu0 0.0
    %7191 = vmatprep.subr.mxu0 0.0
    %7192 = vmatpush2.msra.mxu0 0.0
    %7193 = vmatprep.subr.mxu0 0.0
    %7194 = vmatpush2.msra.mxu0 0.0
    %7195 = vmatprep.subr.mxu0 0.0
    %7196 = vmatpush2.msra.mxu0 0.0
    %7197 = vmatprep.mubr.f32.mxu0 0.0
    %7198 = vmatmul.mubr.f32.gmra.mxu0 %v7110
    %v7199 = vpop.f32.mrf.mxu0
    %v7200 = vadd.f32 0.0, %v7199
    %v7201 = vpop.f32.mrf.mxu0
    %7202 = vmatprep.mubr.f32.mxu0 0.0
    %7203 = vmatmul.mubr.f32.gmra.mxu0 %v7113
    %v7204 = vpop.f32.mrf.mxu0
    %v7205 = vadd.f32 0.0, %v7204
    %v7206 = vpop.f32.mrf.mxu0
    %7207 = vmatprep.mubr.f32.mxu0 0.0
    %7208 = vmatmul.mubr.f32.gmra.mxu0 %v7116
    %v7209 = vpop.f32.mrf.mxu0
    %v7210 = vadd.f32 0.0, %v7209
    %v7211 = vpop.f32.mrf.mxu0
    %7212 = vmatprep.mubr.f32.mxu0 0.0
    %7213 = vmatmul.mubr.f32.gmra.mxu0 %v7119
    %v7214 = vpop.f32.mrf.mxu0
    %v7215 = vadd.f32 0.0, %v7214
    %v7216 = vpop.f32.mrf.mxu0
    %7217 = vmatprep.mubr.f32.mxu0 0.0
    %7218 = vmatmul.mubr.f32.gmra.mxu0 %v7122
    %v7219 = vpop.f32.mrf.mxu0
    %v7220 = vadd.f32 0.0, %v7219
    %v7221 = vpop.f32.mrf.mxu0
    %7222 = vmatprep.mubr.f32.mxu0 0.0
    %7223 = vmatmul.mubr.f32.gmra.mxu0 %v7125
    %v7224 = vpop.f32.mrf.mxu0
    %v7225 = vadd.f32 0.0, %v7224
    %v7226 = vpop.f32.mrf.mxu0
    %7227 = vmatprep.mubr.f32.mxu0 0.0
    %7228 = vmatmul.mubr.f32.gmra.mxu0 %v7128
    %v7229 = vpop.f32.mrf.mxu0
    %v7230 = vadd.f32 0.0, %v7229
    %v7231 = vpop.f32.mrf.mxu0
    %7232 = vmatprep.mubr.f32.mxu0 0.0
    %7233 = vmatmul.mubr.f32.gmra.mxu0 %v7131
    %v7234 = vpop.f32.mrf.mxu0
    %v7235 = vadd.f32 0.0, %v7234
    %v7236 = vpop.f32.mrf.mxu0
    %7237 = vdwg.mxu0
    %v7238 = vsel %vm579, %v6297, 0.0
    %v7239 = vsel %vm579, %v6426, 0.0
    %v7240 = vadd.f32 %v7238, %v7239
    %v7241 = vsel %vm579, %v6555, 0.0
    %v7242 = vadd.f32 %v7240, %v7241
    %v7243 = vsel %vm579, %v6684, 0.0
    %v7244 = vadd.f32 %v7242, %v7243
    %v7245 = vsel %vm579, %v6813, 0.0
    %v7246 = vadd.f32 %v7244, %v7245
    %v7247 = vsel %vm579, %v6942, 0.0
    %v7248 = vadd.f32 %v7246, %v7247
    %v7249 = vsel %vm579, %v7071, 0.0
    %v7250 = vadd.f32 %v7248, %v7249
    %v7251 = vsel %vm579, %v7200, 0.0
    %v7252 = vadd.f32 %v7250, %v7251
    %v7253 = vsel %vm579, %v6302, 0.0
    %v7254 = vsel %vm579, %v6431, 0.0
    %v7255 = vadd.f32 %v7253, %v7254
    %v7256 = vsel %vm579, %v6560, 0.0
    %v7257 = vadd.f32 %v7255, %v7256
    %v7258 = vsel %vm579, %v6689, 0.0
    %v7259 = vadd.f32 %v7257, %v7258
    %v7260 = vsel %vm579, %v6818, 0.0
    %v7261 = vadd.f32 %v7259, %v7260
    %v7262 = vsel %vm579, %v6947, 0.0
    %v7263 = vadd.f32 %v7261, %v7262
    %v7264 = vsel %vm579, %v7076, 0.0
    %v7265 = vadd.f32 %v7263, %v7264
    %v7266 = vsel %vm579, %v7205, 0.0
    %v7267 = vadd.f32 %v7265, %v7266
    %v7268 = vsel %vm579, %v6307, 0.0
    %v7269 = vsel %vm579, %v6436, 0.0
    %v7270 = vadd.f32 %v7268, %v7269
    %v7271 = vsel %vm579, %v6565, 0.0
    %v7272 = vadd.f32 %v7270, %v7271
    %v7273 = vsel %vm579, %v6694, 0.0
    %v7274 = vadd.f32 %v7272, %v7273
    %v7275 = vsel %vm579, %v6823, 0.0
    %v7276 = vadd.f32 %v7274, %v7275
    %v7277 = vsel %vm579, %v6952, 0.0
    %v7278 = vadd.f32 %v7276, %v7277
    %v7279 = vsel %vm579, %v7081, 0.0
    %v7280 = vadd.f32 %v7278, %v7279
    %v7281 = vsel %vm579, %v7210, 0.0
    %v7282 = vadd.f32 %v7280, %v7281
    %v7283 = vsel %vm579, %v6312, 0.0
    %v7284 = vsel %vm579, %v6441, 0.0
    %v7285 = vadd.f32 %v7283, %v7284
    %v7286 = vsel %vm579, %v6570, 0.0
    %v7287 = vadd.f32 %v7285, %v7286
    %v7288 = vsel %vm579, %v6699, 0.0
    %v7289 = vadd.f32 %v7287, %v7288
    %v7290 = vsel %vm579, %v6828, 0.0
    %v7291 = vadd.f32 %v7289, %v7290
    %v7292 = vsel %vm579, %v6957, 0.0
    %v7293 = vadd.f32 %v7291, %v7292
    %v7294 = vsel %vm579, %v7086, 0.0
    %v7295 = vadd.f32 %v7293, %v7294
    %v7296 = vsel %vm579, %v7215, 0.0
    %v7297 = vadd.f32 %v7295, %v7296
    %v7298 = vsel %vm579, %v6317, 0.0
    %v7299 = vsel %vm579, %v6446, 0.0
    %v7300 = vadd.f32 %v7298, %v7299
    %v7301 = vsel %vm579, %v6575, 0.0
    %v7302 = vadd.f32 %v7300, %v7301
    %v7303 = vsel %vm579, %v6704, 0.0
    %v7304 = vadd.f32 %v7302, %v7303
    %v7305 = vsel %vm579, %v6833, 0.0
    %v7306 = vadd.f32 %v7304, %v7305
    %v7307 = vsel %vm579, %v6962, 0.0
    %v7308 = vadd.f32 %v7306, %v7307
    %v7309 = vsel %vm579, %v7091, 0.0
    %v7310 = vadd.f32 %v7308, %v7309
    %v7311 = vsel %vm579, %v7220, 0.0
    %v7312 = vadd.f32 %v7310, %v7311
    %v7313 = vsel %vm579, %v6322, 0.0
    %v7314 = vsel %vm579, %v6451, 0.0
    %v7315 = vadd.f32 %v7313, %v7314
    %v7316 = vsel %vm579, %v6580, 0.0
    %v7317 = vadd.f32 %v7315, %v7316
    %v7318 = vsel %vm579, %v6709, 0.0
    %v7319 = vadd.f32 %v7317, %v7318
    %v7320 = vsel %vm579, %v6838, 0.0
    %v7321 = vadd.f32 %v7319, %v7320
    %v7322 = vsel %vm579, %v6967, 0.0
    %v7323 = vadd.f32 %v7321, %v7322
    %v7324 = vsel %vm579, %v7096, 0.0
    %v7325 = vadd.f32 %v7323, %v7324
    %v7326 = vsel %vm579, %v7225, 0.0
    %v7327 = vadd.f32 %v7325, %v7326
    %v7328 = vsel %vm579, %v6327, 0.0
    %v7329 = vsel %vm579, %v6456, 0.0
    %v7330 = vadd.f32 %v7328, %v7329
    %v7331 = vsel %vm579, %v6585, 0.0
    %v7332 = vadd.f32 %v7330, %v7331
    %v7333 = vsel %vm579, %v6714, 0.0
    %v7334 = vadd.f32 %v7332, %v7333
    %v7335 = vsel %vm579, %v6843, 0.0
    %v7336 = vadd.f32 %v7334, %v7335
    %v7337 = vsel %vm579, %v6972, 0.0
    %v7338 = vadd.f32 %v7336, %v7337
    %v7339 = vsel %vm579, %v7101, 0.0
    %v7340 = vadd.f32 %v7338, %v7339
    %v7341 = vsel %vm579, %v7230, 0.0
    %v7342 = vadd.f32 %v7340, %v7341
    %v7343 = vsel %vm579, %v6332, 0.0
    %v7344 = vsel %vm579, %v6461, 0.0
    %v7345 = vadd.f32 %v7343, %v7344
    %v7346 = vsel %vm579, %v6590, 0.0
    %v7347 = vadd.f32 %v7345, %v7346
    %v7348 = vsel %vm579, %v6719, 0.0
    %v7349 = vadd.f32 %v7347, %v7348
    %v7350 = vsel %vm579, %v6848, 0.0
    %v7351 = vadd.f32 %v7349, %v7350
    %v7352 = vsel %vm579, %v6977, 0.0
    %v7353 = vadd.f32 %v7351, %v7352
    %v7354 = vsel %vm579, %v7106, 0.0
    %v7355 = vadd.f32 %v7353, %v7354
    %v7356 = vsel %vm579, %v7235, 0.0
    %v7357 = vadd.f32 %v7355, %v7356
    %v7358 = vld [vmem:[#allocation5 + $0x1] sm:$0x1]
    %v7359 = vld [vmem:[#allocation5 + $0x4] sm:$0x1]
    %v7360 = vlaneseq
    %v7361 = vshrl.u32 %v7360, 7
    %v7362 = vsub.s32 0, %v7361
    %v7363 = vrot.slane %v7358, %v7362
    %v7364 = vmul.f32 %v7252, %v7363
    %v7365 = vmul.f32 %v7267, %v7363
    %v7366 = vmul.f32 %v7282, %v7363
    %v7367 = vmul.f32 %v7297, %v7363
    %v7368 = vmul.f32 %v7312, %v7363
    %v7369 = vmul.f32 %v7327, %v7363
    %v7370 = vmul.f32 %v7342, %v7363
    %v7371 = vmul.f32 %v7357, %v7363
    %v7372 = vlaneseq
    %v7373 = vshrl.u32 %v7372, 7
    %v7374 = vsub.s32 0, %v7373
    %v7375 = vrot.slane %v7359, %v7374
    %v7376 = vadd.f32 %v7364, %v7375
    %v7377 = vadd.f32 %v7365, %v7375
    %v7378 = vadd.f32 %v7366, %v7375
    %v7379 = vadd.f32 %v7367, %v7375
    %v7380 = vadd.f32 %v7368, %v7375
    %v7381 = vadd.f32 %v7369, %v7375
    %v7382 = vadd.f32 %v7370, %v7375
    %v7383 = vadd.f32 %v7371, %v7375
    %v7384 = vmax.f32 %v7376, 0.0
    %v7385 = vmax.f32 %v7377, 0.0
    %v7386 = vmax.f32 %v7378, 0.0
    %v7387 = vmax.f32 %v7379, 0.0
    %v7388 = vmax.f32 %v7380, 0.0
    %v7389 = vmax.f32 %v7381, 0.0
    %v7390 = vmax.f32 %v7382, 0.0
    %v7391 = vmax.f32 %v7383, 0.0
    %v7392 = vld [vmem:[#allocation2 + $0x80] sm:$0xff]
    %v7393 = vld [vmem:[#allocation2 + $0x90] sm:$0xff]
    %v7394 = vld [vmem:[#allocation2 + $0xa0] sm:$0xff]
    %v7395 = vld [vmem:[#allocation2 + $0xb0] sm:$0xff]
    %v7397 = vsel %vm579, %v7384, 0
    %v7400 = vsel %vm579, %v7385, 0
    %v7403 = vsel %vm579, %v7386, 0
    %v7406 = vsel %vm579, %v7387, 0
    %v7409 = vsel %vm579, %v7388, 0
    %v7412 = vsel %vm579, %v7389, 0
    %v7415 = vsel %vm579, %v7390, 0
    %v7418 = vsel %vm579, %v7391, 0
    %7420 = vmatprep.subr.mxu0 0.0
    %7421 = vmatpush1.msra.mxu0 0.0
    %7422 = vmatprep.subr.mxu0 0.0
    %7423 = vmatpush1.msra.mxu0 0.0
    %7424 = vmatprep.subr.mxu0 0.0
    %7425 = vmatpush1.msra.mxu0 0.0
    %7426 = vmatprep.subr.mxu0 0.0
    %7427 = vmatpush1.msra.mxu0 0.0
    %7428 = vmatprep.subr.mxu0 0.0
    %7429 = vmatpush1.msra.mxu0 0.0
    %7430 = vmatprep.subr.mxu0 0.0
    %7431 = vmatpush1.msra.mxu0 0.0
    %7432 = vmatprep.subr.mxu0 0.0
    %7433 = vmatpush1.msra.mxu0 0.0
    %7434 = vmatprep.subr.mxu0 0.0
    %7435 = vmatpush1.msra.mxu0 0.0
    %7436 = vmatprep.subr.mxu0 0.0
    %7437 = vmatpush1.msra.mxu0 0.0
    %7438 = vmatprep.subr.mxu0 0.0
    %7439 = vmatpush1.msra.mxu0 0.0
    %7440 = vmatprep.subr.mxu0 0.0
    %7441 = vmatpush1.msra.mxu0 0.0
    %7442 = vmatprep.subr.mxu0 0.0
    %7443 = vmatpush1.msra.mxu0 0.0
    %7444 = vmatprep.subr.mxu0 0.0
    %7445 = vmatpush1.msra.mxu0 %v7395
    %7446 = vmatprep.subr.mxu0 0.0
    %7447 = vmatpush1.msra.mxu0 %v7394
    %7448 = vmatprep.subr.mxu0 0.0
    %7449 = vmatpush1.msra.mxu0 %v7393
    %7450 = vmatprep.subr.mxu0 0.0
    %7451 = vmatpush1.msra.mxu0 %v7392
    %7452 = vmatprep.subr.mxu0 0.0
    %7453 = vmatpush2.msra.mxu0 0.0
    %7454 = vmatprep.subr.mxu0 0.0
    %7455 = vmatpush2.msra.mxu0 0.0
    %7456 = vmatprep.subr.mxu0 0.0
    %7457 = vmatpush2.msra.mxu0 0.0
    %7458 = vmatprep.subr.mxu0 0.0
    %7459 = vmatpush2.msra.mxu0 0.0
    %7460 = vmatprep.subr.mxu0 0.0
    %7461 = vmatpush2.msra.mxu0 0.0
    %7462 = vmatprep.subr.mxu0 0.0
    %7463 = vmatpush2.msra.mxu0 0.0
    %7464 = vmatprep.subr.mxu0 0.0
    %7465 = vmatpush2.msra.mxu0 0.0
    %7466 = vmatprep.subr.mxu0 0.0
    %7467 = vmatpush2.msra.mxu0 0.0
    %7468 = vmatprep.subr.mxu0 0.0
    %7469 = vmatpush2.msra.mxu0 0.0
    %7470 = vmatprep.subr.mxu0 0.0
    %7471 = vmatpush2.msra.mxu0 0.0
    %7472 = vmatprep.subr.mxu0 0.0
    %7473 = vmatpush2.msra.mxu0 0.0
    %7474 = vmatprep.subr.mxu0 0.0
    %7475 = vmatpush2.msra.mxu0 0.0
    %7476 = vmatprep.subr.mxu0 0.0
    %7477 = vmatpush2.msra.mxu0 0.0
    %7478 = vmatprep.subr.mxu0 0.0
    %7479 = vmatpush2.msra.mxu0 0.0
    %7480 = vmatprep.subr.mxu0 0.0
    %7481 = vmatpush2.msra.mxu0 0.0
    %7482 = vmatprep.subr.mxu0 0.0
    %7483 = vmatpush2.msra.mxu0 0.0
    %7484 = vmatprep.mubr.f32.mxu0 0.0
    %7485 = vmatmul.mubr.f32.gmra.mxu0 %v7397
    %v7486 = vpop.f32.mrf.mxu0
    %v7487 = vadd.f32 0.0, %v7486
    %v7488 = vpop.f32.mrf.mxu0
    %7489 = vmatprep.mubr.f32.mxu0 0.0
    %7490 = vmatmul.mubr.f32.gmra.mxu0 %v7400
    %v7491 = vpop.f32.mrf.mxu0
    %v7492 = vadd.f32 0.0, %v7491
    %v7493 = vpop.f32.mrf.mxu0
    %7494 = vmatprep.mubr.f32.mxu0 0.0
    %7495 = vmatmul.mubr.f32.gmra.mxu0 %v7403
    %v7496 = vpop.f32.mrf.mxu0
    %v7497 = vadd.f32 0.0, %v7496
    %v7498 = vpop.f32.mrf.mxu0
    %7499 = vmatprep.mubr.f32.mxu0 0.0
    %7500 = vmatmul.mubr.f32.gmra.mxu0 %v7406
    %v7501 = vpop.f32.mrf.mxu0
    %v7502 = vadd.f32 0.0, %v7501
    %v7503 = vpop.f32.mrf.mxu0
    %7504 = vmatprep.mubr.f32.mxu0 0.0
    %7505 = vmatmul.mubr.f32.gmra.mxu0 %v7409
    %v7506 = vpop.f32.mrf.mxu0
    %v7507 = vadd.f32 0.0, %v7506
    %v7508 = vpop.f32.mrf.mxu0
    %7509 = vmatprep.mubr.f32.mxu0 0.0
    %7510 = vmatmul.mubr.f32.gmra.mxu0 %v7412
    %v7511 = vpop.f32.mrf.mxu0
    %v7512 = vadd.f32 0.0, %v7511
    %v7513 = vpop.f32.mrf.mxu0
    %7514 = vmatprep.mubr.f32.mxu0 0.0
    %7515 = vmatmul.mubr.f32.gmra.mxu0 %v7415
    %v7516 = vpop.f32.mrf.mxu0
    %v7517 = vadd.f32 0.0, %v7516
    %v7518 = vpop.f32.mrf.mxu0
    %7519 = vmatprep.mubr.f32.mxu0 0.0
    %7520 = vmatmul.mubr.f32.gmra.mxu0 %v7418
    %v7521 = vpop.f32.mrf.mxu0
    %v7522 = vadd.f32 0.0, %v7521
    %v7523 = vpop.f32.mrf.mxu0
    %7524 = vdwg.mxu0
    %v7525 = vld [vmem:[%s3 + $0x20] sm:$0x1]
    %v7526 = vld [vmem:[%s3 + $0x21] sm:$0x1]
    %v7527 = vlaneseq
    %v7528 = vshrl.u32 %v7527, 7
    %v7529 = vsub.s32 0, %v7528
    %v7530 = vrot.slane %v7525, %v7529
    %v7531 = vmul.f32 %v7487, %v7530
    %v7532 = vmul.f32 %v7492, %v7530
    %v7533 = vmul.f32 %v7497, %v7530
    %v7534 = vmul.f32 %v7502, %v7530
    %v7535 = vmul.f32 %v7507, %v7530
    %v7536 = vmul.f32 %v7512, %v7530
    %v7537 = vmul.f32 %v7517, %v7530
    %v7538 = vmul.f32 %v7522, %v7530
    %v7539 = vsel %vm579, %v7531, 0.0
    %7540 = vadd.xlane.f32.xlu0 %v7539
    %v7541 = vpop.xlane.xlu0 %7540
    %v7542 = vsel %vm579, %v7532, 0.0
    %7543 = vadd.xlane.f32.xlu0 %v7542
    %v7544 = vpop.xlane.xlu0 %7543
    %v7545 = vsel %vm579, %v7533, 0.0
    %7546 = vadd.xlane.f32.xlu0 %v7545
    %v7547 = vpop.xlane.xlu0 %7546
    %v7548 = vsel %vm579, %v7534, 0.0
    %7549 = vadd.xlane.f32.xlu0 %v7548
    %v7550 = vpop.xlane.xlu0 %7549
    %v7551 = vsel %vm579, %v7535, 0.0
    %7552 = vadd.xlane.f32.xlu0 %v7551
    %v7553 = vpop.xlane.xlu0 %7552
    %v7554 = vsel %vm579, %v7536, 0.0
    %7555 = vadd.xlane.f32.xlu0 %v7554
    %v7556 = vpop.xlane.xlu0 %7555
    %v7557 = vsel %vm579, %v7537, 0.0
    %7558 = vadd.xlane.f32.xlu0 %v7557
    %v7559 = vpop.xlane.xlu0 %7558
    %v7560 = vsel %vm579, %v7538, 0.0
    %7561 = vadd.xlane.f32.xlu0 %v7560
    %v7562 = vpop.xlane.xlu0 %7561
    %v7564 = vsel %vm579, %v7526, 0
    %v7567 = vsel %vm579, %v7487, 0
    %v7570 = vsel %vm579, %v7492, 0
    %v7573 = vsel %vm579, %v7497, 0
    %v7576 = vsel %vm579, %v7502, 0
    %v7579 = vsel %vm579, %v7507, 0
    %v7582 = vsel %vm579, %v7512, 0
    %v7585 = vsel %vm579, %v7517, 0
    %v7588 = vsel %vm579, %v7522, 0
    %7590 = vmatprep.subr.mxu0 0.0
    %7591 = vmatpush1.xpose.msra.mxu0 0.0
    %7592 = vmatprep.subr.mxu0 0.0
    %7593 = vmatpush1.xpose.msra.mxu0 0.0
    %7594 = vmatprep.subr.mxu0 0.0
    %7595 = vmatpush1.xpose.msra.mxu0 0.0
    %7596 = vmatprep.subr.mxu0 0.0
    %7597 = vmatpush1.xpose.msra.mxu0 0.0
    %7598 = vmatprep.subr.mxu0 0.0
    %7599 = vmatpush1.xpose.msra.mxu0 0.0
    %7600 = vmatprep.subr.mxu0 0.0
    %7601 = vmatpush1.xpose.msra.mxu0 0.0
    %7602 = vmatprep.subr.mxu0 0.0
    %7603 = vmatpush1.xpose.msra.mxu0 0.0
    %7604 = vmatprep.subr.mxu0 0.0
    %7605 = vmatpush1.xpose.msra.mxu0 0.0
    %7606 = vmatprep.subr.mxu0 0.0
    %7607 = vmatpush1.xpose.msra.mxu0 %v7588
    %7608 = vmatprep.subr.mxu0 0.0
    %7609 = vmatpush1.xpose.msra.mxu0 %v7585
    %7610 = vmatprep.subr.mxu0 0.0
    %7611 = vmatpush1.xpose.msra.mxu0 %v7582
    %7612 = vmatprep.subr.mxu0 0.0
    %7613 = vmatpush1.xpose.msra.mxu0 %v7579
    %7614 = vmatprep.subr.mxu0 0.0
    %7615 = vmatpush1.xpose.msra.mxu0 %v7576
    %7616 = vmatprep.subr.mxu0 0.0
    %7617 = vmatpush1.xpose.msra.mxu0 %v7573
    %7618 = vmatprep.subr.mxu0 0.0
    %7619 = vmatpush1.xpose.msra.mxu0 %v7570
    %7620 = vmatprep.subr.mxu0 0.0
    %7621 = vmatpush1.xpose.msra.mxu0 %v7567
    %7622 = vmatprep.subr.mxu0 0.0
    %7623 = vmatpush2.xpose.msra.mxu0 0.0
    %7624 = vmatprep.subr.mxu0 0.0
    %7625 = vmatpush2.xpose.msra.mxu0 0.0
    %7626 = vmatprep.subr.mxu0 0.0
    %7627 = vmatpush2.xpose.msra.mxu0 0.0
    %7628 = vmatprep.subr.mxu0 0.0
    %7629 = vmatpush2.xpose.msra.mxu0 0.0
    %7630 = vmatprep.subr.mxu0 0.0
    %7631 = vmatpush2.xpose.msra.mxu0 0.0
    %7632 = vmatprep.subr.mxu0 0.0
    %7633 = vmatpush2.xpose.msra.mxu0 0.0
    %7634 = vmatprep.subr.mxu0 0.0
    %7635 = vmatpush2.xpose.msra.mxu0 0.0
    %7636 = vmatprep.subr.mxu0 0.0
    %7637 = vmatpush2.xpose.msra.mxu0 0.0
    %7638 = vmatprep.subr.mxu0 0.0
    %7639 = vmatpush2.xpose.msra.mxu0 0.0
    %7640 = vmatprep.subr.mxu0 0.0
    %7641 = vmatpush2.xpose.msra.mxu0 0.0
    %7642 = vmatprep.subr.mxu0 0.0
    %7643 = vmatpush2.xpose.msra.mxu0 0.0
    %7644 = vmatprep.subr.mxu0 0.0
    %7645 = vmatpush2.xpose.msra.mxu0 0.0
    %7646 = vmatprep.subr.mxu0 0.0
    %7647 = vmatpush2.xpose.msra.mxu0 0.0
    %7648 = vmatprep.subr.mxu0 0.0
    %7649 = vmatpush2.xpose.msra.mxu0 0.0
    %7650 = vmatprep.subr.mxu0 0.0
    %7651 = vmatpush2.xpose.msra.mxu0 0.0
    %7652 = vmatprep.subr.mxu0 0.0
    %7653 = vmatpush2.xpose.msra.mxu0 0.0
    %7654 = vmatprep.mubr.f32.mxu0 0.0
    %7655 = vmatmul.mubr.f32.gmra.mxu0 %v7564
    %v7656 = vpop.f32.mrf.mxu0
    %v7657 = vadd.f32 0.0, %v7656
    %v7658 = vpop.f32.mrf.mxu0
    %7659 = vdwg.mxu0
    %v7660 = vlaneseq
    %v7661 = vshrl.u32 %v7660, 7
    %v7662 = vsub.s32 0, %v7661
    %v7663 = vrot.slane %v7657, %v7662
    %v7664 = vadd.f32 %v7541, %v7663
    %v7665 = vadd.f32 %v7544, %v7663
    %v7666 = vadd.f32 %v7547, %v7663
    %v7667 = vadd.f32 %v7550, %v7663
    %v7668 = vadd.f32 %v7553, %v7663
    %v7669 = vadd.f32 %v7556, %v7663
    %v7670 = vadd.f32 %v7559, %v7663
    %v7671 = vadd.f32 %v7562, %v7663
    %vm7672 = vcmp.ge.f32.partialorder %v7664, 0.0
    %vm7673 = vcmp.ge.f32.partialorder %v7665, 0.0
    %vm7674 = vcmp.ge.f32.partialorder %v7666, 0.0
    %vm7675 = vcmp.ge.f32.partialorder %v7667, 0.0
    %vm7676 = vcmp.ge.f32.partialorder %v7668, 0.0
    %vm7677 = vcmp.ge.f32.partialorder %v7669, 0.0
    %vm7678 = vcmp.ge.f32.partialorder %v7670, 0.0
    %vm7679 = vcmp.ge.f32.partialorder %v7671, 0.0
    %v7680 = vmul.f32 %v7664, 0.2
    %v7681 = vmul.f32 %v7665, 0.2
    %v7682 = vmul.f32 %v7666, 0.2
    %v7683 = vmul.f32 %v7667, 0.2
    %v7684 = vmul.f32 %v7668, 0.2
    %v7685 = vmul.f32 %v7669, 0.2
    %v7686 = vmul.f32 %v7670, 0.2
    %v7687 = vmul.f32 %v7671, 0.2
    %v7688 = vsel %vm7672, %v7664, %v7680
    %v7689 = vsel %vm7673, %v7665, %v7681
    %v7690 = vsel %vm7674, %v7666, %v7682
    %v7691 = vsel %vm7675, %v7667, %v7683
    %v7692 = vsel %vm7676, %v7668, %v7684
    %v7693 = vsel %vm7677, %v7669, %v7685
    %v7694 = vsel %vm7678, %v7670, %v7686
    %v7695 = vsel %vm7679, %v7671, %v7687
    %v7696 = vsel %vm1764, %v7688, -1e+30
    %v7697 = vsel %vm1765, %v7689, -1e+30
    %v7698 = vsel %vm1766, %v7690, -1e+30
    %v7699 = vsel %vm1767, %v7691, -1e+30
    %v7700 = vsel %vm1768, %v7692, -1e+30
    %v7701 = vsel %vm1769, %v7693, -1e+30
    %v7702 = vsel %vm1770, %v7694, -1e+30
    %v7703 = vsel %vm1771, %v7695, -1e+30
    %v7704 = vsel %vm1852, %v7696, -inf
    %7705 = vmax.xlane.f32.xlu0 %v7704
    %v7706 = vpop.xlane.xlu0 %7705
    %v7707 = vsel %vm1852, %v7697, -inf
    %7708 = vmax.xlane.f32.xlu0 %v7707
    %v7709 = vpop.xlane.xlu0 %7708
    %v7710 = vsel %vm1852, %v7698, -inf
    %7711 = vmax.xlane.f32.xlu0 %v7710
    %v7712 = vpop.xlane.xlu0 %7711
    %v7713 = vsel %vm1852, %v7699, -inf
    %7714 = vmax.xlane.f32.xlu0 %v7713
    %v7715 = vpop.xlane.xlu0 %7714
    %v7716 = vsel %vm1852, %v7700, -inf
    %7717 = vmax.xlane.f32.xlu0 %v7716
    %v7718 = vpop.xlane.xlu0 %7717
    %v7719 = vsel %vm1852, %v7701, -inf
    %7720 = vmax.xlane.f32.xlu0 %v7719
    %v7721 = vpop.xlane.xlu0 %7720
    %v7722 = vsel %vm1852, %v7702, -inf
    %7723 = vmax.xlane.f32.xlu0 %v7722
    %v7724 = vpop.xlane.xlu0 %7723
    %v7725 = vsel %vm1852, %v7703, -inf
    %7726 = vmax.xlane.f32.xlu0 %v7725
    %v7727 = vpop.xlane.xlu0 %7726
    %v7728 = vsub.f32 %v7696, %v7706
    %v7729 = vsub.f32 %v7697, %v7709
    %v7730 = vsub.f32 %v7698, %v7712
    %v7731 = vsub.f32 %v7699, %v7715
    %v7732 = vsub.f32 %v7700, %v7718
    %v7733 = vsub.f32 %v7701, %v7721
    %v7734 = vsub.f32 %v7702, %v7724
    %v7735 = vsub.f32 %v7703, %v7727
    %v7736 = vmul.f32 %v7728, 1.442695
    %v7737 = vpow.pop %v7736
    %v7738 = vmul.f32 %v7729, 1.442695
    %v7739 = vpow.pop %v7738
    %v7740 = vmul.f32 %v7730, 1.442695
    %v7741 = vpow.pop %v7740
    %v7742 = vmul.f32 %v7731, 1.442695
    %v7743 = vpow.pop %v7742
    %v7744 = vmul.f32 %v7732, 1.442695
    %v7745 = vpow.pop %v7744
    %v7746 = vmul.f32 %v7733, 1.442695
    %v7747 = vpow.pop %v7746
    %v7748 = vmul.f32 %v7734, 1.442695
    %v7749 = vpow.pop %v7748
    %v7750 = vmul.f32 %v7735, 1.442695
    %v7751 = vpow.pop %v7750
    %v7752 = vsel %vm1852, %v7737, 0.0
    %7753 = vadd.xlane.f32.xlu0 %v7752
    %v7754 = vpop.xlane.xlu0 %7753
    %v7755 = vsel %vm1852, %v7739, 0.0
    %7756 = vadd.xlane.f32.xlu0 %v7755
    %v7757 = vpop.xlane.xlu0 %7756
    %v7758 = vsel %vm1852, %v7741, 0.0
    %7759 = vadd.xlane.f32.xlu0 %v7758
    %v7760 = vpop.xlane.xlu0 %7759
    %v7761 = vsel %vm1852, %v7743, 0.0
    %7762 = vadd.xlane.f32.xlu0 %v7761
    %v7763 = vpop.xlane.xlu0 %7762
    %v7764 = vsel %vm1852, %v7745, 0.0
    %7765 = vadd.xlane.f32.xlu0 %v7764
    %v7766 = vpop.xlane.xlu0 %7765
    %v7767 = vsel %vm1852, %v7747, 0.0
    %7768 = vadd.xlane.f32.xlu0 %v7767
    %v7769 = vpop.xlane.xlu0 %7768
    %v7770 = vsel %vm1852, %v7749, 0.0
    %7771 = vadd.xlane.f32.xlu0 %v7770
    %v7772 = vpop.xlane.xlu0 %7771
    %v7773 = vsel %vm1852, %v7751, 0.0
    %7774 = vadd.xlane.f32.xlu0 %v7773
    %v7775 = vpop.xlane.xlu0 %7774
    %v7776 = vrcp.pop %v7754
    %v7777 = vrcp.pop %v7757
    %v7778 = vrcp.pop %v7760
    %v7779 = vrcp.pop %v7763
    %v7780 = vrcp.pop %v7766
    %v7781 = vrcp.pop %v7769
    %v7782 = vrcp.pop %v7772
    %v7783 = vrcp.pop %v7775
    %v7784 = vmul.f32 %v7737, %v7776
    %v7785 = vmul.f32 %v7739, %v7777
    %v7786 = vmul.f32 %v7741, %v7778
    %v7787 = vmul.f32 %v7743, %v7779
    %v7788 = vmul.f32 %v7745, %v7780
    %v7789 = vmul.f32 %v7747, %v7781
    %v7790 = vmul.f32 %v7749, %v7782
    %v7791 = vmul.f32 %v7751, %v7783
    %v7793 = vsel %vm1852, %v7784, 0
    %v7796 = vsel %vm1852, %v7785, 0
    %v7799 = vsel %vm1852, %v7786, 0
    %v7802 = vsel %vm1852, %v7787, 0
    %v7805 = vsel %vm1852, %v7788, 0
    %v7808 = vsel %vm1852, %v7789, 0
    %v7811 = vsel %vm1852, %v7790, 0
    %v7814 = vsel %vm1852, %v7791, 0
    %7816 = vmatprep.subr.mxu0 0.0
    %7817 = vmatpush1.msra.mxu0 0.0
    %7818 = vmatprep.subr.mxu0 0.0
    %7819 = vmatpush1.msra.mxu0 0.0
    %7820 = vmatprep.subr.mxu0 0.0
    %7821 = vmatpush1.msra.mxu0 0.0
    %7822 = vmatprep.subr.mxu0 0.0
    %7823 = vmatpush1.msra.mxu0 0.0
    %7824 = vmatprep.subr.mxu0 0.0
    %7825 = vmatpush1.msra.mxu0 0.0
    %7826 = vmatprep.subr.mxu0 0.0
    %7827 = vmatpush1.msra.mxu0 0.0
    %7828 = vmatprep.subr.mxu0 0.0
    %7829 = vmatpush1.msra.mxu0 0.0
    %7830 = vmatprep.subr.mxu0 0.0
    %7831 = vmatpush1.msra.mxu0 0.0
    %7832 = vmatprep.subr.mxu0 0.0
    %7833 = vmatpush1.msra.mxu0 %v7522
    %7834 = vmatprep.subr.mxu0 0.0
    %7835 = vmatpush1.msra.mxu0 %v7517
    %7836 = vmatprep.subr.mxu0 0.0
    %7837 = vmatpush1.msra.mxu0 %v7512
    %7838 = vmatprep.subr.mxu0 0.0
    %7839 = vmatpush1.msra.mxu0 %v7507
    %7840 = vmatprep.subr.mxu0 0.0
    %7841 = vmatpush1.msra.mxu0 %v7502
    %7842 = vmatprep.subr.mxu0 0.0
    %7843 = vmatpush1.msra.mxu0 %v7497
    %7844 = vmatprep.subr.mxu0 0.0
    %7845 = vmatpush1.msra.mxu0 %v7492
    %7846 = vmatprep.subr.mxu0 0.0
    %7847 = vmatpush1.msra.mxu0 %v7487
    %7848 = vmatprep.subr.mxu0 0.0
    %7849 = vmatpush2.msra.mxu0 0.0
    %7850 = vmatprep.subr.mxu0 0.0
    %7851 = vmatpush2.msra.mxu0 0.0
    %7852 = vmatprep.subr.mxu0 0.0
    %7853 = vmatpush2.msra.mxu0 0.0
    %7854 = vmatprep.subr.mxu0 0.0
    %7855 = vmatpush2.msra.mxu0 0.0
    %7856 = vmatprep.subr.mxu0 0.0
    %7857 = vmatpush2.msra.mxu0 0.0
    %7858 = vmatprep.subr.mxu0 0.0
    %7859 = vmatpush2.msra.mxu0 0.0
    %7860 = vmatprep.subr.mxu0 0.0
    %7861 = vmatpush2.msra.mxu0 0.0
    %7862 = vmatprep.subr.mxu0 0.0
    %7863 = vmatpush2.msra.mxu0 0.0
    %7864 = vmatprep.subr.mxu0 0.0
    %7865 = vmatpush2.msra.mxu0 0.0
    %7866 = vmatprep.subr.mxu0 0.0
    %7867 = vmatpush2.msra.mxu0 0.0
    %7868 = vmatprep.subr.mxu0 0.0
    %7869 = vmatpush2.msra.mxu0 0.0
    %7870 = vmatprep.subr.mxu0 0.0
    %7871 = vmatpush2.msra.mxu0 0.0
    %7872 = vmatprep.subr.mxu0 0.0
    %7873 = vmatpush2.msra.mxu0 0.0
    %7874 = vmatprep.subr.mxu0 0.0
    %7875 = vmatpush2.msra.mxu0 0.0
    %7876 = vmatprep.subr.mxu0 0.0
    %7877 = vmatpush2.msra.mxu0 0.0
    %7878 = vmatprep.subr.mxu0 0.0
    %7879 = vmatpush2.msra.mxu0 0.0
    %7880 = vmatprep.mubr.f32.mxu0 0.0
    %7881 = vmatmul.mubr.f32.gmra.mxu0 %v7793
    %v7882 = vpop.f32.mrf.mxu0
    %v7883 = vadd.f32 0.0, %v7882
    %v7884 = vpop.f32.mrf.mxu0
    %7885 = vmatprep.mubr.f32.mxu0 0.0
    %7886 = vmatmul.mubr.f32.gmra.mxu0 %v7796
    %v7887 = vpop.f32.mrf.mxu0
    %v7888 = vadd.f32 0.0, %v7887
    %v7889 = vpop.f32.mrf.mxu0
    %7890 = vmatprep.mubr.f32.mxu0 0.0
    %7891 = vmatmul.mubr.f32.gmra.mxu0 %v7799
    %v7892 = vpop.f32.mrf.mxu0
    %v7893 = vadd.f32 0.0, %v7892
    %v7894 = vpop.f32.mrf.mxu0
    %7895 = vmatprep.mubr.f32.mxu0 0.0
    %7896 = vmatmul.mubr.f32.gmra.mxu0 %v7802
    %v7897 = vpop.f32.mrf.mxu0
    %v7898 = vadd.f32 0.0, %v7897
    %v7899 = vpop.f32.mrf.mxu0
    %7900 = vmatprep.mubr.f32.mxu0 0.0
    %7901 = vmatmul.mubr.f32.gmra.mxu0 %v7805
    %v7902 = vpop.f32.mrf.mxu0
    %v7903 = vadd.f32 0.0, %v7902
    %v7904 = vpop.f32.mrf.mxu0
    %7905 = vmatprep.mubr.f32.mxu0 0.0
    %7906 = vmatmul.mubr.f32.gmra.mxu0 %v7808
    %v7907 = vpop.f32.mrf.mxu0
    %v7908 = vadd.f32 0.0, %v7907
    %v7909 = vpop.f32.mrf.mxu0
    %7910 = vmatprep.mubr.f32.mxu0 0.0
    %7911 = vmatmul.mubr.f32.gmra.mxu0 %v7811
    %v7912 = vpop.f32.mrf.mxu0
    %v7913 = vadd.f32 0.0, %v7912
    %v7914 = vpop.f32.mrf.mxu0
    %7915 = vmatprep.mubr.f32.mxu0 0.0
    %7916 = vmatmul.mubr.f32.gmra.mxu0 %v7814
    %v7917 = vpop.f32.mrf.mxu0
    %v7918 = vadd.f32 0.0, %v7917
    %v7919 = vpop.f32.mrf.mxu0
    %7920 = vdwg.mxu0
    %v7921 = vld [vmem:[#allocation5 + $0x2] sm:$0x1]
    %v7922 = vld [vmem:[#allocation5 + $0x5] sm:$0x1]
    %v7923 = vlaneseq
    %v7924 = vshrl.u32 %v7923, 7
    %v7925 = vsub.s32 0, %v7924
    %v7926 = vrot.slane %v7921, %v7925
    %v7927 = vmul.f32 %v7883, %v7926
    %v7928 = vmul.f32 %v7888, %v7926
    %v7929 = vmul.f32 %v7893, %v7926
    %v7930 = vmul.f32 %v7898, %v7926
    %v7931 = vmul.f32 %v7903, %v7926
    %v7932 = vmul.f32 %v7908, %v7926
    %v7933 = vmul.f32 %v7913, %v7926
    %v7934 = vmul.f32 %v7918, %v7926
    %v7935 = vlaneseq
    %v7936 = vshrl.u32 %v7935, 7
    %v7937 = vsub.s32 0, %v7936
    %v7938 = vrot.slane %v7922, %v7937
    %v7939 = vadd.f32 %v7927, %v7938
    %v7940 = vadd.f32 %v7928, %v7938
    %v7941 = vadd.f32 %v7929, %v7938
    %v7942 = vadd.f32 %v7930, %v7938
    %v7943 = vadd.f32 %v7931, %v7938
    %v7944 = vadd.f32 %v7932, %v7938
    %v7945 = vadd.f32 %v7933, %v7938
    %v7946 = vadd.f32 %v7934, %v7938
    %v7947 = vmax.f32 %v7939, 0.0
    %v7948 = vmax.f32 %v7940, 0.0
    %v7949 = vmax.f32 %v7941, 0.0
    %v7950 = vmax.f32 %v7942, 0.0
    %v7951 = vmax.f32 %v7943, 0.0
    %v7952 = vmax.f32 %v7944, 0.0
    %v7953 = vmax.f32 %v7945, 0.0
    %v7954 = vmax.f32 %v7946, 0.0
    %v7955 = vld [vmem:[%s5] sm:$0xff]
    %v7956 = vld [vmem:[%s5 + $0x8] sm:$0xff]
    %v7957 = vld [vmem:[%s5 + $0x10] sm:$0xff]
    %v7958 = vld [vmem:[%s5 + $0x18] sm:$0xff]
    %v7959 = vld [vmem:[#allocation5 + $0x6] sm:$0x1]
    %v7960 = vld [vmem:[#allocation5 + $0x7] sm:$0x1]
    %v7961 = vlaneseq
    %v7962 = vshrl.u32 %v7961, 7
    %v7963 = vsub.s32 0, %v7962
    %v7964 = vrot.slane %v7959, %v7963
    %v7966 = vsel %vm579, %v7947, 0
    %v7969 = vsel %vm579, %v7948, 0
    %v7972 = vsel %vm579, %v7949, 0
    %v7975 = vsel %vm579, %v7950, 0
    %v7978 = vsel %vm579, %v7951, 0
    %v7981 = vsel %vm579, %v7952, 0
    %v7984 = vsel %vm579, %v7953, 0
    %v7987 = vsel %vm579, %v7954, 0
    %7989 = vmatprep.subr.mxu0 0.0
    %7990 = vmatpush1.msra.mxu0 0.0
    %7991 = vmatprep.subr.mxu0 0.0
    %7992 = vmatpush1.msra.mxu0 0.0
    %7993 = vmatprep.subr.mxu0 0.0
    %7994 = vmatpush1.msra.mxu0 0.0
    %7995 = vmatprep.subr.mxu0 0.0
    %7996 = vmatpush1.msra.mxu0 0.0
    %7997 = vmatprep.subr.mxu0 0.0
    %7998 = vmatpush1.msra.mxu0 0.0
    %7999 = vmatprep.subr.mxu0 0.0
    %8000 = vmatpush1.msra.mxu0 0.0
    %8001 = vmatprep.subr.mxu0 0.0
    %8002 = vmatpush1.msra.mxu0 0.0
    %8003 = vmatprep.subr.mxu0 0.0
    %8004 = vmatpush1.msra.mxu0 0.0
    %8005 = vmatprep.subr.mxu0 0.0
    %8006 = vmatpush1.msra.mxu0 0.0
    %8007 = vmatprep.subr.mxu0 0.0
    %8008 = vmatpush1.msra.mxu0 0.0
    %8009 = vmatprep.subr.mxu0 0.0
    %8010 = vmatpush1.msra.mxu0 0.0
    %8011 = vmatprep.subr.mxu0 0.0
    %8012 = vmatpush1.msra.mxu0 0.0
    %8013 = vmatprep.subr.mxu0 0.0
    %8014 = vmatpush1.msra.mxu0 %v7958
    %8015 = vmatprep.subr.mxu0 0.0
    %8016 = vmatpush1.msra.mxu0 %v7957
    %8017 = vmatprep.subr.mxu0 0.0
    %8018 = vmatpush1.msra.mxu0 %v7956
    %8019 = vmatprep.subr.mxu0 0.0
    %8020 = vmatpush1.msra.mxu0 %v7955
    %8021 = vmatprep.subr.mxu0 0.0
    %8022 = vmatpush2.msra.mxu0 0.0
    %8023 = vmatprep.subr.mxu0 0.0
    %8024 = vmatpush2.msra.mxu0 0.0
    %8025 = vmatprep.subr.mxu0 0.0
    %8026 = vmatpush2.msra.mxu0 0.0
    %8027 = vmatprep.subr.mxu0 0.0
    %8028 = vmatpush2.msra.mxu0 0.0
    %8029 = vmatprep.subr.mxu0 0.0
    %8030 = vmatpush2.msra.mxu0 0.0
    %8031 = vmatprep.subr.mxu0 0.0
    %8032 = vmatpush2.msra.mxu0 0.0
    %8033 = vmatprep.subr.mxu0 0.0
    %8034 = vmatpush2.msra.mxu0 0.0
    %8035 = vmatprep.subr.mxu0 0.0
    %8036 = vmatpush2.msra.mxu0 0.0
    %8037 = vmatprep.subr.mxu0 0.0
    %8038 = vmatpush2.msra.mxu0 0.0
    %8039 = vmatprep.subr.mxu0 0.0
    %8040 = vmatpush2.msra.mxu0 0.0
    %8041 = vmatprep.subr.mxu0 0.0
    %8042 = vmatpush2.msra.mxu0 0.0
    %8043 = vmatprep.subr.mxu0 0.0
    %8044 = vmatpush2.msra.mxu0 0.0
    %8045 = vmatprep.subr.mxu0 0.0
    %8046 = vmatpush2.msra.mxu0 0.0
    %8047 = vmatprep.subr.mxu0 0.0
    %8048 = vmatpush2.msra.mxu0 0.0
    %8049 = vmatprep.subr.mxu0 0.0
    %8050 = vmatpush2.msra.mxu0 0.0
    %8051 = vmatprep.subr.mxu0 0.0
    %8052 = vmatpush2.msra.mxu0 0.0
    %8053 = vmatprep.mubr.f32.mxu0 0.0
    %8054 = vmatmul.mubr.f32.gmra.mxu0 %v7966
    %v8055 = vpop.f32.mrf.mxu0
    %v8056 = vadd.f32 %v7964, %v8055
    %v8057 = vpop.f32.mrf.mxu0
    %8058 = vmatprep.mubr.f32.mxu0 0.0
    %8059 = vmatmul.mubr.f32.gmra.mxu0 %v7969
    %v8060 = vpop.f32.mrf.mxu0
    %v8061 = vadd.f32 %v7964, %v8060
    %v8062 = vpop.f32.mrf.mxu0
    %8063 = vmatprep.mubr.f32.mxu0 0.0
    %8064 = vmatmul.mubr.f32.gmra.mxu0 %v7972
    %v8065 = vpop.f32.mrf.mxu0
    %v8066 = vadd.f32 %v7964, %v8065
    %v8067 = vpop.f32.mrf.mxu0
    %8068 = vmatprep.mubr.f32.mxu0 0.0
    %8069 = vmatmul.mubr.f32.gmra.mxu0 %v7975
    %v8070 = vpop.f32.mrf.mxu0
    %v8071 = vadd.f32 %v7964, %v8070
    %v8072 = vpop.f32.mrf.mxu0
    %8073 = vmatprep.mubr.f32.mxu0 0.0
    %8074 = vmatmul.mubr.f32.gmra.mxu0 %v7978
    %v8075 = vpop.f32.mrf.mxu0
    %v8076 = vadd.f32 %v7964, %v8075
    %v8077 = vpop.f32.mrf.mxu0
    %8078 = vmatprep.mubr.f32.mxu0 0.0
    %8079 = vmatmul.mubr.f32.gmra.mxu0 %v7981
    %v8080 = vpop.f32.mrf.mxu0
    %v8081 = vadd.f32 %v7964, %v8080
    %v8082 = vpop.f32.mrf.mxu0
    %8083 = vmatprep.mubr.f32.mxu0 0.0
    %8084 = vmatmul.mubr.f32.gmra.mxu0 %v7984
    %v8085 = vpop.f32.mrf.mxu0
    %v8086 = vadd.f32 %v7964, %v8085
    %v8087 = vpop.f32.mrf.mxu0
    %8088 = vmatprep.mubr.f32.mxu0 0.0
    %8089 = vmatmul.mubr.f32.gmra.mxu0 %v7987
    %v8090 = vpop.f32.mrf.mxu0
    %v8091 = vadd.f32 %v7964, %v8090
    %v8092 = vpop.f32.mrf.mxu0
    %8093 = vdwg.mxu0
    %8102 = vrot.lane.b32.xlu0 %v8056, 120
    %v8103 = vpop.permute.xlu0 %8102
    %8104 = vrot.lane.b32.xlu0 %v8061, 120
    %v8105 = vpop.permute.xlu0 %8104
    %8106 = vrot.lane.b32.xlu0 %v8066, 120
    %v8107 = vpop.permute.xlu0 %8106
    %8108 = vrot.lane.b32.xlu0 %v8071, 120
    %v8109 = vpop.permute.xlu0 %8108
    %8110 = vrot.lane.b32.xlu0 %v8076, 120
    %v8111 = vpop.permute.xlu0 %8110
    %8112 = vrot.lane.b32.xlu0 %v8081, 120
    %v8113 = vpop.permute.xlu0 %8112
    %8114 = vrot.lane.b32.xlu0 %v8086, 120
    %v8115 = vpop.permute.xlu0 %8114
    %8116 = vrot.lane.b32.xlu0 %v8091, 120
    %v8117 = vpop.permute.xlu0 %8116
    %8118 = vrot.lane.b32.xlu0 %v8056, 112
    %v8119 = vpop.permute.xlu0 %8118
    %8120 = vrot.lane.b32.xlu0 %v8061, 112
    %v8121 = vpop.permute.xlu0 %8120
    %8122 = vrot.lane.b32.xlu0 %v8066, 112
    %v8123 = vpop.permute.xlu0 %8122
    %8124 = vrot.lane.b32.xlu0 %v8071, 112
    %v8125 = vpop.permute.xlu0 %8124
    %8126 = vrot.lane.b32.xlu0 %v8076, 112
    %v8127 = vpop.permute.xlu0 %8126
    %8128 = vrot.lane.b32.xlu0 %v8081, 112
    %v8129 = vpop.permute.xlu0 %8128
    %8130 = vrot.lane.b32.xlu0 %v8086, 112
    %v8131 = vpop.permute.xlu0 %8130
    %8132 = vrot.lane.b32.xlu0 %v8091, 112
    %v8133 = vpop.permute.xlu0 %8132
    %8134 = vrot.lane.b32.xlu0 %v8056, 104
    %v8135 = vpop.permute.xlu0 %8134
    %8136 = vrot.lane.b32.xlu0 %v8061, 104
    %v8137 = vpop.permute.xlu0 %8136
    %8138 = vrot.lane.b32.xlu0 %v8066, 104
    %v8139 = vpop.permute.xlu0 %8138
    %8140 = vrot.lane.b32.xlu0 %v8071, 104
    %v8141 = vpop.permute.xlu0 %8140
    %8142 = vrot.lane.b32.xlu0 %v8076, 104
    %v8143 = vpop.permute.xlu0 %8142
    %8144 = vrot.lane.b32.xlu0 %v8081, 104
    %v8145 = vpop.permute.xlu0 %8144
    %8146 = vrot.lane.b32.xlu0 %v8086, 104
    %v8147 = vpop.permute.xlu0 %8146
    %8148 = vrot.lane.b32.xlu0 %v8091, 104
    %v8149 = vpop.permute.xlu0 %8148
    %8150 = vrot.lane.b32.xlu0 %v8056, 96
    %v8151 = vpop.permute.xlu0 %8150
    %8152 = vrot.lane.b32.xlu0 %v8061, 96
    %v8153 = vpop.permute.xlu0 %8152
    %8154 = vrot.lane.b32.xlu0 %v8066, 96
    %v8155 = vpop.permute.xlu0 %8154
    %8156 = vrot.lane.b32.xlu0 %v8071, 96
    %v8157 = vpop.permute.xlu0 %8156
    %8158 = vrot.lane.b32.xlu0 %v8076, 96
    %v8159 = vpop.permute.xlu0 %8158
    %8160 = vrot.lane.b32.xlu0 %v8081, 96
    %v8161 = vpop.permute.xlu0 %8160
    %8162 = vrot.lane.b32.xlu0 %v8086, 96
    %v8163 = vpop.permute.xlu0 %8162
    %8164 = vrot.lane.b32.xlu0 %v8091, 96
    %v8165 = vpop.permute.xlu0 %8164
    %vm8166 = vcmask 64512
    %v8167 = vsel %vm8166, %v8056, 0
    %v8169 = vsel %vm8166, %v8061, 0
    %v8171 = vsel %vm8166, %v8066, 0
    %v8173 = vsel %vm8166, %v8071, 0
    %v8175 = vsel %vm8166, %v8076, 0
    %v8177 = vsel %vm8166, %v8081, 0
    %v8179 = vsel %vm8166, %v8086, 0
    %v8181 = vsel %vm8166, %v8091, 0
    %v8183 = vsel %vm8166, %v8151, 0
    %v8185 = vsel %vm8166, %v8153, 0
    %v8187 = vsel %vm8166, %v8155, 0
    %v8189 = vsel %vm8166, %v8157, 0
    %v8191 = vsel %vm8166, %v8159, 0
    %v8193 = vsel %vm8166, %v8161, 0
    %v8195 = vsel %vm8166, %v8163, 0
    %v8197 = vsel %vm8166, %v8165, 0
    %8199 = vmatprep.subr.mxu0 0.0
    %8200 = vmatpush1.xpose.msra.mxu0 0.0
    %8201 = vmatprep.subr.mxu0 0.0
    %8202 = vmatpush1.xpose.msra.mxu0 0.0
    %8203 = vmatprep.subr.mxu0 0.0
    %8204 = vmatpush1.xpose.msra.mxu0 0.0
    %8205 = vmatprep.subr.mxu0 0.0
    %8206 = vmatpush1.xpose.msra.mxu0 0.0
    %8207 = vmatprep.subr.mxu0 0.0
    %8208 = vmatpush1.xpose.msra.mxu0 0.0
    %8209 = vmatprep.subr.mxu0 0.0
    %8210 = vmatpush1.xpose.msra.mxu0 0.0
    %8211 = vmatprep.subr.mxu0 0.0
    %8212 = vmatpush1.xpose.msra.mxu0 0.0
    %8213 = vmatprep.subr.mxu0 0.0
    %8214 = vmatpush1.xpose.msra.mxu0 0.0
    %8215 = vmatprep.subr.mxu0 0.0
    %8216 = vmatpush1.xpose.msra.mxu0 %v8197
    %8217 = vmatprep.subr.mxu0 0.0
    %8218 = vmatpush1.xpose.msra.mxu0 %v8195
    %8219 = vmatprep.subr.mxu0 0.0
    %8220 = vmatpush1.xpose.msra.mxu0 %v8193
    %8221 = vmatprep.subr.mxu0 0.0
    %8222 = vmatpush1.xpose.msra.mxu0 %v8191
    %8223 = vmatprep.subr.mxu0 0.0
    %8224 = vmatpush1.xpose.msra.mxu0 %v8189
    %8225 = vmatprep.subr.mxu0 0.0
    %8226 = vmatpush1.xpose.msra.mxu0 %v8187
    %8227 = vmatprep.subr.mxu0 0.0
    %8228 = vmatpush1.xpose.msra.mxu0 %v8185
    %8229 = vmatprep.subr.mxu0 0.0
    %8230 = vmatpush1.xpose.msra.mxu0 %v8183
    %8231 = vmatprep.subr.mxu0 0.0
    %8232 = vmatpush2.xpose.msra.mxu0 0.0
    %8233 = vmatprep.subr.mxu0 0.0
    %8234 = vmatpush2.xpose.msra.mxu0 0.0
    %8235 = vmatprep.subr.mxu0 0.0
    %8236 = vmatpush2.xpose.msra.mxu0 0.0
    %8237 = vmatprep.subr.mxu0 0.0
    %8238 = vmatpush2.xpose.msra.mxu0 0.0
    %8239 = vmatprep.subr.mxu0 0.0
    %8240 = vmatpush2.xpose.msra.mxu0 0.0
    %8241 = vmatprep.subr.mxu0 0.0
    %8242 = vmatpush2.xpose.msra.mxu0 0.0
    %8243 = vmatprep.subr.mxu0 0.0
    %8244 = vmatpush2.xpose.msra.mxu0 0.0
    %8245 = vmatprep.subr.mxu0 0.0
    %8246 = vmatpush2.xpose.msra.mxu0 0.0
    %8247 = vmatprep.subr.mxu0 0.0
    %8248 = vmatpush2.xpose.msra.mxu0 0.0
    %8249 = vmatprep.subr.mxu0 0.0
    %8250 = vmatpush2.xpose.msra.mxu0 0.0
    %8251 = vmatprep.subr.mxu0 0.0
    %8252 = vmatpush2.xpose.msra.mxu0 0.0
    %8253 = vmatprep.subr.mxu0 0.0
    %8254 = vmatpush2.xpose.msra.mxu0 0.0
    %8255 = vmatprep.subr.mxu0 0.0
    %8256 = vmatpush2.xpose.msra.mxu0 0.0
    %8257 = vmatprep.subr.mxu0 0.0
    %8258 = vmatpush2.xpose.msra.mxu0 0.0
    %8259 = vmatprep.subr.mxu0 0.0
    %8260 = vmatpush2.xpose.msra.mxu0 0.0
    %8261 = vmatprep.subr.mxu0 0.0
    %8262 = vmatpush2.xpose.msra.mxu0 0.0
    %8263 = vmatprep.mubr.f32.mxu0 0.0
    %8264 = vmatmul.mubr.f32.gmra.mxu0 %v8167
    %v8265 = vpop.f32.mrf.mxu0
    %v8266 = vadd.f32 0.0, %v8265
    %v8267 = vpop.f32.mrf.mxu0
    %8268 = vmatprep.mubr.f32.mxu0 0.0
    %8269 = vmatmul.mubr.f32.gmra.mxu0 %v8169
    %v8270 = vpop.f32.mrf.mxu0
    %v8271 = vadd.f32 0.0, %v8270
    %v8272 = vpop.f32.mrf.mxu0
    %8273 = vmatprep.mubr.f32.mxu0 0.0
    %8274 = vmatmul.mubr.f32.gmra.mxu0 %v8171
    %v8275 = vpop.f32.mrf.mxu0
    %v8276 = vadd.f32 0.0, %v8275
    %v8277 = vpop.f32.mrf.mxu0
    %8278 = vmatprep.mubr.f32.mxu0 0.0
    %8279 = vmatmul.mubr.f32.gmra.mxu0 %v8173
    %v8280 = vpop.f32.mrf.mxu0
    %v8281 = vadd.f32 0.0, %v8280
    %v8282 = vpop.f32.mrf.mxu0
    %8283 = vmatprep.mubr.f32.mxu0 0.0
    %8284 = vmatmul.mubr.f32.gmra.mxu0 %v8175
    %v8285 = vpop.f32.mrf.mxu0
    %v8286 = vadd.f32 0.0, %v8285
    %v8287 = vpop.f32.mrf.mxu0
    %8288 = vmatprep.mubr.f32.mxu0 0.0
    %8289 = vmatmul.mubr.f32.gmra.mxu0 %v8177
    %v8290 = vpop.f32.mrf.mxu0
    %v8291 = vadd.f32 0.0, %v8290
    %v8292 = vpop.f32.mrf.mxu0
    %8293 = vmatprep.mubr.f32.mxu0 0.0
    %8294 = vmatmul.mubr.f32.gmra.mxu0 %v8179
    %v8295 = vpop.f32.mrf.mxu0
    %v8296 = vadd.f32 0.0, %v8295
    %v8297 = vpop.f32.mrf.mxu0
    %8298 = vmatprep.mubr.f32.mxu0 0.0
    %8299 = vmatmul.mubr.f32.gmra.mxu0 %v8181
    %v8300 = vpop.f32.mrf.mxu0
    %v8301 = vadd.f32 0.0, %v8300
    %v8302 = vpop.f32.mrf.mxu0
    %8303 = vdwg.mxu0
    %8304 = vrot.lane.b32.xlu0 %v8103, 96
    %v8305 = vpop.permute.xlu0 %8304
    %8306 = vrot.lane.b32.xlu0 %v8105, 96
    %v8307 = vpop.permute.xlu0 %8306
    %8308 = vrot.lane.b32.xlu0 %v8107, 96
    %v8309 = vpop.permute.xlu0 %8308
    %8310 = vrot.lane.b32.xlu0 %v8109, 96
    %v8311 = vpop.permute.xlu0 %8310
    %8312 = vrot.lane.b32.xlu0 %v8111, 96
    %v8313 = vpop.permute.xlu0 %8312
    %8314 = vrot.lane.b32.xlu0 %v8113, 96
    %v8315 = vpop.permute.xlu0 %8314
    %8316 = vrot.lane.b32.xlu0 %v8115, 96
    %v8317 = vpop.permute.xlu0 %8316
    %8318 = vrot.lane.b32.xlu0 %v8117, 96
    %v8319 = vpop.permute.xlu0 %8318
    %v8320 = vsel %vm8166, %v8103, 0
    %v8322 = vsel %vm8166, %v8105, 0
    %v8324 = vsel %vm8166, %v8107, 0
    %v8326 = vsel %vm8166, %v8109, 0
    %v8328 = vsel %vm8166, %v8111, 0
    %v8330 = vsel %vm8166, %v8113, 0
    %v8332 = vsel %vm8166, %v8115, 0
    %v8334 = vsel %vm8166, %v8117, 0
    %v8336 = vsel %vm8166, %v8305, 0
    %v8338 = vsel %vm8166, %v8307, 0
    %v8340 = vsel %vm8166, %v8309, 0
    %v8342 = vsel %vm8166, %v8311, 0
    %v8344 = vsel %vm8166, %v8313, 0
    %v8346 = vsel %vm8166, %v8315, 0
    %v8348 = vsel %vm8166, %v8317, 0
    %v8350 = vsel %vm8166, %v8319, 0
    %8352 = vmatprep.subr.mxu0 0.0
    %8353 = vmatpush1.xpose.msra.mxu0 0.0
    %8354 = vmatprep.subr.mxu0 0.0
    %8355 = vmatpush1.xpose.msra.mxu0 0.0
    %8356 = vmatprep.subr.mxu0 0.0
    %8357 = vmatpush1.xpose.msra.mxu0 0.0
    %8358 = vmatprep.subr.mxu0 0.0
    %8359 = vmatpush1.xpose.msra.mxu0 0.0
    %8360 = vmatprep.subr.mxu0 0.0
    %8361 = vmatpush1.xpose.msra.mxu0 0.0
    %8362 = vmatprep.subr.mxu0 0.0
    %8363 = vmatpush1.xpose.msra.mxu0 0.0
    %8364 = vmatprep.subr.mxu0 0.0
    %8365 = vmatpush1.xpose.msra.mxu0 0.0
    %8366 = vmatprep.subr.mxu0 0.0
    %8367 = vmatpush1.xpose.msra.mxu0 0.0
    %8368 = vmatprep.subr.mxu0 0.0
    %8369 = vmatpush1.xpose.msra.mxu0 %v8350
    %8370 = vmatprep.subr.mxu0 0.0
    %8371 = vmatpush1.xpose.msra.mxu0 %v8348
    %8372 = vmatprep.subr.mxu0 0.0
    %8373 = vmatpush1.xpose.msra.mxu0 %v8346
    %8374 = vmatprep.subr.mxu0 0.0
    %8375 = vmatpush1.xpose.msra.mxu0 %v8344
    %8376 = vmatprep.subr.mxu0 0.0
    %8377 = vmatpush1.xpose.msra.mxu0 %v8342
    %8378 = vmatprep.subr.mxu0 0.0
    %8379 = vmatpush1.xpose.msra.mxu0 %v8340
    %8380 = vmatprep.subr.mxu0 0.0
    %8381 = vmatpush1.xpose.msra.mxu0 %v8338
    %8382 = vmatprep.subr.mxu0 0.0
    %8383 = vmatpush1.xpose.msra.mxu0 %v8336
    %8384 = vmatprep.subr.mxu0 0.0
    %8385 = vmatpush2.xpose.msra.mxu0 0.0
    %8386 = vmatprep.subr.mxu0 0.0
    %8387 = vmatpush2.xpose.msra.mxu0 0.0
    %8388 = vmatprep.subr.mxu0 0.0
    %8389 = vmatpush2.xpose.msra.mxu0 0.0
    %8390 = vmatprep.subr.mxu0 0.0
    %8391 = vmatpush2.xpose.msra.mxu0 0.0
    %8392 = vmatprep.subr.mxu0 0.0
    %8393 = vmatpush2.xpose.msra.mxu0 0.0
    %8394 = vmatprep.subr.mxu0 0.0
    %8395 = vmatpush2.xpose.msra.mxu0 0.0
    %8396 = vmatprep.subr.mxu0 0.0
    %8397 = vmatpush2.xpose.msra.mxu0 0.0
    %8398 = vmatprep.subr.mxu0 0.0
    %8399 = vmatpush2.xpose.msra.mxu0 0.0
    %8400 = vmatprep.subr.mxu0 0.0
    %8401 = vmatpush2.xpose.msra.mxu0 0.0
    %8402 = vmatprep.subr.mxu0 0.0
    %8403 = vmatpush2.xpose.msra.mxu0 0.0
    %8404 = vmatprep.subr.mxu0 0.0
    %8405 = vmatpush2.xpose.msra.mxu0 0.0
    %8406 = vmatprep.subr.mxu0 0.0
    %8407 = vmatpush2.xpose.msra.mxu0 0.0
    %8408 = vmatprep.subr.mxu0 0.0
    %8409 = vmatpush2.xpose.msra.mxu0 0.0
    %8410 = vmatprep.subr.mxu0 0.0
    %8411 = vmatpush2.xpose.msra.mxu0 0.0
    %8412 = vmatprep.subr.mxu0 0.0
    %8413 = vmatpush2.xpose.msra.mxu0 0.0
    %8414 = vmatprep.subr.mxu0 0.0
    %8415 = vmatpush2.xpose.msra.mxu0 0.0
    %8416 = vmatprep.mubr.f32.mxu0 0.0
    %8417 = vmatmul.mubr.f32.gmra.mxu0 %v8320
    %v8418 = vpop.f32.mrf.mxu0
    %v8419 = vadd.f32 0.0, %v8418
    %v8420 = vpop.f32.mrf.mxu0
    %8421 = vmatprep.mubr.f32.mxu0 0.0
    %8422 = vmatmul.mubr.f32.gmra.mxu0 %v8322
    %v8423 = vpop.f32.mrf.mxu0
    %v8424 = vadd.f32 0.0, %v8423
    %v8425 = vpop.f32.mrf.mxu0
    %8426 = vmatprep.mubr.f32.mxu0 0.0
    %8427 = vmatmul.mubr.f32.gmra.mxu0 %v8324
    %v8428 = vpop.f32.mrf.mxu0
    %v8429 = vadd.f32 0.0, %v8428
    %v8430 = vpop.f32.mrf.mxu0
    %8431 = vmatprep.mubr.f32.mxu0 0.0
    %8432 = vmatmul.mubr.f32.gmra.mxu0 %v8326
    %v8433 = vpop.f32.mrf.mxu0
    %v8434 = vadd.f32 0.0, %v8433
    %v8435 = vpop.f32.mrf.mxu0
    %8436 = vmatprep.mubr.f32.mxu0 0.0
    %8437 = vmatmul.mubr.f32.gmra.mxu0 %v8328
    %v8438 = vpop.f32.mrf.mxu0
    %v8439 = vadd.f32 0.0, %v8438
    %v8440 = vpop.f32.mrf.mxu0
    %8441 = vmatprep.mubr.f32.mxu0 0.0
    %8442 = vmatmul.mubr.f32.gmra.mxu0 %v8330
    %v8443 = vpop.f32.mrf.mxu0
    %v8444 = vadd.f32 0.0, %v8443
    %v8445 = vpop.f32.mrf.mxu0
    %8446 = vmatprep.mubr.f32.mxu0 0.0
    %8447 = vmatmul.mubr.f32.gmra.mxu0 %v8332
    %v8448 = vpop.f32.mrf.mxu0
    %v8449 = vadd.f32 0.0, %v8448
    %v8450 = vpop.f32.mrf.mxu0
    %8451 = vmatprep.mubr.f32.mxu0 0.0
    %8452 = vmatmul.mubr.f32.gmra.mxu0 %v8334
    %v8453 = vpop.f32.mrf.mxu0
    %v8454 = vadd.f32 0.0, %v8453
    %v8455 = vpop.f32.mrf.mxu0
    %8456 = vdwg.mxu0
    %8457 = vrot.lane.b32.xlu0 %v8119, 96
    %v8458 = vpop.permute.xlu0 %8457
    %8459 = vrot.lane.b32.xlu0 %v8121, 96
    %v8460 = vpop.permute.xlu0 %8459
    %8461 = vrot.lane.b32.xlu0 %v8123, 96
    %v8462 = vpop.permute.xlu0 %8461
    %8463 = vrot.lane.b32.xlu0 %v8125, 96
    %v8464 = vpop.permute.xlu0 %8463
    %8465 = vrot.lane.b32.xlu0 %v8127, 96
    %v8466 = vpop.permute.xlu0 %8465
    %8467 = vrot.lane.b32.xlu0 %v8129, 96
    %v8468 = vpop.permute.xlu0 %8467
    %8469 = vrot.lane.b32.xlu0 %v8131, 96
    %v8470 = vpop.permute.xlu0 %8469
    %8471 = vrot.lane.b32.xlu0 %v8133, 96
    %v8472 = vpop.permute.xlu0 %8471
    %v8473 = vsel %vm8166, %v8119, 0
    %v8475 = vsel %vm8166, %v8121, 0
    %v8477 = vsel %vm8166, %v8123, 0
    %v8479 = vsel %vm8166, %v8125, 0
    %v8481 = vsel %vm8166, %v8127, 0
    %v8483 = vsel %vm8166, %v8129, 0
    %v8485 = vsel %vm8166, %v8131, 0
    %v8487 = vsel %vm8166, %v8133, 0
    %v8489 = vsel %vm8166, %v8458, 0
    %v8491 = vsel %vm8166, %v8460, 0
    %v8493 = vsel %vm8166, %v8462, 0
    %v8495 = vsel %vm8166, %v8464, 0
    %v8497 = vsel %vm8166, %v8466, 0
    %v8499 = vsel %vm8166, %v8468, 0
    %v8501 = vsel %vm8166, %v8470, 0
    %v8503 = vsel %vm8166, %v8472, 0
    %8505 = vmatprep.subr.mxu0 0.0
    %8506 = vmatpush1.xpose.msra.mxu0 0.0
    %8507 = vmatprep.subr.mxu0 0.0
    %8508 = vmatpush1.xpose.msra.mxu0 0.0
    %8509 = vmatprep.subr.mxu0 0.0
    %8510 = vmatpush1.xpose.msra.mxu0 0.0
    %8511 = vmatprep.subr.mxu0 0.0
    %8512 = vmatpush1.xpose.msra.mxu0 0.0
    %8513 = vmatprep.subr.mxu0 0.0
    %8514 = vmatpush1.xpose.msra.mxu0 0.0
    %8515 = vmatprep.subr.mxu0 0.0
    %8516 = vmatpush1.xpose.msra.mxu0 0.0
    %8517 = vmatprep.subr.mxu0 0.0
    %8518 = vmatpush1.xpose.msra.mxu0 0.0
    %8519 = vmatprep.subr.mxu0 0.0
    %8520 = vmatpush1.xpose.msra.mxu0 0.0
    %8521 = vmatprep.subr.mxu0 0.0
    %8522 = vmatpush1.xpose.msra.mxu0 %v8503
    %8523 = vmatprep.subr.mxu0 0.0
    %8524 = vmatpush1.xpose.msra.mxu0 %v8501
    %8525 = vmatprep.subr.mxu0 0.0
    %8526 = vmatpush1.xpose.msra.mxu0 %v8499
    %8527 = vmatprep.subr.mxu0 0.0
    %8528 = vmatpush1.xpose.msra.mxu0 %v8497
    %8529 = vmatprep.subr.mxu0 0.0
    %8530 = vmatpush1.xpose.msra.mxu0 %v8495
    %8531 = vmatprep.subr.mxu0 0.0
    %8532 = vmatpush1.xpose.msra.mxu0 %v8493
    %8533 = vmatprep.subr.mxu0 0.0
    %8534 = vmatpush1.xpose.msra.mxu0 %v8491
    %8535 = vmatprep.subr.mxu0 0.0
    %8536 = vmatpush1.xpose.msra.mxu0 %v8489
    %8537 = vmatprep.subr.mxu0 0.0
    %8538 = vmatpush2.xpose.msra.mxu0 0.0
    %8539 = vmatprep.subr.mxu0 0.0
    %8540 = vmatpush2.xpose.msra.mxu0 0.0
    %8541 = vmatprep.subr.mxu0 0.0
    %8542 = vmatpush2.xpose.msra.mxu0 0.0
    %8543 = vmatprep.subr.mxu0 0.0
    %8544 = vmatpush2.xpose.msra.mxu0 0.0
    %8545 = vmatprep.subr.mxu0 0.0
    %8546 = vmatpush2.xpose.msra.mxu0 0.0
    %8547 = vmatprep.subr.mxu0 0.0
    %8548 = vmatpush2.xpose.msra.mxu0 0.0
    %8549 = vmatprep.subr.mxu0 0.0
    %8550 = vmatpush2.xpose.msra.mxu0 0.0
    %8551 = vmatprep.subr.mxu0 0.0
    %8552 = vmatpush2.xpose.msra.mxu0 0.0
    %8553 = vmatprep.subr.mxu0 0.0
    %8554 = vmatpush2.xpose.msra.mxu0 0.0
    %8555 = vmatprep.subr.mxu0 0.0
    %8556 = vmatpush2.xpose.msra.mxu0 0.0
    %8557 = vmatprep.subr.mxu0 0.0
    %8558 = vmatpush2.xpose.msra.mxu0 0.0
    %8559 = vmatprep.subr.mxu0 0.0
    %8560 = vmatpush2.xpose.msra.mxu0 0.0
    %8561 = vmatprep.subr.mxu0 0.0
    %8562 = vmatpush2.xpose.msra.mxu0 0.0
    %8563 = vmatprep.subr.mxu0 0.0
    %8564 = vmatpush2.xpose.msra.mxu0 0.0
    %8565 = vmatprep.subr.mxu0 0.0
    %8566 = vmatpush2.xpose.msra.mxu0 0.0
    %8567 = vmatprep.subr.mxu0 0.0
    %8568 = vmatpush2.xpose.msra.mxu0 0.0
    %8569 = vmatprep.mubr.f32.mxu0 0.0
    %8570 = vmatmul.mubr.f32.gmra.mxu0 %v8473
    %v8571 = vpop.f32.mrf.mxu0
    %v8572 = vadd.f32 0.0, %v8571
    %v8573 = vpop.f32.mrf.mxu0
    %8574 = vmatprep.mubr.f32.mxu0 0.0
    %8575 = vmatmul.mubr.f32.gmra.mxu0 %v8475
    %v8576 = vpop.f32.mrf.mxu0
    %v8577 = vadd.f32 0.0, %v8576
    %v8578 = vpop.f32.mrf.mxu0
    %8579 = vmatprep.mubr.f32.mxu0 0.0
    %8580 = vmatmul.mubr.f32.gmra.mxu0 %v8477
    %v8581 = vpop.f32.mrf.mxu0
    %v8582 = vadd.f32 0.0, %v8581
    %v8583 = vpop.f32.mrf.mxu0
    %8584 = vmatprep.mubr.f32.mxu0 0.0
    %8585 = vmatmul.mubr.f32.gmra.mxu0 %v8479
    %v8586 = vpop.f32.mrf.mxu0
    %v8587 = vadd.f32 0.0, %v8586
    %v8588 = vpop.f32.mrf.mxu0
    %8589 = vmatprep.mubr.f32.mxu0 0.0
    %8590 = vmatmul.mubr.f32.gmra.mxu0 %v8481
    %v8591 = vpop.f32.mrf.mxu0
    %v8592 = vadd.f32 0.0, %v8591
    %v8593 = vpop.f32.mrf.mxu0
    %8594 = vmatprep.mubr.f32.mxu0 0.0
    %8595 = vmatmul.mubr.f32.gmra.mxu0 %v8483
    %v8596 = vpop.f32.mrf.mxu0
    %v8597 = vadd.f32 0.0, %v8596
    %v8598 = vpop.f32.mrf.mxu0
    %8599 = vmatprep.mubr.f32.mxu0 0.0
    %8600 = vmatmul.mubr.f32.gmra.mxu0 %v8485
    %v8601 = vpop.f32.mrf.mxu0
    %v8602 = vadd.f32 0.0, %v8601
    %v8603 = vpop.f32.mrf.mxu0
    %8604 = vmatprep.mubr.f32.mxu0 0.0
    %8605 = vmatmul.mubr.f32.gmra.mxu0 %v8487
    %v8606 = vpop.f32.mrf.mxu0
    %v8607 = vadd.f32 0.0, %v8606
    %v8608 = vpop.f32.mrf.mxu0
    %8609 = vdwg.mxu0
    %8610 = vrot.lane.b32.xlu0 %v8135, 96
    %v8611 = vpop.permute.xlu0 %8610
    %8612 = vrot.lane.b32.xlu0 %v8137, 96
    %v8613 = vpop.permute.xlu0 %8612
    %8614 = vrot.lane.b32.xlu0 %v8139, 96
    %v8615 = vpop.permute.xlu0 %8614
    %8616 = vrot.lane.b32.xlu0 %v8141, 96
    %v8617 = vpop.permute.xlu0 %8616
    %8618 = vrot.lane.b32.xlu0 %v8143, 96
    %v8619 = vpop.permute.xlu0 %8618
    %8620 = vrot.lane.b32.xlu0 %v8145, 96
    %v8621 = vpop.permute.xlu0 %8620
    %8622 = vrot.lane.b32.xlu0 %v8147, 96
    %v8623 = vpop.permute.xlu0 %8622
    %8624 = vrot.lane.b32.xlu0 %v8149, 96
    %v8625 = vpop.permute.xlu0 %8624
    %v8626 = vsel %vm8166, %v8135, 0
    %v8628 = vsel %vm8166, %v8137, 0
    %v8630 = vsel %vm8166, %v8139, 0
    %v8632 = vsel %vm8166, %v8141, 0
    %v8634 = vsel %vm8166, %v8143, 0
    %v8636 = vsel %vm8166, %v8145, 0
    %v8638 = vsel %vm8166, %v8147, 0
    %v8640 = vsel %vm8166, %v8149, 0
    %v8642 = vsel %vm8166, %v8611, 0
    %v8644 = vsel %vm8166, %v8613, 0
    %v8646 = vsel %vm8166, %v8615, 0
    %v8648 = vsel %vm8166, %v8617, 0
    %v8650 = vsel %vm8166, %v8619, 0
    %v8652 = vsel %vm8166, %v8621, 0
    %v8654 = vsel %vm8166, %v8623, 0
    %v8656 = vsel %vm8166, %v8625, 0
    %8658 = vmatprep.subr.mxu0 0.0
    %8659 = vmatpush1.xpose.msra.mxu0 0.0
    %8660 = vmatprep.subr.mxu0 0.0
    %8661 = vmatpush1.xpose.msra.mxu0 0.0
    %8662 = vmatprep.subr.mxu0 0.0
    %8663 = vmatpush1.xpose.msra.mxu0 0.0
    %8664 = vmatprep.subr.mxu0 0.0
    %8665 = vmatpush1.xpose.msra.mxu0 0.0
    %8666 = vmatprep.subr.mxu0 0.0
    %8667 = vmatpush1.xpose.msra.mxu0 0.0
    %8668 = vmatprep.subr.mxu0 0.0
    %8669 = vmatpush1.xpose.msra.mxu0 0.0
    %8670 = vmatprep.subr.mxu0 0.0
    %8671 = vmatpush1.xpose.msra.mxu0 0.0
    %8672 = vmatprep.subr.mxu0 0.0
    %8673 = vmatpush1.xpose.msra.mxu0 0.0
    %8674 = vmatprep.subr.mxu0 0.0
    %8675 = vmatpush1.xpose.msra.mxu0 %v8656
    %8676 = vmatprep.subr.mxu0 0.0
    %8677 = vmatpush1.xpose.msra.mxu0 %v8654
    %8678 = vmatprep.subr.mxu0 0.0
    %8679 = vmatpush1.xpose.msra.mxu0 %v8652
    %8680 = vmatprep.subr.mxu0 0.0
    %8681 = vmatpush1.xpose.msra.mxu0 %v8650
    %8682 = vmatprep.subr.mxu0 0.0
    %8683 = vmatpush1.xpose.msra.mxu0 %v8648
    %8684 = vmatprep.subr.mxu0 0.0
    %8685 = vmatpush1.xpose.msra.mxu0 %v8646
    %8686 = vmatprep.subr.mxu0 0.0
    %8687 = vmatpush1.xpose.msra.mxu0 %v8644
    %8688 = vmatprep.subr.mxu0 0.0
    %8689 = vmatpush1.xpose.msra.mxu0 %v8642
    %8690 = vmatprep.subr.mxu0 0.0
    %8691 = vmatpush2.xpose.msra.mxu0 0.0
    %8692 = vmatprep.subr.mxu0 0.0
    %8693 = vmatpush2.xpose.msra.mxu0 0.0
    %8694 = vmatprep.subr.mxu0 0.0
    %8695 = vmatpush2.xpose.msra.mxu0 0.0
    %8696 = vmatprep.subr.mxu0 0.0
    %8697 = vmatpush2.xpose.msra.mxu0 0.0
    %8698 = vmatprep.subr.mxu0 0.0
    %8699 = vmatpush2.xpose.msra.mxu0 0.0
    %8700 = vmatprep.subr.mxu0 0.0
    %8701 = vmatpush2.xpose.msra.mxu0 0.0
    %8702 = vmatprep.subr.mxu0 0.0
    %8703 = vmatpush2.xpose.msra.mxu0 0.0
    %8704 = vmatprep.subr.mxu0 0.0
    %8705 = vmatpush2.xpose.msra.mxu0 0.0
    %8706 = vmatprep.subr.mxu0 0.0
    %8707 = vmatpush2.xpose.msra.mxu0 0.0
    %8708 = vmatprep.subr.mxu0 0.0
    %8709 = vmatpush2.xpose.msra.mxu0 0.0
    %8710 = vmatprep.subr.mxu0 0.0
    %8711 = vmatpush2.xpose.msra.mxu0 0.0
    %8712 = vmatprep.subr.mxu0 0.0
    %8713 = vmatpush2.xpose.msra.mxu0 0.0
    %8714 = vmatprep.subr.mxu0 0.0
    %8715 = vmatpush2.xpose.msra.mxu0 0.0
    %8716 = vmatprep.subr.mxu0 0.0
    %8717 = vmatpush2.xpose.msra.mxu0 0.0
    %8718 = vmatprep.subr.mxu0 0.0
    %8719 = vmatpush2.xpose.msra.mxu0 0.0
    %8720 = vmatprep.subr.mxu0 0.0
    %8721 = vmatpush2.xpose.msra.mxu0 0.0
    %8722 = vmatprep.mubr.f32.mxu0 0.0
    %8723 = vmatmul.mubr.f32.gmra.mxu0 %v8626
    %v8724 = vpop.f32.mrf.mxu0
    %v8725 = vadd.f32 0.0, %v8724
    %v8726 = vpop.f32.mrf.mxu0
    %8727 = vmatprep.mubr.f32.mxu0 0.0
    %8728 = vmatmul.mubr.f32.gmra.mxu0 %v8628
    %v8729 = vpop.f32.mrf.mxu0
    %v8730 = vadd.f32 0.0, %v8729
    %v8731 = vpop.f32.mrf.mxu0
    %8732 = vmatprep.mubr.f32.mxu0 0.0
    %8733 = vmatmul.mubr.f32.gmra.mxu0 %v8630
    %v8734 = vpop.f32.mrf.mxu0
    %v8735 = vadd.f32 0.0, %v8734
    %v8736 = vpop.f32.mrf.mxu0
    %8737 = vmatprep.mubr.f32.mxu0 0.0
    %8738 = vmatmul.mubr.f32.gmra.mxu0 %v8632
    %v8739 = vpop.f32.mrf.mxu0
    %v8740 = vadd.f32 0.0, %v8739
    %v8741 = vpop.f32.mrf.mxu0
    %8742 = vmatprep.mubr.f32.mxu0 0.0
    %8743 = vmatmul.mubr.f32.gmra.mxu0 %v8634
    %v8744 = vpop.f32.mrf.mxu0
    %v8745 = vadd.f32 0.0, %v8744
    %v8746 = vpop.f32.mrf.mxu0
    %8747 = vmatprep.mubr.f32.mxu0 0.0
    %8748 = vmatmul.mubr.f32.gmra.mxu0 %v8636
    %v8749 = vpop.f32.mrf.mxu0
    %v8750 = vadd.f32 0.0, %v8749
    %v8751 = vpop.f32.mrf.mxu0
    %8752 = vmatprep.mubr.f32.mxu0 0.0
    %8753 = vmatmul.mubr.f32.gmra.mxu0 %v8638
    %v8754 = vpop.f32.mrf.mxu0
    %v8755 = vadd.f32 0.0, %v8754
    %v8756 = vpop.f32.mrf.mxu0
    %8757 = vmatprep.mubr.f32.mxu0 0.0
    %8758 = vmatmul.mubr.f32.gmra.mxu0 %v8640
    %v8759 = vpop.f32.mrf.mxu0
    %v8760 = vadd.f32 0.0, %v8759
    %v8761 = vpop.f32.mrf.mxu0
    %8762 = vdwg.mxu0
    %v8763 = vmul.f32 %v8266, 0.35355338
    %v8764 = vmul.f32 %v8271, 0.35355338
    %v8765 = vmul.f32 %v8276, 0.35355338
    %v8766 = vmul.f32 %v8281, 0.35355338
    %v8767 = vmul.f32 %v8286, 0.35355338
    %v8768 = vmul.f32 %v8291, 0.35355338
    %v8769 = vmul.f32 %v8296, 0.35355338
    %v8770 = vmul.f32 %v8301, 0.35355338
    %v8771 = vmul.f32 %v8419, 0.35355338
    %v8772 = vmul.f32 %v8424, 0.35355338
    %v8773 = vmul.f32 %v8429, 0.35355338
    %v8774 = vmul.f32 %v8434, 0.35355338
    %v8775 = vmul.f32 %v8439, 0.35355338
    %v8776 = vmul.f32 %v8444, 0.35355338
    %v8777 = vmul.f32 %v8449, 0.35355338
    %v8778 = vmul.f32 %v8454, 0.35355338
    %v8779 = vmul.f32 %v8572, 0.35355338
    %v8780 = vmul.f32 %v8577, 0.35355338
    %v8781 = vmul.f32 %v8582, 0.35355338
    %v8782 = vmul.f32 %v8587, 0.35355338
    %v8783 = vmul.f32 %v8592, 0.35355338
    %v8784 = vmul.f32 %v8597, 0.35355338
    %v8785 = vmul.f32 %v8602, 0.35355338
    %v8786 = vmul.f32 %v8607, 0.35355338
    %v8787 = vmul.f32 %v8725, 0.35355338
    %v8788 = vmul.f32 %v8730, 0.35355338
    %v8789 = vmul.f32 %v8735, 0.35355338
    %v8790 = vmul.f32 %v8740, 0.35355338
    %v8791 = vmul.f32 %v8745, 0.35355338
    %v8792 = vmul.f32 %v8750, 0.35355338
    %v8793 = vmul.f32 %v8755, 0.35355338
    %v8794 = vmul.f32 %v8760, 0.35355338
    %v8795 = vsel %vm1852, %v8763, -inf
    %8796 = vmax.xlane.f32.xlu0 %v8795
    %v8797 = vpop.xlane.xlu0 %8796
    %v8798 = vsel %vm1852, %v8764, -inf
    %8799 = vmax.xlane.f32.xlu0 %v8798
    %v8800 = vpop.xlane.xlu0 %8799
    %v8801 = vsel %vm1852, %v8765, -inf
    %8802 = vmax.xlane.f32.xlu0 %v8801
    %v8803 = vpop.xlane.xlu0 %8802
    %v8804 = vsel %vm1852, %v8766, -inf
    %8805 = vmax.xlane.f32.xlu0 %v8804
    %v8806 = vpop.xlane.xlu0 %8805
    %v8807 = vsel %vm1852, %v8767, -inf
    %8808 = vmax.xlane.f32.xlu0 %v8807
    %v8809 = vpop.xlane.xlu0 %8808
    %v8810 = vsel %vm1852, %v8768, -inf
    %8811 = vmax.xlane.f32.xlu0 %v8810
    %v8812 = vpop.xlane.xlu0 %8811
    %v8813 = vsel %vm1852, %v8769, -inf
    %8814 = vmax.xlane.f32.xlu0 %v8813
    %v8815 = vpop.xlane.xlu0 %8814
    %v8816 = vsel %vm1852, %v8770, -inf
    %8817 = vmax.xlane.f32.xlu0 %v8816
    %v8818 = vpop.xlane.xlu0 %8817
    %v8819 = vsel %vm1852, %v8771, -inf
    %8820 = vmax.xlane.f32.xlu0 %v8819
    %v8821 = vpop.xlane.xlu0 %8820
    %v8822 = vsel %vm1852, %v8772, -inf
    %8823 = vmax.xlane.f32.xlu0 %v8822
    %v8824 = vpop.xlane.xlu0 %8823
    %v8825 = vsel %vm1852, %v8773, -inf
    %8826 = vmax.xlane.f32.xlu0 %v8825
    %v8827 = vpop.xlane.xlu0 %8826
    %v8828 = vsel %vm1852, %v8774, -inf
    %8829 = vmax.xlane.f32.xlu0 %v8828
    %v8830 = vpop.xlane.xlu0 %8829
    %v8831 = vsel %vm1852, %v8775, -inf
    %8832 = vmax.xlane.f32.xlu0 %v8831
    %v8833 = vpop.xlane.xlu0 %8832
    %v8834 = vsel %vm1852, %v8776, -inf
    %8835 = vmax.xlane.f32.xlu0 %v8834
    %v8836 = vpop.xlane.xlu0 %8835
    %v8837 = vsel %vm1852, %v8777, -inf
    %8838 = vmax.xlane.f32.xlu0 %v8837
    %v8839 = vpop.xlane.xlu0 %8838
    %v8840 = vsel %vm1852, %v8778, -inf
    %8841 = vmax.xlane.f32.xlu0 %v8840
    %v8842 = vpop.xlane.xlu0 %8841
    %v8843 = vsel %vm1852, %v8779, -inf
    %8844 = vmax.xlane.f32.xlu0 %v8843
    %v8845 = vpop.xlane.xlu0 %8844
    %v8846 = vsel %vm1852, %v8780, -inf
    %8847 = vmax.xlane.f32.xlu0 %v8846
    %v8848 = vpop.xlane.xlu0 %8847
    %v8849 = vsel %vm1852, %v8781, -inf
    %8850 = vmax.xlane.f32.xlu0 %v8849
    %v8851 = vpop.xlane.xlu0 %8850
    %v8852 = vsel %vm1852, %v8782, -inf
    %8853 = vmax.xlane.f32.xlu0 %v8852
    %v8854 = vpop.xlane.xlu0 %8853
    %v8855 = vsel %vm1852, %v8783, -inf
    %8856 = vmax.xlane.f32.xlu0 %v8855
    %v8857 = vpop.xlane.xlu0 %8856
    %v8858 = vsel %vm1852, %v8784, -inf
    %8859 = vmax.xlane.f32.xlu0 %v8858
    %v8860 = vpop.xlane.xlu0 %8859
    %v8861 = vsel %vm1852, %v8785, -inf
    %8862 = vmax.xlane.f32.xlu0 %v8861
    %v8863 = vpop.xlane.xlu0 %8862
    %v8864 = vsel %vm1852, %v8786, -inf
    %8865 = vmax.xlane.f32.xlu0 %v8864
    %v8866 = vpop.xlane.xlu0 %8865
    %v8867 = vsel %vm1852, %v8787, -inf
    %8868 = vmax.xlane.f32.xlu0 %v8867
    %v8869 = vpop.xlane.xlu0 %8868
    %v8870 = vsel %vm1852, %v8788, -inf
    %8871 = vmax.xlane.f32.xlu0 %v8870
    %v8872 = vpop.xlane.xlu0 %8871
    %v8873 = vsel %vm1852, %v8789, -inf
    %8874 = vmax.xlane.f32.xlu0 %v8873
    %v8875 = vpop.xlane.xlu0 %8874
    %v8876 = vsel %vm1852, %v8790, -inf
    %8877 = vmax.xlane.f32.xlu0 %v8876
    %v8878 = vpop.xlane.xlu0 %8877
    %v8879 = vsel %vm1852, %v8791, -inf
    %8880 = vmax.xlane.f32.xlu0 %v8879
    %v8881 = vpop.xlane.xlu0 %8880
    %v8882 = vsel %vm1852, %v8792, -inf
    %8883 = vmax.xlane.f32.xlu0 %v8882
    %v8884 = vpop.xlane.xlu0 %8883
    %v8885 = vsel %vm1852, %v8793, -inf
    %8886 = vmax.xlane.f32.xlu0 %v8885
    %v8887 = vpop.xlane.xlu0 %8886
    %v8888 = vsel %vm1852, %v8794, -inf
    %8889 = vmax.xlane.f32.xlu0 %v8888
    %v8890 = vpop.xlane.xlu0 %8889
    %v8891 = vsub.f32 %v8763, %v8797
    %v8892 = vsub.f32 %v8764, %v8800
    %v8893 = vsub.f32 %v8765, %v8803
    %v8894 = vsub.f32 %v8766, %v8806
    %v8895 = vsub.f32 %v8767, %v8809
    %v8896 = vsub.f32 %v8768, %v8812
    %v8897 = vsub.f32 %v8769, %v8815
    %v8898 = vsub.f32 %v8770, %v8818
    %v8899 = vsub.f32 %v8771, %v8821
    %v8900 = vsub.f32 %v8772, %v8824
    %v8901 = vsub.f32 %v8773, %v8827
    %v8902 = vsub.f32 %v8774, %v8830
    %v8903 = vsub.f32 %v8775, %v8833
    %v8904 = vsub.f32 %v8776, %v8836
    %v8905 = vsub.f32 %v8777, %v8839
    %v8906 = vsub.f32 %v8778, %v8842
    %v8907 = vsub.f32 %v8779, %v8845
    %v8908 = vsub.f32 %v8780, %v8848
    %v8909 = vsub.f32 %v8781, %v8851
    %v8910 = vsub.f32 %v8782, %v8854
    %v8911 = vsub.f32 %v8783, %v8857
    %v8912 = vsub.f32 %v8784, %v8860
    %v8913 = vsub.f32 %v8785, %v8863
    %v8914 = vsub.f32 %v8786, %v8866
    %v8915 = vsub.f32 %v8787, %v8869
    %v8916 = vsub.f32 %v8788, %v8872
    %v8917 = vsub.f32 %v8789, %v8875
    %v8918 = vsub.f32 %v8790, %v8878
    %v8919 = vsub.f32 %v8791, %v8881
    %v8920 = vsub.f32 %v8792, %v8884
    %v8921 = vsub.f32 %v8793, %v8887
    %v8922 = vsub.f32 %v8794, %v8890
    %v8923 = vmul.f32 %v8891, 1.442695
    %v8924 = vpow.pop %v8923
    %v8925 = vmul.f32 %v8892, 1.442695
    %v8926 = vpow.pop %v8925
    %v8927 = vmul.f32 %v8893, 1.442695
    %v8928 = vpow.pop %v8927
    %v8929 = vmul.f32 %v8894, 1.442695
    %v8930 = vpow.pop %v8929
    %v8931 = vmul.f32 %v8895, 1.442695
    %v8932 = vpow.pop %v8931
    %v8933 = vmul.f32 %v8896, 1.442695
    %v8934 = vpow.pop %v8933
    %v8935 = vmul.f32 %v8897, 1.442695
    %v8936 = vpow.pop %v8935
    %v8937 = vmul.f32 %v8898, 1.442695
    %v8938 = vpow.pop %v8937
    %v8939 = vmul.f32 %v8899, 1.442695
    %v8940 = vpow.pop %v8939
    %v8941 = vmul.f32 %v8900, 1.442695
    %v8942 = vpow.pop %v8941
    %v8943 = vmul.f32 %v8901, 1.442695
    %v8944 = vpow.pop %v8943
    %v8945 = vmul.f32 %v8902, 1.442695
    %v8946 = vpow.pop %v8945
    %v8947 = vmul.f32 %v8903, 1.442695
    %v8948 = vpow.pop %v8947
    %v8949 = vmul.f32 %v8904, 1.442695
    %v8950 = vpow.pop %v8949
    %v8951 = vmul.f32 %v8905, 1.442695
    %v8952 = vpow.pop %v8951
    %v8953 = vmul.f32 %v8906, 1.442695
    %v8954 = vpow.pop %v8953
    %v8955 = vmul.f32 %v8907, 1.442695
    %v8956 = vpow.pop %v8955
    %v8957 = vmul.f32 %v8908, 1.442695
    %v8958 = vpow.pop %v8957
    %v8959 = vmul.f32 %v8909, 1.442695
    %v8960 = vpow.pop %v8959
    %v8961 = vmul.f32 %v8910, 1.442695
    %v8962 = vpow.pop %v8961
    %v8963 = vmul.f32 %v8911, 1.442695
    %v8964 = vpow.pop %v8963
    %v8965 = vmul.f32 %v8912, 1.442695
    %v8966 = vpow.pop %v8965
    %v8967 = vmul.f32 %v8913, 1.442695
    %v8968 = vpow.pop %v8967
    %v8969 = vmul.f32 %v8914, 1.442695
    %v8970 = vpow.pop %v8969
    %v8971 = vmul.f32 %v8915, 1.442695
    %v8972 = vpow.pop %v8971
    %v8973 = vmul.f32 %v8916, 1.442695
    %v8974 = vpow.pop %v8973
    %v8975 = vmul.f32 %v8917, 1.442695
    %v8976 = vpow.pop %v8975
    %v8977 = vmul.f32 %v8918, 1.442695
    %v8978 = vpow.pop %v8977
    %v8979 = vmul.f32 %v8919, 1.442695
    %v8980 = vpow.pop %v8979
    %v8981 = vmul.f32 %v8920, 1.442695
    %v8982 = vpow.pop %v8981
    %v8983 = vmul.f32 %v8921, 1.442695
    %v8984 = vpow.pop %v8983
    %v8985 = vmul.f32 %v8922, 1.442695
    %v8986 = vpow.pop %v8985
    %v8987 = vsel %vm1852, %v8924, 0.0
    %8988 = vadd.xlane.f32.xlu0 %v8987
    %v8989 = vpop.xlane.xlu0 %8988
    %v8990 = vsel %vm1852, %v8926, 0.0
    %8991 = vadd.xlane.f32.xlu0 %v8990
    %v8992 = vpop.xlane.xlu0 %8991
    %v8993 = vsel %vm1852, %v8928, 0.0
    %8994 = vadd.xlane.f32.xlu0 %v8993
    %v8995 = vpop.xlane.xlu0 %8994
    %v8996 = vsel %vm1852, %v8930, 0.0
    %8997 = vadd.xlane.f32.xlu0 %v8996
    %v8998 = vpop.xlane.xlu0 %8997
    %v8999 = vsel %vm1852, %v8932, 0.0
    %9000 = vadd.xlane.f32.xlu0 %v8999
    %v9001 = vpop.xlane.xlu0 %9000
    %v9002 = vsel %vm1852, %v8934, 0.0
    %9003 = vadd.xlane.f32.xlu0 %v9002
    %v9004 = vpop.xlane.xlu0 %9003
    %v9005 = vsel %vm1852, %v8936, 0.0
    %9006 = vadd.xlane.f32.xlu0 %v9005
    %v9007 = vpop.xlane.xlu0 %9006
    %v9008 = vsel %vm1852, %v8938, 0.0
    %9009 = vadd.xlane.f32.xlu0 %v9008
    %v9010 = vpop.xlane.xlu0 %9009
    %v9011 = vsel %vm1852, %v8940, 0.0
    %9012 = vadd.xlane.f32.xlu0 %v9011
    %v9013 = vpop.xlane.xlu0 %9012
    %v9014 = vsel %vm1852, %v8942, 0.0
    %9015 = vadd.xlane.f32.xlu0 %v9014
    %v9016 = vpop.xlane.xlu0 %9015
    %v9017 = vsel %vm1852, %v8944, 0.0
    %9018 = vadd.xlane.f32.xlu0 %v9017
    %v9019 = vpop.xlane.xlu0 %9018
    %v9020 = vsel %vm1852, %v8946, 0.0
    %9021 = vadd.xlane.f32.xlu0 %v9020
    %v9022 = vpop.xlane.xlu0 %9021
    %v9023 = vsel %vm1852, %v8948, 0.0
    %9024 = vadd.xlane.f32.xlu0 %v9023
    %v9025 = vpop.xlane.xlu0 %9024
    %v9026 = vsel %vm1852, %v8950, 0.0
    %9027 = vadd.xlane.f32.xlu0 %v9026
    %v9028 = vpop.xlane.xlu0 %9027
    %v9029 = vsel %vm1852, %v8952, 0.0
    %9030 = vadd.xlane.f32.xlu0 %v9029
    %v9031 = vpop.xlane.xlu0 %9030
    %v9032 = vsel %vm1852, %v8954, 0.0
    %9033 = vadd.xlane.f32.xlu0 %v9032
    %v9034 = vpop.xlane.xlu0 %9033
    %v9035 = vsel %vm1852, %v8956, 0.0
    %9036 = vadd.xlane.f32.xlu0 %v9035
    %v9037 = vpop.xlane.xlu0 %9036
    %v9038 = vsel %vm1852, %v8958, 0.0
    %9039 = vadd.xlane.f32.xlu0 %v9038
    %v9040 = vpop.xlane.xlu0 %9039
    %v9041 = vsel %vm1852, %v8960, 0.0
    %9042 = vadd.xlane.f32.xlu0 %v9041
    %v9043 = vpop.xlane.xlu0 %9042
    %v9044 = vsel %vm1852, %v8962, 0.0
    %9045 = vadd.xlane.f32.xlu0 %v9044
    %v9046 = vpop.xlane.xlu0 %9045
    %v9047 = vsel %vm1852, %v8964, 0.0
    %9048 = vadd.xlane.f32.xlu0 %v9047
    %v9049 = vpop.xlane.xlu0 %9048
    %v9050 = vsel %vm1852, %v8966, 0.0
    %9051 = vadd.xlane.f32.xlu0 %v9050
    %v9052 = vpop.xlane.xlu0 %9051
    %v9053 = vsel %vm1852, %v8968, 0.0
    %9054 = vadd.xlane.f32.xlu0 %v9053
    %v9055 = vpop.xlane.xlu0 %9054
    %v9056 = vsel %vm1852, %v8970, 0.0
    %9057 = vadd.xlane.f32.xlu0 %v9056
    %v9058 = vpop.xlane.xlu0 %9057
    %v9059 = vsel %vm1852, %v8972, 0.0
    %9060 = vadd.xlane.f32.xlu0 %v9059
    %v9061 = vpop.xlane.xlu0 %9060
    %v9062 = vsel %vm1852, %v8974, 0.0
    %9063 = vadd.xlane.f32.xlu0 %v9062
    %v9064 = vpop.xlane.xlu0 %9063
    %v9065 = vsel %vm1852, %v8976, 0.0
    %9066 = vadd.xlane.f32.xlu0 %v9065
    %v9067 = vpop.xlane.xlu0 %9066
    %v9068 = vsel %vm1852, %v8978, 0.0
    %9069 = vadd.xlane.f32.xlu0 %v9068
    %v9070 = vpop.xlane.xlu0 %9069
    %v9071 = vsel %vm1852, %v8980, 0.0
    %9072 = vadd.xlane.f32.xlu0 %v9071
    %v9073 = vpop.xlane.xlu0 %9072
    %v9074 = vsel %vm1852, %v8982, 0.0
    %9075 = vadd.xlane.f32.xlu0 %v9074
    %v9076 = vpop.xlane.xlu0 %9075
    %v9077 = vsel %vm1852, %v8984, 0.0
    %9078 = vadd.xlane.f32.xlu0 %v9077
    %v9079 = vpop.xlane.xlu0 %9078
    %v9080 = vsel %vm1852, %v8986, 0.0
    %9081 = vadd.xlane.f32.xlu0 %v9080
    %v9082 = vpop.xlane.xlu0 %9081
    %v9083 = vrcp.pop %v8989
    %v9084 = vrcp.pop %v8992
    %v9085 = vrcp.pop %v8995
    %v9086 = vrcp.pop %v8998
    %v9087 = vrcp.pop %v9001
    %v9088 = vrcp.pop %v9004
    %v9089 = vrcp.pop %v9007
    %v9090 = vrcp.pop %v9010
    %v9091 = vrcp.pop %v9013
    %v9092 = vrcp.pop %v9016
    %v9093 = vrcp.pop %v9019
    %v9094 = vrcp.pop %v9022
    %v9095 = vrcp.pop %v9025
    %v9096 = vrcp.pop %v9028
    %v9097 = vrcp.pop %v9031
    %v9098 = vrcp.pop %v9034
    %v9099 = vrcp.pop %v9037
    %v9100 = vrcp.pop %v9040
    %v9101 = vrcp.pop %v9043
    %v9102 = vrcp.pop %v9046
    %v9103 = vrcp.pop %v9049
    %v9104 = vrcp.pop %v9052
    %v9105 = vrcp.pop %v9055
    %v9106 = vrcp.pop %v9058
    %v9107 = vrcp.pop %v9061
    %v9108 = vrcp.pop %v9064
    %v9109 = vrcp.pop %v9067
    %v9110 = vrcp.pop %v9070
    %v9111 = vrcp.pop %v9073
    %v9112 = vrcp.pop %v9076
    %v9113 = vrcp.pop %v9079
    %v9114 = vrcp.pop %v9082
    %v9115 = vmul.f32 %v8924, %v9083
    %v9116 = vmul.f32 %v8926, %v9084
    %v9117 = vmul.f32 %v8928, %v9085
    %v9118 = vmul.f32 %v8930, %v9086
    %v9119 = vmul.f32 %v8932, %v9087
    %v9120 = vmul.f32 %v8934, %v9088
    %v9121 = vmul.f32 %v8936, %v9089
    %v9122 = vmul.f32 %v8938, %v9090
    %v9123 = vmul.f32 %v8940, %v9091
    %v9124 = vmul.f32 %v8942, %v9092
    %v9125 = vmul.f32 %v8944, %v9093
    %v9126 = vmul.f32 %v8946, %v9094
    %v9127 = vmul.f32 %v8948, %v9095
    %v9128 = vmul.f32 %v8950, %v9096
    %v9129 = vmul.f32 %v8952, %v9097
    %v9130 = vmul.f32 %v8954, %v9098
    %v9131 = vmul.f32 %v8956, %v9099
    %v9132 = vmul.f32 %v8958, %v9100
    %v9133 = vmul.f32 %v8960, %v9101
    %v9134 = vmul.f32 %v8962, %v9102
    %v9135 = vmul.f32 %v8964, %v9103
    %v9136 = vmul.f32 %v8966, %v9104
    %v9137 = vmul.f32 %v8968, %v9105
    %v9138 = vmul.f32 %v8970, %v9106
    %v9139 = vmul.f32 %v8972, %v9107
    %v9140 = vmul.f32 %v8974, %v9108
    %v9141 = vmul.f32 %v8976, %v9109
    %v9142 = vmul.f32 %v8978, %v9110
    %v9143 = vmul.f32 %v8980, %v9111
    %v9144 = vmul.f32 %v8982, %v9112
    %v9145 = vmul.f32 %v8984, %v9113
    %v9146 = vmul.f32 %v8986, %v9114
    %9147 = vrot.lane.b32.xlu0 %v8056, 64
    %v9148 = vpop.permute.xlu0 %9147
    %9149 = vrot.lane.b32.xlu0 %v8061, 64
    %v9150 = vpop.permute.xlu0 %9149
    %9151 = vrot.lane.b32.xlu0 %v8066, 64
    %v9152 = vpop.permute.xlu0 %9151
    %9153 = vrot.lane.b32.xlu0 %v8071, 64
    %v9154 = vpop.permute.xlu0 %9153
    %9155 = vrot.lane.b32.xlu0 %v8076, 64
    %v9156 = vpop.permute.xlu0 %9155
    %9157 = vrot.lane.b32.xlu0 %v8081, 64
    %v9158 = vpop.permute.xlu0 %9157
    %9159 = vrot.lane.b32.xlu0 %v8086, 64
    %v9160 = vpop.permute.xlu0 %9159
    %9161 = vrot.lane.b32.xlu0 %v8091, 64
    %v9162 = vpop.permute.xlu0 %9161
    %v9172 = vsel %vm1852, %v9115, 0
    %v9175 = vsel %vm1852, %v9116, 0
    %v9178 = vsel %vm1852, %v9117, 0
    %v9181 = vsel %vm1852, %v9118, 0
    %v9184 = vsel %vm1852, %v9119, 0
    %v9187 = vsel %vm1852, %v9120, 0
    %v9190 = vsel %vm1852, %v9121, 0
    %v9193 = vsel %vm1852, %v9122, 0
    %9195 = vmatprep.subr.mxu0 0.0
    %9196 = vmatpush1.msra.mxu0 0.0
    %9197 = vmatprep.subr.mxu0 0.0
    %9198 = vmatpush1.msra.mxu0 0.0
    %9199 = vmatprep.subr.mxu0 0.0
    %9200 = vmatpush1.msra.mxu0 0.0
    %9201 = vmatprep.subr.mxu0 0.0
    %9202 = vmatpush1.msra.mxu0 0.0
    %9203 = vmatprep.subr.mxu0 0.0
    %9204 = vmatpush1.msra.mxu0 0.0
    %9205 = vmatprep.subr.mxu0 0.0
    %9206 = vmatpush1.msra.mxu0 0.0
    %9207 = vmatprep.subr.mxu0 0.0
    %9208 = vmatpush1.msra.mxu0 0.0
    %9209 = vmatprep.subr.mxu0 0.0
    %9210 = vmatpush1.msra.mxu0 0.0
    %9211 = vmatprep.subr.mxu0 0.0
    %9212 = vmatpush1.msra.mxu0 %v9162
    %9213 = vmatprep.subr.mxu0 0.0
    %9214 = vmatpush1.msra.mxu0 %v9160
    %9215 = vmatprep.subr.mxu0 0.0
    %9216 = vmatpush1.msra.mxu0 %v9158
    %9217 = vmatprep.subr.mxu0 0.0
    %9218 = vmatpush1.msra.mxu0 %v9156
    %9219 = vmatprep.subr.mxu0 0.0
    %9220 = vmatpush1.msra.mxu0 %v9154
    %9221 = vmatprep.subr.mxu0 0.0
    %9222 = vmatpush1.msra.mxu0 %v9152
    %9223 = vmatprep.subr.mxu0 0.0
    %9224 = vmatpush1.msra.mxu0 %v9150
    %9225 = vmatprep.subr.mxu0 0.0
    %9226 = vmatpush1.msra.mxu0 %v9148
    %9227 = vmatprep.subr.mxu0 0.0
    %9228 = vmatpush2.msra.mxu0 0.0
    %9229 = vmatprep.subr.mxu0 0.0
    %9230 = vmatpush2.msra.mxu0 0.0
    %9231 = vmatprep.subr.mxu0 0.0
    %9232 = vmatpush2.msra.mxu0 0.0
    %9233 = vmatprep.subr.mxu0 0.0
    %9234 = vmatpush2.msra.mxu0 0.0
    %9235 = vmatprep.subr.mxu0 0.0
    %9236 = vmatpush2.msra.mxu0 0.0
    %9237 = vmatprep.subr.mxu0 0.0
    %9238 = vmatpush2.msra.mxu0 0.0
    %9239 = vmatprep.subr.mxu0 0.0
    %9240 = vmatpush2.msra.mxu0 0.0
    %9241 = vmatprep.subr.mxu0 0.0
    %9242 = vmatpush2.msra.mxu0 0.0
    %9243 = vmatprep.subr.mxu0 0.0
    %9244 = vmatpush2.msra.mxu0 0.0
    %9245 = vmatprep.subr.mxu0 0.0
    %9246 = vmatpush2.msra.mxu0 0.0
    %9247 = vmatprep.subr.mxu0 0.0
    %9248 = vmatpush2.msra.mxu0 0.0
    %9249 = vmatprep.subr.mxu0 0.0
    %9250 = vmatpush2.msra.mxu0 0.0
    %9251 = vmatprep.subr.mxu0 0.0
    %9252 = vmatpush2.msra.mxu0 0.0
    %9253 = vmatprep.subr.mxu0 0.0
    %9254 = vmatpush2.msra.mxu0 0.0
    %9255 = vmatprep.subr.mxu0 0.0
    %9256 = vmatpush2.msra.mxu0 0.0
    %9257 = vmatprep.subr.mxu0 0.0
    %9258 = vmatpush2.msra.mxu0 0.0
    %9259 = vmatprep.mubr.f32.mxu0 0.0
    %9260 = vmatmul.mubr.f32.gmra.mxu0 %v9172
    %v9261 = vpop.f32.mrf.mxu0
    %v9262 = vadd.f32 0.0, %v9261
    %v9263 = vpop.f32.mrf.mxu0
    %9264 = vmatprep.mubr.f32.mxu0 0.0
    %9265 = vmatmul.mubr.f32.gmra.mxu0 %v9175
    %v9266 = vpop.f32.mrf.mxu0
    %v9267 = vadd.f32 0.0, %v9266
    %v9268 = vpop.f32.mrf.mxu0
    %9269 = vmatprep.mubr.f32.mxu0 0.0
    %9270 = vmatmul.mubr.f32.gmra.mxu0 %v9178
    %v9271 = vpop.f32.mrf.mxu0
    %v9272 = vadd.f32 0.0, %v9271
    %v9273 = vpop.f32.mrf.mxu0
    %9274 = vmatprep.mubr.f32.mxu0 0.0
    %9275 = vmatmul.mubr.f32.gmra.mxu0 %v9181
    %v9276 = vpop.f32.mrf.mxu0
    %v9277 = vadd.f32 0.0, %v9276
    %v9278 = vpop.f32.mrf.mxu0
    %9279 = vmatprep.mubr.f32.mxu0 0.0
    %9280 = vmatmul.mubr.f32.gmra.mxu0 %v9184
    %v9281 = vpop.f32.mrf.mxu0
    %v9282 = vadd.f32 0.0, %v9281
    %v9283 = vpop.f32.mrf.mxu0
    %9284 = vmatprep.mubr.f32.mxu0 0.0
    %9285 = vmatmul.mubr.f32.gmra.mxu0 %v9187
    %v9286 = vpop.f32.mrf.mxu0
    %v9287 = vadd.f32 0.0, %v9286
    %v9288 = vpop.f32.mrf.mxu0
    %9289 = vmatprep.mubr.f32.mxu0 0.0
    %9290 = vmatmul.mubr.f32.gmra.mxu0 %v9190
    %v9291 = vpop.f32.mrf.mxu0
    %v9292 = vadd.f32 0.0, %v9291
    %v9293 = vpop.f32.mrf.mxu0
    %9294 = vmatprep.mubr.f32.mxu0 0.0
    %9295 = vmatmul.mubr.f32.gmra.mxu0 %v9193
    %v9296 = vpop.f32.mrf.mxu0
    %v9297 = vadd.f32 0.0, %v9296
    %v9298 = vpop.f32.mrf.mxu0
    %9299 = vdwg.mxu0
    %9300 = vrot.lane.b32.xlu0 %v8103, 64
    %v9301 = vpop.permute.xlu0 %9300
    %9302 = vrot.lane.b32.xlu0 %v8105, 64
    %v9303 = vpop.permute.xlu0 %9302
    %9304 = vrot.lane.b32.xlu0 %v8107, 64
    %v9305 = vpop.permute.xlu0 %9304
    %9306 = vrot.lane.b32.xlu0 %v8109, 64
    %v9307 = vpop.permute.xlu0 %9306
    %9308 = vrot.lane.b32.xlu0 %v8111, 64
    %v9309 = vpop.permute.xlu0 %9308
    %9310 = vrot.lane.b32.xlu0 %v8113, 64
    %v9311 = vpop.permute.xlu0 %9310
    %9312 = vrot.lane.b32.xlu0 %v8115, 64
    %v9313 = vpop.permute.xlu0 %9312
    %9314 = vrot.lane.b32.xlu0 %v8117, 64
    %v9315 = vpop.permute.xlu0 %9314
    %v9325 = vsel %vm1852, %v9123, 0
    %v9328 = vsel %vm1852, %v9124, 0
    %v9331 = vsel %vm1852, %v9125, 0
    %v9334 = vsel %vm1852, %v9126, 0
    %v9337 = vsel %vm1852, %v9127, 0
    %v9340 = vsel %vm1852, %v9128, 0
    %v9343 = vsel %vm1852, %v9129, 0
    %v9346 = vsel %vm1852, %v9130, 0
    %9348 = vmatprep.subr.mxu0 0.0
    %9349 = vmatpush1.msra.mxu0 0.0
    %9350 = vmatprep.subr.mxu0 0.0
    %9351 = vmatpush1.msra.mxu0 0.0
    %9352 = vmatprep.subr.mxu0 0.0
    %9353 = vmatpush1.msra.mxu0 0.0
    %9354 = vmatprep.subr.mxu0 0.0
    %9355 = vmatpush1.msra.mxu0 0.0
    %9356 = vmatprep.subr.mxu0 0.0
    %9357 = vmatpush1.msra.mxu0 0.0
    %9358 = vmatprep.subr.mxu0 0.0
    %9359 = vmatpush1.msra.mxu0 0.0
    %9360 = vmatprep.subr.mxu0 0.0
    %9361 = vmatpush1.msra.mxu0 0.0
    %9362 = vmatprep.subr.mxu0 0.0
    %9363 = vmatpush1.msra.mxu0 0.0
    %9364 = vmatprep.subr.mxu0 0.0
    %9365 = vmatpush1.msra.mxu0 %v9315
    %9366 = vmatprep.subr.mxu0 0.0
    %9367 = vmatpush1.msra.mxu0 %v9313
    %9368 = vmatprep.subr.mxu0 0.0
    %9369 = vmatpush1.msra.mxu0 %v9311
    %9370 = vmatprep.subr.mxu0 0.0
    %9371 = vmatpush1.msra.mxu0 %v9309
    %9372 = vmatprep.subr.mxu0 0.0
    %9373 = vmatpush1.msra.mxu0 %v9307
    %9374 = vmatprep.subr.mxu0 0.0
    %9375 = vmatpush1.msra.mxu0 %v9305
    %9376 = vmatprep.subr.mxu0 0.0
    %9377 = vmatpush1.msra.mxu0 %v9303
    %9378 = vmatprep.subr.mxu0 0.0
    %9379 = vmatpush1.msra.mxu0 %v9301
    %9380 = vmatprep.subr.mxu0 0.0
    %9381 = vmatpush2.msra.mxu0 0.0
    %9382 = vmatprep.subr.mxu0 0.0
    %9383 = vmatpush2.msra.mxu0 0.0
    %9384 = vmatprep.subr.mxu0 0.0
    %9385 = vmatpush2.msra.mxu0 0.0
    %9386 = vmatprep.subr.mxu0 0.0
    %9387 = vmatpush2.msra.mxu0 0.0
    %9388 = vmatprep.subr.mxu0 0.0
    %9389 = vmatpush2.msra.mxu0 0.0
    %9390 = vmatprep.subr.mxu0 0.0
    %9391 = vmatpush2.msra.mxu0 0.0
    %9392 = vmatprep.subr.mxu0 0.0
    %9393 = vmatpush2.msra.mxu0 0.0
    %9394 = vmatprep.subr.mxu0 0.0
    %9395 = vmatpush2.msra.mxu0 0.0
    %9396 = vmatprep.subr.mxu0 0.0
    %9397 = vmatpush2.msra.mxu0 0.0
    %9398 = vmatprep.subr.mxu0 0.0
    %9399 = vmatpush2.msra.mxu0 0.0
    %9400 = vmatprep.subr.mxu0 0.0
    %9401 = vmatpush2.msra.mxu0 0.0
    %9402 = vmatprep.subr.mxu0 0.0
    %9403 = vmatpush2.msra.mxu0 0.0
    %9404 = vmatprep.subr.mxu0 0.0
    %9405 = vmatpush2.msra.mxu0 0.0
    %9406 = vmatprep.subr.mxu0 0.0
    %9407 = vmatpush2.msra.mxu0 0.0
    %9408 = vmatprep.subr.mxu0 0.0
    %9409 = vmatpush2.msra.mxu0 0.0
    %9410 = vmatprep.subr.mxu0 0.0
    %9411 = vmatpush2.msra.mxu0 0.0
    %9412 = vmatprep.mubr.f32.mxu0 0.0
    %9413 = vmatmul.mubr.f32.gmra.mxu0 %v9325
    %v9414 = vpop.f32.mrf.mxu0
    %v9415 = vadd.f32 0.0, %v9414
    %v9416 = vpop.f32.mrf.mxu0
    %9417 = vmatprep.mubr.f32.mxu0 0.0
    %9418 = vmatmul.mubr.f32.gmra.mxu0 %v9328
    %v9419 = vpop.f32.mrf.mxu0
    %v9420 = vadd.f32 0.0, %v9419
    %v9421 = vpop.f32.mrf.mxu0
    %9422 = vmatprep.mubr.f32.mxu0 0.0
    %9423 = vmatmul.mubr.f32.gmra.mxu0 %v9331
    %v9424 = vpop.f32.mrf.mxu0
    %v9425 = vadd.f32 0.0, %v9424
    %v9426 = vpop.f32.mrf.mxu0
    %9427 = vmatprep.mubr.f32.mxu0 0.0
    %9428 = vmatmul.mubr.f32.gmra.mxu0 %v9334
    %v9429 = vpop.f32.mrf.mxu0
    %v9430 = vadd.f32 0.0, %v9429
    %v9431 = vpop.f32.mrf.mxu0
    %9432 = vmatprep.mubr.f32.mxu0 0.0
    %9433 = vmatmul.mubr.f32.gmra.mxu0 %v9337
    %v9434 = vpop.f32.mrf.mxu0
    %v9435 = vadd.f32 0.0, %v9434
    %v9436 = vpop.f32.mrf.mxu0
    %9437 = vmatprep.mubr.f32.mxu0 0.0
    %9438 = vmatmul.mubr.f32.gmra.mxu0 %v9340
    %v9439 = vpop.f32.mrf.mxu0
    %v9440 = vadd.f32 0.0, %v9439
    %v9441 = vpop.f32.mrf.mxu0
    %9442 = vmatprep.mubr.f32.mxu0 0.0
    %9443 = vmatmul.mubr.f32.gmra.mxu0 %v9343
    %v9444 = vpop.f32.mrf.mxu0
    %v9445 = vadd.f32 0.0, %v9444
    %v9446 = vpop.f32.mrf.mxu0
    %9447 = vmatprep.mubr.f32.mxu0 0.0
    %9448 = vmatmul.mubr.f32.gmra.mxu0 %v9346
    %v9449 = vpop.f32.mrf.mxu0
    %v9450 = vadd.f32 0.0, %v9449
    %v9451 = vpop.f32.mrf.mxu0
    %9452 = vdwg.mxu0
    %9453 = vrot.lane.b32.xlu0 %v8119, 64
    %v9454 = vpop.permute.xlu0 %9453
    %9455 = vrot.lane.b32.xlu0 %v8121, 64
    %v9456 = vpop.permute.xlu0 %9455
    %9457 = vrot.lane.b32.xlu0 %v8123, 64
    %v9458 = vpop.permute.xlu0 %9457
    %9459 = vrot.lane.b32.xlu0 %v8125, 64
    %v9460 = vpop.permute.xlu0 %9459
    %9461 = vrot.lane.b32.xlu0 %v8127, 64
    %v9462 = vpop.permute.xlu0 %9461
    %9463 = vrot.lane.b32.xlu0 %v8129, 64
    %v9464 = vpop.permute.xlu0 %9463
    %9465 = vrot.lane.b32.xlu0 %v8131, 64
    %v9466 = vpop.permute.xlu0 %9465
    %9467 = vrot.lane.b32.xlu0 %v8133, 64
    %v9468 = vpop.permute.xlu0 %9467
    %v9478 = vsel %vm1852, %v9131, 0
    %v9481 = vsel %vm1852, %v9132, 0
    %v9484 = vsel %vm1852, %v9133, 0
    %v9487 = vsel %vm1852, %v9134, 0
    %v9490 = vsel %vm1852, %v9135, 0
    %v9493 = vsel %vm1852, %v9136, 0
    %v9496 = vsel %vm1852, %v9137, 0
    %v9499 = vsel %vm1852, %v9138, 0
    %9501 = vmatprep.subr.mxu0 0.0
    %9502 = vmatpush1.msra.mxu0 0.0
    %9503 = vmatprep.subr.mxu0 0.0
    %9504 = vmatpush1.msra.mxu0 0.0
    %9505 = vmatprep.subr.mxu0 0.0
    %9506 = vmatpush1.msra.mxu0 0.0
    %9507 = vmatprep.subr.mxu0 0.0
    %9508 = vmatpush1.msra.mxu0 0.0
    %9509 = vmatprep.subr.mxu0 0.0
    %9510 = vmatpush1.msra.mxu0 0.0
    %9511 = vmatprep.subr.mxu0 0.0
    %9512 = vmatpush1.msra.mxu0 0.0
    %9513 = vmatprep.subr.mxu0 0.0
    %9514 = vmatpush1.msra.mxu0 0.0
    %9515 = vmatprep.subr.mxu0 0.0
    %9516 = vmatpush1.msra.mxu0 0.0
    %9517 = vmatprep.subr.mxu0 0.0
    %9518 = vmatpush1.msra.mxu0 %v9468
    %9519 = vmatprep.subr.mxu0 0.0
    %9520 = vmatpush1.msra.mxu0 %v9466
    %9521 = vmatprep.subr.mxu0 0.0
    %9522 = vmatpush1.msra.mxu0 %v9464
    %9523 = vmatprep.subr.mxu0 0.0
    %9524 = vmatpush1.msra.mxu0 %v9462
    %9525 = vmatprep.subr.mxu0 0.0
    %9526 = vmatpush1.msra.mxu0 %v9460
    %9527 = vmatprep.subr.mxu0 0.0
    %9528 = vmatpush1.msra.mxu0 %v9458
    %9529 = vmatprep.subr.mxu0 0.0
    %9530 = vmatpush1.msra.mxu0 %v9456
    %9531 = vmatprep.subr.mxu0 0.0
    %9532 = vmatpush1.msra.mxu0 %v9454
    %9533 = vmatprep.subr.mxu0 0.0
    %9534 = vmatpush2.msra.mxu0 0.0
    %9535 = vmatprep.subr.mxu0 0.0
    %9536 = vmatpush2.msra.mxu0 0.0
    %9537 = vmatprep.subr.mxu0 0.0
    %9538 = vmatpush2.msra.mxu0 0.0
    %9539 = vmatprep.subr.mxu0 0.0
    %9540 = vmatpush2.msra.mxu0 0.0
    %9541 = vmatprep.subr.mxu0 0.0
    %9542 = vmatpush2.msra.mxu0 0.0
    %9543 = vmatprep.subr.mxu0 0.0
    %9544 = vmatpush2.msra.mxu0 0.0
    %9545 = vmatprep.subr.mxu0 0.0
    %9546 = vmatpush2.msra.mxu0 0.0
    %9547 = vmatprep.subr.mxu0 0.0
    %9548 = vmatpush2.msra.mxu0 0.0
    %9549 = vmatprep.subr.mxu0 0.0
    %9550 = vmatpush2.msra.mxu0 0.0
    %9551 = vmatprep.subr.mxu0 0.0
    %9552 = vmatpush2.msra.mxu0 0.0
    %9553 = vmatprep.subr.mxu0 0.0
    %9554 = vmatpush2.msra.mxu0 0.0
    %9555 = vmatprep.subr.mxu0 0.0
    %9556 = vmatpush2.msra.mxu0 0.0
    %9557 = vmatprep.subr.mxu0 0.0
    %9558 = vmatpush2.msra.mxu0 0.0
    %9559 = vmatprep.subr.mxu0 0.0
    %9560 = vmatpush2.msra.mxu0 0.0
    %9561 = vmatprep.subr.mxu0 0.0
    %9562 = vmatpush2.msra.mxu0 0.0
    %9563 = vmatprep.subr.mxu0 0.0
    %9564 = vmatpush2.msra.mxu0 0.0
    %9565 = vmatprep.mubr.f32.mxu0 0.0
    %9566 = vmatmul.mubr.f32.gmra.mxu0 %v9478
    %v9567 = vpop.f32.mrf.mxu0
    %v9568 = vadd.f32 0.0, %v9567
    %v9569 = vpop.f32.mrf.mxu0
    %9570 = vmatprep.mubr.f32.mxu0 0.0
    %9571 = vmatmul.mubr.f32.gmra.mxu0 %v9481
    %v9572 = vpop.f32.mrf.mxu0
    %v9573 = vadd.f32 0.0, %v9572
    %v9574 = vpop.f32.mrf.mxu0
    %9575 = vmatprep.mubr.f32.mxu0 0.0
    %9576 = vmatmul.mubr.f32.gmra.mxu0 %v9484
    %v9577 = vpop.f32.mrf.mxu0
    %v9578 = vadd.f32 0.0, %v9577
    %v9579 = vpop.f32.mrf.mxu0
    %9580 = vmatprep.mubr.f32.mxu0 0.0
    %9581 = vmatmul.mubr.f32.gmra.mxu0 %v9487
    %v9582 = vpop.f32.mrf.mxu0
    %v9583 = vadd.f32 0.0, %v9582
    %v9584 = vpop.f32.mrf.mxu0
    %9585 = vmatprep.mubr.f32.mxu0 0.0
    %9586 = vmatmul.mubr.f32.gmra.mxu0 %v9490
    %v9587 = vpop.f32.mrf.mxu0
    %v9588 = vadd.f32 0.0, %v9587
    %v9589 = vpop.f32.mrf.mxu0
    %9590 = vmatprep.mubr.f32.mxu0 0.0
    %9591 = vmatmul.mubr.f32.gmra.mxu0 %v9493
    %v9592 = vpop.f32.mrf.mxu0
    %v9593 = vadd.f32 0.0, %v9592
    %v9594 = vpop.f32.mrf.mxu0
    %9595 = vmatprep.mubr.f32.mxu0 0.0
    %9596 = vmatmul.mubr.f32.gmra.mxu0 %v9496
    %v9597 = vpop.f32.mrf.mxu0
    %v9598 = vadd.f32 0.0, %v9597
    %v9599 = vpop.f32.mrf.mxu0
    %9600 = vmatprep.mubr.f32.mxu0 0.0
    %9601 = vmatmul.mubr.f32.gmra.mxu0 %v9499
    %v9602 = vpop.f32.mrf.mxu0
    %v9603 = vadd.f32 0.0, %v9602
    %v9604 = vpop.f32.mrf.mxu0
    %9605 = vdwg.mxu0
    %9606 = vrot.lane.b32.xlu0 %v8135, 64
    %v9607 = vpop.permute.xlu0 %9606
    %9608 = vrot.lane.b32.xlu0 %v8137, 64
    %v9609 = vpop.permute.xlu0 %9608
    %9610 = vrot.lane.b32.xlu0 %v8139, 64
    %v9611 = vpop.permute.xlu0 %9610
    %9612 = vrot.lane.b32.xlu0 %v8141, 64
    %v9613 = vpop.permute.xlu0 %9612
    %9614 = vrot.lane.b32.xlu0 %v8143, 64
    %v9615 = vpop.permute.xlu0 %9614
    %9616 = vrot.lane.b32.xlu0 %v8145, 64
    %v9617 = vpop.permute.xlu0 %9616
    %9618 = vrot.lane.b32.xlu0 %v8147, 64
    %v9619 = vpop.permute.xlu0 %9618
    %9620 = vrot.lane.b32.xlu0 %v8149, 64
    %v9621 = vpop.permute.xlu0 %9620
    %v9631 = vsel %vm1852, %v9139, 0
    %v9634 = vsel %vm1852, %v9140, 0
    %v9637 = vsel %vm1852, %v9141, 0
    %v9640 = vsel %vm1852, %v9142, 0
    %v9643 = vsel %vm1852, %v9143, 0
    %v9646 = vsel %vm1852, %v9144, 0
    %v9649 = vsel %vm1852, %v9145, 0
    %v9652 = vsel %vm1852, %v9146, 0
    %9654 = vmatprep.subr.mxu0 0.0
    %9655 = vmatpush1.msra.mxu0 0.0
    %9656 = vmatprep.subr.mxu0 0.0
    %9657 = vmatpush1.msra.mxu0 0.0
    %9658 = vmatprep.subr.mxu0 0.0
    %9659 = vmatpush1.msra.mxu0 0.0
    %9660 = vmatprep.subr.mxu0 0.0
    %9661 = vmatpush1.msra.mxu0 0.0
    %9662 = vmatprep.subr.mxu0 0.0
    %9663 = vmatpush1.msra.mxu0 0.0
    %9664 = vmatprep.subr.mxu0 0.0
    %9665 = vmatpush1.msra.mxu0 0.0
    %9666 = vmatprep.subr.mxu0 0.0
    %9667 = vmatpush1.msra.mxu0 0.0
    %9668 = vmatprep.subr.mxu0 0.0
    %9669 = vmatpush1.msra.mxu0 0.0
    %9670 = vmatprep.subr.mxu0 0.0
    %9671 = vmatpush1.msra.mxu0 %v9621
    %9672 = vmatprep.subr.mxu0 0.0
    %9673 = vmatpush1.msra.mxu0 %v9619
    %9674 = vmatprep.subr.mxu0 0.0
    %9675 = vmatpush1.msra.mxu0 %v9617
    %9676 = vmatprep.subr.mxu0 0.0
    %9677 = vmatpush1.msra.mxu0 %v9615
    %9678 = vmatprep.subr.mxu0 0.0
    %9679 = vmatpush1.msra.mxu0 %v9613
    %9680 = vmatprep.subr.mxu0 0.0
    %9681 = vmatpush1.msra.mxu0 %v9611
    %9682 = vmatprep.subr.mxu0 0.0
    %9683 = vmatpush1.msra.mxu0 %v9609
    %9684 = vmatprep.subr.mxu0 0.0
    %9685 = vmatpush1.msra.mxu0 %v9607
    %9686 = vmatprep.subr.mxu0 0.0
    %9687 = vmatpush2.msra.mxu0 0.0
    %9688 = vmatprep.subr.mxu0 0.0
    %9689 = vmatpush2.msra.mxu0 0.0
    %9690 = vmatprep.subr.mxu0 0.0
    %9691 = vmatpush2.msra.mxu0 0.0
    %9692 = vmatprep.subr.mxu0 0.0
    %9693 = vmatpush2.msra.mxu0 0.0
    %9694 = vmatprep.subr.mxu0 0.0
    %9695 = vmatpush2.msra.mxu0 0.0
    %9696 = vmatprep.subr.mxu0 0.0
    %9697 = vmatpush2.msra.mxu0 0.0
    %9698 = vmatprep.subr.mxu0 0.0
    %9699 = vmatpush2.msra.mxu0 0.0
    %9700 = vmatprep.subr.mxu0 0.0
    %9701 = vmatpush2.msra.mxu0 0.0
    %9702 = vmatprep.subr.mxu0 0.0
    %9703 = vmatpush2.msra.mxu0 0.0
    %9704 = vmatprep.subr.mxu0 0.0
    %9705 = vmatpush2.msra.mxu0 0.0
    %9706 = vmatprep.subr.mxu0 0.0
    %9707 = vmatpush2.msra.mxu0 0.0
    %9708 = vmatprep.subr.mxu0 0.0
    %9709 = vmatpush2.msra.mxu0 0.0
    %9710 = vmatprep.subr.mxu0 0.0
    %9711 = vmatpush2.msra.mxu0 0.0
    %9712 = vmatprep.subr.mxu0 0.0
    %9713 = vmatpush2.msra.mxu0 0.0
    %9714 = vmatprep.subr.mxu0 0.0
    %9715 = vmatpush2.msra.mxu0 0.0
    %9716 = vmatprep.subr.mxu0 0.0
    %9717 = vmatpush2.msra.mxu0 0.0
    %9718 = vmatprep.mubr.f32.mxu0 0.0
    %9719 = vmatmul.mubr.f32.gmra.mxu0 %v9631
    %v9720 = vpop.f32.mrf.mxu0
    %v9721 = vadd.f32 0.0, %v9720
    %v9722 = vpop.f32.mrf.mxu0
    %9723 = vmatprep.mubr.f32.mxu0 0.0
    %9724 = vmatmul.mubr.f32.gmra.mxu0 %v9634
    %v9725 = vpop.f32.mrf.mxu0
    %v9726 = vadd.f32 0.0, %v9725
    %v9727 = vpop.f32.mrf.mxu0
    %9728 = vmatprep.mubr.f32.mxu0 0.0
    %9729 = vmatmul.mubr.f32.gmra.mxu0 %v9637
    %v9730 = vpop.f32.mrf.mxu0
    %v9731 = vadd.f32 0.0, %v9730
    %v9732 = vpop.f32.mrf.mxu0
    %9733 = vmatprep.mubr.f32.mxu0 0.0
    %9734 = vmatmul.mubr.f32.gmra.mxu0 %v9640
    %v9735 = vpop.f32.mrf.mxu0
    %v9736 = vadd.f32 0.0, %v9735
    %v9737 = vpop.f32.mrf.mxu0
    %9738 = vmatprep.mubr.f32.mxu0 0.0
    %9739 = vmatmul.mubr.f32.gmra.mxu0 %v9643
    %v9740 = vpop.f32.mrf.mxu0
    %v9741 = vadd.f32 0.0, %v9740
    %v9742 = vpop.f32.mrf.mxu0
    %9743 = vmatprep.mubr.f32.mxu0 0.0
    %9744 = vmatmul.mubr.f32.gmra.mxu0 %v9646
    %v9745 = vpop.f32.mrf.mxu0
    %v9746 = vadd.f32 0.0, %v9745
    %v9747 = vpop.f32.mrf.mxu0
    %9748 = vmatprep.mubr.f32.mxu0 0.0
    %9749 = vmatmul.mubr.f32.gmra.mxu0 %v9649
    %v9750 = vpop.f32.mrf.mxu0
    %v9751 = vadd.f32 0.0, %v9750
    %v9752 = vpop.f32.mrf.mxu0
    %9753 = vmatprep.mubr.f32.mxu0 0.0
    %9754 = vmatmul.mubr.f32.gmra.mxu0 %v9652
    %v9755 = vpop.f32.mrf.mxu0
    %v9756 = vadd.f32 0.0, %v9755
    %v9757 = vpop.f32.mrf.mxu0
    %9758 = vdwg.mxu0
    %9767 = vrot.lane.b32.xlu0 %v9415, 8
    %v9768 = vpop.permute.xlu0 %9767
    %9769 = vrot.lane.b32.xlu0 %v9420, 8
    %v9770 = vpop.permute.xlu0 %9769
    %9771 = vrot.lane.b32.xlu0 %v9425, 8
    %v9772 = vpop.permute.xlu0 %9771
    %9773 = vrot.lane.b32.xlu0 %v9430, 8
    %v9774 = vpop.permute.xlu0 %9773
    %9775 = vrot.lane.b32.xlu0 %v9435, 8
    %v9776 = vpop.permute.xlu0 %9775
    %9777 = vrot.lane.b32.xlu0 %v9440, 8
    %v9778 = vpop.permute.xlu0 %9777
    %9779 = vrot.lane.b32.xlu0 %v9445, 8
    %v9780 = vpop.permute.xlu0 %9779
    %9781 = vrot.lane.b32.xlu0 %v9450, 8
    %v9782 = vpop.permute.xlu0 %9781
    %9799 = vrot.lane.b32.xlu0 %v9568, 16
    %v9800 = vpop.permute.xlu0 %9799
    %9801 = vrot.lane.b32.xlu0 %v9573, 16
    %v9802 = vpop.permute.xlu0 %9801
    %9803 = vrot.lane.b32.xlu0 %v9578, 16
    %v9804 = vpop.permute.xlu0 %9803
    %9805 = vrot.lane.b32.xlu0 %v9583, 16
    %v9806 = vpop.permute.xlu0 %9805
    %9807 = vrot.lane.b32.xlu0 %v9588, 16
    %v9808 = vpop.permute.xlu0 %9807
    %9809 = vrot.lane.b32.xlu0 %v9593, 16
    %v9810 = vpop.permute.xlu0 %9809
    %9811 = vrot.lane.b32.xlu0 %v9598, 16
    %v9812 = vpop.permute.xlu0 %9811
    %9813 = vrot.lane.b32.xlu0 %v9603, 16
    %v9814 = vpop.permute.xlu0 %9813
    %9831 = vrot.lane.b32.xlu0 %v9721, 24
    %v9832 = vpop.permute.xlu0 %9831
    %9833 = vrot.lane.b32.xlu0 %v9726, 24
    %v9834 = vpop.permute.xlu0 %9833
    %9835 = vrot.lane.b32.xlu0 %v9731, 24
    %v9836 = vpop.permute.xlu0 %9835
    %9837 = vrot.lane.b32.xlu0 %v9736, 24
    %v9838 = vpop.permute.xlu0 %9837
    %9839 = vrot.lane.b32.xlu0 %v9741, 24
    %v9840 = vpop.permute.xlu0 %9839
    %9841 = vrot.lane.b32.xlu0 %v9746, 24
    %v9842 = vpop.permute.xlu0 %9841
    %9843 = vrot.lane.b32.xlu0 %v9751, 24
    %v9844 = vpop.permute.xlu0 %9843
    %9845 = vrot.lane.b32.xlu0 %v9756, 24
    %v9846 = vpop.permute.xlu0 %9845
    %v9855 = vsel %vm8166, %v9262, %v9768
    %v9856 = vsel %vm8166, %v9267, %v9770
    %v9857 = vsel %vm8166, %v9272, %v9772
    %v9858 = vsel %vm8166, %v9277, %v9774
    %v9859 = vsel %vm8166, %v9282, %v9776
    %v9860 = vsel %vm8166, %v9287, %v9778
    %v9861 = vsel %vm8166, %v9292, %v9780
    %v9862 = vsel %vm8166, %v9297, %v9782
    %v9863 = vsel %vm75, %v9855, %v9800
    %v9864 = vsel %vm75, %v9856, %v9802
    %v9865 = vsel %vm75, %v9857, %v9804
    %v9866 = vsel %vm75, %v9858, %v9806
    %v9867 = vsel %vm75, %v9859, %v9808
    %v9868 = vsel %vm75, %v9860, %v9810
    %v9869 = vsel %vm75, %v9861, %v9812
    %v9870 = vsel %vm75, %v9862, %v9814
    %vm9871 = vcmask 195584
    %v9872 = vsel %vm9871, %v9863, %v9832
    %v9873 = vsel %vm9871, %v9864, %v9834
    %v9874 = vsel %vm9871, %v9865, %v9836
    %v9875 = vsel %vm9871, %v9866, %v9838
    %v9876 = vsel %vm9871, %v9867, %v9840
    %v9877 = vsel %vm9871, %v9868, %v9842
    %v9878 = vsel %vm9871, %v9869, %v9844
    %v9879 = vsel %vm9871, %v9870, %v9846
    %v9880 = vlaneseq
    %v9881 = vshrl.u32 %v9880, 7
    %v9882 = vsub.s32 0, %v9881
    %v9883 = vrot.slane %v7960, %v9882
    %9888 = vrot.lane.b32.xlu0 %v7955, 32
    %v9889 = vpop.permute.xlu0 %9888
    %9890 = vrot.lane.b32.xlu0 %v7956, 32
    %v9891 = vpop.permute.xlu0 %9890
    %9892 = vrot.lane.b32.xlu0 %v7957, 32
    %v9893 = vpop.permute.xlu0 %9892
    %9894 = vrot.lane.b32.xlu0 %v7958, 32
    %v9895 = vpop.permute.xlu0 %9894
    %v9901 = vsel %vm579, %v9872, 0
    %v9904 = vsel %vm579, %v9873, 0
    %v9907 = vsel %vm579, %v9874, 0
    %v9910 = vsel %vm579, %v9875, 0
    %v9913 = vsel %vm579, %v9876, 0
    %v9916 = vsel %vm579, %v9877, 0
    %v9919 = vsel %vm579, %v9878, 0
    %v9922 = vsel %vm579, %v9879, 0
    %9924 = vmatprep.subr.mxu0 0.0
    %9925 = vmatpush1.msra.mxu0 0.0
    %9926 = vmatprep.subr.mxu0 0.0
    %9927 = vmatpush1.msra.mxu0 0.0
    %9928 = vmatprep.subr.mxu0 0.0
    %9929 = vmatpush1.msra.mxu0 0.0
    %9930 = vmatprep.subr.mxu0 0.0
    %9931 = vmatpush1.msra.mxu0 0.0
    %9932 = vmatprep.subr.mxu0 0.0
    %9933 = vmatpush1.msra.mxu0 0.0
    %9934 = vmatprep.subr.mxu0 0.0
    %9935 = vmatpush1.msra.mxu0 0.0
    %9936 = vmatprep.subr.mxu0 0.0
    %9937 = vmatpush1.msra.mxu0 0.0
    %9938 = vmatprep.subr.mxu0 0.0
    %9939 = vmatpush1.msra.mxu0 0.0
    %9940 = vmatprep.subr.mxu0 0.0
    %9941 = vmatpush1.msra.mxu0 0.0
    %9942 = vmatprep.subr.mxu0 0.0
    %9943 = vmatpush1.msra.mxu0 0.0
    %9944 = vmatprep.subr.mxu0 0.0
    %9945 = vmatpush1.msra.mxu0 0.0
    %9946 = vmatprep.subr.mxu0 0.0
    %9947 = vmatpush1.msra.mxu0 0.0
    %9948 = vmatprep.subr.mxu0 0.0
    %9949 = vmatpush1.msra.mxu0 %v9895
    %9950 = vmatprep.subr.mxu0 0.0
    %9951 = vmatpush1.msra.mxu0 %v9893
    %9952 = vmatprep.subr.mxu0 0.0
    %9953 = vmatpush1.msra.mxu0 %v9891
    %9954 = vmatprep.subr.mxu0 0.0
    %9955 = vmatpush1.msra.mxu0 %v9889
    %9956 = vmatprep.subr.mxu0 0.0
    %9957 = vmatpush2.msra.mxu0 0.0
    %9958 = vmatprep.subr.mxu0 0.0
    %9959 = vmatpush2.msra.mxu0 0.0
    %9960 = vmatprep.subr.mxu0 0.0
    %9961 = vmatpush2.msra.mxu0 0.0
    %9962 = vmatprep.subr.mxu0 0.0
    %9963 = vmatpush2.msra.mxu0 0.0
    %9964 = vmatprep.subr.mxu0 0.0
    %9965 = vmatpush2.msra.mxu0 0.0
    %9966 = vmatprep.subr.mxu0 0.0
    %9967 = vmatpush2.msra.mxu0 0.0
    %9968 = vmatprep.subr.mxu0 0.0
    %9969 = vmatpush2.msra.mxu0 0.0
    %9970 = vmatprep.subr.mxu0 0.0
    %9971 = vmatpush2.msra.mxu0 0.0
    %9972 = vmatprep.subr.mxu0 0.0
    %9973 = vmatpush2.msra.mxu0 0.0
    %9974 = vmatprep.subr.mxu0 0.0
    %9975 = vmatpush2.msra.mxu0 0.0
    %9976 = vmatprep.subr.mxu0 0.0
    %9977 = vmatpush2.msra.mxu0 0.0
    %9978 = vmatprep.subr.mxu0 0.0
    %9979 = vmatpush2.msra.mxu0 0.0
    %9980 = vmatprep.subr.mxu0 0.0
    %9981 = vmatpush2.msra.mxu0 0.0
    %9982 = vmatprep.subr.mxu0 0.0
    %9983 = vmatpush2.msra.mxu0 0.0
    %9984 = vmatprep.subr.mxu0 0.0
    %9985 = vmatpush2.msra.mxu0 0.0
    %9986 = vmatprep.subr.mxu0 0.0
    %9987 = vmatpush2.msra.mxu0 0.0
    %9988 = vmatprep.mubr.f32.mxu0 0.0
    %9989 = vmatmul.mubr.f32.gmra.mxu0 %v9901
    %v9990 = vpop.f32.mrf.mxu0
    %v9991 = vadd.f32 %v9883, %v9990
    %v9992 = vpop.f32.mrf.mxu0
    %9993 = vmatprep.mubr.f32.mxu0 0.0
    %9994 = vmatmul.mubr.f32.gmra.mxu0 %v9904
    %v9995 = vpop.f32.mrf.mxu0
    %v9996 = vadd.f32 %v9883, %v9995
    %v9997 = vpop.f32.mrf.mxu0
    %9998 = vmatprep.mubr.f32.mxu0 0.0
    %9999 = vmatmul.mubr.f32.gmra.mxu0 %v9907
    %v10000 = vpop.f32.mrf.mxu0
    %v10001 = vadd.f32 %v9883, %v10000
    %v10002 = vpop.f32.mrf.mxu0
    %10003 = vmatprep.mubr.f32.mxu0 0.0
    %10004 = vmatmul.mubr.f32.gmra.mxu0 %v9910
    %v10005 = vpop.f32.mrf.mxu0
    %v10006 = vadd.f32 %v9883, %v10005
    %v10007 = vpop.f32.mrf.mxu0
    %10008 = vmatprep.mubr.f32.mxu0 0.0
    %10009 = vmatmul.mubr.f32.gmra.mxu0 %v9913
    %v10010 = vpop.f32.mrf.mxu0
    %v10011 = vadd.f32 %v9883, %v10010
    %v10012 = vpop.f32.mrf.mxu0
    %10013 = vmatprep.mubr.f32.mxu0 0.0
    %10014 = vmatmul.mubr.f32.gmra.mxu0 %v9916
    %v10015 = vpop.f32.mrf.mxu0
    %v10016 = vadd.f32 %v9883, %v10015
    %v10017 = vpop.f32.mrf.mxu0
    %10018 = vmatprep.mubr.f32.mxu0 0.0
    %10019 = vmatmul.mubr.f32.gmra.mxu0 %v9919
    %v10020 = vpop.f32.mrf.mxu0
    %v10021 = vadd.f32 %v9883, %v10020
    %v10022 = vpop.f32.mrf.mxu0
    %10023 = vmatprep.mubr.f32.mxu0 0.0
    %10024 = vmatmul.mubr.f32.gmra.mxu0 %v9922
    %v10025 = vpop.f32.mrf.mxu0
    %v10026 = vadd.f32 %v9883, %v10025
    %v10027 = vpop.f32.mrf.mxu0
    %10028 = vdwg.mxu0
    %v10029 = vld [vmem:[%s6] sm:$0xff]
    %v10030 = vld [vmem:[%s6 + $0x8] sm:$0xff]
    %v10031 = vld [vmem:[%s6 + $0x10] sm:$0xff]
    %v10032 = vld [vmem:[%s6 + $0x18] sm:$0xff]
    %v10033 = vld [vmem:[%s6 + $0x20] sm:$0xff]
    %v10034 = vld [vmem:[%s6 + $0x28] sm:$0xff]
    %v10035 = vld [vmem:[#allocation5 + $0x8] sm:$0x1]
    %v10036 = vld [vmem:[#allocation5 + $0x9] sm:$0x1]
    %v10037 = vlaneseq
    %v10038 = vshrl.u32 %v10037, 7
    %v10039 = vsub.s32 0, %v10038
    %v10040 = vrot.slane %v10035, %v10039
    %v10042 = vsel %vm579, %v9991, 0
    %v10045 = vsel %vm579, %v9996, 0
    %v10048 = vsel %vm579, %v10001, 0
    %v10051 = vsel %vm579, %v10006, 0
    %v10054 = vsel %vm579, %v10011, 0
    %v10057 = vsel %vm579, %v10016, 0
    %v10060 = vsel %vm579, %v10021, 0
    %v10063 = vsel %vm579, %v10026, 0
    %10065 = vmatprep.subr.mxu0 0.0
    %10066 = vmatpush1.msra.mxu0 0.0
    %10067 = vmatprep.subr.mxu0 0.0
    %10068 = vmatpush1.msra.mxu0 0.0
    %10069 = vmatprep.subr.mxu0 0.0
    %10070 = vmatpush1.msra.mxu0 0.0
    %10071 = vmatprep.subr.mxu0 0.0
    %10072 = vmatpush1.msra.mxu0 0.0
    %10073 = vmatprep.subr.mxu0 0.0
    %10074 = vmatpush1.msra.mxu0 0.0
    %10075 = vmatprep.subr.mxu0 0.0
    %10076 = vmatpush1.msra.mxu0 0.0
    %10077 = vmatprep.subr.mxu0 0.0
    %10078 = vmatpush1.msra.mxu0 0.0
    %10079 = vmatprep.subr.mxu0 0.0
    %10080 = vmatpush1.msra.mxu0 0.0
    %10081 = vmatprep.subr.mxu0 0.0
    %10082 = vmatpush1.msra.mxu0 0.0
    %10083 = vmatprep.subr.mxu0 0.0
    %10084 = vmatpush1.msra.mxu0 0.0
    %10085 = vmatprep.subr.mxu0 0.0
    %10086 = vmatpush1.msra.mxu0 0.0
    %10087 = vmatprep.subr.mxu0 0.0
    %10088 = vmatpush1.msra.mxu0 0.0
    %10089 = vmatprep.subr.mxu0 0.0
    %10090 = vmatpush1.msra.mxu0 %v10032
    %10091 = vmatprep.subr.mxu0 0.0
    %10092 = vmatpush1.msra.mxu0 %v10031
    %10093 = vmatprep.subr.mxu0 0.0
    %10094 = vmatpush1.msra.mxu0 %v10030
    %10095 = vmatprep.subr.mxu0 0.0
    %10096 = vmatpush1.msra.mxu0 %v10029
    %10097 = vmatprep.subr.mxu0 0.0
    %10098 = vmatpush2.msra.mxu0 0.0
    %10099 = vmatprep.subr.mxu0 0.0
    %10100 = vmatpush2.msra.mxu0 0.0
    %10101 = vmatprep.subr.mxu0 0.0
    %10102 = vmatpush2.msra.mxu0 0.0
    %10103 = vmatprep.subr.mxu0 0.0
    %10104 = vmatpush2.msra.mxu0 0.0
    %10105 = vmatprep.subr.mxu0 0.0
    %10106 = vmatpush2.msra.mxu0 0.0
    %10107 = vmatprep.subr.mxu0 0.0
    %10108 = vmatpush2.msra.mxu0 0.0
    %10109 = vmatprep.subr.mxu0 0.0
    %10110 = vmatpush2.msra.mxu0 0.0
    %10111 = vmatprep.subr.mxu0 0.0
    %10112 = vmatpush2.msra.mxu0 0.0
    %10113 = vmatprep.subr.mxu0 0.0
    %10114 = vmatpush2.msra.mxu0 0.0
    %10115 = vmatprep.subr.mxu0 0.0
    %10116 = vmatpush2.msra.mxu0 0.0
    %10117 = vmatprep.subr.mxu0 0.0
    %10118 = vmatpush2.msra.mxu0 0.0
    %10119 = vmatprep.subr.mxu0 0.0
    %10120 = vmatpush2.msra.mxu0 0.0
    %10121 = vmatprep.subr.mxu0 0.0
    %10122 = vmatpush2.msra.mxu0 0.0
    %10123 = vmatprep.subr.mxu0 0.0
    %10124 = vmatpush2.msra.mxu0 0.0
    %10125 = vmatprep.subr.mxu0 0.0
    %10126 = vmatpush2.msra.mxu0 0.0
    %10127 = vmatprep.subr.mxu0 0.0
    %10128 = vmatpush2.msra.mxu0 0.0
    %10129 = vmatprep.mubr.f32.mxu0 0.0
    %10130 = vmatmul.mubr.f32.gmra.mxu0 %v10042
    %v10131 = vpop.f32.mrf.mxu0
    %v10132 = vadd.f32 %v10040, %v10131
    %v10133 = vpop.f32.mrf.mxu0
    %10134 = vmatprep.mubr.f32.mxu0 0.0
    %10135 = vmatmul.mubr.f32.gmra.mxu0 %v10045
    %v10136 = vpop.f32.mrf.mxu0
    %v10137 = vadd.f32 %v10040, %v10136
    %v10138 = vpop.f32.mrf.mxu0
    %10139 = vmatprep.mubr.f32.mxu0 0.0
    %10140 = vmatmul.mubr.f32.gmra.mxu0 %v10048
    %v10141 = vpop.f32.mrf.mxu0
    %v10142 = vadd.f32 %v10040, %v10141
    %v10143 = vpop.f32.mrf.mxu0
    %10144 = vmatprep.mubr.f32.mxu0 0.0
    %10145 = vmatmul.mubr.f32.gmra.mxu0 %v10051
    %v10146 = vpop.f32.mrf.mxu0
    %v10147 = vadd.f32 %v10040, %v10146
    %v10148 = vpop.f32.mrf.mxu0
    %10149 = vmatprep.mubr.f32.mxu0 0.0
    %10150 = vmatmul.mubr.f32.gmra.mxu0 %v10054
    %v10151 = vpop.f32.mrf.mxu0
    %v10152 = vadd.f32 %v10040, %v10151
    %v10153 = vpop.f32.mrf.mxu0
    %10154 = vmatprep.mubr.f32.mxu0 0.0
    %10155 = vmatmul.mubr.f32.gmra.mxu0 %v10057
    %v10156 = vpop.f32.mrf.mxu0
    %v10157 = vadd.f32 %v10040, %v10156
    %v10158 = vpop.f32.mrf.mxu0
    %10159 = vmatprep.mubr.f32.mxu0 0.0
    %10160 = vmatmul.mubr.f32.gmra.mxu0 %v10060
    %v10161 = vpop.f32.mrf.mxu0
    %v10162 = vadd.f32 %v10040, %v10161
    %v10163 = vpop.f32.mrf.mxu0
    %10164 = vmatprep.mubr.f32.mxu0 0.0
    %10165 = vmatmul.mubr.f32.gmra.mxu0 %v10063
    %v10166 = vpop.f32.mrf.mxu0
    %v10167 = vadd.f32 %v10040, %v10166
    %v10168 = vpop.f32.mrf.mxu0
    %10169 = vdwg.mxu0
    %v10170 = vmax.f32 %v10132, 0.0
    %v10171 = vmax.f32 %v10137, 0.0
    %v10172 = vmax.f32 %v10142, 0.0
    %v10173 = vmax.f32 %v10147, 0.0
    %v10174 = vmax.f32 %v10152, 0.0
    %v10175 = vmax.f32 %v10157, 0.0
    %v10176 = vmax.f32 %v10162, 0.0
    %v10177 = vmax.f32 %v10167, 0.0
    %v10178 = vlaneseq
    %v10179 = vshrl.u32 %v10178, 7
    %v10180 = vsub.s32 0, %v10179
    %v10181 = vrot.slane %v10036, %v10180
    %v10183 = vsel %vm75, %v10170, 0
    %v10186 = vsel %vm75, %v10171, 0
    %v10189 = vsel %vm75, %v10172, 0
    %v10192 = vsel %vm75, %v10173, 0
    %v10195 = vsel %vm75, %v10174, 0
    %v10198 = vsel %vm75, %v10175, 0
    %v10201 = vsel %vm75, %v10176, 0
    %v10204 = vsel %vm75, %v10177, 0
    %10206 = vmatprep.subr.mxu0 0.0
    %10207 = vmatpush1.msra.mxu0 0.0
    %10208 = vmatprep.subr.mxu0 0.0
    %10209 = vmatpush1.msra.mxu0 0.0
    %10210 = vmatprep.subr.mxu0 0.0
    %10211 = vmatpush1.msra.mxu0 0.0
    %10212 = vmatprep.subr.mxu0 0.0
    %10213 = vmatpush1.msra.mxu0 0.0
    %10214 = vmatprep.subr.mxu0 0.0
    %10215 = vmatpush1.msra.mxu0 0.0
    %10216 = vmatprep.subr.mxu0 0.0
    %10217 = vmatpush1.msra.mxu0 0.0
    %10218 = vmatprep.subr.mxu0 0.0
    %10219 = vmatpush1.msra.mxu0 0.0
    %10220 = vmatprep.subr.mxu0 0.0
    %10221 = vmatpush1.msra.mxu0 0.0
    %10222 = vmatprep.subr.mxu0 0.0
    %10223 = vmatpush1.msra.mxu0 0.0
    %10224 = vmatprep.subr.mxu0 0.0
    %10225 = vmatpush1.msra.mxu0 0.0
    %10226 = vmatprep.subr.mxu0 0.0
    %10227 = vmatpush1.msra.mxu0 0.0
    %10228 = vmatprep.subr.mxu0 0.0
    %10229 = vmatpush1.msra.mxu0 0.0
    %10230 = vmatprep.subr.mxu0 0.0
    %10231 = vmatpush1.msra.mxu0 0.0
    %10232 = vmatprep.subr.mxu0 0.0
    %10233 = vmatpush1.msra.mxu0 0.0
    %10234 = vmatprep.subr.mxu0 0.0
    %10235 = vmatpush1.msra.mxu0 %v10034
    %10236 = vmatprep.subr.mxu0 0.0
    %10237 = vmatpush1.msra.mxu0 %v10033
    %10238 = vmatprep.subr.mxu0 0.0
    %10239 = vmatpush2.msra.mxu0 0.0
    %10240 = vmatprep.subr.mxu0 0.0
    %10241 = vmatpush2.msra.mxu0 0.0
    %10242 = vmatprep.subr.mxu0 0.0
    %10243 = vmatpush2.msra.mxu0 0.0
    %10244 = vmatprep.subr.mxu0 0.0
    %10245 = vmatpush2.msra.mxu0 0.0
    %10246 = vmatprep.subr.mxu0 0.0
    %10247 = vmatpush2.msra.mxu0 0.0
    %10248 = vmatprep.subr.mxu0 0.0
    %10249 = vmatpush2.msra.mxu0 0.0
    %10250 = vmatprep.subr.mxu0 0.0
    %10251 = vmatpush2.msra.mxu0 0.0
    %10252 = vmatprep.subr.mxu0 0.0
    %10253 = vmatpush2.msra.mxu0 0.0
    %10254 = vmatprep.subr.mxu0 0.0
    %10255 = vmatpush2.msra.mxu0 0.0
    %10256 = vmatprep.subr.mxu0 0.0
    %10257 = vmatpush2.msra.mxu0 0.0
    %10258 = vmatprep.subr.mxu0 0.0
    %10259 = vmatpush2.msra.mxu0 0.0
    %10260 = vmatprep.subr.mxu0 0.0
    %10261 = vmatpush2.msra.mxu0 0.0
    %10262 = vmatprep.subr.mxu0 0.0
    %10263 = vmatpush2.msra.mxu0 0.0
    %10264 = vmatprep.subr.mxu0 0.0
    %10265 = vmatpush2.msra.mxu0 0.0
    %10266 = vmatprep.subr.mxu0 0.0
    %10267 = vmatpush2.msra.mxu0 0.0
    %10268 = vmatprep.subr.mxu0 0.0
    %10269 = vmatpush2.msra.mxu0 0.0
    %10270 = vmatprep.mubr.f32.mxu0 0.0
    %10271 = vmatmul.mubr.f32.gmra.mxu0 %v10183
    %v10272 = vpop.f32.mrf.mxu0
    %v10273 = vadd.f32 %v10181, %v10272
    %v10274 = vpop.f32.mrf.mxu0
    %10275 = vmatprep.mubr.f32.mxu0 0.0
    %10276 = vmatmul.mubr.f32.gmra.mxu0 %v10186
    %v10277 = vpop.f32.mrf.mxu0
    %v10278 = vadd.f32 %v10181, %v10277
    %v10279 = vpop.f32.mrf.mxu0
    %10280 = vmatprep.mubr.f32.mxu0 0.0
    %10281 = vmatmul.mubr.f32.gmra.mxu0 %v10189
    %v10282 = vpop.f32.mrf.mxu0
    %v10283 = vadd.f32 %v10181, %v10282
    %v10284 = vpop.f32.mrf.mxu0
    %10285 = vmatprep.mubr.f32.mxu0 0.0
    %10286 = vmatmul.mubr.f32.gmra.mxu0 %v10192
    %v10287 = vpop.f32.mrf.mxu0
    %v10288 = vadd.f32 %v10181, %v10287
    %v10289 = vpop.f32.mrf.mxu0
    %10290 = vmatprep.mubr.f32.mxu0 0.0
    %10291 = vmatmul.mubr.f32.gmra.mxu0 %v10195
    %v10292 = vpop.f32.mrf.mxu0
    %v10293 = vadd.f32 %v10181, %v10292
    %v10294 = vpop.f32.mrf.mxu0
    %10295 = vmatprep.mubr.f32.mxu0 0.0
    %10296 = vmatmul.mubr.f32.gmra.mxu0 %v10198
    %v10297 = vpop.f32.mrf.mxu0
    %v10298 = vadd.f32 %v10181, %v10297
    %v10299 = vpop.f32.mrf.mxu0
    %10300 = vmatprep.mubr.f32.mxu0 0.0
    %10301 = vmatmul.mubr.f32.gmra.mxu0 %v10201
    %v10302 = vpop.f32.mrf.mxu0
    %v10303 = vadd.f32 %v10181, %v10302
    %v10304 = vpop.f32.mrf.mxu0
    %10305 = vmatprep.mubr.f32.mxu0 0.0
    %10306 = vmatmul.mubr.f32.gmra.mxu0 %v10204
    %v10307 = vpop.f32.mrf.mxu0
    %v10308 = vadd.f32 %v10181, %v10307
    %v10309 = vpop.f32.mrf.mxu0
    %10310 = vdwg.mxu0
    %10311 = vst [vmem:[#allocation7] sm:$0xff] %v10273
    %10312 = vst [vmem:[#allocation7 + $0x8] sm:$0xff] %v10278
    %10313 = vst [vmem:[#allocation7 + $0x10] sm:$0xff] %v10283
    %10314 = vst [vmem:[#allocation7 + $0x18] sm:$0xff] %v10288
    %10315 = vst [vmem:[#allocation7 + $0x20] sm:$0xff] %v10293
    %10316 = vst [vmem:[#allocation7 + $0x28] sm:$0xff] %v10298
    %10317 = vst [vmem:[#allocation7 + $0x30] sm:$0xff] %v10303
    %10318 = vst [vmem:[#allocation7 + $0x38] sm:$0xff] %v10308
    // Predicated region
    $region38: #{neural_gnn_with_attention_forward.1} parent=1 // pred_check
      _
    $region39: #{neural_gnn_with_attention_forward.1} parent=1 // pred_check_branch
      %10320 = sbr.rel (0) target = $region41
    $region40: #{neural_gnn_with_attention_forward.1} parent=1 // pred_region
      %s10322 = ssub.s32 1024, 1024
      %10323 = vsyncadd [#allocation4], %s10322
      %s10324 = sshll.u32 [#allocation7], 4
      %s10325 = int_to_ptr.vmem [resolvable:$true] %s10324
      %10330 = dma.vmem_to_hbm [thread:$0]  %s10325, 1024, %s7, [#allocation4], 128, 128, 8
    $region41: #{neural_gnn_with_attention_forward.1} parent=1 // pred_fallthru
      _
    // Predicated region
    $region42: #{neural_gnn_with_attention_forward.1} parent=1 // pred_check
      _
    $region43: #{neural_gnn_with_attention_forward.1} parent=1 // pred_check_branch
      %10332 = sbr.rel (0) target = $region45
    $region44: #{neural_gnn_with_attention_forward.1} parent=1 // pred_region
      %10333 = dma.done [#allocation4], 1024
    $region45: #{neural_gnn_with_attention_forward.1} parent=1 // pred_fallthru
      _
    %10334 = vsyncpa [#allocation3], 1
    %10335 = vsyncpa [#allocation6], 1
    %10336 = vsyncpa [#allocation4], 1

</llo_original>
